<compile_context>
chip_gen: v6e
topology: v6e:2x2x1
jax: 0.10.0
libtpu: 0.0.40
codegen_flags: <defaults>
</compile_context>

<pallas_src>
import jax
import jax.numpy as jnp
from jax.experimental import pallas as pl
from jax.experimental.pallas import tpu as pltpu

# ---- model hyper-parameters ----
FIELD_NUM = 5                      # user, user2, item, item2, item3
EMBED_DIM = 4
HIDDEN_UNITS = [32, 32, 16]
N_USER = 290
N_ITEM = 300
N_ROWS = N_USER + N_ITEM           # 590 combined two-hot index space (items offset by 290)

H0, H1, H2 = HIDDEN_UNITS
FE = FIELD_NUM * EMBED_DIM         # 20  flattened z width
EE = EMBED_DIM * EMBED_DIM         # 16  flattened outer-product width

# ---- packed embedding table layout: [TBL_ROWS, 128] bf16 ----
TBL_ROWS = 640                     # 590 rows padded to a multiple of 8 (and of 128 for DMA)
TBL_COLS = 128                     # lane-dense
_LZ_C = 0                          # cols  0:32  per-row l_z contribution (w_z folded offline)
_FREP_C = 32                       # cols 32:48  field-sum repeated  (col i*4+j = f[i])
_FTILE_C = 48                      # cols 48:64  field-sum tiled     (col i*4+j = f[j])

# ---- packed weight/bias buffer layout: [WP_ROWS, 128] f32 (8-aligned matrix starts) ----
_WP_R = 0                          # w_p  [16, 32]
_W1_R = 16                         # w1   [32, 32]
_W2_R = 48                         # w2   [32, 16]
_LB_R = 80                         # l_b  [1, 32]
_B1_R = 81                         # b1   [1, 32]
_B2_R = 82                         # b2   [1, 16]
_WF_R = 83                         # wf   [1, 16]
_BF_R = 84                         # bf   [1, 1]
WP_ROWS = 88

TILE_B = 512                       # batch tile: multiple of 256 (v6e/v7x MXU) and >= 512


def _pnn_kernel(ids_ref, tbl_ref, w_ref, o_ref):
    tb = o_ref.shape[1]                                    # TILE_B

    ids = ids_ref[...]                                     # [TB, 2] int32
    u_col = ids[:, 0:1]                                    # [TB, 1] user ids
    i_col = ids[:, 1:2] + N_USER                           # [TB, 1] item ids (row offset)

    # Two-hot rows (exact in bf16) x bf16 packed table: a single MXU matmul performs the
    # embedding gather, the l_z projection (w_z folded offline) and the field-sum
    # repeat/tile expansion in one shot.
    col = jax.lax.broadcasted_iota(jnp.int32, (1, TBL_ROWS), 1)                # [1, 640]
    hit = jnp.logical_or(col == u_col, col == i_col)                           # [TB, 640]
    twohot = jnp.where(hit, 1.0, 0.0).astype(jnp.bfloat16)                     # [TB, 640] bf16
    g = jnp.dot(twohot, tbl_ref[...], preferred_element_type=jnp.float32)      # [TB, 128] f32

    l_z = g[:, _LZ_C:_LZ_C + H0]                           # [TB, 32]
    # Outer product p[b, i*4+j] = f[b,i] * f[b,j]: one VPU multiply of two lane slices.
    p = g[:, _FREP_C:_FREP_C + EE] * g[:, _FTILE_C:_FTILE_C + EE]              # [TB, 16]

    # ProductLayer: l_p matmul (K=16) + precomputed l_z + bias, ReLU.
    l_p = jnp.dot(p, w_ref[_WP_R:_WP_R + EE, 0:H0],
                  preferred_element_type=jnp.float32)
    h = jnp.maximum(l_z + l_p + w_ref[_LB_R:_LB_R + 1, 0:H0], 0.0)

    # DNN: Linear + ReLU (x2). Dropout is identity in eval.  # TODO(synk): train-mode dropout
    h = jnp.maximum(
        jnp.dot(h, w_ref[_W1_R:_W1_R + H0, 0:H1], preferred_element_type=jnp.float32)
        + w_ref[_B1_R:_B1_R + 1, 0:H1], 0.0)
    h = jnp.maximum(
        jnp.dot(h, w_ref[_W2_R:_W2_R + H1, 0:H2], preferred_element_type=jnp.float32)
        + w_ref[_B2_R:_B2_R + 1, 0:H2], 0.0)

    # dense_final: N=1 matmul replaced by VPU multiply + lane reduction (avoids an MXU pass).
    logit = (jnp.sum(h * w_ref[_WF_R:_WF_R + 1, 0:H2], axis=-1, keepdims=True)
             + w_ref[_BF_R:_BF_R + 1, 0:1])                # [TB, 1]

    # sigmoid + sublane->lane relayout into the lane-dense [1, TILE_B] output block.
    o_ref[...] = jax.nn.sigmoid(logit).reshape(1, tb)


def init_params(key):
    E, F_, H = EMBED_DIM, FIELD_NUM, HIDDEN_UNITS
    ks = jax.random.split(key, 12)
    return {
        # embedding tables (user3_emb unused in forward, omitted)
        "user_emb":  jax.random.normal(ks[0], (N_USER, E), jnp.float32),
        "user2_emb": jax.random.normal(ks[1], (N_USER, E), jnp.float32),
        "item_emb":  jax.random.normal(ks[2], (N_ITEM, E), jnp.float32),
        "item2_emb": jax.random.normal(ks[3], (N_ITEM, E), jnp.float32),
        "item3_emb": jax.random.normal(ks[4], (N_ITEM, E), jnp.float32),
        # ProductLayer params (torch.rand -> uniform [0,1))
        "w_z": jax.random.uniform(ks[5], (F_, E, H[0]), jnp.float32),
        "w_p": jax.random.uniform(ks[6], (E, E, H[0]), jnp.float32),   # mode='out'
        "l_b": jax.random.uniform(ks[7], (H[0],), jnp.float32),
        # DNN linears, stored [in, out]
        "w1": jax.random.uniform(ks[8], (H[0], H[1]), jnp.float32, -0.1, 0.1),
        "b1": jnp.zeros((H[1],), jnp.float32),
        "w2": jax.random.uniform(ks[9], (H[1], H[2]), jnp.float32, -0.1, 0.1),
        "b2": jnp.zeros((H[2],), jnp.float32),
        # dense_final
        "wf": jax.random.uniform(ks[10], (H[2], 1), jnp.float32, -0.1, 0.1),
        "bf": jnp.zeros((1,), jnp.float32),
    }


def pack_inputs(params):
    """One-time parameter packing (pure layout + w_z folding, no per-sample work)."""
    E = EMBED_DIM
    f32 = jnp.float32

    # ---- embedding table [640, 128] bf16 -------------------------------------------
    # Per-row l_z contribution (w_z folded in f32, then cast): l_z = table_lz[u] + table_lz[290+i]
    wz = params["w_z"].reshape(FE, H0)                                    # [20, 32]
    lz_user = (params["user_emb"] @ wz[0 * E:1 * E]
               + params["user2_emb"] @ wz[1 * E:2 * E])                   # [290, 32]
    lz_item = (params["item_emb"] @ wz[2 * E:3 * E]
               + params["item2_emb"] @ wz[3 * E:4 * E]
               + params["item3_emb"] @ wz[4 * E:5 * E])                   # [300, 32]
    u_sum = params["user_emb"] + params["user2_emb"]                      # [290, 4]
    i_sum = params["item_emb"] + params["item2_emb"] + params["item3_emb"]  # [300, 4]
    user_rows = jnp.concatenate(
        [lz_user, jnp.repeat(u_sum, E, axis=1), jnp.tile(u_sum, (1, E))], axis=1)   # [290, 64]
    item_rows = jnp.concatenate(
        [lz_item, jnp.repeat(i_sum, E, axis=1), jnp.tile(i_sum, (1, E))], axis=1)   # [300, 64]
    tbl = jnp.concatenate([user_rows, item_rows], axis=0)                 # [590, 64]
    tbl = jnp.pad(tbl, ((0, TBL_ROWS - N_ROWS), (0, TBL_COLS - tbl.shape[1])))
    tbl = tbl.astype(jnp.bfloat16)                                        # [640, 128] bf16

    # ---- single packed weight/bias buffer [88, 128] f32 ------------------------------
    def pad_lanes(a):
        return jnp.pad(a, ((0, 0), (0, TBL_COLS - a.shape[1])))

    wpack = jnp.concatenate([
        pad_lanes(params["w_p"].reshape(EE, H0)),                         # rows  0:16
        pad_lanes(params["w1"]),                                          # rows 16:48
        pad_lanes(params["w2"]),                                          # rows 48:80
        pad_lanes(params["l_b"].reshape(1, H0)),                          # row 80
        pad_lanes(params["b1"].reshape(1, H1)),                           # row 81
        pad_lanes(params["b2"].reshape(1, H2)),                           # row 82
        pad_lanes(params["wf"].reshape(1, H2)),                           # row 83
        pad_lanes(params["bf"].reshape(1, 1)),                            # row 84
        jnp.zeros((WP_ROWS - 85, TBL_COLS), f32),                         # pad to 88 rows
    ], axis=0).astype(f32)
    assert wpack.shape == (WP_ROWS, TBL_COLS)
    return {"table": tbl, "wpack": wpack}


@jax.jit
def pnn_forward(packed, ids):
    """ids: int32 [B, 2] -> (user_id, item_id) per row; returns sigmoid scores [B, 1]."""
    B = ids.shape[0]
    # clamp ids to valid embedding range (bounds safety)
    u = jnp.clip(ids[:, 0].astype(jnp.int32), 0, N_USER - 1)
    it = jnp.clip(ids[:, 1].astype(jnp.int32), 0, N_ITEM - 1)
    ids2 = jnp.stack([u, it], axis=1)

    nb = pl.cdiv(B, TILE_B)
    bp = nb * TILE_B
    ids_pad = jnp.pad(ids2, ((0, bp - B), (0, 0)))          # padded rows score (u=0,i=0), discarded

    out = pl.pallas_call(
        _pnn_kernel,
        out_shape=jax.ShapeDtypeStruct((1, bp), jnp.float32),   # lane-oriented output
        grid=(nb,),
        in_specs=[
            pl.BlockSpec((TILE_B, 2), lambda i: (i, 0)),                  # batch-tiled ids
            pl.BlockSpec((TBL_ROWS, TBL_COLS), lambda i: (0, 0)),         # table: VMEM-resident
            pl.BlockSpec((WP_ROWS, TBL_COLS), lambda i: (0, 0)),          # weights: VMEM-resident
        ],
        out_specs=pl.BlockSpec((1, TILE_B), lambda i: (0, i)),
        compiler_params=pltpu.CompilerParams(
            dimension_semantics=("parallel",),      # shard batch tiles across cores (v7x)
        ),
    )(ids_pad, packed["table"], packed["wpack"])
    return out[0, :B].reshape(B, 1)


def pnn_reference(params, ids):
    """Pure-JAX reference mirroring the PyTorch forward (eval mode), f32 HIGHEST precision."""
    E, F_ = EMBED_DIM, FIELD_NUM
    B = ids.shape[0]
    hp = jax.lax.Precision.HIGHEST
    u, it = ids[:, 0], ids[:, 1]
    sparse = jnp.stack(
        [params["user_emb"][u], params["user2_emb"][u],
         params["item_emb"][it], params["item2_emb"][it], params["item3_emb"][it]],
        axis=1)                                                   # [B, 5, 4]
    z = sparse.reshape(B, F_ * E)
    l_z = jnp.dot(z, params["w_z"].reshape(F_ * E, H0), precision=hp)
    f = sparse.sum(axis=1)                                        # [B, 4]
    p = (f[:, :, None] * f[:, None, :]).reshape(B, E * E)
    l_p = jnp.dot(p, params["w_p"].reshape(E * E, H0), precision=hp)
    h = jax.nn.relu(l_z + l_p + params["l_b"][None, :])
    h = jax.nn.relu(jnp.dot(h, params["w1"], precision=hp) + params["b1"][None, :])
    h = jax.nn.relu(jnp.dot(h, params["w2"], precision=hp) + params["b2"][None, :])
    logit = jnp.dot(h, params["wf"], precision=hp) + params["bf"][None, :]
    return jax.nn.sigmoid(logit)


if __name__ == "__main__":
    key = jax.random.PRNGKey(0)
    pkey, ku, ki, ku2, ki2 = jax.random.split(key, 5)
    params = init_params(pkey)
    packed = pack_inputs(params)

    # Tolerance covers bf16 rounding of the packed embedding table + MXU default precision;
    # observed error is typically ~1e-3 on the sigmoid outputs.
    TOL = 1e-2

    # small batch (single grid step)
    u8 = jax.random.randint(ku, (8,), 0, N_USER, dtype=jnp.int32)
    i8 = jax.random.randint(ki, (8,), 0, N_ITEM, dtype=jnp.int32)
    ids8 = jnp.stack([u8, i8], axis=1)                            # [8, 2]
    out8 = jax.block_until_ready(pnn_forward(packed, ids8))
    assert out8.shape == (8, 1)
    assert bool(jnp.all(jnp.isfinite(out8)))
    ref8 = pnn_reference(params, ids8)
    assert bool(jnp.allclose(out8, ref8, atol=TOL)), "kernel mismatch vs reference (B=8)"

    # larger batch exercising multiple grid steps (nb=2) and the VMEM-resident param revisit
    ub = jax.random.randint(ku2, (600,), 0, N_USER, dtype=jnp.int32)
    ib = jax.random.randint(ki2, (600,), 0, N_ITEM, dtype=jnp.int32)
    idsb = jnp.stack([ub, ib], axis=1)                            # [600, 2]
    outb = jax.block_until_ready(pnn_forward(packed, idsb))
    assert outb.shape == (600, 1)
    assert bool(jnp.all(jnp.isfinite(outb)))
    refb = pnn_reference(params, idsb)
    assert bool(jnp.allclose(outb, refb, atol=TOL)), "kernel mismatch vs reference (B=600)"

    print("KERNEL_OK")
</pallas_src>

<mosaic_0001>
module attributes {stable_mosaic.version = 11 : i64} {
  func.func @_pnn_kernel(%arg0: i32, %arg1: memref<512x2xi32, #tpu.memory_space<vmem>>, %arg2: memref<640x128xbf16, #tpu.memory_space<vmem>>, %arg3: memref<88x128xf32, #tpu.memory_space<vmem>>, %arg4: memref<1x512xf32, #tpu.memory_space<vmem>>) attributes {dimension_semantics = [#tpu.dimension_semantics<parallel>], iteration_bounds = array<i64: 1>, scalar_prefetch = 0 : i64, scratch_operands = 0 : i64, tpu.core_type = #tpu.core_type<tc>, window_params = [{transform_indices = @transform_0, window_bounds = array<i64: 512, 2>}, {pipeline_mode = #tpu.pipeline_mode<synchronous>, transform_indices = @transform_1, window_bounds = array<i64: 640, 128>}, {pipeline_mode = #tpu.pipeline_mode<synchronous>, transform_indices = @transform_2, window_bounds = array<i64: 88, 128>}, {transform_indices = @transform_3, window_bounds = array<i64: 1, 512>}]} {
    %c0 = arith.constant 0 : index
    %c0_0 = arith.constant 0 : index
    %0 = vector.load %arg1[%c0, %c0_0] : memref<512x2xi32, #tpu.memory_space<vmem>>, vector<512x2xi32>
    %1 = vector.extract_strided_slice %0 {offsets = [0, 0], sizes = [512, 1], strides = [1, 1]} : vector<512x2xi32> to vector<512x1xi32>
    %2 = vector.extract_strided_slice %0 {offsets = [0, 1], sizes = [512, 1], strides = [1, 1]} : vector<512x2xi32> to vector<512x1xi32>
    %c290_i32 = arith.constant 290 : i32
    %3 = vector.broadcast %c290_i32 : i32 to vector<512x1xi32>
    %4 = arith.addi %2, %3 : vector<512x1xi32>
    %5 = tpu.iota {dimensions = array<i32: 1>} : vector<1x640xi32>
    %6 = vector.broadcast %5 : vector<1x640xi32> to vector<512x640xi32>
    %7 = vector.broadcast %1 : vector<512x1xi32> to vector<512x640xi32>
    %8 = arith.cmpi eq, %6, %7 : vector<512x640xi32>
    %9 = vector.broadcast %5 : vector<1x640xi32> to vector<512x640xi32>
    %10 = vector.broadcast %4 : vector<512x1xi32> to vector<512x640xi32>
    %11 = arith.cmpi eq, %9, %10 : vector<512x640xi32>
    %12 = arith.ori %8, %11 : vector<512x640xi1>
    %cst = arith.constant 1.000000e+00 : f32
    %cst_1 = arith.constant 0.000000e+00 : f32
    %13 = vector.broadcast %cst : f32 to vector<512x640xf32>
    %14 = vector.broadcast %cst_1 : f32 to vector<512x640xf32>
    %15 = arith.select %12, %13, %14 : vector<512x640xi1>, vector<512x640xf32>
    %16 = arith.truncf %15 : vector<512x640xf32> to vector<512x640xbf16>
    %c0_2 = arith.constant 0 : index
    %c0_3 = arith.constant 0 : index
    %17 = vector.load %arg2[%c0_2, %c0_3] : memref<640x128xbf16, #tpu.memory_space<vmem>>, vector<640x128xbf16>
    %cst_4 = arith.constant dense<0.000000e+00> : vector<512x128xf32>
    %18 = tpu.matmul %16, %17, %cst_4 {dimension_numbers = #tpu.dot_dimension_numbers<[1], [0], [0], [1], [0, 0, 1, 1], [], []>} : vector<512x640xbf16>, vector<640x128xbf16>, vector<512x128xf32> -> vector<512x128xf32>
    %19 = vector.extract_strided_slice %18 {offsets = [0, 0], sizes = [512, 32], strides = [1, 1]} : vector<512x128xf32> to vector<512x32xf32>
    %20 = vector.extract_strided_slice %18 {offsets = [0, 32], sizes = [512, 16], strides = [1, 1]} : vector<512x128xf32> to vector<512x16xf32>
    %21 = vector.extract_strided_slice %18 {offsets = [0, 48], sizes = [512, 16], strides = [1, 1]} : vector<512x128xf32> to vector<512x16xf32>
    %22 = arith.mulf %20, %21 : vector<512x16xf32>
    %c0_5 = arith.constant 0 : index
    %c0_6 = arith.constant 0 : index
    %23 = vector.load %arg3[%c0_5, %c0_6] : memref<88x128xf32, #tpu.memory_space<vmem>>, vector<16x32xf32>
    %cst_7 = arith.constant dense<0.000000e+00> : vector<512x32xf32>
    %24 = tpu.matmul %22, %23, %cst_7 {dimension_numbers = #tpu.dot_dimension_numbers<[1], [0], [0], [1], [0, 0, 1, 1], [], []>} : vector<512x16xf32>, vector<16x32xf32>, vector<512x32xf32> -> vector<512x32xf32>
    %25 = arith.addf %19, %24 : vector<512x32xf32>
    %c80 = arith.constant 80 : index
    %c0_8 = arith.constant 0 : index
    %26 = vector.load %arg3[%c80, %c0_8] : memref<88x128xf32, #tpu.memory_space<vmem>>, vector<1x32xf32>
    %27 = vector.broadcast %26 : vector<1x32xf32> to vector<512x32xf32>
    %28 = arith.addf %25, %27 : vector<512x32xf32>
    %cst_9 = arith.constant 0.000000e+00 : f32
    %29 = vector.broadcast %cst_9 : f32 to vector<512x32xf32>
    %30 = arith.maximumf %28, %29 : vector<512x32xf32>
    %c16 = arith.constant 16 : index
    %c0_10 = arith.constant 0 : index
    %31 = vector.load %arg3[%c16, %c0_10] : memref<88x128xf32, #tpu.memory_space<vmem>>, vector<32x32xf32>
    %cst_11 = arith.constant dense<0.000000e+00> : vector<512x32xf32>
    %32 = tpu.matmul %30, %31, %cst_11 {dimension_numbers = #tpu.dot_dimension_numbers<[1], [0], [0], [1], [0, 0, 1, 1], [], []>} : vector<512x32xf32>, vector<32x32xf32>, vector<512x32xf32> -> vector<512x32xf32>
    %c81 = arith.constant 81 : index
    %c0_12 = arith.constant 0 : index
    %33 = vector.load %arg3[%c81, %c0_12] : memref<88x128xf32, #tpu.memory_space<vmem>>, vector<1x32xf32>
    %34 = vector.broadcast %33 : vector<1x32xf32> to vector<512x32xf32>
    %35 = arith.addf %32, %34 : vector<512x32xf32>
    %cst_13 = arith.constant 0.000000e+00 : f32
    %36 = vector.broadcast %cst_13 : f32 to vector<512x32xf32>
    %37 = arith.maximumf %35, %36 : vector<512x32xf32>
    %c48 = arith.constant 48 : index
    %c0_14 = arith.constant 0 : index
    %38 = vector.load %arg3[%c48, %c0_14] : memref<88x128xf32, #tpu.memory_space<vmem>>, vector<32x16xf32>
    %cst_15 = arith.constant dense<0.000000e+00> : vector<512x16xf32>
    %39 = tpu.matmul %37, %38, %cst_15 {dimension_numbers = #tpu.dot_dimension_numbers<[1], [0], [0], [1], [0, 0, 1, 1], [], []>} : vector<512x32xf32>, vector<32x16xf32>, vector<512x16xf32> -> vector<512x16xf32>
    %c82 = arith.constant 82 : index
    %c0_16 = arith.constant 0 : index
    %40 = vector.load %arg3[%c82, %c0_16] : memref<88x128xf32, #tpu.memory_space<vmem>>, vector<1x16xf32>
    %41 = vector.broadcast %40 : vector<1x16xf32> to vector<512x16xf32>
    %42 = arith.addf %39, %41 : vector<512x16xf32>
    %cst_17 = arith.constant 0.000000e+00 : f32
    %43 = vector.broadcast %cst_17 : f32 to vector<512x16xf32>
    %44 = arith.maximumf %42, %43 : vector<512x16xf32>
    %c83 = arith.constant 83 : index
    %c0_18 = arith.constant 0 : index
    %45 = vector.load %arg3[%c83, %c0_18] : memref<88x128xf32, #tpu.memory_space<vmem>>, vector<1x16xf32>
    %46 = vector.broadcast %45 : vector<1x16xf32> to vector<512x16xf32>
    %47 = arith.mulf %44, %46 : vector<512x16xf32>
    %cst_19 = arith.constant dense<0.000000e+00> : vector<512xf32>
    %48 = vector.multi_reduction <add>, %47, %cst_19 [1] : vector<512x16xf32> to vector<512xf32>
    %49 = vector.shape_cast %48 : vector<512xf32> to vector<512x1xf32>
    %c84 = arith.constant 84 : index
    %c0_20 = arith.constant 0 : index
    %50 = vector.load %arg3[%c84, %c0_20] : memref<88x128xf32, #tpu.memory_space<vmem>>, vector<1x1xf32>
    %51 = vector.broadcast %50 : vector<1x1xf32> to vector<512x1xf32>
    %52 = arith.addf %49, %51 : vector<512x1xf32>
    %53 = arith.negf %52 : vector<512x1xf32>
    %54 = math.exp %53 : vector<512x1xf32>
    %cst_21 = arith.constant 1.000000e+00 : f32
    %55 = vector.broadcast %cst_21 : f32 to vector<512x1xf32>
    %56 = arith.addf %55, %54 : vector<512x1xf32>
    %57 = arith.divf %55, %56 : vector<512x1xf32>
    %58 = vector.shape_cast %57 : vector<512x1xf32> to vector<1x512xf32>
    %c0_22 = arith.constant 0 : index
    %c0_23 = arith.constant 0 : index
    %59 = vector.load %arg4[%c0_22, %c0_23] : memref<1x512xf32, #tpu.memory_space<vmem>>, vector<1x512xf32>
    tpu.vector_store %arg4[%c0_22, %c0_23], %58 {strides = array<i32>} : memref<1x512xf32, #tpu.memory_space<vmem>>, vector<1x512xf32>,
    return
  }
  func.func @transform_0(%arg0: i32) -> (i32, i32) {
    %c0_i32 = arith.constant 0 : i32
    %c0_i32_0 = arith.constant 0 : i32
    return %arg0, %c0_i32 : i32, i32
  }
  func.func @transform_1(%arg0: i32) -> (i32, i32) {
    %c0_i32 = arith.constant 0 : i32
    %c0_i32_0 = arith.constant 0 : i32
    %c0_i32_1 = arith.constant 0 : i32
    return %c0_i32, %c0_i32_0 : i32, i32
  }
  func.func @transform_2(%arg0: i32) -> (i32, i32) {
    %c0_i32 = arith.constant 0 : i32
    %c0_i32_0 = arith.constant 0 : i32
    %c0_i32_1 = arith.constant 0 : i32
    return %c0_i32, %c0_i32_0 : i32, i32
  }
  func.func @transform_3(%arg0: i32) -> (i32, i32) {
    %c0_i32 = arith.constant 0 : i32
    %c0_i32_0 = arith.constant 0 : i32
    return %c0_i32, %arg0 : i32, i32
  }
}

</mosaic_0001>

<llo_original>
// kernel: pnn_forward.1
$region0: #{pnn_forward.1}
  #allocation0 [shape = 'u32[]', space=smem, size = 0x4, offset = 0x4, fixed_abs, tag = 'smem constant byte address 0x4 - core index']
  #allocation1 [shape = 'u32[144,128]{1,0:T(1,128)}', space=vmem, size = 0x12000, scoped, tag = 'internal scratch']
  %s0 = inlined_call_operand.vmem [shape: s32[512,2], index: 0, kind: input, shape index: {}]
  %s1 = inlined_call_operand.vmem [shape: bf16[640,128], index: 1, kind: input, shape index: {}]
  %s2 = inlined_call_operand.vmem [shape: f32[88,128], index: 2, kind: input, shape index: {}]
  %s3 = inlined_call_operand.vmem [shape: f32[1,512], index: 3, kind: output, shape index: {}]
  %s4 = sld [smem:[#allocation0]]
  $region22: #{pnn_forward.1} parent=0
    _
  %s6 = ssub.s32 1, %s4
  %s7 = scalar_select 0, %s6, %s4
  // Predicated region
  $region2: #{pnn_forward.1} parent=0 // pred_check
    _
  $region3: #{pnn_forward.1} parent=0 // pred_check_branch
    %9 = sbr.rel (0) target = $region5
  $region4: #{pnn_forward.1} parent=0 // pred_region
    _
  $region5: #{pnn_forward.1} parent=0 // pred_fallthru
    _
  // Predicated region
  $region6: #{pnn_forward.1} parent=0 // pred_check
    _
  $region7: #{pnn_forward.1} parent=0 // pred_check_branch
    %11 = sbr.rel (0) target = $region9
  $region8: #{pnn_forward.1} parent=0 // pred_region
    _
  $region9: #{pnn_forward.1} parent=0 // pred_fallthru
    _
  // Predicated region
  $region10: #{pnn_forward.1} parent=0 // pred_check
    _
  $region11: #{pnn_forward.1} parent=0 // pred_check_branch
    %13 = sbr.rel (0) target = $region13
  $region12: #{pnn_forward.1} parent=0 // pred_region
    _
  $region13: #{pnn_forward.1} parent=0 // pred_fallthru
    _
  %v15 = vld [vmem:[%s0] sm:$0xff]
  %v16 = vld [vmem:[%s0 + $0x8] sm:$0xff]
  %v17 = vld [vmem:[%s0 + $0x10] sm:$0xff]
  %v18 = vld [vmem:[%s0 + $0x18] sm:$0xff]
  %v19 = vld [vmem:[%s0 + $0x20] sm:$0xff]
  %v20 = vld [vmem:[%s0 + $0x28] sm:$0xff]
  %v21 = vld [vmem:[%s0 + $0x30] sm:$0xff]
  %v22 = vld [vmem:[%s0 + $0x38] sm:$0xff]
  %v23 = vld [vmem:[%s0 + $0x40] sm:$0xff]
  %v24 = vld [vmem:[%s0 + $0x48] sm:$0xff]
  %v25 = vld [vmem:[%s0 + $0x50] sm:$0xff]
  %v26 = vld [vmem:[%s0 + $0x58] sm:$0xff]
  %v27 = vld [vmem:[%s0 + $0x60] sm:$0xff]
  %v28 = vld [vmem:[%s0 + $0x68] sm:$0xff]
  %v29 = vld [vmem:[%s0 + $0x70] sm:$0xff]
  %v30 = vld [vmem:[%s0 + $0x78] sm:$0xff]
  %v31 = vld [vmem:[%s0 + $0x80] sm:$0xff]
  %v32 = vld [vmem:[%s0 + $0x88] sm:$0xff]
  %v33 = vld [vmem:[%s0 + $0x90] sm:$0xff]
  %v34 = vld [vmem:[%s0 + $0x98] sm:$0xff]
  %v35 = vld [vmem:[%s0 + $0xa0] sm:$0xff]
  %v36 = vld [vmem:[%s0 + $0xa8] sm:$0xff]
  %v37 = vld [vmem:[%s0 + $0xb0] sm:$0xff]
  %v38 = vld [vmem:[%s0 + $0xb8] sm:$0xff]
  %v39 = vld [vmem:[%s0 + $0xc0] sm:$0xff]
  %v40 = vld [vmem:[%s0 + $0xc8] sm:$0xff]
  %v41 = vld [vmem:[%s0 + $0xd0] sm:$0xff]
  %v42 = vld [vmem:[%s0 + $0xd8] sm:$0xff]
  %v43 = vld [vmem:[%s0 + $0xe0] sm:$0xff]
  %v44 = vld [vmem:[%s0 + $0xe8] sm:$0xff]
  %v45 = vld [vmem:[%s0 + $0xf0] sm:$0xff]
  %v46 = vld [vmem:[%s0 + $0xf8] sm:$0xff]
  %v47 = vld [vmem:[%s0 + $0x100] sm:$0xff]
  %v48 = vld [vmem:[%s0 + $0x108] sm:$0xff]
  %v49 = vld [vmem:[%s0 + $0x110] sm:$0xff]
  %v50 = vld [vmem:[%s0 + $0x118] sm:$0xff]
  %v51 = vld [vmem:[%s0 + $0x120] sm:$0xff]
  %v52 = vld [vmem:[%s0 + $0x128] sm:$0xff]
  %v53 = vld [vmem:[%s0 + $0x130] sm:$0xff]
  %v54 = vld [vmem:[%s0 + $0x138] sm:$0xff]
  %v55 = vld [vmem:[%s0 + $0x140] sm:$0xff]
  %v56 = vld [vmem:[%s0 + $0x148] sm:$0xff]
  %v57 = vld [vmem:[%s0 + $0x150] sm:$0xff]
  %v58 = vld [vmem:[%s0 + $0x158] sm:$0xff]
  %v59 = vld [vmem:[%s0 + $0x160] sm:$0xff]
  %v60 = vld [vmem:[%s0 + $0x168] sm:$0xff]
  %v61 = vld [vmem:[%s0 + $0x170] sm:$0xff]
  %v62 = vld [vmem:[%s0 + $0x178] sm:$0xff]
  %v63 = vld [vmem:[%s0 + $0x180] sm:$0xff]
  %v64 = vld [vmem:[%s0 + $0x188] sm:$0xff]
  %v65 = vld [vmem:[%s0 + $0x190] sm:$0xff]
  %v66 = vld [vmem:[%s0 + $0x198] sm:$0xff]
  %v67 = vld [vmem:[%s0 + $0x1a0] sm:$0xff]
  %v68 = vld [vmem:[%s0 + $0x1a8] sm:$0xff]
  %v69 = vld [vmem:[%s0 + $0x1b0] sm:$0xff]
  %v70 = vld [vmem:[%s0 + $0x1b8] sm:$0xff]
  %v71 = vld [vmem:[%s0 + $0x1c0] sm:$0xff]
  %v72 = vld [vmem:[%s0 + $0x1c8] sm:$0xff]
  %v73 = vld [vmem:[%s0 + $0x1d0] sm:$0xff]
  %v74 = vld [vmem:[%s0 + $0x1d8] sm:$0xff]
  %v75 = vld [vmem:[%s0 + $0x1e0] sm:$0xff]
  %v76 = vld [vmem:[%s0 + $0x1e8] sm:$0xff]
  %v77 = vld [vmem:[%s0 + $0x1f0] sm:$0xff]
  %v78 = vld [vmem:[%s0 + $0x1f8] sm:$0xff]
  %v79 = vadd.s32 %v15, 290
  %v80 = vadd.s32 %v16, 290
  %v81 = vadd.s32 %v17, 290
  %v82 = vadd.s32 %v18, 290
  %v83 = vadd.s32 %v19, 290
  %v84 = vadd.s32 %v20, 290
  %v85 = vadd.s32 %v21, 290
  %v86 = vadd.s32 %v22, 290
  %v87 = vadd.s32 %v23, 290
  %v88 = vadd.s32 %v24, 290
  %v89 = vadd.s32 %v25, 290
  %v90 = vadd.s32 %v26, 290
  %v91 = vadd.s32 %v27, 290
  %v92 = vadd.s32 %v28, 290
  %v93 = vadd.s32 %v29, 290
  %v94 = vadd.s32 %v30, 290
  %v95 = vadd.s32 %v31, 290
  %v96 = vadd.s32 %v32, 290
  %v97 = vadd.s32 %v33, 290
  %v98 = vadd.s32 %v34, 290
  %v99 = vadd.s32 %v35, 290
  %v100 = vadd.s32 %v36, 290
  %v101 = vadd.s32 %v37, 290
  %v102 = vadd.s32 %v38, 290
  %v103 = vadd.s32 %v39, 290
  %v104 = vadd.s32 %v40, 290
  %v105 = vadd.s32 %v41, 290
  %v106 = vadd.s32 %v42, 290
  %v107 = vadd.s32 %v43, 290
  %v108 = vadd.s32 %v44, 290
  %v109 = vadd.s32 %v45, 290
  %v110 = vadd.s32 %v46, 290
  %v111 = vadd.s32 %v47, 290
  %v112 = vadd.s32 %v48, 290
  %v113 = vadd.s32 %v49, 290
  %v114 = vadd.s32 %v50, 290
  %v115 = vadd.s32 %v51, 290
  %v116 = vadd.s32 %v52, 290
  %v117 = vadd.s32 %v53, 290
  %v118 = vadd.s32 %v54, 290
  %v119 = vadd.s32 %v55, 290
  %v120 = vadd.s32 %v56, 290
  %v121 = vadd.s32 %v57, 290
  %v122 = vadd.s32 %v58, 290
  %v123 = vadd.s32 %v59, 290
  %v124 = vadd.s32 %v60, 290
  %v125 = vadd.s32 %v61, 290
  %v126 = vadd.s32 %v62, 290
  %v127 = vadd.s32 %v63, 290
  %v128 = vadd.s32 %v64, 290
  %v129 = vadd.s32 %v65, 290
  %v130 = vadd.s32 %v66, 290
  %v131 = vadd.s32 %v67, 290
  %v132 = vadd.s32 %v68, 290
  %v133 = vadd.s32 %v69, 290
  %v134 = vadd.s32 %v70, 290
  %v135 = vadd.s32 %v71, 290
  %v136 = vadd.s32 %v72, 290
  %v137 = vadd.s32 %v73, 290
  %v138 = vadd.s32 %v74, 290
  %v139 = vadd.s32 %v75, 290
  %v140 = vadd.s32 %v76, 290
  %v141 = vadd.s32 %v77, 290
  %v142 = vadd.s32 %v78, 290
  %v143 = vlaneseq
  %v144 = vand.u32 %v143, 127
  %v145 = vadd.s32 %v144, 128
  %v146 = vadd.s32 %v144, 256
  %v147 = vadd.s32 %v144, 384
  %v148 = vadd.s32 %v144, 512
  %149 = vset.pattern.permute.xlu0 0
  %150 = vperm.xlu0 %149, %v15
  %v151 = vpop.permute.xlu0 %150
  %152 = vset.pattern.permute.xlu0 0
  %153 = vperm.xlu0 %152, %v16
  %v154 = vpop.permute.xlu0 %153
  %155 = vset.pattern.permute.xlu0 0
  %156 = vperm.xlu0 %155, %v17
  %v157 = vpop.permute.xlu0 %156
  %158 = vset.pattern.permute.xlu0 0
  %159 = vperm.xlu0 %158, %v18
  %v160 = vpop.permute.xlu0 %159
  %161 = vset.pattern.permute.xlu0 0
  %162 = vperm.xlu0 %161, %v19
  %v163 = vpop.permute.xlu0 %162
  %164 = vset.pattern.permute.xlu0 0
  %165 = vperm.xlu0 %164, %v20
  %v166 = vpop.permute.xlu0 %165
  %167 = vset.pattern.permute.xlu0 0
  %168 = vperm.xlu0 %167, %v21
  %v169 = vpop.permute.xlu0 %168
  %170 = vset.pattern.permute.xlu0 0
  %171 = vperm.xlu0 %170, %v22
  %v172 = vpop.permute.xlu0 %171
  %173 = vset.pattern.permute.xlu0 0
  %174 = vperm.xlu0 %173, %v23
  %v175 = vpop.permute.xlu0 %174
  %176 = vset.pattern.permute.xlu0 0
  %177 = vperm.xlu0 %176, %v24
  %v178 = vpop.permute.xlu0 %177
  %179 = vset.pattern.permute.xlu0 0
  %180 = vperm.xlu0 %179, %v25
  %v181 = vpop.permute.xlu0 %180
  %182 = vset.pattern.permute.xlu0 0
  %183 = vperm.xlu0 %182, %v26
  %v184 = vpop.permute.xlu0 %183
  %185 = vset.pattern.permute.xlu0 0
  %186 = vperm.xlu0 %185, %v27
  %v187 = vpop.permute.xlu0 %186
  %188 = vset.pattern.permute.xlu0 0
  %189 = vperm.xlu0 %188, %v28
  %v190 = vpop.permute.xlu0 %189
  %191 = vset.pattern.permute.xlu0 0
  %192 = vperm.xlu0 %191, %v29
  %v193 = vpop.permute.xlu0 %192
  %194 = vset.pattern.permute.xlu0 0
  %195 = vperm.xlu0 %194, %v30
  %v196 = vpop.permute.xlu0 %195
  %197 = vset.pattern.permute.xlu0 0
  %198 = vperm.xlu0 %197, %v31
  %v199 = vpop.permute.xlu0 %198
  %200 = vset.pattern.permute.xlu0 0
  %201 = vperm.xlu0 %200, %v32
  %v202 = vpop.permute.xlu0 %201
  %203 = vset.pattern.permute.xlu0 0
  %204 = vperm.xlu0 %203, %v33
  %v205 = vpop.permute.xlu0 %204
  %206 = vset.pattern.permute.xlu0 0
  %207 = vperm.xlu0 %206, %v34
  %v208 = vpop.permute.xlu0 %207
  %209 = vset.pattern.permute.xlu0 0
  %210 = vperm.xlu0 %209, %v35
  %v211 = vpop.permute.xlu0 %210
  %212 = vset.pattern.permute.xlu0 0
  %213 = vperm.xlu0 %212, %v36
  %v214 = vpop.permute.xlu0 %213
  %215 = vset.pattern.permute.xlu0 0
  %216 = vperm.xlu0 %215, %v37
  %v217 = vpop.permute.xlu0 %216
  %218 = vset.pattern.permute.xlu0 0
  %219 = vperm.xlu0 %218, %v38
  %v220 = vpop.permute.xlu0 %219
  %221 = vset.pattern.permute.xlu0 0
  %222 = vperm.xlu0 %221, %v39
  %v223 = vpop.permute.xlu0 %222
  %224 = vset.pattern.permute.xlu0 0
  %225 = vperm.xlu0 %224, %v40
  %v226 = vpop.permute.xlu0 %225
  %227 = vset.pattern.permute.xlu0 0
  %228 = vperm.xlu0 %227, %v41
  %v229 = vpop.permute.xlu0 %228
  %230 = vset.pattern.permute.xlu0 0
  %231 = vperm.xlu0 %230, %v42
  %v232 = vpop.permute.xlu0 %231
  %233 = vset.pattern.permute.xlu0 0
  %234 = vperm.xlu0 %233, %v43
  %v235 = vpop.permute.xlu0 %234
  %236 = vset.pattern.permute.xlu0 0
  %237 = vperm.xlu0 %236, %v44
  %v238 = vpop.permute.xlu0 %237
  %239 = vset.pattern.permute.xlu0 0
  %240 = vperm.xlu0 %239, %v45
  %v241 = vpop.permute.xlu0 %240
  %242 = vset.pattern.permute.xlu0 0
  %243 = vperm.xlu0 %242, %v46
  %v244 = vpop.permute.xlu0 %243
  %245 = vset.pattern.permute.xlu0 0
  %246 = vperm.xlu0 %245, %v47
  %v247 = vpop.permute.xlu0 %246
  %248 = vset.pattern.permute.xlu0 0
  %249 = vperm.xlu0 %248, %v48
  %v250 = vpop.permute.xlu0 %249
  %251 = vset.pattern.permute.xlu0 0
  %252 = vperm.xlu0 %251, %v49
  %v253 = vpop.permute.xlu0 %252
  %254 = vset.pattern.permute.xlu0 0
  %255 = vperm.xlu0 %254, %v50
  %v256 = vpop.permute.xlu0 %255
  %257 = vset.pattern.permute.xlu0 0
  %258 = vperm.xlu0 %257, %v51
  %v259 = vpop.permute.xlu0 %258
  %260 = vset.pattern.permute.xlu0 0
  %261 = vperm.xlu0 %260, %v52
  %v262 = vpop.permute.xlu0 %261
  %263 = vset.pattern.permute.xlu0 0
  %264 = vperm.xlu0 %263, %v53
  %v265 = vpop.permute.xlu0 %264
  %266 = vset.pattern.permute.xlu0 0
  %267 = vperm.xlu0 %266, %v54
  %v268 = vpop.permute.xlu0 %267
  %269 = vset.pattern.permute.xlu0 0
  %270 = vperm.xlu0 %269, %v55
  %v271 = vpop.permute.xlu0 %270
  %272 = vset.pattern.permute.xlu0 0
  %273 = vperm.xlu0 %272, %v56
  %v274 = vpop.permute.xlu0 %273
  %275 = vset.pattern.permute.xlu0 0
  %276 = vperm.xlu0 %275, %v57
  %v277 = vpop.permute.xlu0 %276
  %278 = vset.pattern.permute.xlu0 0
  %279 = vperm.xlu0 %278, %v58
  %v280 = vpop.permute.xlu0 %279
  %281 = vset.pattern.permute.xlu0 0
  %282 = vperm.xlu0 %281, %v59
  %v283 = vpop.permute.xlu0 %282
  %284 = vset.pattern.permute.xlu0 0
  %285 = vperm.xlu0 %284, %v60
  %v286 = vpop.permute.xlu0 %285
  %287 = vset.pattern.permute.xlu0 0
  %288 = vperm.xlu0 %287, %v61
  %v289 = vpop.permute.xlu0 %288
  %290 = vset.pattern.permute.xlu0 0
  %291 = vperm.xlu0 %290, %v62
  %v292 = vpop.permute.xlu0 %291
  %293 = vset.pattern.permute.xlu0 0
  %294 = vperm.xlu0 %293, %v63
  %v295 = vpop.permute.xlu0 %294
  %296 = vset.pattern.permute.xlu0 0
  %297 = vperm.xlu0 %296, %v64
  %v298 = vpop.permute.xlu0 %297
  %299 = vset.pattern.permute.xlu0 0
  %300 = vperm.xlu0 %299, %v65
  %v301 = vpop.permute.xlu0 %300
  %302 = vset.pattern.permute.xlu0 0
  %303 = vperm.xlu0 %302, %v66
  %v304 = vpop.permute.xlu0 %303
  %305 = vset.pattern.permute.xlu0 0
  %306 = vperm.xlu0 %305, %v67
  %v307 = vpop.permute.xlu0 %306
  %308 = vset.pattern.permute.xlu0 0
  %309 = vperm.xlu0 %308, %v68
  %v310 = vpop.permute.xlu0 %309
  %311 = vset.pattern.permute.xlu0 0
  %312 = vperm.xlu0 %311, %v69
  %v313 = vpop.permute.xlu0 %312
  %314 = vset.pattern.permute.xlu0 0
  %315 = vperm.xlu0 %314, %v70
  %v316 = vpop.permute.xlu0 %315
  %317 = vset.pattern.permute.xlu0 0
  %318 = vperm.xlu0 %317, %v71
  %v319 = vpop.permute.xlu0 %318
  %320 = vset.pattern.permute.xlu0 0
  %321 = vperm.xlu0 %320, %v72
  %v322 = vpop.permute.xlu0 %321
  %323 = vset.pattern.permute.xlu0 0
  %324 = vperm.xlu0 %323, %v73
  %v325 = vpop.permute.xlu0 %324
  %326 = vset.pattern.permute.xlu0 0
  %327 = vperm.xlu0 %326, %v74
  %v328 = vpop.permute.xlu0 %327
  %329 = vset.pattern.permute.xlu0 0
  %330 = vperm.xlu0 %329, %v75
  %v331 = vpop.permute.xlu0 %330
  %332 = vset.pattern.permute.xlu0 0
  %333 = vperm.xlu0 %332, %v76
  %v334 = vpop.permute.xlu0 %333
  %335 = vset.pattern.permute.xlu0 0
  %336 = vperm.xlu0 %335, %v77
  %v337 = vpop.permute.xlu0 %336
  %338 = vset.pattern.permute.xlu0 0
  %339 = vperm.xlu0 %338, %v78
  %v340 = vpop.permute.xlu0 %339
  %vm341 = vcmp.eq.s32.totalorder %v144, %v151
  %vm342 = vcmp.eq.s32.totalorder %v145, %v151
  %vm343 = vcmp.eq.s32.totalorder %v146, %v151
  %vm344 = vcmp.eq.s32.totalorder %v147, %v151
  %vm345 = vcmp.eq.s32.totalorder %v148, %v151
  %vm346 = vcmp.eq.s32.totalorder %v144, %v154
  %vm347 = vcmp.eq.s32.totalorder %v145, %v154
  %vm348 = vcmp.eq.s32.totalorder %v146, %v154
  %vm349 = vcmp.eq.s32.totalorder %v147, %v154
  %vm350 = vcmp.eq.s32.totalorder %v148, %v154
  %vm351 = vcmp.eq.s32.totalorder %v144, %v157
  %vm352 = vcmp.eq.s32.totalorder %v145, %v157
  %vm353 = vcmp.eq.s32.totalorder %v146, %v157
  %vm354 = vcmp.eq.s32.totalorder %v147, %v157
  %vm355 = vcmp.eq.s32.totalorder %v148, %v157
  %vm356 = vcmp.eq.s32.totalorder %v144, %v160
  %vm357 = vcmp.eq.s32.totalorder %v145, %v160
  %vm358 = vcmp.eq.s32.totalorder %v146, %v160
  %vm359 = vcmp.eq.s32.totalorder %v147, %v160
  %vm360 = vcmp.eq.s32.totalorder %v148, %v160
  %vm361 = vcmp.eq.s32.totalorder %v144, %v163
  %vm362 = vcmp.eq.s32.totalorder %v145, %v163
  %vm363 = vcmp.eq.s32.totalorder %v146, %v163
  %vm364 = vcmp.eq.s32.totalorder %v147, %v163
  %vm365 = vcmp.eq.s32.totalorder %v148, %v163
  %vm366 = vcmp.eq.s32.totalorder %v144, %v166
  %vm367 = vcmp.eq.s32.totalorder %v145, %v166
  %vm368 = vcmp.eq.s32.totalorder %v146, %v166
  %vm369 = vcmp.eq.s32.totalorder %v147, %v166
  %vm370 = vcmp.eq.s32.totalorder %v148, %v166
  %vm371 = vcmp.eq.s32.totalorder %v144, %v169
  %vm372 = vcmp.eq.s32.totalorder %v145, %v169
  %vm373 = vcmp.eq.s32.totalorder %v146, %v169
  %vm374 = vcmp.eq.s32.totalorder %v147, %v169
  %vm375 = vcmp.eq.s32.totalorder %v148, %v169
  %vm376 = vcmp.eq.s32.totalorder %v144, %v172
  %vm377 = vcmp.eq.s32.totalorder %v145, %v172
  %vm378 = vcmp.eq.s32.totalorder %v146, %v172
  %vm379 = vcmp.eq.s32.totalorder %v147, %v172
  %vm380 = vcmp.eq.s32.totalorder %v148, %v172
  %vm381 = vcmp.eq.s32.totalorder %v144, %v175
  %vm382 = vcmp.eq.s32.totalorder %v145, %v175
  %vm383 = vcmp.eq.s32.totalorder %v146, %v175
  %vm384 = vcmp.eq.s32.totalorder %v147, %v175
  %vm385 = vcmp.eq.s32.totalorder %v148, %v175
  %vm386 = vcmp.eq.s32.totalorder %v144, %v178
  %vm387 = vcmp.eq.s32.totalorder %v145, %v178
  %vm388 = vcmp.eq.s32.totalorder %v146, %v178
  %vm389 = vcmp.eq.s32.totalorder %v147, %v178
  %vm390 = vcmp.eq.s32.totalorder %v148, %v178
  %vm391 = vcmp.eq.s32.totalorder %v144, %v181
  %vm392 = vcmp.eq.s32.totalorder %v145, %v181
  %vm393 = vcmp.eq.s32.totalorder %v146, %v181
  %vm394 = vcmp.eq.s32.totalorder %v147, %v181
  %vm395 = vcmp.eq.s32.totalorder %v148, %v181
  %vm396 = vcmp.eq.s32.totalorder %v144, %v184
  %vm397 = vcmp.eq.s32.totalorder %v145, %v184
  %vm398 = vcmp.eq.s32.totalorder %v146, %v184
  %vm399 = vcmp.eq.s32.totalorder %v147, %v184
  %vm400 = vcmp.eq.s32.totalorder %v148, %v184
  %vm401 = vcmp.eq.s32.totalorder %v144, %v187
  %vm402 = vcmp.eq.s32.totalorder %v145, %v187
  %vm403 = vcmp.eq.s32.totalorder %v146, %v187
  %vm404 = vcmp.eq.s32.totalorder %v147, %v187
  %vm405 = vcmp.eq.s32.totalorder %v148, %v187
  %vm406 = vcmp.eq.s32.totalorder %v144, %v190
  %vm407 = vcmp.eq.s32.totalorder %v145, %v190
  %vm408 = vcmp.eq.s32.totalorder %v146, %v190
  %vm409 = vcmp.eq.s32.totalorder %v147, %v190
  %vm410 = vcmp.eq.s32.totalorder %v148, %v190
  %vm411 = vcmp.eq.s32.totalorder %v144, %v193
  %vm412 = vcmp.eq.s32.totalorder %v145, %v193
  %vm413 = vcmp.eq.s32.totalorder %v146, %v193
  %vm414 = vcmp.eq.s32.totalorder %v147, %v193
  %vm415 = vcmp.eq.s32.totalorder %v148, %v193
  %vm416 = vcmp.eq.s32.totalorder %v144, %v196
  %vm417 = vcmp.eq.s32.totalorder %v145, %v196
  %vm418 = vcmp.eq.s32.totalorder %v146, %v196
  %vm419 = vcmp.eq.s32.totalorder %v147, %v196
  %vm420 = vcmp.eq.s32.totalorder %v148, %v196
  %vm421 = vcmp.eq.s32.totalorder %v144, %v199
  %vm422 = vcmp.eq.s32.totalorder %v145, %v199
  %vm423 = vcmp.eq.s32.totalorder %v146, %v199
  %vm424 = vcmp.eq.s32.totalorder %v147, %v199
  %vm425 = vcmp.eq.s32.totalorder %v148, %v199
  %vm426 = vcmp.eq.s32.totalorder %v144, %v202
  %vm427 = vcmp.eq.s32.totalorder %v145, %v202
  %vm428 = vcmp.eq.s32.totalorder %v146, %v202
  %vm429 = vcmp.eq.s32.totalorder %v147, %v202
  %vm430 = vcmp.eq.s32.totalorder %v148, %v202
  %vm431 = vcmp.eq.s32.totalorder %v144, %v205
  %vm432 = vcmp.eq.s32.totalorder %v145, %v205
  %vm433 = vcmp.eq.s32.totalorder %v146, %v205
  %vm434 = vcmp.eq.s32.totalorder %v147, %v205
  %vm435 = vcmp.eq.s32.totalorder %v148, %v205
  %vm436 = vcmp.eq.s32.totalorder %v144, %v208
  %vm437 = vcmp.eq.s32.totalorder %v145, %v208
  %vm438 = vcmp.eq.s32.totalorder %v146, %v208
  %vm439 = vcmp.eq.s32.totalorder %v147, %v208
  %vm440 = vcmp.eq.s32.totalorder %v148, %v208
  %vm441 = vcmp.eq.s32.totalorder %v144, %v211
  %vm442 = vcmp.eq.s32.totalorder %v145, %v211
  %vm443 = vcmp.eq.s32.totalorder %v146, %v211
  %vm444 = vcmp.eq.s32.totalorder %v147, %v211
  %vm445 = vcmp.eq.s32.totalorder %v148, %v211
  %vm446 = vcmp.eq.s32.totalorder %v144, %v214
  %vm447 = vcmp.eq.s32.totalorder %v145, %v214
  %vm448 = vcmp.eq.s32.totalorder %v146, %v214
  %vm449 = vcmp.eq.s32.totalorder %v147, %v214
  %vm450 = vcmp.eq.s32.totalorder %v148, %v214
  %vm451 = vcmp.eq.s32.totalorder %v144, %v217
  %vm452 = vcmp.eq.s32.totalorder %v145, %v217
  %vm453 = vcmp.eq.s32.totalorder %v146, %v217
  %vm454 = vcmp.eq.s32.totalorder %v147, %v217
  %vm455 = vcmp.eq.s32.totalorder %v148, %v217
  %vm456 = vcmp.eq.s32.totalorder %v144, %v220
  %vm457 = vcmp.eq.s32.totalorder %v145, %v220
  %vm458 = vcmp.eq.s32.totalorder %v146, %v220
  %vm459 = vcmp.eq.s32.totalorder %v147, %v220
  %vm460 = vcmp.eq.s32.totalorder %v148, %v220
  %vm461 = vcmp.eq.s32.totalorder %v144, %v223
  %vm462 = vcmp.eq.s32.totalorder %v145, %v223
  %vm463 = vcmp.eq.s32.totalorder %v146, %v223
  %vm464 = vcmp.eq.s32.totalorder %v147, %v223
  %vm465 = vcmp.eq.s32.totalorder %v148, %v223
  %vm466 = vcmp.eq.s32.totalorder %v144, %v226
  %vm467 = vcmp.eq.s32.totalorder %v145, %v226
  %vm468 = vcmp.eq.s32.totalorder %v146, %v226
  %vm469 = vcmp.eq.s32.totalorder %v147, %v226
  %vm470 = vcmp.eq.s32.totalorder %v148, %v226
  %vm471 = vcmp.eq.s32.totalorder %v144, %v229
  %vm472 = vcmp.eq.s32.totalorder %v145, %v229
  %vm473 = vcmp.eq.s32.totalorder %v146, %v229
  %vm474 = vcmp.eq.s32.totalorder %v147, %v229
  %vm475 = vcmp.eq.s32.totalorder %v148, %v229
  %vm476 = vcmp.eq.s32.totalorder %v144, %v232
  %vm477 = vcmp.eq.s32.totalorder %v145, %v232
  %vm478 = vcmp.eq.s32.totalorder %v146, %v232
  %vm479 = vcmp.eq.s32.totalorder %v147, %v232
  %vm480 = vcmp.eq.s32.totalorder %v148, %v232
  %vm481 = vcmp.eq.s32.totalorder %v144, %v235
  %vm482 = vcmp.eq.s32.totalorder %v145, %v235
  %vm483 = vcmp.eq.s32.totalorder %v146, %v235
  %vm484 = vcmp.eq.s32.totalorder %v147, %v235
  %vm485 = vcmp.eq.s32.totalorder %v148, %v235
  %vm486 = vcmp.eq.s32.totalorder %v144, %v238
  %vm487 = vcmp.eq.s32.totalorder %v145, %v238
  %vm488 = vcmp.eq.s32.totalorder %v146, %v238
  %vm489 = vcmp.eq.s32.totalorder %v147, %v238
  %vm490 = vcmp.eq.s32.totalorder %v148, %v238
  %vm491 = vcmp.eq.s32.totalorder %v144, %v241
  %vm492 = vcmp.eq.s32.totalorder %v145, %v241
  %vm493 = vcmp.eq.s32.totalorder %v146, %v241
  %vm494 = vcmp.eq.s32.totalorder %v147, %v241
  %vm495 = vcmp.eq.s32.totalorder %v148, %v241
  %vm496 = vcmp.eq.s32.totalorder %v144, %v244
  %vm497 = vcmp.eq.s32.totalorder %v145, %v244
  %vm498 = vcmp.eq.s32.totalorder %v146, %v244
  %vm499 = vcmp.eq.s32.totalorder %v147, %v244
  %vm500 = vcmp.eq.s32.totalorder %v148, %v244
  %vm501 = vcmp.eq.s32.totalorder %v144, %v247
  %vm502 = vcmp.eq.s32.totalorder %v145, %v247
  %vm503 = vcmp.eq.s32.totalorder %v146, %v247
  %vm504 = vcmp.eq.s32.totalorder %v147, %v247
  %vm505 = vcmp.eq.s32.totalorder %v148, %v247
  %vm506 = vcmp.eq.s32.totalorder %v144, %v250
  %vm507 = vcmp.eq.s32.totalorder %v145, %v250
  %vm508 = vcmp.eq.s32.totalorder %v146, %v250
  %vm509 = vcmp.eq.s32.totalorder %v147, %v250
  %vm510 = vcmp.eq.s32.totalorder %v148, %v250
  %vm511 = vcmp.eq.s32.totalorder %v144, %v253
  %vm512 = vcmp.eq.s32.totalorder %v145, %v253
  %vm513 = vcmp.eq.s32.totalorder %v146, %v253
  %vm514 = vcmp.eq.s32.totalorder %v147, %v253
  %vm515 = vcmp.eq.s32.totalorder %v148, %v253
  %vm516 = vcmp.eq.s32.totalorder %v144, %v256
  %vm517 = vcmp.eq.s32.totalorder %v145, %v256
  %vm518 = vcmp.eq.s32.totalorder %v146, %v256
  %vm519 = vcmp.eq.s32.totalorder %v147, %v256
  %vm520 = vcmp.eq.s32.totalorder %v148, %v256
  %vm521 = vcmp.eq.s32.totalorder %v144, %v259
  %vm522 = vcmp.eq.s32.totalorder %v145, %v259
  %vm523 = vcmp.eq.s32.totalorder %v146, %v259
  %vm524 = vcmp.eq.s32.totalorder %v147, %v259
  %vm525 = vcmp.eq.s32.totalorder %v148, %v259
  %vm526 = vcmp.eq.s32.totalorder %v144, %v262
  %vm527 = vcmp.eq.s32.totalorder %v145, %v262
  %vm528 = vcmp.eq.s32.totalorder %v146, %v262
  %vm529 = vcmp.eq.s32.totalorder %v147, %v262
  %vm530 = vcmp.eq.s32.totalorder %v148, %v262
  %vm531 = vcmp.eq.s32.totalorder %v144, %v265
  %vm532 = vcmp.eq.s32.totalorder %v145, %v265
  %vm533 = vcmp.eq.s32.totalorder %v146, %v265
  %vm534 = vcmp.eq.s32.totalorder %v147, %v265
  %vm535 = vcmp.eq.s32.totalorder %v148, %v265
  %vm536 = vcmp.eq.s32.totalorder %v144, %v268
  %vm537 = vcmp.eq.s32.totalorder %v145, %v268
  %vm538 = vcmp.eq.s32.totalorder %v146, %v268
  %vm539 = vcmp.eq.s32.totalorder %v147, %v268
  %vm540 = vcmp.eq.s32.totalorder %v148, %v268
  %vm541 = vcmp.eq.s32.totalorder %v144, %v271
  %vm542 = vcmp.eq.s32.totalorder %v145, %v271
  %vm543 = vcmp.eq.s32.totalorder %v146, %v271
  %vm544 = vcmp.eq.s32.totalorder %v147, %v271
  %vm545 = vcmp.eq.s32.totalorder %v148, %v271
  %vm546 = vcmp.eq.s32.totalorder %v144, %v274
  %vm547 = vcmp.eq.s32.totalorder %v145, %v274
  %vm548 = vcmp.eq.s32.totalorder %v146, %v274
  %vm549 = vcmp.eq.s32.totalorder %v147, %v274
  %vm550 = vcmp.eq.s32.totalorder %v148, %v274
  %vm551 = vcmp.eq.s32.totalorder %v144, %v277
  %vm552 = vcmp.eq.s32.totalorder %v145, %v277
  %vm553 = vcmp.eq.s32.totalorder %v146, %v277
  %vm554 = vcmp.eq.s32.totalorder %v147, %v277
  %vm555 = vcmp.eq.s32.totalorder %v148, %v277
  %vm556 = vcmp.eq.s32.totalorder %v144, %v280
  %vm557 = vcmp.eq.s32.totalorder %v145, %v280
  %vm558 = vcmp.eq.s32.totalorder %v146, %v280
  %vm559 = vcmp.eq.s32.totalorder %v147, %v280
  %vm560 = vcmp.eq.s32.totalorder %v148, %v280
  %vm561 = vcmp.eq.s32.totalorder %v144, %v283
  %vm562 = vcmp.eq.s32.totalorder %v145, %v283
  %vm563 = vcmp.eq.s32.totalorder %v146, %v283
  %vm564 = vcmp.eq.s32.totalorder %v147, %v283
  %vm565 = vcmp.eq.s32.totalorder %v148, %v283
  %vm566 = vcmp.eq.s32.totalorder %v144, %v286
  %vm567 = vcmp.eq.s32.totalorder %v145, %v286
  %vm568 = vcmp.eq.s32.totalorder %v146, %v286
  %vm569 = vcmp.eq.s32.totalorder %v147, %v286
  %vm570 = vcmp.eq.s32.totalorder %v148, %v286
  %vm571 = vcmp.eq.s32.totalorder %v144, %v289
  %vm572 = vcmp.eq.s32.totalorder %v145, %v289
  %vm573 = vcmp.eq.s32.totalorder %v146, %v289
  %vm574 = vcmp.eq.s32.totalorder %v147, %v289
  %vm575 = vcmp.eq.s32.totalorder %v148, %v289
  %vm576 = vcmp.eq.s32.totalorder %v144, %v292
  %vm577 = vcmp.eq.s32.totalorder %v145, %v292
  %vm578 = vcmp.eq.s32.totalorder %v146, %v292
  %vm579 = vcmp.eq.s32.totalorder %v147, %v292
  %vm580 = vcmp.eq.s32.totalorder %v148, %v292
  %vm581 = vcmp.eq.s32.totalorder %v144, %v295
  %vm582 = vcmp.eq.s32.totalorder %v145, %v295
  %vm583 = vcmp.eq.s32.totalorder %v146, %v295
  %vm584 = vcmp.eq.s32.totalorder %v147, %v295
  %vm585 = vcmp.eq.s32.totalorder %v148, %v295
  %vm586 = vcmp.eq.s32.totalorder %v144, %v298
  %vm587 = vcmp.eq.s32.totalorder %v145, %v298
  %vm588 = vcmp.eq.s32.totalorder %v146, %v298
  %vm589 = vcmp.eq.s32.totalorder %v147, %v298
  %vm590 = vcmp.eq.s32.totalorder %v148, %v298
  %vm591 = vcmp.eq.s32.totalorder %v144, %v301
  %vm592 = vcmp.eq.s32.totalorder %v145, %v301
  %vm593 = vcmp.eq.s32.totalorder %v146, %v301
  %vm594 = vcmp.eq.s32.totalorder %v147, %v301
  %vm595 = vcmp.eq.s32.totalorder %v148, %v301
  %vm596 = vcmp.eq.s32.totalorder %v144, %v304
  %vm597 = vcmp.eq.s32.totalorder %v145, %v304
  %vm598 = vcmp.eq.s32.totalorder %v146, %v304
  %vm599 = vcmp.eq.s32.totalorder %v147, %v304
  %vm600 = vcmp.eq.s32.totalorder %v148, %v304
  %vm601 = vcmp.eq.s32.totalorder %v144, %v307
  %vm602 = vcmp.eq.s32.totalorder %v145, %v307
  %vm603 = vcmp.eq.s32.totalorder %v146, %v307
  %vm604 = vcmp.eq.s32.totalorder %v147, %v307
  %vm605 = vcmp.eq.s32.totalorder %v148, %v307
  %vm606 = vcmp.eq.s32.totalorder %v144, %v310
  %vm607 = vcmp.eq.s32.totalorder %v145, %v310
  %vm608 = vcmp.eq.s32.totalorder %v146, %v310
  %vm609 = vcmp.eq.s32.totalorder %v147, %v310
  %vm610 = vcmp.eq.s32.totalorder %v148, %v310
  %vm611 = vcmp.eq.s32.totalorder %v144, %v313
  %vm612 = vcmp.eq.s32.totalorder %v145, %v313
  %vm613 = vcmp.eq.s32.totalorder %v146, %v313
  %vm614 = vcmp.eq.s32.totalorder %v147, %v313
  %vm615 = vcmp.eq.s32.totalorder %v148, %v313
  %vm616 = vcmp.eq.s32.totalorder %v144, %v316
  %vm617 = vcmp.eq.s32.totalorder %v145, %v316
  %vm618 = vcmp.eq.s32.totalorder %v146, %v316
  %vm619 = vcmp.eq.s32.totalorder %v147, %v316
  %vm620 = vcmp.eq.s32.totalorder %v148, %v316
  %vm621 = vcmp.eq.s32.totalorder %v144, %v319
  %vm622 = vcmp.eq.s32.totalorder %v145, %v319
  %vm623 = vcmp.eq.s32.totalorder %v146, %v319
  %vm624 = vcmp.eq.s32.totalorder %v147, %v319
  %vm625 = vcmp.eq.s32.totalorder %v148, %v319
  %vm626 = vcmp.eq.s32.totalorder %v144, %v322
  %vm627 = vcmp.eq.s32.totalorder %v145, %v322
  %vm628 = vcmp.eq.s32.totalorder %v146, %v322
  %vm629 = vcmp.eq.s32.totalorder %v147, %v322
  %vm630 = vcmp.eq.s32.totalorder %v148, %v322
  %vm631 = vcmp.eq.s32.totalorder %v144, %v325
  %vm632 = vcmp.eq.s32.totalorder %v145, %v325
  %vm633 = vcmp.eq.s32.totalorder %v146, %v325
  %vm634 = vcmp.eq.s32.totalorder %v147, %v325
  %vm635 = vcmp.eq.s32.totalorder %v148, %v325
  %vm636 = vcmp.eq.s32.totalorder %v144, %v328
  %vm637 = vcmp.eq.s32.totalorder %v145, %v328
  %vm638 = vcmp.eq.s32.totalorder %v146, %v328
  %vm639 = vcmp.eq.s32.totalorder %v147, %v328
  %vm640 = vcmp.eq.s32.totalorder %v148, %v328
  %vm641 = vcmp.eq.s32.totalorder %v144, %v331
  %vm642 = vcmp.eq.s32.totalorder %v145, %v331
  %vm643 = vcmp.eq.s32.totalorder %v146, %v331
  %vm644 = vcmp.eq.s32.totalorder %v147, %v331
  %vm645 = vcmp.eq.s32.totalorder %v148, %v331
  %vm646 = vcmp.eq.s32.totalorder %v144, %v334
  %vm647 = vcmp.eq.s32.totalorder %v145, %v334
  %vm648 = vcmp.eq.s32.totalorder %v146, %v334
  %vm649 = vcmp.eq.s32.totalorder %v147, %v334
  %vm650 = vcmp.eq.s32.totalorder %v148, %v334
  %vm651 = vcmp.eq.s32.totalorder %v144, %v337
  %vm652 = vcmp.eq.s32.totalorder %v145, %v337
  %vm653 = vcmp.eq.s32.totalorder %v146, %v337
  %vm654 = vcmp.eq.s32.totalorder %v147, %v337
  %vm655 = vcmp.eq.s32.totalorder %v148, %v337
  %vm656 = vcmp.eq.s32.totalorder %v144, %v340
  %vm657 = vcmp.eq.s32.totalorder %v145, %v340
  %vm658 = vcmp.eq.s32.totalorder %v146, %v340
  %vm659 = vcmp.eq.s32.totalorder %v147, %v340
  %vm660 = vcmp.eq.s32.totalorder %v148, %v340
  %661 = vset.pattern.permute.xlu0 1
  %662 = vperm.xlu0 %661, %v79
  %v663 = vpop.permute.xlu0 %662
  %664 = vset.pattern.permute.xlu0 1
  %665 = vperm.xlu0 %664, %v80
  %v666 = vpop.permute.xlu0 %665
  %667 = vset.pattern.permute.xlu0 1
  %668 = vperm.xlu0 %667, %v81
  %v669 = vpop.permute.xlu0 %668
  %670 = vset.pattern.permute.xlu0 1
  %671 = vperm.xlu0 %670, %v82
  %v672 = vpop.permute.xlu0 %671
  %673 = vset.pattern.permute.xlu0 1
  %674 = vperm.xlu0 %673, %v83
  %v675 = vpop.permute.xlu0 %674
  %676 = vset.pattern.permute.xlu0 1
  %677 = vperm.xlu0 %676, %v84
  %v678 = vpop.permute.xlu0 %677
  %679 = vset.pattern.permute.xlu0 1
  %680 = vperm.xlu0 %679, %v85
  %v681 = vpop.permute.xlu0 %680
  %682 = vset.pattern.permute.xlu0 1
  %683 = vperm.xlu0 %682, %v86
  %v684 = vpop.permute.xlu0 %683
  %685 = vset.pattern.permute.xlu0 1
  %686 = vperm.xlu0 %685, %v87
  %v687 = vpop.permute.xlu0 %686
  %688 = vset.pattern.permute.xlu0 1
  %689 = vperm.xlu0 %688, %v88
  %v690 = vpop.permute.xlu0 %689
  %691 = vset.pattern.permute.xlu0 1
  %692 = vperm.xlu0 %691, %v89
  %v693 = vpop.permute.xlu0 %692
  %694 = vset.pattern.permute.xlu0 1
  %695 = vperm.xlu0 %694, %v90
  %v696 = vpop.permute.xlu0 %695
  %697 = vset.pattern.permute.xlu0 1
  %698 = vperm.xlu0 %697, %v91
  %v699 = vpop.permute.xlu0 %698
  %700 = vset.pattern.permute.xlu0 1
  %701 = vperm.xlu0 %700, %v92
  %v702 = vpop.permute.xlu0 %701
  %703 = vset.pattern.permute.xlu0 1
  %704 = vperm.xlu0 %703, %v93
  %v705 = vpop.permute.xlu0 %704
  %706 = vset.pattern.permute.xlu0 1
  %707 = vperm.xlu0 %706, %v94
  %v708 = vpop.permute.xlu0 %707
  %709 = vset.pattern.permute.xlu0 1
  %710 = vperm.xlu0 %709, %v95
  %v711 = vpop.permute.xlu0 %710
  %712 = vset.pattern.permute.xlu0 1
  %713 = vperm.xlu0 %712, %v96
  %v714 = vpop.permute.xlu0 %713
  %715 = vset.pattern.permute.xlu0 1
  %716 = vperm.xlu0 %715, %v97
  %v717 = vpop.permute.xlu0 %716
  %718 = vset.pattern.permute.xlu0 1
  %719 = vperm.xlu0 %718, %v98
  %v720 = vpop.permute.xlu0 %719
  %721 = vset.pattern.permute.xlu0 1
  %722 = vperm.xlu0 %721, %v99
  %v723 = vpop.permute.xlu0 %722
  %724 = vset.pattern.permute.xlu0 1
  %725 = vperm.xlu0 %724, %v100
  %v726 = vpop.permute.xlu0 %725
  %727 = vset.pattern.permute.xlu0 1
  %728 = vperm.xlu0 %727, %v101
  %v729 = vpop.permute.xlu0 %728
  %730 = vset.pattern.permute.xlu0 1
  %731 = vperm.xlu0 %730, %v102
  %v732 = vpop.permute.xlu0 %731
  %733 = vset.pattern.permute.xlu0 1
  %734 = vperm.xlu0 %733, %v103
  %v735 = vpop.permute.xlu0 %734
  %736 = vset.pattern.permute.xlu0 1
  %737 = vperm.xlu0 %736, %v104
  %v738 = vpop.permute.xlu0 %737
  %739 = vset.pattern.permute.xlu0 1
  %740 = vperm.xlu0 %739, %v105
  %v741 = vpop.permute.xlu0 %740
  %742 = vset.pattern.permute.xlu0 1
  %743 = vperm.xlu0 %742, %v106
  %v744 = vpop.permute.xlu0 %743
  %745 = vset.pattern.permute.xlu0 1
  %746 = vperm.xlu0 %745, %v107
  %v747 = vpop.permute.xlu0 %746
  %748 = vset.pattern.permute.xlu0 1
  %749 = vperm.xlu0 %748, %v108
  %v750 = vpop.permute.xlu0 %749
  %751 = vset.pattern.permute.xlu0 1
  %752 = vperm.xlu0 %751, %v109
  %v753 = vpop.permute.xlu0 %752
  %754 = vset.pattern.permute.xlu0 1
  %755 = vperm.xlu0 %754, %v110
  %v756 = vpop.permute.xlu0 %755
  %757 = vset.pattern.permute.xlu0 1
  %758 = vperm.xlu0 %757, %v111
  %v759 = vpop.permute.xlu0 %758
  %760 = vset.pattern.permute.xlu0 1
  %761 = vperm.xlu0 %760, %v112
  %v762 = vpop.permute.xlu0 %761
  %763 = vset.pattern.permute.xlu0 1
  %764 = vperm.xlu0 %763, %v113
  %v765 = vpop.permute.xlu0 %764
  %766 = vset.pattern.permute.xlu0 1
  %767 = vperm.xlu0 %766, %v114
  %v768 = vpop.permute.xlu0 %767
  %769 = vset.pattern.permute.xlu0 1
  %770 = vperm.xlu0 %769, %v115
  %v771 = vpop.permute.xlu0 %770
  %772 = vset.pattern.permute.xlu0 1
  %773 = vperm.xlu0 %772, %v116
  %v774 = vpop.permute.xlu0 %773
  %775 = vset.pattern.permute.xlu0 1
  %776 = vperm.xlu0 %775, %v117
  %v777 = vpop.permute.xlu0 %776
  %778 = vset.pattern.permute.xlu0 1
  %779 = vperm.xlu0 %778, %v118
  %v780 = vpop.permute.xlu0 %779
  %781 = vset.pattern.permute.xlu0 1
  %782 = vperm.xlu0 %781, %v119
  %v783 = vpop.permute.xlu0 %782
  %784 = vset.pattern.permute.xlu0 1
  %785 = vperm.xlu0 %784, %v120
  %v786 = vpop.permute.xlu0 %785
  %787 = vset.pattern.permute.xlu0 1
  %788 = vperm.xlu0 %787, %v121
  %v789 = vpop.permute.xlu0 %788
  %790 = vset.pattern.permute.xlu0 1
  %791 = vperm.xlu0 %790, %v122
  %v792 = vpop.permute.xlu0 %791
  %793 = vset.pattern.permute.xlu0 1
  %794 = vperm.xlu0 %793, %v123
  %v795 = vpop.permute.xlu0 %794
  %796 = vset.pattern.permute.xlu0 1
  %797 = vperm.xlu0 %796, %v124
  %v798 = vpop.permute.xlu0 %797
  %799 = vset.pattern.permute.xlu0 1
  %800 = vperm.xlu0 %799, %v125
  %v801 = vpop.permute.xlu0 %800
  %802 = vset.pattern.permute.xlu0 1
  %803 = vperm.xlu0 %802, %v126
  %v804 = vpop.permute.xlu0 %803
  %805 = vset.pattern.permute.xlu0 1
  %806 = vperm.xlu0 %805, %v127
  %v807 = vpop.permute.xlu0 %806
  %808 = vset.pattern.permute.xlu0 1
  %809 = vperm.xlu0 %808, %v128
  %v810 = vpop.permute.xlu0 %809
  %811 = vset.pattern.permute.xlu0 1
  %812 = vperm.xlu0 %811, %v129
  %v813 = vpop.permute.xlu0 %812
  %814 = vset.pattern.permute.xlu0 1
  %815 = vperm.xlu0 %814, %v130
  %v816 = vpop.permute.xlu0 %815
  %817 = vset.pattern.permute.xlu0 1
  %818 = vperm.xlu0 %817, %v131
  %v819 = vpop.permute.xlu0 %818
  %820 = vset.pattern.permute.xlu0 1
  %821 = vperm.xlu0 %820, %v132
  %v822 = vpop.permute.xlu0 %821
  %823 = vset.pattern.permute.xlu0 1
  %824 = vperm.xlu0 %823, %v133
  %v825 = vpop.permute.xlu0 %824
  %826 = vset.pattern.permute.xlu0 1
  %827 = vperm.xlu0 %826, %v134
  %v828 = vpop.permute.xlu0 %827
  %829 = vset.pattern.permute.xlu0 1
  %830 = vperm.xlu0 %829, %v135
  %v831 = vpop.permute.xlu0 %830
  %832 = vset.pattern.permute.xlu0 1
  %833 = vperm.xlu0 %832, %v136
  %v834 = vpop.permute.xlu0 %833
  %835 = vset.pattern.permute.xlu0 1
  %836 = vperm.xlu0 %835, %v137
  %v837 = vpop.permute.xlu0 %836
  %838 = vset.pattern.permute.xlu0 1
  %839 = vperm.xlu0 %838, %v138
  %v840 = vpop.permute.xlu0 %839
  %841 = vset.pattern.permute.xlu0 1
  %842 = vperm.xlu0 %841, %v139
  %v843 = vpop.permute.xlu0 %842
  %844 = vset.pattern.permute.xlu0 1
  %845 = vperm.xlu0 %844, %v140
  %v846 = vpop.permute.xlu0 %845
  %847 = vset.pattern.permute.xlu0 1
  %848 = vperm.xlu0 %847, %v141
  %v849 = vpop.permute.xlu0 %848
  %850 = vset.pattern.permute.xlu0 1
  %851 = vperm.xlu0 %850, %v142
  %v852 = vpop.permute.xlu0 %851
  %vm853 = vcmp.eq.s32.totalorder %v144, %v663
  %vm854 = vcmp.eq.s32.totalorder %v145, %v663
  %vm855 = vcmp.eq.s32.totalorder %v146, %v663
  %vm856 = vcmp.eq.s32.totalorder %v147, %v663
  %vm857 = vcmp.eq.s32.totalorder %v148, %v663
  %vm858 = vcmp.eq.s32.totalorder %v144, %v666
  %vm859 = vcmp.eq.s32.totalorder %v145, %v666
  %vm860 = vcmp.eq.s32.totalorder %v146, %v666
  %vm861 = vcmp.eq.s32.totalorder %v147, %v666
  %vm862 = vcmp.eq.s32.totalorder %v148, %v666
  %vm863 = vcmp.eq.s32.totalorder %v144, %v669
  %vm864 = vcmp.eq.s32.totalorder %v145, %v669
  %vm865 = vcmp.eq.s32.totalorder %v146, %v669
  %vm866 = vcmp.eq.s32.totalorder %v147, %v669
  %vm867 = vcmp.eq.s32.totalorder %v148, %v669
  %vm868 = vcmp.eq.s32.totalorder %v144, %v672
  %vm869 = vcmp.eq.s32.totalorder %v145, %v672
  %vm870 = vcmp.eq.s32.totalorder %v146, %v672
  %vm871 = vcmp.eq.s32.totalorder %v147, %v672
  %vm872 = vcmp.eq.s32.totalorder %v148, %v672
  %vm873 = vcmp.eq.s32.totalorder %v144, %v675
  %vm874 = vcmp.eq.s32.totalorder %v145, %v675
  %vm875 = vcmp.eq.s32.totalorder %v146, %v675
  %vm876 = vcmp.eq.s32.totalorder %v147, %v675
  %vm877 = vcmp.eq.s32.totalorder %v148, %v675
  %vm878 = vcmp.eq.s32.totalorder %v144, %v678
  %vm879 = vcmp.eq.s32.totalorder %v145, %v678
  %vm880 = vcmp.eq.s32.totalorder %v146, %v678
  %vm881 = vcmp.eq.s32.totalorder %v147, %v678
  %vm882 = vcmp.eq.s32.totalorder %v148, %v678
  %vm883 = vcmp.eq.s32.totalorder %v144, %v681
  %vm884 = vcmp.eq.s32.totalorder %v145, %v681
  %vm885 = vcmp.eq.s32.totalorder %v146, %v681
  %vm886 = vcmp.eq.s32.totalorder %v147, %v681
  %vm887 = vcmp.eq.s32.totalorder %v148, %v681
  %vm888 = vcmp.eq.s32.totalorder %v144, %v684
  %vm889 = vcmp.eq.s32.totalorder %v145, %v684
  %vm890 = vcmp.eq.s32.totalorder %v146, %v684
  %vm891 = vcmp.eq.s32.totalorder %v147, %v684
  %vm892 = vcmp.eq.s32.totalorder %v148, %v684
  %vm893 = vcmp.eq.s32.totalorder %v144, %v687
  %vm894 = vcmp.eq.s32.totalorder %v145, %v687
  %vm895 = vcmp.eq.s32.totalorder %v146, %v687
  %vm896 = vcmp.eq.s32.totalorder %v147, %v687
  %vm897 = vcmp.eq.s32.totalorder %v148, %v687
  %vm898 = vcmp.eq.s32.totalorder %v144, %v690
  %vm899 = vcmp.eq.s32.totalorder %v145, %v690
  %vm900 = vcmp.eq.s32.totalorder %v146, %v690
  %vm901 = vcmp.eq.s32.totalorder %v147, %v690
  %vm902 = vcmp.eq.s32.totalorder %v148, %v690
  %vm903 = vcmp.eq.s32.totalorder %v144, %v693
  %vm904 = vcmp.eq.s32.totalorder %v145, %v693
  %vm905 = vcmp.eq.s32.totalorder %v146, %v693
  %vm906 = vcmp.eq.s32.totalorder %v147, %v693
  %vm907 = vcmp.eq.s32.totalorder %v148, %v693
  %vm908 = vcmp.eq.s32.totalorder %v144, %v696
  %vm909 = vcmp.eq.s32.totalorder %v145, %v696
  %vm910 = vcmp.eq.s32.totalorder %v146, %v696
  %vm911 = vcmp.eq.s32.totalorder %v147, %v696
  %vm912 = vcmp.eq.s32.totalorder %v148, %v696
  %vm913 = vcmp.eq.s32.totalorder %v144, %v699
  %vm914 = vcmp.eq.s32.totalorder %v145, %v699
  %vm915 = vcmp.eq.s32.totalorder %v146, %v699
  %vm916 = vcmp.eq.s32.totalorder %v147, %v699
  %vm917 = vcmp.eq.s32.totalorder %v148, %v699
  %vm918 = vcmp.eq.s32.totalorder %v144, %v702
  %vm919 = vcmp.eq.s32.totalorder %v145, %v702
  %vm920 = vcmp.eq.s32.totalorder %v146, %v702
  %vm921 = vcmp.eq.s32.totalorder %v147, %v702
  %vm922 = vcmp.eq.s32.totalorder %v148, %v702
  %vm923 = vcmp.eq.s32.totalorder %v144, %v705
  %vm924 = vcmp.eq.s32.totalorder %v145, %v705
  %vm925 = vcmp.eq.s32.totalorder %v146, %v705
  %vm926 = vcmp.eq.s32.totalorder %v147, %v705
  %vm927 = vcmp.eq.s32.totalorder %v148, %v705
  %vm928 = vcmp.eq.s32.totalorder %v144, %v708
  %vm929 = vcmp.eq.s32.totalorder %v145, %v708
  %vm930 = vcmp.eq.s32.totalorder %v146, %v708
  %vm931 = vcmp.eq.s32.totalorder %v147, %v708
  %vm932 = vcmp.eq.s32.totalorder %v148, %v708
  %vm933 = vcmp.eq.s32.totalorder %v144, %v711
  %vm934 = vcmp.eq.s32.totalorder %v145, %v711
  %vm935 = vcmp.eq.s32.totalorder %v146, %v711
  %vm936 = vcmp.eq.s32.totalorder %v147, %v711
  %vm937 = vcmp.eq.s32.totalorder %v148, %v711
  %vm938 = vcmp.eq.s32.totalorder %v144, %v714
  %vm939 = vcmp.eq.s32.totalorder %v145, %v714
  %vm940 = vcmp.eq.s32.totalorder %v146, %v714
  %vm941 = vcmp.eq.s32.totalorder %v147, %v714
  %vm942 = vcmp.eq.s32.totalorder %v148, %v714
  %vm943 = vcmp.eq.s32.totalorder %v144, %v717
  %vm944 = vcmp.eq.s32.totalorder %v145, %v717
  %vm945 = vcmp.eq.s32.totalorder %v146, %v717
  %vm946 = vcmp.eq.s32.totalorder %v147, %v717
  %vm947 = vcmp.eq.s32.totalorder %v148, %v717
  %vm948 = vcmp.eq.s32.totalorder %v144, %v720
  %vm949 = vcmp.eq.s32.totalorder %v145, %v720
  %vm950 = vcmp.eq.s32.totalorder %v146, %v720
  %vm951 = vcmp.eq.s32.totalorder %v147, %v720
  %vm952 = vcmp.eq.s32.totalorder %v148, %v720
  %vm953 = vcmp.eq.s32.totalorder %v144, %v723
  %vm954 = vcmp.eq.s32.totalorder %v145, %v723
  %vm955 = vcmp.eq.s32.totalorder %v146, %v723
  %vm956 = vcmp.eq.s32.totalorder %v147, %v723
  %vm957 = vcmp.eq.s32.totalorder %v148, %v723
  %vm958 = vcmp.eq.s32.totalorder %v144, %v726
  %vm959 = vcmp.eq.s32.totalorder %v145, %v726
  %vm960 = vcmp.eq.s32.totalorder %v146, %v726
  %vm961 = vcmp.eq.s32.totalorder %v147, %v726
  %vm962 = vcmp.eq.s32.totalorder %v148, %v726
  %vm963 = vcmp.eq.s32.totalorder %v144, %v729
  %vm964 = vcmp.eq.s32.totalorder %v145, %v729
  %vm965 = vcmp.eq.s32.totalorder %v146, %v729
  %vm966 = vcmp.eq.s32.totalorder %v147, %v729
  %vm967 = vcmp.eq.s32.totalorder %v148, %v729
  %vm968 = vcmp.eq.s32.totalorder %v144, %v732
  %vm969 = vcmp.eq.s32.totalorder %v145, %v732
  %vm970 = vcmp.eq.s32.totalorder %v146, %v732
  %vm971 = vcmp.eq.s32.totalorder %v147, %v732
  %vm972 = vcmp.eq.s32.totalorder %v148, %v732
  %vm973 = vcmp.eq.s32.totalorder %v144, %v735
  %vm974 = vcmp.eq.s32.totalorder %v145, %v735
  %vm975 = vcmp.eq.s32.totalorder %v146, %v735
  %vm976 = vcmp.eq.s32.totalorder %v147, %v735
  %vm977 = vcmp.eq.s32.totalorder %v148, %v735
  %vm978 = vcmp.eq.s32.totalorder %v144, %v738
  %vm979 = vcmp.eq.s32.totalorder %v145, %v738
  %vm980 = vcmp.eq.s32.totalorder %v146, %v738
  %vm981 = vcmp.eq.s32.totalorder %v147, %v738
  %vm982 = vcmp.eq.s32.totalorder %v148, %v738
  %vm983 = vcmp.eq.s32.totalorder %v144, %v741
  %vm984 = vcmp.eq.s32.totalorder %v145, %v741
  %vm985 = vcmp.eq.s32.totalorder %v146, %v741
  %vm986 = vcmp.eq.s32.totalorder %v147, %v741
  %vm987 = vcmp.eq.s32.totalorder %v148, %v741
  %vm988 = vcmp.eq.s32.totalorder %v144, %v744
  %vm989 = vcmp.eq.s32.totalorder %v145, %v744
  %vm990 = vcmp.eq.s32.totalorder %v146, %v744
  %vm991 = vcmp.eq.s32.totalorder %v147, %v744
  %vm992 = vcmp.eq.s32.totalorder %v148, %v744
  %vm993 = vcmp.eq.s32.totalorder %v144, %v747
  %vm994 = vcmp.eq.s32.totalorder %v145, %v747
  %vm995 = vcmp.eq.s32.totalorder %v146, %v747
  %vm996 = vcmp.eq.s32.totalorder %v147, %v747
  %vm997 = vcmp.eq.s32.totalorder %v148, %v747
  %vm998 = vcmp.eq.s32.totalorder %v144, %v750
  %vm999 = vcmp.eq.s32.totalorder %v145, %v750
  %vm1000 = vcmp.eq.s32.totalorder %v146, %v750
  %vm1001 = vcmp.eq.s32.totalorder %v147, %v750
  %vm1002 = vcmp.eq.s32.totalorder %v148, %v750
  %vm1003 = vcmp.eq.s32.totalorder %v144, %v753
  %vm1004 = vcmp.eq.s32.totalorder %v145, %v753
  %vm1005 = vcmp.eq.s32.totalorder %v146, %v753
  %vm1006 = vcmp.eq.s32.totalorder %v147, %v753
  %vm1007 = vcmp.eq.s32.totalorder %v148, %v753
  %vm1008 = vcmp.eq.s32.totalorder %v144, %v756
  %vm1009 = vcmp.eq.s32.totalorder %v145, %v756
  %vm1010 = vcmp.eq.s32.totalorder %v146, %v756
  %vm1011 = vcmp.eq.s32.totalorder %v147, %v756
  %vm1012 = vcmp.eq.s32.totalorder %v148, %v756
  %vm1013 = vcmp.eq.s32.totalorder %v144, %v759
  %vm1014 = vcmp.eq.s32.totalorder %v145, %v759
  %vm1015 = vcmp.eq.s32.totalorder %v146, %v759
  %vm1016 = vcmp.eq.s32.totalorder %v147, %v759
  %vm1017 = vcmp.eq.s32.totalorder %v148, %v759
  %vm1018 = vcmp.eq.s32.totalorder %v144, %v762
  %vm1019 = vcmp.eq.s32.totalorder %v145, %v762
  %vm1020 = vcmp.eq.s32.totalorder %v146, %v762
  %vm1021 = vcmp.eq.s32.totalorder %v147, %v762
  %vm1022 = vcmp.eq.s32.totalorder %v148, %v762
  %vm1023 = vcmp.eq.s32.totalorder %v144, %v765
  %vm1024 = vcmp.eq.s32.totalorder %v145, %v765
  %vm1025 = vcmp.eq.s32.totalorder %v146, %v765
  %vm1026 = vcmp.eq.s32.totalorder %v147, %v765
  %vm1027 = vcmp.eq.s32.totalorder %v148, %v765
  %vm1028 = vcmp.eq.s32.totalorder %v144, %v768
  %vm1029 = vcmp.eq.s32.totalorder %v145, %v768
  %vm1030 = vcmp.eq.s32.totalorder %v146, %v768
  %vm1031 = vcmp.eq.s32.totalorder %v147, %v768
  %vm1032 = vcmp.eq.s32.totalorder %v148, %v768
  %vm1033 = vcmp.eq.s32.totalorder %v144, %v771
  %vm1034 = vcmp.eq.s32.totalorder %v145, %v771
  %vm1035 = vcmp.eq.s32.totalorder %v146, %v771
  %vm1036 = vcmp.eq.s32.totalorder %v147, %v771
  %vm1037 = vcmp.eq.s32.totalorder %v148, %v771
  %vm1038 = vcmp.eq.s32.totalorder %v144, %v774
  %vm1039 = vcmp.eq.s32.totalorder %v145, %v774
  %vm1040 = vcmp.eq.s32.totalorder %v146, %v774
  %vm1041 = vcmp.eq.s32.totalorder %v147, %v774
  %vm1042 = vcmp.eq.s32.totalorder %v148, %v774
  %vm1043 = vcmp.eq.s32.totalorder %v144, %v777
  %vm1044 = vcmp.eq.s32.totalorder %v145, %v777
  %vm1045 = vcmp.eq.s32.totalorder %v146, %v777
  %vm1046 = vcmp.eq.s32.totalorder %v147, %v777
  %vm1047 = vcmp.eq.s32.totalorder %v148, %v777
  %vm1048 = vcmp.eq.s32.totalorder %v144, %v780
  %vm1049 = vcmp.eq.s32.totalorder %v145, %v780
  %vm1050 = vcmp.eq.s32.totalorder %v146, %v780
  %vm1051 = vcmp.eq.s32.totalorder %v147, %v780
  %vm1052 = vcmp.eq.s32.totalorder %v148, %v780
  %vm1053 = vcmp.eq.s32.totalorder %v144, %v783
  %vm1054 = vcmp.eq.s32.totalorder %v145, %v783
  %vm1055 = vcmp.eq.s32.totalorder %v146, %v783
  %vm1056 = vcmp.eq.s32.totalorder %v147, %v783
  %vm1057 = vcmp.eq.s32.totalorder %v148, %v783
  %vm1058 = vcmp.eq.s32.totalorder %v144, %v786
  %vm1059 = vcmp.eq.s32.totalorder %v145, %v786
  %vm1060 = vcmp.eq.s32.totalorder %v146, %v786
  %vm1061 = vcmp.eq.s32.totalorder %v147, %v786
  %vm1062 = vcmp.eq.s32.totalorder %v148, %v786
  %vm1063 = vcmp.eq.s32.totalorder %v144, %v789
  %vm1064 = vcmp.eq.s32.totalorder %v145, %v789
  %vm1065 = vcmp.eq.s32.totalorder %v146, %v789
  %vm1066 = vcmp.eq.s32.totalorder %v147, %v789
  %vm1067 = vcmp.eq.s32.totalorder %v148, %v789
  %vm1068 = vcmp.eq.s32.totalorder %v144, %v792
  %vm1069 = vcmp.eq.s32.totalorder %v145, %v792
  %vm1070 = vcmp.eq.s32.totalorder %v146, %v792
  %vm1071 = vcmp.eq.s32.totalorder %v147, %v792
  %vm1072 = vcmp.eq.s32.totalorder %v148, %v792
  %vm1073 = vcmp.eq.s32.totalorder %v144, %v795
  %vm1074 = vcmp.eq.s32.totalorder %v145, %v795
  %vm1075 = vcmp.eq.s32.totalorder %v146, %v795
  %vm1076 = vcmp.eq.s32.totalorder %v147, %v795
  %vm1077 = vcmp.eq.s32.totalorder %v148, %v795
  %vm1078 = vcmp.eq.s32.totalorder %v144, %v798
  %vm1079 = vcmp.eq.s32.totalorder %v145, %v798
  %vm1080 = vcmp.eq.s32.totalorder %v146, %v798
  %vm1081 = vcmp.eq.s32.totalorder %v147, %v798
  %vm1082 = vcmp.eq.s32.totalorder %v148, %v798
  %vm1083 = vcmp.eq.s32.totalorder %v144, %v801
  %vm1084 = vcmp.eq.s32.totalorder %v145, %v801
  %vm1085 = vcmp.eq.s32.totalorder %v146, %v801
  %vm1086 = vcmp.eq.s32.totalorder %v147, %v801
  %vm1087 = vcmp.eq.s32.totalorder %v148, %v801
  %vm1088 = vcmp.eq.s32.totalorder %v144, %v804
  %vm1089 = vcmp.eq.s32.totalorder %v145, %v804
  %vm1090 = vcmp.eq.s32.totalorder %v146, %v804
  %vm1091 = vcmp.eq.s32.totalorder %v147, %v804
  %vm1092 = vcmp.eq.s32.totalorder %v148, %v804
  %vm1093 = vcmp.eq.s32.totalorder %v144, %v807
  %vm1094 = vcmp.eq.s32.totalorder %v145, %v807
  %vm1095 = vcmp.eq.s32.totalorder %v146, %v807
  %vm1096 = vcmp.eq.s32.totalorder %v147, %v807
  %vm1097 = vcmp.eq.s32.totalorder %v148, %v807
  %vm1098 = vcmp.eq.s32.totalorder %v144, %v810
  %vm1099 = vcmp.eq.s32.totalorder %v145, %v810
  %vm1100 = vcmp.eq.s32.totalorder %v146, %v810
  %vm1101 = vcmp.eq.s32.totalorder %v147, %v810
  %vm1102 = vcmp.eq.s32.totalorder %v148, %v810
  %vm1103 = vcmp.eq.s32.totalorder %v144, %v813
  %vm1104 = vcmp.eq.s32.totalorder %v145, %v813
  %vm1105 = vcmp.eq.s32.totalorder %v146, %v813
  %vm1106 = vcmp.eq.s32.totalorder %v147, %v813
  %vm1107 = vcmp.eq.s32.totalorder %v148, %v813
  %vm1108 = vcmp.eq.s32.totalorder %v144, %v816
  %vm1109 = vcmp.eq.s32.totalorder %v145, %v816
  %vm1110 = vcmp.eq.s32.totalorder %v146, %v816
  %vm1111 = vcmp.eq.s32.totalorder %v147, %v816
  %vm1112 = vcmp.eq.s32.totalorder %v148, %v816
  %vm1113 = vcmp.eq.s32.totalorder %v144, %v819
  %vm1114 = vcmp.eq.s32.totalorder %v145, %v819
  %vm1115 = vcmp.eq.s32.totalorder %v146, %v819
  %vm1116 = vcmp.eq.s32.totalorder %v147, %v819
  %vm1117 = vcmp.eq.s32.totalorder %v148, %v819
  %vm1118 = vcmp.eq.s32.totalorder %v144, %v822
  %vm1119 = vcmp.eq.s32.totalorder %v145, %v822
  %vm1120 = vcmp.eq.s32.totalorder %v146, %v822
  %vm1121 = vcmp.eq.s32.totalorder %v147, %v822
  %vm1122 = vcmp.eq.s32.totalorder %v148, %v822
  %vm1123 = vcmp.eq.s32.totalorder %v144, %v825
  %vm1124 = vcmp.eq.s32.totalorder %v145, %v825
  %vm1125 = vcmp.eq.s32.totalorder %v146, %v825
  %vm1126 = vcmp.eq.s32.totalorder %v147, %v825
  %vm1127 = vcmp.eq.s32.totalorder %v148, %v825
  %vm1128 = vcmp.eq.s32.totalorder %v144, %v828
  %vm1129 = vcmp.eq.s32.totalorder %v145, %v828
  %vm1130 = vcmp.eq.s32.totalorder %v146, %v828
  %vm1131 = vcmp.eq.s32.totalorder %v147, %v828
  %vm1132 = vcmp.eq.s32.totalorder %v148, %v828
  %vm1133 = vcmp.eq.s32.totalorder %v144, %v831
  %vm1134 = vcmp.eq.s32.totalorder %v145, %v831
  %vm1135 = vcmp.eq.s32.totalorder %v146, %v831
  %vm1136 = vcmp.eq.s32.totalorder %v147, %v831
  %vm1137 = vcmp.eq.s32.totalorder %v148, %v831
  %vm1138 = vcmp.eq.s32.totalorder %v144, %v834
  %vm1139 = vcmp.eq.s32.totalorder %v145, %v834
  %vm1140 = vcmp.eq.s32.totalorder %v146, %v834
  %vm1141 = vcmp.eq.s32.totalorder %v147, %v834
  %vm1142 = vcmp.eq.s32.totalorder %v148, %v834
  %vm1143 = vcmp.eq.s32.totalorder %v144, %v837
  %vm1144 = vcmp.eq.s32.totalorder %v145, %v837
  %vm1145 = vcmp.eq.s32.totalorder %v146, %v837
  %vm1146 = vcmp.eq.s32.totalorder %v147, %v837
  %vm1147 = vcmp.eq.s32.totalorder %v148, %v837
  %vm1148 = vcmp.eq.s32.totalorder %v144, %v840
  %vm1149 = vcmp.eq.s32.totalorder %v145, %v840
  %vm1150 = vcmp.eq.s32.totalorder %v146, %v840
  %vm1151 = vcmp.eq.s32.totalorder %v147, %v840
  %vm1152 = vcmp.eq.s32.totalorder %v148, %v840
  %vm1153 = vcmp.eq.s32.totalorder %v144, %v843
  %vm1154 = vcmp.eq.s32.totalorder %v145, %v843
  %vm1155 = vcmp.eq.s32.totalorder %v146, %v843
  %vm1156 = vcmp.eq.s32.totalorder %v147, %v843
  %vm1157 = vcmp.eq.s32.totalorder %v148, %v843
  %vm1158 = vcmp.eq.s32.totalorder %v144, %v846
  %vm1159 = vcmp.eq.s32.totalorder %v145, %v846
  %vm1160 = vcmp.eq.s32.totalorder %v146, %v846
  %vm1161 = vcmp.eq.s32.totalorder %v147, %v846
  %vm1162 = vcmp.eq.s32.totalorder %v148, %v846
  %vm1163 = vcmp.eq.s32.totalorder %v144, %v849
  %vm1164 = vcmp.eq.s32.totalorder %v145, %v849
  %vm1165 = vcmp.eq.s32.totalorder %v146, %v849
  %vm1166 = vcmp.eq.s32.totalorder %v147, %v849
  %vm1167 = vcmp.eq.s32.totalorder %v148, %v849
  %vm1168 = vcmp.eq.s32.totalorder %v144, %v852
  %vm1169 = vcmp.eq.s32.totalorder %v145, %v852
  %vm1170 = vcmp.eq.s32.totalorder %v146, %v852
  %vm1171 = vcmp.eq.s32.totalorder %v147, %v852
  %vm1172 = vcmp.eq.s32.totalorder %v148, %v852
  %vm1173 = vmor %vm341, %vm853
  %vm1174 = vmor %vm342, %vm854
  %vm1175 = vmor %vm343, %vm855
  %vm1176 = vmor %vm344, %vm856
  %vm1177 = vmor %vm345, %vm857
  %vm1178 = vmor %vm346, %vm858
  %vm1179 = vmor %vm347, %vm859
  %vm1180 = vmor %vm348, %vm860
  %vm1181 = vmor %vm349, %vm861
  %vm1182 = vmor %vm350, %vm862
  %vm1183 = vmor %vm351, %vm863
  %vm1184 = vmor %vm352, %vm864
  %vm1185 = vmor %vm353, %vm865
  %vm1186 = vmor %vm354, %vm866
  %vm1187 = vmor %vm355, %vm867
  %vm1188 = vmor %vm356, %vm868
  %vm1189 = vmor %vm357, %vm869
  %vm1190 = vmor %vm358, %vm870
  %vm1191 = vmor %vm359, %vm871
  %vm1192 = vmor %vm360, %vm872
  %vm1193 = vmor %vm361, %vm873
  %vm1194 = vmor %vm362, %vm874
  %vm1195 = vmor %vm363, %vm875
  %vm1196 = vmor %vm364, %vm876
  %vm1197 = vmor %vm365, %vm877
  %vm1198 = vmor %vm366, %vm878
  %vm1199 = vmor %vm367, %vm879
  %vm1200 = vmor %vm368, %vm880
  %vm1201 = vmor %vm369, %vm881
  %vm1202 = vmor %vm370, %vm882
  %vm1203 = vmor %vm371, %vm883
  %vm1204 = vmor %vm372, %vm884
  %vm1205 = vmor %vm373, %vm885
  %vm1206 = vmor %vm374, %vm886
  %vm1207 = vmor %vm375, %vm887
  %vm1208 = vmor %vm376, %vm888
  %vm1209 = vmor %vm377, %vm889
  %vm1210 = vmor %vm378, %vm890
  %vm1211 = vmor %vm379, %vm891
  %vm1212 = vmor %vm380, %vm892
  %vm1213 = vmor %vm381, %vm893
  %vm1214 = vmor %vm382, %vm894
  %vm1215 = vmor %vm383, %vm895
  %vm1216 = vmor %vm384, %vm896
  %vm1217 = vmor %vm385, %vm897
  %vm1218 = vmor %vm386, %vm898
  %vm1219 = vmor %vm387, %vm899
  %vm1220 = vmor %vm388, %vm900
  %vm1221 = vmor %vm389, %vm901
  %vm1222 = vmor %vm390, %vm902
  %vm1223 = vmor %vm391, %vm903
  %vm1224 = vmor %vm392, %vm904
  %vm1225 = vmor %vm393, %vm905
  %vm1226 = vmor %vm394, %vm906
  %vm1227 = vmor %vm395, %vm907
  %vm1228 = vmor %vm396, %vm908
  %vm1229 = vmor %vm397, %vm909
  %vm1230 = vmor %vm398, %vm910
  %vm1231 = vmor %vm399, %vm911
  %vm1232 = vmor %vm400, %vm912
  %vm1233 = vmor %vm401, %vm913
  %vm1234 = vmor %vm402, %vm914
  %vm1235 = vmor %vm403, %vm915
  %vm1236 = vmor %vm404, %vm916
  %vm1237 = vmor %vm405, %vm917
  %vm1238 = vmor %vm406, %vm918
  %vm1239 = vmor %vm407, %vm919
  %vm1240 = vmor %vm408, %vm920
  %vm1241 = vmor %vm409, %vm921
  %vm1242 = vmor %vm410, %vm922
  %vm1243 = vmor %vm411, %vm923
  %vm1244 = vmor %vm412, %vm924
  %vm1245 = vmor %vm413, %vm925
  %vm1246 = vmor %vm414, %vm926
  %vm1247 = vmor %vm415, %vm927
  %vm1248 = vmor %vm416, %vm928
  %vm1249 = vmor %vm417, %vm929
  %vm1250 = vmor %vm418, %vm930
  %vm1251 = vmor %vm419, %vm931
  %vm1252 = vmor %vm420, %vm932
  %vm1253 = vmor %vm421, %vm933
  %vm1254 = vmor %vm422, %vm934
  %vm1255 = vmor %vm423, %vm935
  %vm1256 = vmor %vm424, %vm936
  %vm1257 = vmor %vm425, %vm937
  %vm1258 = vmor %vm426, %vm938
  %vm1259 = vmor %vm427, %vm939
  %vm1260 = vmor %vm428, %vm940
  %vm1261 = vmor %vm429, %vm941
  %vm1262 = vmor %vm430, %vm942
  %vm1263 = vmor %vm431, %vm943
  %vm1264 = vmor %vm432, %vm944
  %vm1265 = vmor %vm433, %vm945
  %vm1266 = vmor %vm434, %vm946
  %vm1267 = vmor %vm435, %vm947
  %vm1268 = vmor %vm436, %vm948
  %vm1269 = vmor %vm437, %vm949
  %vm1270 = vmor %vm438, %vm950
  %vm1271 = vmor %vm439, %vm951
  %vm1272 = vmor %vm440, %vm952
  %vm1273 = vmor %vm441, %vm953
  %vm1274 = vmor %vm442, %vm954
  %vm1275 = vmor %vm443, %vm955
  %vm1276 = vmor %vm444, %vm956
  %vm1277 = vmor %vm445, %vm957
  %vm1278 = vmor %vm446, %vm958
  %vm1279 = vmor %vm447, %vm959
  %vm1280 = vmor %vm448, %vm960
  %vm1281 = vmor %vm449, %vm961
  %vm1282 = vmor %vm450, %vm962
  %vm1283 = vmor %vm451, %vm963
  %vm1284 = vmor %vm452, %vm964
  %vm1285 = vmor %vm453, %vm965
  %vm1286 = vmor %vm454, %vm966
  %vm1287 = vmor %vm455, %vm967
  %vm1288 = vmor %vm456, %vm968
  %vm1289 = vmor %vm457, %vm969
  %vm1290 = vmor %vm458, %vm970
  %vm1291 = vmor %vm459, %vm971
  %vm1292 = vmor %vm460, %vm972
  %vm1293 = vmor %vm461, %vm973
  %vm1294 = vmor %vm462, %vm974
  %vm1295 = vmor %vm463, %vm975
  %vm1296 = vmor %vm464, %vm976
  %vm1297 = vmor %vm465, %vm977
  %vm1298 = vmor %vm466, %vm978
  %vm1299 = vmor %vm467, %vm979
  %vm1300 = vmor %vm468, %vm980
  %vm1301 = vmor %vm469, %vm981
  %vm1302 = vmor %vm470, %vm982
  %vm1303 = vmor %vm471, %vm983
  %vm1304 = vmor %vm472, %vm984
  %vm1305 = vmor %vm473, %vm985
  %vm1306 = vmor %vm474, %vm986
  %vm1307 = vmor %vm475, %vm987
  %vm1308 = vmor %vm476, %vm988
  %vm1309 = vmor %vm477, %vm989
  %vm1310 = vmor %vm478, %vm990
  %vm1311 = vmor %vm479, %vm991
  %vm1312 = vmor %vm480, %vm992
  %vm1313 = vmor %vm481, %vm993
  %vm1314 = vmor %vm482, %vm994
  %vm1315 = vmor %vm483, %vm995
  %vm1316 = vmor %vm484, %vm996
  %vm1317 = vmor %vm485, %vm997
  %vm1318 = vmor %vm486, %vm998
  %vm1319 = vmor %vm487, %vm999
  %vm1320 = vmor %vm488, %vm1000
  %vm1321 = vmor %vm489, %vm1001
  %vm1322 = vmor %vm490, %vm1002
  %vm1323 = vmor %vm491, %vm1003
  %vm1324 = vmor %vm492, %vm1004
  %vm1325 = vmor %vm493, %vm1005
  %vm1326 = vmor %vm494, %vm1006
  %vm1327 = vmor %vm495, %vm1007
  %vm1328 = vmor %vm496, %vm1008
  %vm1329 = vmor %vm497, %vm1009
  %vm1330 = vmor %vm498, %vm1010
  %vm1331 = vmor %vm499, %vm1011
  %vm1332 = vmor %vm500, %vm1012
  %vm1333 = vmor %vm501, %vm1013
  %vm1334 = vmor %vm502, %vm1014
  %vm1335 = vmor %vm503, %vm1015
  %vm1336 = vmor %vm504, %vm1016
  %vm1337 = vmor %vm505, %vm1017
  %vm1338 = vmor %vm506, %vm1018
  %vm1339 = vmor %vm507, %vm1019
  %vm1340 = vmor %vm508, %vm1020
  %vm1341 = vmor %vm509, %vm1021
  %vm1342 = vmor %vm510, %vm1022
  %vm1343 = vmor %vm511, %vm1023
  %vm1344 = vmor %vm512, %vm1024
  %vm1345 = vmor %vm513, %vm1025
  %vm1346 = vmor %vm514, %vm1026
  %vm1347 = vmor %vm515, %vm1027
  %vm1348 = vmor %vm516, %vm1028
  %vm1349 = vmor %vm517, %vm1029
  %vm1350 = vmor %vm518, %vm1030
  %vm1351 = vmor %vm519, %vm1031
  %vm1352 = vmor %vm520, %vm1032
  %vm1353 = vmor %vm521, %vm1033
  %vm1354 = vmor %vm522, %vm1034
  %vm1355 = vmor %vm523, %vm1035
  %vm1356 = vmor %vm524, %vm1036
  %vm1357 = vmor %vm525, %vm1037
  %vm1358 = vmor %vm526, %vm1038
  %vm1359 = vmor %vm527, %vm1039
  %vm1360 = vmor %vm528, %vm1040
  %vm1361 = vmor %vm529, %vm1041
  %vm1362 = vmor %vm530, %vm1042
  %vm1363 = vmor %vm531, %vm1043
  %vm1364 = vmor %vm532, %vm1044
  %vm1365 = vmor %vm533, %vm1045
  %vm1366 = vmor %vm534, %vm1046
  %vm1367 = vmor %vm535, %vm1047
  %vm1368 = vmor %vm536, %vm1048
  %vm1369 = vmor %vm537, %vm1049
  %vm1370 = vmor %vm538, %vm1050
  %vm1371 = vmor %vm539, %vm1051
  %vm1372 = vmor %vm540, %vm1052
  %vm1373 = vmor %vm541, %vm1053
  %vm1374 = vmor %vm542, %vm1054
  %vm1375 = vmor %vm543, %vm1055
  %vm1376 = vmor %vm544, %vm1056
  %vm1377 = vmor %vm545, %vm1057
  %vm1378 = vmor %vm546, %vm1058
  %vm1379 = vmor %vm547, %vm1059
  %vm1380 = vmor %vm548, %vm1060
  %vm1381 = vmor %vm549, %vm1061
  %vm1382 = vmor %vm550, %vm1062
  %vm1383 = vmor %vm551, %vm1063
  %vm1384 = vmor %vm552, %vm1064
  %vm1385 = vmor %vm553, %vm1065
  %vm1386 = vmor %vm554, %vm1066
  %vm1387 = vmor %vm555, %vm1067
  %vm1388 = vmor %vm556, %vm1068
  %vm1389 = vmor %vm557, %vm1069
  %vm1390 = vmor %vm558, %vm1070
  %vm1391 = vmor %vm559, %vm1071
  %vm1392 = vmor %vm560, %vm1072
  %vm1393 = vmor %vm561, %vm1073
  %vm1394 = vmor %vm562, %vm1074
  %vm1395 = vmor %vm563, %vm1075
  %vm1396 = vmor %vm564, %vm1076
  %vm1397 = vmor %vm565, %vm1077
  %vm1398 = vmor %vm566, %vm1078
  %vm1399 = vmor %vm567, %vm1079
  %vm1400 = vmor %vm568, %vm1080
  %vm1401 = vmor %vm569, %vm1081
  %vm1402 = vmor %vm570, %vm1082
  %vm1403 = vmor %vm571, %vm1083
  %vm1404 = vmor %vm572, %vm1084
  %vm1405 = vmor %vm573, %vm1085
  %vm1406 = vmor %vm574, %vm1086
  %vm1407 = vmor %vm575, %vm1087
  %vm1408 = vmor %vm576, %vm1088
  %vm1409 = vmor %vm577, %vm1089
  %vm1410 = vmor %vm578, %vm1090
  %vm1411 = vmor %vm579, %vm1091
  %vm1412 = vmor %vm580, %vm1092
  %vm1413 = vmor %vm581, %vm1093
  %vm1414 = vmor %vm582, %vm1094
  %vm1415 = vmor %vm583, %vm1095
  %vm1416 = vmor %vm584, %vm1096
  %vm1417 = vmor %vm585, %vm1097
  %vm1418 = vmor %vm586, %vm1098
  %vm1419 = vmor %vm587, %vm1099
  %vm1420 = vmor %vm588, %vm1100
  %vm1421 = vmor %vm589, %vm1101
  %vm1422 = vmor %vm590, %vm1102
  %vm1423 = vmor %vm591, %vm1103
  %vm1424 = vmor %vm592, %vm1104
  %vm1425 = vmor %vm593, %vm1105
  %vm1426 = vmor %vm594, %vm1106
  %vm1427 = vmor %vm595, %vm1107
  %vm1428 = vmor %vm596, %vm1108
  %vm1429 = vmor %vm597, %vm1109
  %vm1430 = vmor %vm598, %vm1110
  %vm1431 = vmor %vm599, %vm1111
  %vm1432 = vmor %vm600, %vm1112
  %vm1433 = vmor %vm601, %vm1113
  %vm1434 = vmor %vm602, %vm1114
  %vm1435 = vmor %vm603, %vm1115
  %vm1436 = vmor %vm604, %vm1116
  %vm1437 = vmor %vm605, %vm1117
  %vm1438 = vmor %vm606, %vm1118
  %vm1439 = vmor %vm607, %vm1119
  %vm1440 = vmor %vm608, %vm1120
  %vm1441 = vmor %vm609, %vm1121
  %vm1442 = vmor %vm610, %vm1122
  %vm1443 = vmor %vm611, %vm1123
  %vm1444 = vmor %vm612, %vm1124
  %vm1445 = vmor %vm613, %vm1125
  %vm1446 = vmor %vm614, %vm1126
  %vm1447 = vmor %vm615, %vm1127
  %vm1448 = vmor %vm616, %vm1128
  %vm1449 = vmor %vm617, %vm1129
  %vm1450 = vmor %vm618, %vm1130
  %vm1451 = vmor %vm619, %vm1131
  %vm1452 = vmor %vm620, %vm1132
  %vm1453 = vmor %vm621, %vm1133
  %vm1454 = vmor %vm622, %vm1134
  %vm1455 = vmor %vm623, %vm1135
  %vm1456 = vmor %vm624, %vm1136
  %vm1457 = vmor %vm625, %vm1137
  %vm1458 = vmor %vm626, %vm1138
  %vm1459 = vmor %vm627, %vm1139
  %vm1460 = vmor %vm628, %vm1140
  %vm1461 = vmor %vm629, %vm1141
  %vm1462 = vmor %vm630, %vm1142
  %vm1463 = vmor %vm631, %vm1143
  %vm1464 = vmor %vm632, %vm1144
  %vm1465 = vmor %vm633, %vm1145
  %vm1466 = vmor %vm634, %vm1146
  %vm1467 = vmor %vm635, %vm1147
  %vm1468 = vmor %vm636, %vm1148
  %vm1469 = vmor %vm637, %vm1149
  %vm1470 = vmor %vm638, %vm1150
  %vm1471 = vmor %vm639, %vm1151
  %vm1472 = vmor %vm640, %vm1152
  %vm1473 = vmor %vm641, %vm1153
  %vm1474 = vmor %vm642, %vm1154
  %vm1475 = vmor %vm643, %vm1155
  %vm1476 = vmor %vm644, %vm1156
  %vm1477 = vmor %vm645, %vm1157
  %vm1478 = vmor %vm646, %vm1158
  %vm1479 = vmor %vm647, %vm1159
  %vm1480 = vmor %vm648, %vm1160
  %vm1481 = vmor %vm649, %vm1161
  %vm1482 = vmor %vm650, %vm1162
  %vm1483 = vmor %vm651, %vm1163
  %vm1484 = vmor %vm652, %vm1164
  %vm1485 = vmor %vm653, %vm1165
  %vm1486 = vmor %vm654, %vm1166
  %vm1487 = vmor %vm655, %vm1167
  %vm1488 = vmor %vm656, %vm1168
  %vm1489 = vmor %vm657, %vm1169
  %vm1490 = vmor %vm658, %vm1170
  %vm1491 = vmor %vm659, %vm1171
  %vm1492 = vmor %vm660, %vm1172
  %v1493 = vsel %vm1173, 1.0, 0.0
  %v1494 = vsel %vm1174, 1.0, 0.0
  %v1495 = vsel %vm1175, 1.0, 0.0
  %v1496 = vsel %vm1176, 1.0, 0.0
  %v1497 = vsel %vm1177, 1.0, 0.0
  %v1498 = vsel %vm1178, 1.0, 0.0
  %v1499 = vsel %vm1179, 1.0, 0.0
  %v1500 = vsel %vm1180, 1.0, 0.0
  %v1501 = vsel %vm1181, 1.0, 0.0
  %v1502 = vsel %vm1182, 1.0, 0.0
  %v1503 = vsel %vm1183, 1.0, 0.0
  %v1504 = vsel %vm1184, 1.0, 0.0
  %v1505 = vsel %vm1185, 1.0, 0.0
  %v1506 = vsel %vm1186, 1.0, 0.0
  %v1507 = vsel %vm1187, 1.0, 0.0
  %v1508 = vsel %vm1188, 1.0, 0.0
  %v1509 = vsel %vm1189, 1.0, 0.0
  %v1510 = vsel %vm1190, 1.0, 0.0
  %v1511 = vsel %vm1191, 1.0, 0.0
  %v1512 = vsel %vm1192, 1.0, 0.0
  %v1513 = vsel %vm1193, 1.0, 0.0
  %v1514 = vsel %vm1194, 1.0, 0.0
  %v1515 = vsel %vm1195, 1.0, 0.0
  %v1516 = vsel %vm1196, 1.0, 0.0
  %v1517 = vsel %vm1197, 1.0, 0.0
  %v1518 = vsel %vm1198, 1.0, 0.0
  %v1519 = vsel %vm1199, 1.0, 0.0
  %v1520 = vsel %vm1200, 1.0, 0.0
  %v1521 = vsel %vm1201, 1.0, 0.0
  %v1522 = vsel %vm1202, 1.0, 0.0
  %v1523 = vsel %vm1203, 1.0, 0.0
  %v1524 = vsel %vm1204, 1.0, 0.0
  %v1525 = vsel %vm1205, 1.0, 0.0
  %v1526 = vsel %vm1206, 1.0, 0.0
  %v1527 = vsel %vm1207, 1.0, 0.0
  %v1528 = vsel %vm1208, 1.0, 0.0
  %v1529 = vsel %vm1209, 1.0, 0.0
  %v1530 = vsel %vm1210, 1.0, 0.0
  %v1531 = vsel %vm1211, 1.0, 0.0
  %v1532 = vsel %vm1212, 1.0, 0.0
  %v1533 = vsel %vm1213, 1.0, 0.0
  %v1534 = vsel %vm1214, 1.0, 0.0
  %v1535 = vsel %vm1215, 1.0, 0.0
  %v1536 = vsel %vm1216, 1.0, 0.0
  %v1537 = vsel %vm1217, 1.0, 0.0
  %v1538 = vsel %vm1218, 1.0, 0.0
  %v1539 = vsel %vm1219, 1.0, 0.0
  %v1540 = vsel %vm1220, 1.0, 0.0
  %v1541 = vsel %vm1221, 1.0, 0.0
  %v1542 = vsel %vm1222, 1.0, 0.0
  %v1543 = vsel %vm1223, 1.0, 0.0
  %v1544 = vsel %vm1224, 1.0, 0.0
  %v1545 = vsel %vm1225, 1.0, 0.0
  %v1546 = vsel %vm1226, 1.0, 0.0
  %v1547 = vsel %vm1227, 1.0, 0.0
  %v1548 = vsel %vm1228, 1.0, 0.0
  %v1549 = vsel %vm1229, 1.0, 0.0
  %v1550 = vsel %vm1230, 1.0, 0.0
  %v1551 = vsel %vm1231, 1.0, 0.0
  %v1552 = vsel %vm1232, 1.0, 0.0
  %v1553 = vsel %vm1233, 1.0, 0.0
  %v1554 = vsel %vm1234, 1.0, 0.0
  %v1555 = vsel %vm1235, 1.0, 0.0
  %v1556 = vsel %vm1236, 1.0, 0.0
  %v1557 = vsel %vm1237, 1.0, 0.0
  %v1558 = vsel %vm1238, 1.0, 0.0
  %v1559 = vsel %vm1239, 1.0, 0.0
  %v1560 = vsel %vm1240, 1.0, 0.0
  %v1561 = vsel %vm1241, 1.0, 0.0
  %v1562 = vsel %vm1242, 1.0, 0.0
  %v1563 = vsel %vm1243, 1.0, 0.0
  %v1564 = vsel %vm1244, 1.0, 0.0
  %v1565 = vsel %vm1245, 1.0, 0.0
  %v1566 = vsel %vm1246, 1.0, 0.0
  %v1567 = vsel %vm1247, 1.0, 0.0
  %v1568 = vsel %vm1248, 1.0, 0.0
  %v1569 = vsel %vm1249, 1.0, 0.0
  %v1570 = vsel %vm1250, 1.0, 0.0
  %v1571 = vsel %vm1251, 1.0, 0.0
  %v1572 = vsel %vm1252, 1.0, 0.0
  %v1573 = vsel %vm1253, 1.0, 0.0
  %v1574 = vsel %vm1254, 1.0, 0.0
  %v1575 = vsel %vm1255, 1.0, 0.0
  %v1576 = vsel %vm1256, 1.0, 0.0
  %v1577 = vsel %vm1257, 1.0, 0.0
  %v1578 = vsel %vm1258, 1.0, 0.0
  %v1579 = vsel %vm1259, 1.0, 0.0
  %v1580 = vsel %vm1260, 1.0, 0.0
  %v1581 = vsel %vm1261, 1.0, 0.0
  %v1582 = vsel %vm1262, 1.0, 0.0
  %v1583 = vsel %vm1263, 1.0, 0.0
  %v1584 = vsel %vm1264, 1.0, 0.0
  %v1585 = vsel %vm1265, 1.0, 0.0
  %v1586 = vsel %vm1266, 1.0, 0.0
  %v1587 = vsel %vm1267, 1.0, 0.0
  %v1588 = vsel %vm1268, 1.0, 0.0
  %v1589 = vsel %vm1269, 1.0, 0.0
  %v1590 = vsel %vm1270, 1.0, 0.0
  %v1591 = vsel %vm1271, 1.0, 0.0
  %v1592 = vsel %vm1272, 1.0, 0.0
  %v1593 = vsel %vm1273, 1.0, 0.0
  %v1594 = vsel %vm1274, 1.0, 0.0
  %v1595 = vsel %vm1275, 1.0, 0.0
  %v1596 = vsel %vm1276, 1.0, 0.0
  %v1597 = vsel %vm1277, 1.0, 0.0
  %v1598 = vsel %vm1278, 1.0, 0.0
  %v1599 = vsel %vm1279, 1.0, 0.0
  %v1600 = vsel %vm1280, 1.0, 0.0
  %v1601 = vsel %vm1281, 1.0, 0.0
  %v1602 = vsel %vm1282, 1.0, 0.0
  %v1603 = vsel %vm1283, 1.0, 0.0
  %v1604 = vsel %vm1284, 1.0, 0.0
  %v1605 = vsel %vm1285, 1.0, 0.0
  %v1606 = vsel %vm1286, 1.0, 0.0
  %v1607 = vsel %vm1287, 1.0, 0.0
  %v1608 = vsel %vm1288, 1.0, 0.0
  %v1609 = vsel %vm1289, 1.0, 0.0
  %v1610 = vsel %vm1290, 1.0, 0.0
  %v1611 = vsel %vm1291, 1.0, 0.0
  %v1612 = vsel %vm1292, 1.0, 0.0
  %v1613 = vsel %vm1293, 1.0, 0.0
  %v1614 = vsel %vm1294, 1.0, 0.0
  %v1615 = vsel %vm1295, 1.0, 0.0
  %v1616 = vsel %vm1296, 1.0, 0.0
  %v1617 = vsel %vm1297, 1.0, 0.0
  %v1618 = vsel %vm1298, 1.0, 0.0
  %v1619 = vsel %vm1299, 1.0, 0.0
  %v1620 = vsel %vm1300, 1.0, 0.0
  %v1621 = vsel %vm1301, 1.0, 0.0
  %v1622 = vsel %vm1302, 1.0, 0.0
  %v1623 = vsel %vm1303, 1.0, 0.0
  %v1624 = vsel %vm1304, 1.0, 0.0
  %v1625 = vsel %vm1305, 1.0, 0.0
  %v1626 = vsel %vm1306, 1.0, 0.0
  %v1627 = vsel %vm1307, 1.0, 0.0
  %v1628 = vsel %vm1308, 1.0, 0.0
  %v1629 = vsel %vm1309, 1.0, 0.0
  %v1630 = vsel %vm1310, 1.0, 0.0
  %v1631 = vsel %vm1311, 1.0, 0.0
  %v1632 = vsel %vm1312, 1.0, 0.0
  %v1633 = vsel %vm1313, 1.0, 0.0
  %v1634 = vsel %vm1314, 1.0, 0.0
  %v1635 = vsel %vm1315, 1.0, 0.0
  %v1636 = vsel %vm1316, 1.0, 0.0
  %v1637 = vsel %vm1317, 1.0, 0.0
  %v1638 = vsel %vm1318, 1.0, 0.0
  %v1639 = vsel %vm1319, 1.0, 0.0
  %v1640 = vsel %vm1320, 1.0, 0.0
  %v1641 = vsel %vm1321, 1.0, 0.0
  %v1642 = vsel %vm1322, 1.0, 0.0
  %v1643 = vsel %vm1323, 1.0, 0.0
  %v1644 = vsel %vm1324, 1.0, 0.0
  %v1645 = vsel %vm1325, 1.0, 0.0
  %v1646 = vsel %vm1326, 1.0, 0.0
  %v1647 = vsel %vm1327, 1.0, 0.0
  %v1648 = vsel %vm1328, 1.0, 0.0
  %v1649 = vsel %vm1329, 1.0, 0.0
  %v1650 = vsel %vm1330, 1.0, 0.0
  %v1651 = vsel %vm1331, 1.0, 0.0
  %v1652 = vsel %vm1332, 1.0, 0.0
  %v1653 = vsel %vm1333, 1.0, 0.0
  %v1654 = vsel %vm1334, 1.0, 0.0
  %v1655 = vsel %vm1335, 1.0, 0.0
  %v1656 = vsel %vm1336, 1.0, 0.0
  %v1657 = vsel %vm1337, 1.0, 0.0
  %v1658 = vsel %vm1338, 1.0, 0.0
  %v1659 = vsel %vm1339, 1.0, 0.0
  %v1660 = vsel %vm1340, 1.0, 0.0
  %v1661 = vsel %vm1341, 1.0, 0.0
  %v1662 = vsel %vm1342, 1.0, 0.0
  %v1663 = vsel %vm1343, 1.0, 0.0
  %v1664 = vsel %vm1344, 1.0, 0.0
  %v1665 = vsel %vm1345, 1.0, 0.0
  %v1666 = vsel %vm1346, 1.0, 0.0
  %v1667 = vsel %vm1347, 1.0, 0.0
  %v1668 = vsel %vm1348, 1.0, 0.0
  %v1669 = vsel %vm1349, 1.0, 0.0
  %v1670 = vsel %vm1350, 1.0, 0.0
  %v1671 = vsel %vm1351, 1.0, 0.0
  %v1672 = vsel %vm1352, 1.0, 0.0
  %v1673 = vsel %vm1353, 1.0, 0.0
  %v1674 = vsel %vm1354, 1.0, 0.0
  %v1675 = vsel %vm1355, 1.0, 0.0
  %v1676 = vsel %vm1356, 1.0, 0.0
  %v1677 = vsel %vm1357, 1.0, 0.0
  %v1678 = vsel %vm1358, 1.0, 0.0
  %v1679 = vsel %vm1359, 1.0, 0.0
  %v1680 = vsel %vm1360, 1.0, 0.0
  %v1681 = vsel %vm1361, 1.0, 0.0
  %v1682 = vsel %vm1362, 1.0, 0.0
  %v1683 = vsel %vm1363, 1.0, 0.0
  %v1684 = vsel %vm1364, 1.0, 0.0
  %v1685 = vsel %vm1365, 1.0, 0.0
  %v1686 = vsel %vm1366, 1.0, 0.0
  %v1687 = vsel %vm1367, 1.0, 0.0
  %v1688 = vsel %vm1368, 1.0, 0.0
  %v1689 = vsel %vm1369, 1.0, 0.0
  %v1690 = vsel %vm1370, 1.0, 0.0
  %v1691 = vsel %vm1371, 1.0, 0.0
  %v1692 = vsel %vm1372, 1.0, 0.0
  %v1693 = vsel %vm1373, 1.0, 0.0
  %v1694 = vsel %vm1374, 1.0, 0.0
  %v1695 = vsel %vm1375, 1.0, 0.0
  %v1696 = vsel %vm1376, 1.0, 0.0
  %v1697 = vsel %vm1377, 1.0, 0.0
  %v1698 = vsel %vm1378, 1.0, 0.0
  %v1699 = vsel %vm1379, 1.0, 0.0
  %v1700 = vsel %vm1380, 1.0, 0.0
  %v1701 = vsel %vm1381, 1.0, 0.0
  %v1702 = vsel %vm1382, 1.0, 0.0
  %v1703 = vsel %vm1383, 1.0, 0.0
  %v1704 = vsel %vm1384, 1.0, 0.0
  %v1705 = vsel %vm1385, 1.0, 0.0
  %v1706 = vsel %vm1386, 1.0, 0.0
  %v1707 = vsel %vm1387, 1.0, 0.0
  %v1708 = vsel %vm1388, 1.0, 0.0
  %v1709 = vsel %vm1389, 1.0, 0.0
  %v1710 = vsel %vm1390, 1.0, 0.0
  %v1711 = vsel %vm1391, 1.0, 0.0
  %v1712 = vsel %vm1392, 1.0, 0.0
  %v1713 = vsel %vm1393, 1.0, 0.0
  %v1714 = vsel %vm1394, 1.0, 0.0
  %v1715 = vsel %vm1395, 1.0, 0.0
  %v1716 = vsel %vm1396, 1.0, 0.0
  %v1717 = vsel %vm1397, 1.0, 0.0
  %v1718 = vsel %vm1398, 1.0, 0.0
  %v1719 = vsel %vm1399, 1.0, 0.0
  %v1720 = vsel %vm1400, 1.0, 0.0
  %v1721 = vsel %vm1401, 1.0, 0.0
  %v1722 = vsel %vm1402, 1.0, 0.0
  %v1723 = vsel %vm1403, 1.0, 0.0
  %v1724 = vsel %vm1404, 1.0, 0.0
  %v1725 = vsel %vm1405, 1.0, 0.0
  %v1726 = vsel %vm1406, 1.0, 0.0
  %v1727 = vsel %vm1407, 1.0, 0.0
  %v1728 = vsel %vm1408, 1.0, 0.0
  %v1729 = vsel %vm1409, 1.0, 0.0
  %v1730 = vsel %vm1410, 1.0, 0.0
  %v1731 = vsel %vm1411, 1.0, 0.0
  %v1732 = vsel %vm1412, 1.0, 0.0
  %v1733 = vsel %vm1413, 1.0, 0.0
  %v1734 = vsel %vm1414, 1.0, 0.0
  %v1735 = vsel %vm1415, 1.0, 0.0
  %v1736 = vsel %vm1416, 1.0, 0.0
  %v1737 = vsel %vm1417, 1.0, 0.0
  %v1738 = vsel %vm1418, 1.0, 0.0
  %v1739 = vsel %vm1419, 1.0, 0.0
  %v1740 = vsel %vm1420, 1.0, 0.0
  %v1741 = vsel %vm1421, 1.0, 0.0
  %v1742 = vsel %vm1422, 1.0, 0.0
  %v1743 = vsel %vm1423, 1.0, 0.0
  %v1744 = vsel %vm1424, 1.0, 0.0
  %v1745 = vsel %vm1425, 1.0, 0.0
  %v1746 = vsel %vm1426, 1.0, 0.0
  %v1747 = vsel %vm1427, 1.0, 0.0
  %v1748 = vsel %vm1428, 1.0, 0.0
  %v1749 = vsel %vm1429, 1.0, 0.0
  %v1750 = vsel %vm1430, 1.0, 0.0
  %v1751 = vsel %vm1431, 1.0, 0.0
  %v1752 = vsel %vm1432, 1.0, 0.0
  %v1753 = vsel %vm1433, 1.0, 0.0
  %v1754 = vsel %vm1434, 1.0, 0.0
  %v1755 = vsel %vm1435, 1.0, 0.0
  %v1756 = vsel %vm1436, 1.0, 0.0
  %v1757 = vsel %vm1437, 1.0, 0.0
  %v1758 = vsel %vm1438, 1.0, 0.0
  %v1759 = vsel %vm1439, 1.0, 0.0
  %v1760 = vsel %vm1440, 1.0, 0.0
  %v1761 = vsel %vm1441, 1.0, 0.0
  %v1762 = vsel %vm1442, 1.0, 0.0
  %v1763 = vsel %vm1443, 1.0, 0.0
  %v1764 = vsel %vm1444, 1.0, 0.0
  %v1765 = vsel %vm1445, 1.0, 0.0
  %v1766 = vsel %vm1446, 1.0, 0.0
  %v1767 = vsel %vm1447, 1.0, 0.0
  %v1768 = vsel %vm1448, 1.0, 0.0
  %v1769 = vsel %vm1449, 1.0, 0.0
  %v1770 = vsel %vm1450, 1.0, 0.0
  %v1771 = vsel %vm1451, 1.0, 0.0
  %v1772 = vsel %vm1452, 1.0, 0.0
  %v1773 = vsel %vm1453, 1.0, 0.0
  %v1774 = vsel %vm1454, 1.0, 0.0
  %v1775 = vsel %vm1455, 1.0, 0.0
  %v1776 = vsel %vm1456, 1.0, 0.0
  %v1777 = vsel %vm1457, 1.0, 0.0
  %v1778 = vsel %vm1458, 1.0, 0.0
  %v1779 = vsel %vm1459, 1.0, 0.0
  %v1780 = vsel %vm1460, 1.0, 0.0
  %v1781 = vsel %vm1461, 1.0, 0.0
  %v1782 = vsel %vm1462, 1.0, 0.0
  %v1783 = vsel %vm1463, 1.0, 0.0
  %v1784 = vsel %vm1464, 1.0, 0.0
  %v1785 = vsel %vm1465, 1.0, 0.0
  %v1786 = vsel %vm1466, 1.0, 0.0
  %v1787 = vsel %vm1467, 1.0, 0.0
  %v1788 = vsel %vm1468, 1.0, 0.0
  %v1789 = vsel %vm1469, 1.0, 0.0
  %v1790 = vsel %vm1470, 1.0, 0.0
  %v1791 = vsel %vm1471, 1.0, 0.0
  %v1792 = vsel %vm1472, 1.0, 0.0
  %v1793 = vsel %vm1473, 1.0, 0.0
  %v1794 = vsel %vm1474, 1.0, 0.0
  %v1795 = vsel %vm1475, 1.0, 0.0
  %v1796 = vsel %vm1476, 1.0, 0.0
  %v1797 = vsel %vm1477, 1.0, 0.0
  %v1798 = vsel %vm1478, 1.0, 0.0
  %v1799 = vsel %vm1479, 1.0, 0.0
  %v1800 = vsel %vm1480, 1.0, 0.0
  %v1801 = vsel %vm1481, 1.0, 0.0
  %v1802 = vsel %vm1482, 1.0, 0.0
  %v1803 = vsel %vm1483, 1.0, 0.0
  %v1804 = vsel %vm1484, 1.0, 0.0
  %v1805 = vsel %vm1485, 1.0, 0.0
  %v1806 = vsel %vm1486, 1.0, 0.0
  %v1807 = vsel %vm1487, 1.0, 0.0
  %v1808 = vsel %vm1488, 1.0, 0.0
  %v1809 = vsel %vm1489, 1.0, 0.0
  %v1810 = vsel %vm1490, 1.0, 0.0
  %v1811 = vsel %vm1491, 1.0, 0.0
  %v1812 = vsel %vm1492, 1.0, 0.0
  %v1813 = vpack.c.bf16 %v1498, %v1493
  %v1814 = vpack.c.bf16 %v1499, %v1494
  %v1815 = vpack.c.bf16 %v1500, %v1495
  %v1816 = vpack.c.bf16 %v1501, %v1496
  %v1817 = vpack.c.bf16 %v1502, %v1497
  %v1818 = vpack.c.bf16 %v1508, %v1503
  %v1819 = vpack.c.bf16 %v1509, %v1504
  %v1820 = vpack.c.bf16 %v1510, %v1505
  %v1821 = vpack.c.bf16 %v1511, %v1506
  %v1822 = vpack.c.bf16 %v1512, %v1507
  %v1823 = vpack.c.bf16 %v1518, %v1513
  %v1824 = vpack.c.bf16 %v1519, %v1514
  %v1825 = vpack.c.bf16 %v1520, %v1515
  %v1826 = vpack.c.bf16 %v1521, %v1516
  %v1827 = vpack.c.bf16 %v1522, %v1517
  %v1828 = vpack.c.bf16 %v1528, %v1523
  %v1829 = vpack.c.bf16 %v1529, %v1524
  %v1830 = vpack.c.bf16 %v1530, %v1525
  %v1831 = vpack.c.bf16 %v1531, %v1526
  %v1832 = vpack.c.bf16 %v1532, %v1527
  %v1833 = vpack.c.bf16 %v1538, %v1533
  %v1834 = vpack.c.bf16 %v1539, %v1534
  %v1835 = vpack.c.bf16 %v1540, %v1535
  %v1836 = vpack.c.bf16 %v1541, %v1536
  %v1837 = vpack.c.bf16 %v1542, %v1537
  %v1838 = vpack.c.bf16 %v1548, %v1543
  %v1839 = vpack.c.bf16 %v1549, %v1544
  %v1840 = vpack.c.bf16 %v1550, %v1545
  %v1841 = vpack.c.bf16 %v1551, %v1546
  %v1842 = vpack.c.bf16 %v1552, %v1547
  %v1843 = vpack.c.bf16 %v1558, %v1553
  %v1844 = vpack.c.bf16 %v1559, %v1554
  %v1845 = vpack.c.bf16 %v1560, %v1555
  %v1846 = vpack.c.bf16 %v1561, %v1556
  %v1847 = vpack.c.bf16 %v1562, %v1557
  %v1848 = vpack.c.bf16 %v1568, %v1563
  %v1849 = vpack.c.bf16 %v1569, %v1564
  %v1850 = vpack.c.bf16 %v1570, %v1565
  %v1851 = vpack.c.bf16 %v1571, %v1566
  %v1852 = vpack.c.bf16 %v1572, %v1567
  %v1853 = vpack.c.bf16 %v1578, %v1573
  %v1854 = vpack.c.bf16 %v1579, %v1574
  %v1855 = vpack.c.bf16 %v1580, %v1575
  %v1856 = vpack.c.bf16 %v1581, %v1576
  %v1857 = vpack.c.bf16 %v1582, %v1577
  %v1858 = vpack.c.bf16 %v1588, %v1583
  %v1859 = vpack.c.bf16 %v1589, %v1584
  %v1860 = vpack.c.bf16 %v1590, %v1585
  %v1861 = vpack.c.bf16 %v1591, %v1586
  %v1862 = vpack.c.bf16 %v1592, %v1587
  %v1863 = vpack.c.bf16 %v1598, %v1593
  %v1864 = vpack.c.bf16 %v1599, %v1594
  %v1865 = vpack.c.bf16 %v1600, %v1595
  %v1866 = vpack.c.bf16 %v1601, %v1596
  %v1867 = vpack.c.bf16 %v1602, %v1597
  %v1868 = vpack.c.bf16 %v1608, %v1603
  %v1869 = vpack.c.bf16 %v1609, %v1604
  %v1870 = vpack.c.bf16 %v1610, %v1605
  %v1871 = vpack.c.bf16 %v1611, %v1606
  %v1872 = vpack.c.bf16 %v1612, %v1607
  %v1873 = vpack.c.bf16 %v1618, %v1613
  %v1874 = vpack.c.bf16 %v1619, %v1614
  %v1875 = vpack.c.bf16 %v1620, %v1615
  %v1876 = vpack.c.bf16 %v1621, %v1616
  %v1877 = vpack.c.bf16 %v1622, %v1617
  %v1878 = vpack.c.bf16 %v1628, %v1623
  %v1879 = vpack.c.bf16 %v1629, %v1624
  %v1880 = vpack.c.bf16 %v1630, %v1625
  %v1881 = vpack.c.bf16 %v1631, %v1626
  %v1882 = vpack.c.bf16 %v1632, %v1627
  %v1883 = vpack.c.bf16 %v1638, %v1633
  %v1884 = vpack.c.bf16 %v1639, %v1634
  %v1885 = vpack.c.bf16 %v1640, %v1635
  %v1886 = vpack.c.bf16 %v1641, %v1636
  %v1887 = vpack.c.bf16 %v1642, %v1637
  %v1888 = vpack.c.bf16 %v1648, %v1643
  %v1889 = vpack.c.bf16 %v1649, %v1644
  %v1890 = vpack.c.bf16 %v1650, %v1645
  %v1891 = vpack.c.bf16 %v1651, %v1646
  %v1892 = vpack.c.bf16 %v1652, %v1647
  %v1893 = vpack.c.bf16 %v1658, %v1653
  %v1894 = vpack.c.bf16 %v1659, %v1654
  %v1895 = vpack.c.bf16 %v1660, %v1655
  %v1896 = vpack.c.bf16 %v1661, %v1656
  %v1897 = vpack.c.bf16 %v1662, %v1657
  %v1898 = vpack.c.bf16 %v1668, %v1663
  %v1899 = vpack.c.bf16 %v1669, %v1664
  %v1900 = vpack.c.bf16 %v1670, %v1665
  %v1901 = vpack.c.bf16 %v1671, %v1666
  %v1902 = vpack.c.bf16 %v1672, %v1667
  %v1903 = vpack.c.bf16 %v1678, %v1673
  %v1904 = vpack.c.bf16 %v1679, %v1674
  %v1905 = vpack.c.bf16 %v1680, %v1675
  %v1906 = vpack.c.bf16 %v1681, %v1676
  %v1907 = vpack.c.bf16 %v1682, %v1677
  %v1908 = vpack.c.bf16 %v1688, %v1683
  %v1909 = vpack.c.bf16 %v1689, %v1684
  %v1910 = vpack.c.bf16 %v1690, %v1685
  %v1911 = vpack.c.bf16 %v1691, %v1686
  %v1912 = vpack.c.bf16 %v1692, %v1687
  %v1913 = vpack.c.bf16 %v1698, %v1693
  %v1914 = vpack.c.bf16 %v1699, %v1694
  %v1915 = vpack.c.bf16 %v1700, %v1695
  %v1916 = vpack.c.bf16 %v1701, %v1696
  %v1917 = vpack.c.bf16 %v1702, %v1697
  %v1918 = vpack.c.bf16 %v1708, %v1703
  %v1919 = vpack.c.bf16 %v1709, %v1704
  %v1920 = vpack.c.bf16 %v1710, %v1705
  %v1921 = vpack.c.bf16 %v1711, %v1706
  %v1922 = vpack.c.bf16 %v1712, %v1707
  %v1923 = vpack.c.bf16 %v1718, %v1713
  %v1924 = vpack.c.bf16 %v1719, %v1714
  %v1925 = vpack.c.bf16 %v1720, %v1715
  %v1926 = vpack.c.bf16 %v1721, %v1716
  %v1927 = vpack.c.bf16 %v1722, %v1717
  %v1928 = vpack.c.bf16 %v1728, %v1723
  %v1929 = vpack.c.bf16 %v1729, %v1724
  %v1930 = vpack.c.bf16 %v1730, %v1725
  %v1931 = vpack.c.bf16 %v1731, %v1726
  %v1932 = vpack.c.bf16 %v1732, %v1727
  %v1933 = vpack.c.bf16 %v1738, %v1733
  %v1934 = vpack.c.bf16 %v1739, %v1734
  %v1935 = vpack.c.bf16 %v1740, %v1735
  %v1936 = vpack.c.bf16 %v1741, %v1736
  %v1937 = vpack.c.bf16 %v1742, %v1737
  %v1938 = vpack.c.bf16 %v1748, %v1743
  %v1939 = vpack.c.bf16 %v1749, %v1744
  %v1940 = vpack.c.bf16 %v1750, %v1745
  %v1941 = vpack.c.bf16 %v1751, %v1746
  %v1942 = vpack.c.bf16 %v1752, %v1747
  %v1943 = vpack.c.bf16 %v1758, %v1753
  %v1944 = vpack.c.bf16 %v1759, %v1754
  %v1945 = vpack.c.bf16 %v1760, %v1755
  %v1946 = vpack.c.bf16 %v1761, %v1756
  %v1947 = vpack.c.bf16 %v1762, %v1757
  %v1948 = vpack.c.bf16 %v1768, %v1763
  %v1949 = vpack.c.bf16 %v1769, %v1764
  %v1950 = vpack.c.bf16 %v1770, %v1765
  %v1951 = vpack.c.bf16 %v1771, %v1766
  %v1952 = vpack.c.bf16 %v1772, %v1767
  %v1953 = vpack.c.bf16 %v1778, %v1773
  %v1954 = vpack.c.bf16 %v1779, %v1774
  %v1955 = vpack.c.bf16 %v1780, %v1775
  %v1956 = vpack.c.bf16 %v1781, %v1776
  %v1957 = vpack.c.bf16 %v1782, %v1777
  %v1958 = vpack.c.bf16 %v1788, %v1783
  %v1959 = vpack.c.bf16 %v1789, %v1784
  %v1960 = vpack.c.bf16 %v1790, %v1785
  %v1961 = vpack.c.bf16 %v1791, %v1786
  %v1962 = vpack.c.bf16 %v1792, %v1787
  %v1963 = vpack.c.bf16 %v1798, %v1793
  %v1964 = vpack.c.bf16 %v1799, %v1794
  %v1965 = vpack.c.bf16 %v1800, %v1795
  %v1966 = vpack.c.bf16 %v1801, %v1796
  %v1967 = vpack.c.bf16 %v1802, %v1797
  %v1968 = vpack.c.bf16 %v1808, %v1803
  %v1969 = vpack.c.bf16 %v1809, %v1804
  %v1970 = vpack.c.bf16 %v1810, %v1805
  %v1971 = vpack.c.bf16 %v1811, %v1806
  %v1972 = vpack.c.bf16 %v1812, %v1807
  %v1973 = vld [vmem:[%s1] sm:$0xf]
  %v1974 = vld [vmem:[%s1 + $0x4] sm:$0xf]
  %v1975 = vld [vmem:[%s1 + $0x8] sm:$0xf]
  %v1976 = vld [vmem:[%s1 + $0xc] sm:$0xf]
  %v1977 = vld [vmem:[%s1 + $0x10] sm:$0xf]
  %v1978 = vld [vmem:[%s1 + $0x14] sm:$0xf]
  %v1979 = vld [vmem:[%s1 + $0x18] sm:$0xf]
  %v1980 = vld [vmem:[%s1 + $0x1c] sm:$0xf]
  %v1981 = vld [vmem:[%s1 + $0x20] sm:$0xf]
  %v1982 = vld [vmem:[%s1 + $0x24] sm:$0xf]
  %v1983 = vld [vmem:[%s1 + $0x28] sm:$0xf]
  %v1984 = vld [vmem:[%s1 + $0x2c] sm:$0xf]
  %v1985 = vld [vmem:[%s1 + $0x30] sm:$0xf]
  %v1986 = vld [vmem:[%s1 + $0x34] sm:$0xf]
  %v1987 = vld [vmem:[%s1 + $0x38] sm:$0xf]
  %v1988 = vld [vmem:[%s1 + $0x3c] sm:$0xf]
  %v1989 = vld [vmem:[%s1 + $0x40] sm:$0xf]
  %v1990 = vld [vmem:[%s1 + $0x44] sm:$0xf]
  %v1991 = vld [vmem:[%s1 + $0x48] sm:$0xf]
  %v1992 = vld [vmem:[%s1 + $0x4c] sm:$0xf]
  %v1993 = vld [vmem:[%s1 + $0x50] sm:$0xf]
  %v1994 = vld [vmem:[%s1 + $0x54] sm:$0xf]
  %v1995 = vld [vmem:[%s1 + $0x58] sm:$0xf]
  %v1996 = vld [vmem:[%s1 + $0x5c] sm:$0xf]
  %v1997 = vld [vmem:[%s1 + $0x60] sm:$0xf]
  %v1998 = vld [vmem:[%s1 + $0x64] sm:$0xf]
  %v1999 = vld [vmem:[%s1 + $0x68] sm:$0xf]
  %v2000 = vld [vmem:[%s1 + $0x6c] sm:$0xf]
  %v2001 = vld [vmem:[%s1 + $0x70] sm:$0xf]
  %v2002 = vld [vmem:[%s1 + $0x74] sm:$0xf]
  %v2003 = vld [vmem:[%s1 + $0x78] sm:$0xf]
  %v2004 = vld [vmem:[%s1 + $0x7c] sm:$0xf]
  %v2005 = vld [vmem:[%s1 + $0x80] sm:$0xf]
  %v2006 = vld [vmem:[%s1 + $0x84] sm:$0xf]
  %v2007 = vld [vmem:[%s1 + $0x88] sm:$0xf]
  %v2008 = vld [vmem:[%s1 + $0x8c] sm:$0xf]
  %v2009 = vld [vmem:[%s1 + $0x90] sm:$0xf]
  %v2010 = vld [vmem:[%s1 + $0x94] sm:$0xf]
  %v2011 = vld [vmem:[%s1 + $0x98] sm:$0xf]
  %v2012 = vld [vmem:[%s1 + $0x9c] sm:$0xf]
  %v2013 = vld [vmem:[%s1 + $0xa0] sm:$0xf]
  %v2014 = vld [vmem:[%s1 + $0xa4] sm:$0xf]
  %v2015 = vld [vmem:[%s1 + $0xa8] sm:$0xf]
  %v2016 = vld [vmem:[%s1 + $0xac] sm:$0xf]
  %v2017 = vld [vmem:[%s1 + $0xb0] sm:$0xf]
  %v2018 = vld [vmem:[%s1 + $0xb4] sm:$0xf]
  %v2019 = vld [vmem:[%s1 + $0xb8] sm:$0xf]
  %v2020 = vld [vmem:[%s1 + $0xbc] sm:$0xf]
  %v2021 = vld [vmem:[%s1 + $0xc0] sm:$0xf]
  %v2022 = vld [vmem:[%s1 + $0xc4] sm:$0xf]
  %v2023 = vld [vmem:[%s1 + $0xc8] sm:$0xf]
  %v2024 = vld [vmem:[%s1 + $0xcc] sm:$0xf]
  %v2025 = vld [vmem:[%s1 + $0xd0] sm:$0xf]
  %v2026 = vld [vmem:[%s1 + $0xd4] sm:$0xf]
  %v2027 = vld [vmem:[%s1 + $0xd8] sm:$0xf]
  %v2028 = vld [vmem:[%s1 + $0xdc] sm:$0xf]
  %v2029 = vld [vmem:[%s1 + $0xe0] sm:$0xf]
  %v2030 = vld [vmem:[%s1 + $0xe4] sm:$0xf]
  %v2031 = vld [vmem:[%s1 + $0xe8] sm:$0xf]
  %v2032 = vld [vmem:[%s1 + $0xec] sm:$0xf]
  %v2033 = vld [vmem:[%s1 + $0xf0] sm:$0xf]
  %v2034 = vld [vmem:[%s1 + $0xf4] sm:$0xf]
  %v2035 = vld [vmem:[%s1 + $0xf8] sm:$0xf]
  %v2036 = vld [vmem:[%s1 + $0xfc] sm:$0xf]
  %v2037 = vld [vmem:[%s1 + $0x100] sm:$0xf]
  %v2038 = vld [vmem:[%s1 + $0x104] sm:$0xf]
  %v2039 = vld [vmem:[%s1 + $0x108] sm:$0xf]
  %v2040 = vld [vmem:[%s1 + $0x10c] sm:$0xf]
  %v2041 = vld [vmem:[%s1 + $0x110] sm:$0xf]
  %v2042 = vld [vmem:[%s1 + $0x114] sm:$0xf]
  %v2043 = vld [vmem:[%s1 + $0x118] sm:$0xf]
  %v2044 = vld [vmem:[%s1 + $0x11c] sm:$0xf]
  %v2045 = vld [vmem:[%s1 + $0x120] sm:$0xf]
  %v2046 = vld [vmem:[%s1 + $0x124] sm:$0xf]
  %v2047 = vld [vmem:[%s1 + $0x128] sm:$0xf]
  %v2048 = vld [vmem:[%s1 + $0x12c] sm:$0xf]
  %v2049 = vld [vmem:[%s1 + $0x130] sm:$0xf]
  %v2050 = vld [vmem:[%s1 + $0x134] sm:$0xf]
  %v2051 = vld [vmem:[%s1 + $0x138] sm:$0xf]
  %v2052 = vld [vmem:[%s1 + $0x13c] sm:$0xf]
  %v2133 = vunpack.c.l.b16 %v1973
  %v2134 = vunpack.c.l.b16 %v1974
  %v2135 = vunpack.c.l.b16 %v1975
  %v2136 = vunpack.c.l.b16 %v1976
  %v2137 = vunpack.c.l.b16 %v1977
  %v2138 = vunpack.c.l.b16 %v1978
  %v2139 = vunpack.c.l.b16 %v1979
  %v2140 = vunpack.c.l.b16 %v1980
  %v2141 = vunpack.c.l.b16 %v1981
  %v2142 = vunpack.c.l.b16 %v1982
  %v2143 = vunpack.c.l.b16 %v1983
  %v2144 = vunpack.c.l.b16 %v1984
  %v2145 = vunpack.c.l.b16 %v1985
  %v2146 = vunpack.c.l.b16 %v1986
  %v2147 = vunpack.c.l.b16 %v1987
  %v2148 = vunpack.c.l.b16 %v1988
  %v2149 = vunpack.c.l.b16 %v1989
  %v2150 = vunpack.c.l.b16 %v1990
  %v2151 = vunpack.c.l.b16 %v1991
  %v2152 = vunpack.c.l.b16 %v1992
  %v2153 = vunpack.c.l.b16 %v1993
  %v2154 = vunpack.c.l.b16 %v1994
  %v2155 = vunpack.c.l.b16 %v1995
  %v2156 = vunpack.c.l.b16 %v1996
  %v2157 = vunpack.c.l.b16 %v1997
  %v2158 = vunpack.c.l.b16 %v1998
  %v2159 = vunpack.c.l.b16 %v1999
  %v2160 = vunpack.c.l.b16 %v2000
  %v2161 = vunpack.c.l.b16 %v2001
  %v2162 = vunpack.c.l.b16 %v2002
  %v2163 = vunpack.c.l.b16 %v2003
  %v2164 = vunpack.c.l.b16 %v2004
  %v2165 = vunpack.c.l.b16 %v2005
  %v2166 = vunpack.c.l.b16 %v2006
  %v2167 = vunpack.c.l.b16 %v2007
  %v2168 = vunpack.c.l.b16 %v2008
  %v2169 = vunpack.c.l.b16 %v2009
  %v2170 = vunpack.c.l.b16 %v2010
  %v2171 = vunpack.c.l.b16 %v2011
  %v2172 = vunpack.c.l.b16 %v2012
  %v2173 = vunpack.c.l.b16 %v2013
  %v2174 = vunpack.c.l.b16 %v2014
  %v2175 = vunpack.c.l.b16 %v2015
  %v2176 = vunpack.c.l.b16 %v2016
  %v2177 = vunpack.c.l.b16 %v2017
  %v2178 = vunpack.c.l.b16 %v2018
  %v2179 = vunpack.c.l.b16 %v2019
  %v2180 = vunpack.c.l.b16 %v2020
  %v2181 = vunpack.c.l.b16 %v2021
  %v2182 = vunpack.c.l.b16 %v2022
  %v2183 = vunpack.c.l.b16 %v2023
  %v2184 = vunpack.c.l.b16 %v2024
  %v2185 = vunpack.c.l.b16 %v2025
  %v2186 = vunpack.c.l.b16 %v2026
  %v2187 = vunpack.c.l.b16 %v2027
  %v2188 = vunpack.c.l.b16 %v2028
  %v2189 = vunpack.c.l.b16 %v2029
  %v2190 = vunpack.c.l.b16 %v2030
  %v2191 = vunpack.c.l.b16 %v2031
  %v2192 = vunpack.c.l.b16 %v2032
  %v2193 = vunpack.c.l.b16 %v2033
  %v2194 = vunpack.c.l.b16 %v2034
  %v2195 = vunpack.c.l.b16 %v2035
  %v2196 = vunpack.c.l.b16 %v2036
  %v2197 = vunpack.c.l.b16 %v2037
  %v2198 = vunpack.c.l.b16 %v2038
  %v2199 = vunpack.c.l.b16 %v2039
  %v2200 = vunpack.c.l.b16 %v2040
  %v2201 = vunpack.c.l.b16 %v2041
  %v2202 = vunpack.c.l.b16 %v2042
  %v2203 = vunpack.c.l.b16 %v2043
  %v2204 = vunpack.c.l.b16 %v2044
  %v2205 = vunpack.c.l.b16 %v2045
  %v2206 = vunpack.c.l.b16 %v2046
  %v2207 = vunpack.c.l.b16 %v2047
  %v2208 = vunpack.c.l.b16 %v2048
  %v2209 = vunpack.c.l.b16 %v2049
  %v2210 = vunpack.c.l.b16 %v2050
  %v2211 = vunpack.c.l.b16 %v2051
  %v2212 = vunpack.c.l.b16 %v2052
  %v2213 = vpack.c.b16 %v2134, %v2133
  %v2214 = vpack.c.b16 %v2136, %v2135
  %v2215 = vpack.c.b16 %v2138, %v2137
  %v2216 = vpack.c.b16 %v2140, %v2139
  %v2217 = vpack.c.b16 %v2142, %v2141
  %v2218 = vpack.c.b16 %v2144, %v2143
  %v2219 = vpack.c.b16 %v2146, %v2145
  %v2220 = vpack.c.b16 %v2148, %v2147
  %v2221 = vpack.c.b16 %v2150, %v2149
  %v2222 = vpack.c.b16 %v2152, %v2151
  %v2223 = vpack.c.b16 %v2154, %v2153
  %v2224 = vpack.c.b16 %v2156, %v2155
  %v2225 = vpack.c.b16 %v2158, %v2157
  %v2226 = vpack.c.b16 %v2160, %v2159
  %v2227 = vpack.c.b16 %v2162, %v2161
  %v2228 = vpack.c.b16 %v2164, %v2163
  %v2229 = vpack.c.b16 %v2166, %v2165
  %v2230 = vpack.c.b16 %v2168, %v2167
  %v2231 = vpack.c.b16 %v2170, %v2169
  %v2232 = vpack.c.b16 %v2172, %v2171
  %v2233 = vpack.c.b16 %v2174, %v2173
  %v2234 = vpack.c.b16 %v2176, %v2175
  %v2235 = vpack.c.b16 %v2178, %v2177
  %v2236 = vpack.c.b16 %v2180, %v2179
  %v2237 = vpack.c.b16 %v2182, %v2181
  %v2238 = vpack.c.b16 %v2184, %v2183
  %v2239 = vpack.c.b16 %v2186, %v2185
  %v2240 = vpack.c.b16 %v2188, %v2187
  %v2241 = vpack.c.b16 %v2190, %v2189
  %v2242 = vpack.c.b16 %v2192, %v2191
  %v2243 = vpack.c.b16 %v2194, %v2193
  %v2244 = vpack.c.b16 %v2196, %v2195
  %v2245 = vpack.c.b16 %v2198, %v2197
  %v2246 = vpack.c.b16 %v2200, %v2199
  %v2247 = vpack.c.b16 %v2202, %v2201
  %v2248 = vpack.c.b16 %v2204, %v2203
  %v2249 = vpack.c.b16 %v2206, %v2205
  %v2250 = vpack.c.b16 %v2208, %v2207
  %v2251 = vpack.c.b16 %v2210, %v2209
  %v2252 = vpack.c.b16 %v2212, %v2211
  %2293 = vmatprep.subr.bf16.mxu0 0
  %2294 = vmatpush1.bf16.msra.mxu0 %v2220
  %2295 = vmatprep.subr.bf16.mxu0 0
  %2296 = vmatpush1.bf16.msra.mxu0 %v2219
  %2297 = vmatprep.subr.bf16.mxu0 0
  %2298 = vmatpush1.bf16.msra.mxu0 %v2218
  %2299 = vmatprep.subr.bf16.mxu0 0
  %2300 = vmatpush1.bf16.msra.mxu0 %v2217
  %2301 = vmatprep.subr.bf16.mxu0 0
  %2302 = vmatpush1.bf16.msra.mxu0 %v2216
  %2303 = vmatprep.subr.bf16.mxu0 0
  %2304 = vmatpush1.bf16.msra.mxu0 %v2215
  %2305 = vmatprep.subr.bf16.mxu0 0
  %2306 = vmatpush1.bf16.msra.mxu0 %v2214
  %2307 = vmatprep.subr.bf16.mxu0 0
  %2308 = vmatpush1.bf16.msra.mxu0 %v2213
  %2309 = vmatprep.subr.bf16.mxu0 0
  %2310 = vmatpush2.bf16.msra.mxu0 %v2228
  %2311 = vmatprep.subr.bf16.mxu0 0
  %2312 = vmatpush2.bf16.msra.mxu0 %v2227
  %2313 = vmatprep.subr.bf16.mxu0 0
  %2314 = vmatpush2.bf16.msra.mxu0 %v2226
  %2315 = vmatprep.subr.bf16.mxu0 0
  %2316 = vmatpush2.bf16.msra.mxu0 %v2225
  %2317 = vmatprep.subr.bf16.mxu0 0
  %2318 = vmatpush2.bf16.msra.mxu0 %v2224
  %2319 = vmatprep.subr.bf16.mxu0 0
  %2320 = vmatpush2.bf16.msra.mxu0 %v2223
  %2321 = vmatprep.subr.bf16.mxu0 0
  %2322 = vmatpush2.bf16.msra.mxu0 %v2222
  %2323 = vmatprep.subr.bf16.mxu0 0
  %2324 = vmatpush2.bf16.msra.mxu0 %v2221
  %2325 = vmatprep.mubr.bf16.mxu0 %v1814
  %2326 = vmatmul.mubr.bf16.gmra.mxu0 %v1813
  %v2327 = vpop.f32.mrf.mxu0
  %v2328 = vadd.f32 0.0, %v2327
  %v2329 = vpop.f32.mrf.mxu0
  %v2330 = vpop.f32.mrf.mxu0
  %v2331 = vadd.f32 0.0, %v2330
  %v2332 = vpop.f32.mrf.mxu0
  %2333 = vmatprep.mubr.bf16.mxu0 %v1819
  %2334 = vmatmul.mubr.bf16.gmra.mxu0 %v1818
  %v2335 = vpop.f32.mrf.mxu0
  %v2336 = vadd.f32 0.0, %v2335
  %v2337 = vpop.f32.mrf.mxu0
  %v2338 = vpop.f32.mrf.mxu0
  %v2339 = vadd.f32 0.0, %v2338
  %v2340 = vpop.f32.mrf.mxu0
  %2341 = vmatprep.mubr.bf16.mxu0 %v1824
  %2342 = vmatmul.mubr.bf16.gmra.mxu0 %v1823
  %v2343 = vpop.f32.mrf.mxu0
  %v2344 = vadd.f32 0.0, %v2343
  %v2345 = vpop.f32.mrf.mxu0
  %v2346 = vpop.f32.mrf.mxu0
  %v2347 = vadd.f32 0.0, %v2346
  %v2348 = vpop.f32.mrf.mxu0
  %2349 = vmatprep.mubr.bf16.mxu0 %v1829
  %2350 = vmatmul.mubr.bf16.gmra.mxu0 %v1828
  %v2351 = vpop.f32.mrf.mxu0
  %v2352 = vadd.f32 0.0, %v2351
  %v2353 = vpop.f32.mrf.mxu0
  %v2354 = vpop.f32.mrf.mxu0
  %v2355 = vadd.f32 0.0, %v2354
  %v2356 = vpop.f32.mrf.mxu0
  %2357 = vmatprep.mubr.bf16.mxu0 %v1834
  %2358 = vmatmul.mubr.bf16.gmra.mxu0 %v1833
  %v2359 = vpop.f32.mrf.mxu0
  %v2360 = vadd.f32 0.0, %v2359
  %v2361 = vpop.f32.mrf.mxu0
  %v2362 = vpop.f32.mrf.mxu0
  %v2363 = vadd.f32 0.0, %v2362
  %v2364 = vpop.f32.mrf.mxu0
  %2365 = vmatprep.mubr.bf16.mxu0 %v1839
  %2366 = vmatmul.mubr.bf16.gmra.mxu0 %v1838
  %v2367 = vpop.f32.mrf.mxu0
  %v2368 = vadd.f32 0.0, %v2367
  %v2369 = vpop.f32.mrf.mxu0
  %v2370 = vpop.f32.mrf.mxu0
  %v2371 = vadd.f32 0.0, %v2370
  %v2372 = vpop.f32.mrf.mxu0
  %2373 = vmatprep.mubr.bf16.mxu0 %v1844
  %2374 = vmatmul.mubr.bf16.gmra.mxu0 %v1843
  %v2375 = vpop.f32.mrf.mxu0
  %v2376 = vadd.f32 0.0, %v2375
  %v2377 = vpop.f32.mrf.mxu0
  %v2378 = vpop.f32.mrf.mxu0
  %v2379 = vadd.f32 0.0, %v2378
  %v2380 = vpop.f32.mrf.mxu0
  %2381 = vmatprep.mubr.bf16.mxu0 %v1849
  %2382 = vmatmul.mubr.bf16.gmra.mxu0 %v1848
  %v2383 = vpop.f32.mrf.mxu0
  %v2384 = vadd.f32 0.0, %v2383
  %v2385 = vpop.f32.mrf.mxu0
  %v2386 = vpop.f32.mrf.mxu0
  %v2387 = vadd.f32 0.0, %v2386
  %v2388 = vpop.f32.mrf.mxu0
  %2389 = vmatprep.mubr.bf16.mxu0 %v1854
  %2390 = vmatmul.mubr.bf16.gmra.mxu0 %v1853
  %v2391 = vpop.f32.mrf.mxu0
  %v2392 = vadd.f32 0.0, %v2391
  %v2393 = vpop.f32.mrf.mxu0
  %v2394 = vpop.f32.mrf.mxu0
  %v2395 = vadd.f32 0.0, %v2394
  %v2396 = vpop.f32.mrf.mxu0
  %2397 = vmatprep.mubr.bf16.mxu0 %v1859
  %2398 = vmatmul.mubr.bf16.gmra.mxu0 %v1858
  %v2399 = vpop.f32.mrf.mxu0
  %v2400 = vadd.f32 0.0, %v2399
  %v2401 = vpop.f32.mrf.mxu0
  %v2402 = vpop.f32.mrf.mxu0
  %v2403 = vadd.f32 0.0, %v2402
  %v2404 = vpop.f32.mrf.mxu0
  %2405 = vmatprep.mubr.bf16.mxu0 %v1864
  %2406 = vmatmul.mubr.bf16.gmra.mxu0 %v1863
  %v2407 = vpop.f32.mrf.mxu0
  %v2408 = vadd.f32 0.0, %v2407
  %v2409 = vpop.f32.mrf.mxu0
  %v2410 = vpop.f32.mrf.mxu0
  %v2411 = vadd.f32 0.0, %v2410
  %v2412 = vpop.f32.mrf.mxu0
  %2413 = vmatprep.mubr.bf16.mxu0 %v1869
  %2414 = vmatmul.mubr.bf16.gmra.mxu0 %v1868
  %v2415 = vpop.f32.mrf.mxu0
  %v2416 = vadd.f32 0.0, %v2415
  %v2417 = vpop.f32.mrf.mxu0
  %v2418 = vpop.f32.mrf.mxu0
  %v2419 = vadd.f32 0.0, %v2418
  %v2420 = vpop.f32.mrf.mxu0
  %2421 = vmatprep.mubr.bf16.mxu0 %v1874
  %2422 = vmatmul.mubr.bf16.gmra.mxu0 %v1873
  %v2423 = vpop.f32.mrf.mxu0
  %v2424 = vadd.f32 0.0, %v2423
  %v2425 = vpop.f32.mrf.mxu0
  %v2426 = vpop.f32.mrf.mxu0
  %v2427 = vadd.f32 0.0, %v2426
  %v2428 = vpop.f32.mrf.mxu0
  %2429 = vmatprep.mubr.bf16.mxu0 %v1879
  %2430 = vmatmul.mubr.bf16.gmra.mxu0 %v1878
  %v2431 = vpop.f32.mrf.mxu0
  %v2432 = vadd.f32 0.0, %v2431
  %v2433 = vpop.f32.mrf.mxu0
  %v2434 = vpop.f32.mrf.mxu0
  %v2435 = vadd.f32 0.0, %v2434
  %v2436 = vpop.f32.mrf.mxu0
  %2437 = vmatprep.mubr.bf16.mxu0 %v1884
  %2438 = vmatmul.mubr.bf16.gmra.mxu0 %v1883
  %v2439 = vpop.f32.mrf.mxu0
  %v2440 = vadd.f32 0.0, %v2439
  %v2441 = vpop.f32.mrf.mxu0
  %v2442 = vpop.f32.mrf.mxu0
  %v2443 = vadd.f32 0.0, %v2442
  %v2444 = vpop.f32.mrf.mxu0
  %2445 = vmatprep.mubr.bf16.mxu0 %v1889
  %2446 = vmatmul.mubr.bf16.gmra.mxu0 %v1888
  %v2447 = vpop.f32.mrf.mxu0
  %v2448 = vadd.f32 0.0, %v2447
  %v2449 = vpop.f32.mrf.mxu0
  %v2450 = vpop.f32.mrf.mxu0
  %v2451 = vadd.f32 0.0, %v2450
  %v2452 = vpop.f32.mrf.mxu0
  %2453 = vmatprep.mubr.bf16.mxu0 %v1894
  %2454 = vmatmul.mubr.bf16.gmra.mxu0 %v1893
  %v2455 = vpop.f32.mrf.mxu0
  %v2456 = vadd.f32 0.0, %v2455
  %v2457 = vpop.f32.mrf.mxu0
  %v2458 = vpop.f32.mrf.mxu0
  %v2459 = vadd.f32 0.0, %v2458
  %v2460 = vpop.f32.mrf.mxu0
  %2461 = vmatprep.mubr.bf16.mxu0 %v1899
  %2462 = vmatmul.mubr.bf16.gmra.mxu0 %v1898
  %v2463 = vpop.f32.mrf.mxu0
  %v2464 = vadd.f32 0.0, %v2463
  %v2465 = vpop.f32.mrf.mxu0
  %v2466 = vpop.f32.mrf.mxu0
  %v2467 = vadd.f32 0.0, %v2466
  %v2468 = vpop.f32.mrf.mxu0
  %2469 = vmatprep.mubr.bf16.mxu0 %v1904
  %2470 = vmatmul.mubr.bf16.gmra.mxu0 %v1903
  %v2471 = vpop.f32.mrf.mxu0
  %v2472 = vadd.f32 0.0, %v2471
  %v2473 = vpop.f32.mrf.mxu0
  %v2474 = vpop.f32.mrf.mxu0
  %v2475 = vadd.f32 0.0, %v2474
  %v2476 = vpop.f32.mrf.mxu0
  %2477 = vmatprep.mubr.bf16.mxu0 %v1909
  %2478 = vmatmul.mubr.bf16.gmra.mxu0 %v1908
  %v2479 = vpop.f32.mrf.mxu0
  %v2480 = vadd.f32 0.0, %v2479
  %v2481 = vpop.f32.mrf.mxu0
  %v2482 = vpop.f32.mrf.mxu0
  %v2483 = vadd.f32 0.0, %v2482
  %v2484 = vpop.f32.mrf.mxu0
  %2485 = vmatprep.mubr.bf16.mxu0 %v1914
  %2486 = vmatmul.mubr.bf16.gmra.mxu0 %v1913
  %v2487 = vpop.f32.mrf.mxu0
  %v2488 = vadd.f32 0.0, %v2487
  %v2489 = vpop.f32.mrf.mxu0
  %v2490 = vpop.f32.mrf.mxu0
  %v2491 = vadd.f32 0.0, %v2490
  %v2492 = vpop.f32.mrf.mxu0
  %2493 = vmatprep.mubr.bf16.mxu0 %v1919
  %2494 = vmatmul.mubr.bf16.gmra.mxu0 %v1918
  %v2495 = vpop.f32.mrf.mxu0
  %v2496 = vadd.f32 0.0, %v2495
  %v2497 = vpop.f32.mrf.mxu0
  %v2498 = vpop.f32.mrf.mxu0
  %v2499 = vadd.f32 0.0, %v2498
  %v2500 = vpop.f32.mrf.mxu0
  %2501 = vmatprep.mubr.bf16.mxu0 %v1924
  %2502 = vmatmul.mubr.bf16.gmra.mxu0 %v1923
  %v2503 = vpop.f32.mrf.mxu0
  %v2504 = vadd.f32 0.0, %v2503
  %v2505 = vpop.f32.mrf.mxu0
  %v2506 = vpop.f32.mrf.mxu0
  %v2507 = vadd.f32 0.0, %v2506
  %v2508 = vpop.f32.mrf.mxu0
  %2509 = vmatprep.mubr.bf16.mxu0 %v1929
  %2510 = vmatmul.mubr.bf16.gmra.mxu0 %v1928
  %v2511 = vpop.f32.mrf.mxu0
  %v2512 = vadd.f32 0.0, %v2511
  %v2513 = vpop.f32.mrf.mxu0
  %v2514 = vpop.f32.mrf.mxu0
  %v2515 = vadd.f32 0.0, %v2514
  %v2516 = vpop.f32.mrf.mxu0
  %2517 = vmatprep.mubr.bf16.mxu0 %v1934
  %2518 = vmatmul.mubr.bf16.gmra.mxu0 %v1933
  %v2519 = vpop.f32.mrf.mxu0
  %v2520 = vadd.f32 0.0, %v2519
  %v2521 = vpop.f32.mrf.mxu0
  %v2522 = vpop.f32.mrf.mxu0
  %v2523 = vadd.f32 0.0, %v2522
  %v2524 = vpop.f32.mrf.mxu0
  %2525 = vmatprep.mubr.bf16.mxu0 %v1939
  %2526 = vmatmul.mubr.bf16.gmra.mxu0 %v1938
  %v2527 = vpop.f32.mrf.mxu0
  %v2528 = vadd.f32 0.0, %v2527
  %v2529 = vpop.f32.mrf.mxu0
  %v2530 = vpop.f32.mrf.mxu0
  %v2531 = vadd.f32 0.0, %v2530
  %v2532 = vpop.f32.mrf.mxu0
  %2533 = vmatprep.mubr.bf16.mxu0 %v1944
  %2534 = vmatmul.mubr.bf16.gmra.mxu0 %v1943
  %v2535 = vpop.f32.mrf.mxu0
  %v2536 = vadd.f32 0.0, %v2535
  %v2537 = vpop.f32.mrf.mxu0
  %v2538 = vpop.f32.mrf.mxu0
  %v2539 = vadd.f32 0.0, %v2538
  %v2540 = vpop.f32.mrf.mxu0
  %2541 = vmatprep.mubr.bf16.mxu0 %v1949
  %2542 = vmatmul.mubr.bf16.gmra.mxu0 %v1948
  %v2543 = vpop.f32.mrf.mxu0
  %v2544 = vadd.f32 0.0, %v2543
  %v2545 = vpop.f32.mrf.mxu0
  %v2546 = vpop.f32.mrf.mxu0
  %v2547 = vadd.f32 0.0, %v2546
  %v2548 = vpop.f32.mrf.mxu0
  %2549 = vmatprep.mubr.bf16.mxu0 %v1954
  %2550 = vmatmul.mubr.bf16.gmra.mxu0 %v1953
  %v2551 = vpop.f32.mrf.mxu0
  %v2552 = vadd.f32 0.0, %v2551
  %v2553 = vpop.f32.mrf.mxu0
  %v2554 = vpop.f32.mrf.mxu0
  %v2555 = vadd.f32 0.0, %v2554
  %v2556 = vpop.f32.mrf.mxu0
  %2557 = vmatprep.mubr.bf16.mxu0 %v1959
  %2558 = vmatmul.mubr.bf16.gmra.mxu0 %v1958
  %v2559 = vpop.f32.mrf.mxu0
  %v2560 = vadd.f32 0.0, %v2559
  %v2561 = vpop.f32.mrf.mxu0
  %v2562 = vpop.f32.mrf.mxu0
  %v2563 = vadd.f32 0.0, %v2562
  %v2564 = vpop.f32.mrf.mxu0
  %2565 = vmatprep.mubr.bf16.mxu0 %v1964
  %2566 = vmatmul.mubr.bf16.gmra.mxu0 %v1963
  %v2567 = vpop.f32.mrf.mxu0
  %v2568 = vadd.f32 0.0, %v2567
  %v2569 = vpop.f32.mrf.mxu0
  %v2570 = vpop.f32.mrf.mxu0
  %v2571 = vadd.f32 0.0, %v2570
  %v2572 = vpop.f32.mrf.mxu0
  %2573 = vmatprep.mubr.bf16.mxu0 %v1969
  %2574 = vmatmul.mubr.bf16.gmra.mxu0 %v1968
  %v2575 = vpop.f32.mrf.mxu0
  %v2576 = vadd.f32 0.0, %v2575
  %v2577 = vpop.f32.mrf.mxu0
  %v2578 = vpop.f32.mrf.mxu0
  %v2579 = vadd.f32 0.0, %v2578
  %v2580 = vpop.f32.mrf.mxu0
  %2581 = vdwg.mxu0
  %2582 = vmatprep.subr.bf16.mxu0 0
  %2583 = vmatpush1.bf16.msra.mxu0 %v2236
  %2584 = vmatprep.subr.bf16.mxu0 0
  %2585 = vmatpush1.bf16.msra.mxu0 %v2235
  %2586 = vmatprep.subr.bf16.mxu0 0
  %2587 = vmatpush1.bf16.msra.mxu0 %v2234
  %2588 = vmatprep.subr.bf16.mxu0 0
  %2589 = vmatpush1.bf16.msra.mxu0 %v2233
  %2590 = vmatprep.subr.bf16.mxu0 0
  %2591 = vmatpush1.bf16.msra.mxu0 %v2232
  %2592 = vmatprep.subr.bf16.mxu0 0
  %2593 = vmatpush1.bf16.msra.mxu0 %v2231
  %2594 = vmatprep.subr.bf16.mxu0 0
  %2595 = vmatpush1.bf16.msra.mxu0 %v2230
  %2596 = vmatprep.subr.bf16.mxu0 0
  %2597 = vmatpush1.bf16.msra.mxu0 %v2229
  %2598 = vmatprep.subr.bf16.mxu0 0
  %2599 = vmatpush2.bf16.msra.mxu0 %v2244
  %2600 = vmatprep.subr.bf16.mxu0 0
  %2601 = vmatpush2.bf16.msra.mxu0 %v2243
  %2602 = vmatprep.subr.bf16.mxu0 0
  %2603 = vmatpush2.bf16.msra.mxu0 %v2242
  %2604 = vmatprep.subr.bf16.mxu0 0
  %2605 = vmatpush2.bf16.msra.mxu0 %v2241
  %2606 = vmatprep.subr.bf16.mxu0 0
  %2607 = vmatpush2.bf16.msra.mxu0 %v2240
  %2608 = vmatprep.subr.bf16.mxu0 0
  %2609 = vmatpush2.bf16.msra.mxu0 %v2239
  %2610 = vmatprep.subr.bf16.mxu0 0
  %2611 = vmatpush2.bf16.msra.mxu0 %v2238
  %2612 = vmatprep.subr.bf16.mxu0 0
  %2613 = vmatpush2.bf16.msra.mxu0 %v2237
  %2614 = vmatprep.mubr.bf16.mxu0 %v1816
  %2615 = vmatmul.mubr.bf16.gmra.mxu0 %v1815
  %v2616 = vpop.f32.mrf.mxu0
  %v2617 = vadd.f32 %v2328, %v2616
  %v2618 = vpop.f32.mrf.mxu0
  %v2619 = vpop.f32.mrf.mxu0
  %v2620 = vadd.f32 %v2331, %v2619
  %v2621 = vpop.f32.mrf.mxu0
  %2622 = vmatprep.mubr.bf16.mxu0 %v1821
  %2623 = vmatmul.mubr.bf16.gmra.mxu0 %v1820
  %v2624 = vpop.f32.mrf.mxu0
  %v2625 = vadd.f32 %v2336, %v2624
  %v2626 = vpop.f32.mrf.mxu0
  %v2627 = vpop.f32.mrf.mxu0
  %v2628 = vadd.f32 %v2339, %v2627
  %v2629 = vpop.f32.mrf.mxu0
  %2630 = vmatprep.mubr.bf16.mxu0 %v1826
  %2631 = vmatmul.mubr.bf16.gmra.mxu0 %v1825
  %v2632 = vpop.f32.mrf.mxu0
  %v2633 = vadd.f32 %v2344, %v2632
  %v2634 = vpop.f32.mrf.mxu0
  %v2635 = vpop.f32.mrf.mxu0
  %v2636 = vadd.f32 %v2347, %v2635
  %v2637 = vpop.f32.mrf.mxu0
  %2638 = vmatprep.mubr.bf16.mxu0 %v1831
  %2639 = vmatmul.mubr.bf16.gmra.mxu0 %v1830
  %v2640 = vpop.f32.mrf.mxu0
  %v2641 = vadd.f32 %v2352, %v2640
  %v2642 = vpop.f32.mrf.mxu0
  %v2643 = vpop.f32.mrf.mxu0
  %v2644 = vadd.f32 %v2355, %v2643
  %v2645 = vpop.f32.mrf.mxu0
  %2646 = vmatprep.mubr.bf16.mxu0 %v1836
  %2647 = vmatmul.mubr.bf16.gmra.mxu0 %v1835
  %v2648 = vpop.f32.mrf.mxu0
  %v2649 = vadd.f32 %v2360, %v2648
  %v2650 = vpop.f32.mrf.mxu0
  %v2651 = vpop.f32.mrf.mxu0
  %v2652 = vadd.f32 %v2363, %v2651
  %v2653 = vpop.f32.mrf.mxu0
  %2654 = vmatprep.mubr.bf16.mxu0 %v1841
  %2655 = vmatmul.mubr.bf16.gmra.mxu0 %v1840
  %v2656 = vpop.f32.mrf.mxu0
  %v2657 = vadd.f32 %v2368, %v2656
  %v2658 = vpop.f32.mrf.mxu0
  %v2659 = vpop.f32.mrf.mxu0
  %v2660 = vadd.f32 %v2371, %v2659
  %v2661 = vpop.f32.mrf.mxu0
  %2662 = vmatprep.mubr.bf16.mxu0 %v1846
  %2663 = vmatmul.mubr.bf16.gmra.mxu0 %v1845
  %v2664 = vpop.f32.mrf.mxu0
  %v2665 = vadd.f32 %v2376, %v2664
  %v2666 = vpop.f32.mrf.mxu0
  %v2667 = vpop.f32.mrf.mxu0
  %v2668 = vadd.f32 %v2379, %v2667
  %v2669 = vpop.f32.mrf.mxu0
  %2670 = vmatprep.mubr.bf16.mxu0 %v1851
  %2671 = vmatmul.mubr.bf16.gmra.mxu0 %v1850
  %v2672 = vpop.f32.mrf.mxu0
  %v2673 = vadd.f32 %v2384, %v2672
  %v2674 = vpop.f32.mrf.mxu0
  %v2675 = vpop.f32.mrf.mxu0
  %v2676 = vadd.f32 %v2387, %v2675
  %v2677 = vpop.f32.mrf.mxu0
  %2678 = vmatprep.mubr.bf16.mxu0 %v1856
  %2679 = vmatmul.mubr.bf16.gmra.mxu0 %v1855
  %v2680 = vpop.f32.mrf.mxu0
  %v2681 = vadd.f32 %v2392, %v2680
  %v2682 = vpop.f32.mrf.mxu0
  %v2683 = vpop.f32.mrf.mxu0
  %v2684 = vadd.f32 %v2395, %v2683
  %v2685 = vpop.f32.mrf.mxu0
  %2686 = vmatprep.mubr.bf16.mxu0 %v1861
  %2687 = vmatmul.mubr.bf16.gmra.mxu0 %v1860
  %v2688 = vpop.f32.mrf.mxu0
  %v2689 = vadd.f32 %v2400, %v2688
  %v2690 = vpop.f32.mrf.mxu0
  %v2691 = vpop.f32.mrf.mxu0
  %v2692 = vadd.f32 %v2403, %v2691
  %v2693 = vpop.f32.mrf.mxu0
  %2694 = vmatprep.mubr.bf16.mxu0 %v1866
  %2695 = vmatmul.mubr.bf16.gmra.mxu0 %v1865
  %v2696 = vpop.f32.mrf.mxu0
  %v2697 = vadd.f32 %v2408, %v2696
  %v2698 = vpop.f32.mrf.mxu0
  %v2699 = vpop.f32.mrf.mxu0
  %v2700 = vadd.f32 %v2411, %v2699
  %v2701 = vpop.f32.mrf.mxu0
  %2702 = vmatprep.mubr.bf16.mxu0 %v1871
  %2703 = vmatmul.mubr.bf16.gmra.mxu0 %v1870
  %v2704 = vpop.f32.mrf.mxu0
  %v2705 = vadd.f32 %v2416, %v2704
  %v2706 = vpop.f32.mrf.mxu0
  %v2707 = vpop.f32.mrf.mxu0
  %v2708 = vadd.f32 %v2419, %v2707
  %v2709 = vpop.f32.mrf.mxu0
  %2710 = vmatprep.mubr.bf16.mxu0 %v1876
  %2711 = vmatmul.mubr.bf16.gmra.mxu0 %v1875
  %v2712 = vpop.f32.mrf.mxu0
  %v2713 = vadd.f32 %v2424, %v2712
  %v2714 = vpop.f32.mrf.mxu0
  %v2715 = vpop.f32.mrf.mxu0
  %v2716 = vadd.f32 %v2427, %v2715
  %v2717 = vpop.f32.mrf.mxu0
  %2718 = vmatprep.mubr.bf16.mxu0 %v1881
  %2719 = vmatmul.mubr.bf16.gmra.mxu0 %v1880
  %v2720 = vpop.f32.mrf.mxu0
  %v2721 = vadd.f32 %v2432, %v2720
  %v2722 = vpop.f32.mrf.mxu0
  %v2723 = vpop.f32.mrf.mxu0
  %v2724 = vadd.f32 %v2435, %v2723
  %v2725 = vpop.f32.mrf.mxu0
  %2726 = vmatprep.mubr.bf16.mxu0 %v1886
  %2727 = vmatmul.mubr.bf16.gmra.mxu0 %v1885
  %v2728 = vpop.f32.mrf.mxu0
  %v2729 = vadd.f32 %v2440, %v2728
  %v2730 = vpop.f32.mrf.mxu0
  %v2731 = vpop.f32.mrf.mxu0
  %v2732 = vadd.f32 %v2443, %v2731
  %v2733 = vpop.f32.mrf.mxu0
  %2734 = vmatprep.mubr.bf16.mxu0 %v1891
  %2735 = vmatmul.mubr.bf16.gmra.mxu0 %v1890
  %v2736 = vpop.f32.mrf.mxu0
  %v2737 = vadd.f32 %v2448, %v2736
  %v2738 = vpop.f32.mrf.mxu0
  %v2739 = vpop.f32.mrf.mxu0
  %v2740 = vadd.f32 %v2451, %v2739
  %v2741 = vpop.f32.mrf.mxu0
  %2742 = vmatprep.mubr.bf16.mxu0 %v1896
  %2743 = vmatmul.mubr.bf16.gmra.mxu0 %v1895
  %v2744 = vpop.f32.mrf.mxu0
  %v2745 = vadd.f32 %v2456, %v2744
  %v2746 = vpop.f32.mrf.mxu0
  %v2747 = vpop.f32.mrf.mxu0
  %v2748 = vadd.f32 %v2459, %v2747
  %v2749 = vpop.f32.mrf.mxu0
  %2750 = vmatprep.mubr.bf16.mxu0 %v1901
  %2751 = vmatmul.mubr.bf16.gmra.mxu0 %v1900
  %v2752 = vpop.f32.mrf.mxu0
  %v2753 = vadd.f32 %v2464, %v2752
  %v2754 = vpop.f32.mrf.mxu0
  %v2755 = vpop.f32.mrf.mxu0
  %v2756 = vadd.f32 %v2467, %v2755
  %v2757 = vpop.f32.mrf.mxu0
  %2758 = vmatprep.mubr.bf16.mxu0 %v1906
  %2759 = vmatmul.mubr.bf16.gmra.mxu0 %v1905
  %v2760 = vpop.f32.mrf.mxu0
  %v2761 = vadd.f32 %v2472, %v2760
  %v2762 = vpop.f32.mrf.mxu0
  %v2763 = vpop.f32.mrf.mxu0
  %v2764 = vadd.f32 %v2475, %v2763
  %v2765 = vpop.f32.mrf.mxu0
  %2766 = vmatprep.mubr.bf16.mxu0 %v1911
  %2767 = vmatmul.mubr.bf16.gmra.mxu0 %v1910
  %v2768 = vpop.f32.mrf.mxu0
  %v2769 = vadd.f32 %v2480, %v2768
  %v2770 = vpop.f32.mrf.mxu0
  %v2771 = vpop.f32.mrf.mxu0
  %v2772 = vadd.f32 %v2483, %v2771
  %v2773 = vpop.f32.mrf.mxu0
  %2774 = vmatprep.mubr.bf16.mxu0 %v1916
  %2775 = vmatmul.mubr.bf16.gmra.mxu0 %v1915
  %v2776 = vpop.f32.mrf.mxu0
  %v2777 = vadd.f32 %v2488, %v2776
  %v2778 = vpop.f32.mrf.mxu0
  %v2779 = vpop.f32.mrf.mxu0
  %v2780 = vadd.f32 %v2491, %v2779
  %v2781 = vpop.f32.mrf.mxu0
  %2782 = vmatprep.mubr.bf16.mxu0 %v1921
  %2783 = vmatmul.mubr.bf16.gmra.mxu0 %v1920
  %v2784 = vpop.f32.mrf.mxu0
  %v2785 = vadd.f32 %v2496, %v2784
  %v2786 = vpop.f32.mrf.mxu0
  %v2787 = vpop.f32.mrf.mxu0
  %v2788 = vadd.f32 %v2499, %v2787
  %v2789 = vpop.f32.mrf.mxu0
  %2790 = vmatprep.mubr.bf16.mxu0 %v1926
  %2791 = vmatmul.mubr.bf16.gmra.mxu0 %v1925
  %v2792 = vpop.f32.mrf.mxu0
  %v2793 = vadd.f32 %v2504, %v2792
  %v2794 = vpop.f32.mrf.mxu0
  %v2795 = vpop.f32.mrf.mxu0
  %v2796 = vadd.f32 %v2507, %v2795
  %v2797 = vpop.f32.mrf.mxu0
  %2798 = vmatprep.mubr.bf16.mxu0 %v1931
  %2799 = vmatmul.mubr.bf16.gmra.mxu0 %v1930
  %v2800 = vpop.f32.mrf.mxu0
  %v2801 = vadd.f32 %v2512, %v2800
  %v2802 = vpop.f32.mrf.mxu0
  %v2803 = vpop.f32.mrf.mxu0
  %v2804 = vadd.f32 %v2515, %v2803
  %v2805 = vpop.f32.mrf.mxu0
  %2806 = vmatprep.mubr.bf16.mxu0 %v1936
  %2807 = vmatmul.mubr.bf16.gmra.mxu0 %v1935
  %v2808 = vpop.f32.mrf.mxu0
  %v2809 = vadd.f32 %v2520, %v2808
  %v2810 = vpop.f32.mrf.mxu0
  %v2811 = vpop.f32.mrf.mxu0
  %v2812 = vadd.f32 %v2523, %v2811
  %v2813 = vpop.f32.mrf.mxu0
  %2814 = vmatprep.mubr.bf16.mxu0 %v1941
  %2815 = vmatmul.mubr.bf16.gmra.mxu0 %v1940
  %v2816 = vpop.f32.mrf.mxu0
  %v2817 = vadd.f32 %v2528, %v2816
  %v2818 = vpop.f32.mrf.mxu0
  %v2819 = vpop.f32.mrf.mxu0
  %v2820 = vadd.f32 %v2531, %v2819
  %v2821 = vpop.f32.mrf.mxu0
  %2822 = vmatprep.mubr.bf16.mxu0 %v1946
  %2823 = vmatmul.mubr.bf16.gmra.mxu0 %v1945
  %v2824 = vpop.f32.mrf.mxu0
  %v2825 = vadd.f32 %v2536, %v2824
  %v2826 = vpop.f32.mrf.mxu0
  %v2827 = vpop.f32.mrf.mxu0
  %v2828 = vadd.f32 %v2539, %v2827
  %v2829 = vpop.f32.mrf.mxu0
  %2830 = vmatprep.mubr.bf16.mxu0 %v1951
  %2831 = vmatmul.mubr.bf16.gmra.mxu0 %v1950
  %v2832 = vpop.f32.mrf.mxu0
  %v2833 = vadd.f32 %v2544, %v2832
  %v2834 = vpop.f32.mrf.mxu0
  %v2835 = vpop.f32.mrf.mxu0
  %v2836 = vadd.f32 %v2547, %v2835
  %v2837 = vpop.f32.mrf.mxu0
  %2838 = vmatprep.mubr.bf16.mxu0 %v1956
  %2839 = vmatmul.mubr.bf16.gmra.mxu0 %v1955
  %v2840 = vpop.f32.mrf.mxu0
  %v2841 = vadd.f32 %v2552, %v2840
  %v2842 = vpop.f32.mrf.mxu0
  %v2843 = vpop.f32.mrf.mxu0
  %v2844 = vadd.f32 %v2555, %v2843
  %v2845 = vpop.f32.mrf.mxu0
  %2846 = vmatprep.mubr.bf16.mxu0 %v1961
  %2847 = vmatmul.mubr.bf16.gmra.mxu0 %v1960
  %v2848 = vpop.f32.mrf.mxu0
  %v2849 = vadd.f32 %v2560, %v2848
  %v2850 = vpop.f32.mrf.mxu0
  %v2851 = vpop.f32.mrf.mxu0
  %v2852 = vadd.f32 %v2563, %v2851
  %v2853 = vpop.f32.mrf.mxu0
  %2854 = vmatprep.mubr.bf16.mxu0 %v1966
  %2855 = vmatmul.mubr.bf16.gmra.mxu0 %v1965
  %v2856 = vpop.f32.mrf.mxu0
  %v2857 = vadd.f32 %v2568, %v2856
  %v2858 = vpop.f32.mrf.mxu0
  %v2859 = vpop.f32.mrf.mxu0
  %v2860 = vadd.f32 %v2571, %v2859
  %v2861 = vpop.f32.mrf.mxu0
  %2862 = vmatprep.mubr.bf16.mxu0 %v1971
  %2863 = vmatmul.mubr.bf16.gmra.mxu0 %v1970
  %v2864 = vpop.f32.mrf.mxu0
  %v2865 = vadd.f32 %v2576, %v2864
  %v2866 = vpop.f32.mrf.mxu0
  %v2867 = vpop.f32.mrf.mxu0
  %v2868 = vadd.f32 %v2579, %v2867
  %v2869 = vpop.f32.mrf.mxu0
  %2870 = vdwg.mxu0
  %2871 = vmatprep.subr.bf16.mxu0 0
  %2872 = vmatpush1.bf16.msra.mxu0 %v2252
  %2873 = vmatprep.subr.bf16.mxu0 0
  %2874 = vmatpush1.bf16.msra.mxu0 %v2251
  %2875 = vmatprep.subr.bf16.mxu0 0
  %2876 = vmatpush1.bf16.msra.mxu0 %v2250
  %2877 = vmatprep.subr.bf16.mxu0 0
  %2878 = vmatpush1.bf16.msra.mxu0 %v2249
  %2879 = vmatprep.subr.bf16.mxu0 0
  %2880 = vmatpush1.bf16.msra.mxu0 %v2248
  %2881 = vmatprep.subr.bf16.mxu0 0
  %2882 = vmatpush1.bf16.msra.mxu0 %v2247
  %2883 = vmatprep.subr.bf16.mxu0 0
  %2884 = vmatpush1.bf16.msra.mxu0 %v2246
  %2885 = vmatprep.subr.bf16.mxu0 0
  %2886 = vmatpush1.bf16.msra.mxu0 %v2245
  %2887 = vmatprep.subr.bf16.mxu0 0
  %2888 = vmatpush2.bf16.msra.mxu0 0
  %2889 = vmatprep.subr.bf16.mxu0 0
  %2890 = vmatpush2.bf16.msra.mxu0 0
  %2891 = vmatprep.subr.bf16.mxu0 0
  %2892 = vmatpush2.bf16.msra.mxu0 0
  %2893 = vmatprep.subr.bf16.mxu0 0
  %2894 = vmatpush2.bf16.msra.mxu0 0
  %2895 = vmatprep.subr.bf16.mxu0 0
  %2896 = vmatpush2.bf16.msra.mxu0 0
  %2897 = vmatprep.subr.bf16.mxu0 0
  %2898 = vmatpush2.bf16.msra.mxu0 0
  %2899 = vmatprep.subr.bf16.mxu0 0
  %2900 = vmatpush2.bf16.msra.mxu0 0
  %2901 = vmatprep.subr.bf16.mxu0 0
  %2902 = vmatpush2.bf16.msra.mxu0 0
  %2903 = vmatprep.mubr.bf16.mxu0 0
  %2904 = vmatmul.mubr.bf16.gmra.mxu0 %v1817
  %v2905 = vpop.f32.mrf.mxu0
  %v2906 = vadd.f32 %v2617, %v2905
  %v2907 = vpop.f32.mrf.mxu0
  %v2908 = vpop.f32.mrf.mxu0
  %v2909 = vadd.f32 %v2620, %v2908
  %v2910 = vpop.f32.mrf.mxu0
  %2911 = vmatprep.mubr.bf16.mxu0 0
  %2912 = vmatmul.mubr.bf16.gmra.mxu0 %v1822
  %v2913 = vpop.f32.mrf.mxu0
  %v2914 = vadd.f32 %v2625, %v2913
  %v2915 = vpop.f32.mrf.mxu0
  %v2916 = vpop.f32.mrf.mxu0
  %v2917 = vadd.f32 %v2628, %v2916
  %v2918 = vpop.f32.mrf.mxu0
  %2919 = vmatprep.mubr.bf16.mxu0 0
  %2920 = vmatmul.mubr.bf16.gmra.mxu0 %v1827
  %v2921 = vpop.f32.mrf.mxu0
  %v2922 = vadd.f32 %v2633, %v2921
  %v2923 = vpop.f32.mrf.mxu0
  %v2924 = vpop.f32.mrf.mxu0
  %v2925 = vadd.f32 %v2636, %v2924
  %v2926 = vpop.f32.mrf.mxu0
  %2927 = vmatprep.mubr.bf16.mxu0 0
  %2928 = vmatmul.mubr.bf16.gmra.mxu0 %v1832
  %v2929 = vpop.f32.mrf.mxu0
  %v2930 = vadd.f32 %v2641, %v2929
  %v2931 = vpop.f32.mrf.mxu0
  %v2932 = vpop.f32.mrf.mxu0
  %v2933 = vadd.f32 %v2644, %v2932
  %v2934 = vpop.f32.mrf.mxu0
  %2935 = vmatprep.mubr.bf16.mxu0 0
  %2936 = vmatmul.mubr.bf16.gmra.mxu0 %v1837
  %v2937 = vpop.f32.mrf.mxu0
  %v2938 = vadd.f32 %v2649, %v2937
  %v2939 = vpop.f32.mrf.mxu0
  %v2940 = vpop.f32.mrf.mxu0
  %v2941 = vadd.f32 %v2652, %v2940
  %v2942 = vpop.f32.mrf.mxu0
  %2943 = vmatprep.mubr.bf16.mxu0 0
  %2944 = vmatmul.mubr.bf16.gmra.mxu0 %v1842
  %v2945 = vpop.f32.mrf.mxu0
  %v2946 = vadd.f32 %v2657, %v2945
  %v2947 = vpop.f32.mrf.mxu0
  %v2948 = vpop.f32.mrf.mxu0
  %v2949 = vadd.f32 %v2660, %v2948
  %v2950 = vpop.f32.mrf.mxu0
  %2951 = vmatprep.mubr.bf16.mxu0 0
  %2952 = vmatmul.mubr.bf16.gmra.mxu0 %v1847
  %v2953 = vpop.f32.mrf.mxu0
  %v2954 = vadd.f32 %v2665, %v2953
  %v2955 = vpop.f32.mrf.mxu0
  %v2956 = vpop.f32.mrf.mxu0
  %v2957 = vadd.f32 %v2668, %v2956
  %v2958 = vpop.f32.mrf.mxu0
  %2959 = vmatprep.mubr.bf16.mxu0 0
  %2960 = vmatmul.mubr.bf16.gmra.mxu0 %v1852
  %v2961 = vpop.f32.mrf.mxu0
  %v2962 = vadd.f32 %v2673, %v2961
  %v2963 = vpop.f32.mrf.mxu0
  %v2964 = vpop.f32.mrf.mxu0
  %v2965 = vadd.f32 %v2676, %v2964
  %v2966 = vpop.f32.mrf.mxu0
  %2967 = vmatprep.mubr.bf16.mxu0 0
  %2968 = vmatmul.mubr.bf16.gmra.mxu0 %v1857
  %v2969 = vpop.f32.mrf.mxu0
  %v2970 = vadd.f32 %v2681, %v2969
  %v2971 = vpop.f32.mrf.mxu0
  %v2972 = vpop.f32.mrf.mxu0
  %v2973 = vadd.f32 %v2684, %v2972
  %v2974 = vpop.f32.mrf.mxu0
  %2975 = vmatprep.mubr.bf16.mxu0 0
  %2976 = vmatmul.mubr.bf16.gmra.mxu0 %v1862
  %v2977 = vpop.f32.mrf.mxu0
  %v2978 = vadd.f32 %v2689, %v2977
  %v2979 = vpop.f32.mrf.mxu0
  %v2980 = vpop.f32.mrf.mxu0
  %v2981 = vadd.f32 %v2692, %v2980
  %v2982 = vpop.f32.mrf.mxu0
  %2983 = vmatprep.mubr.bf16.mxu0 0
  %2984 = vmatmul.mubr.bf16.gmra.mxu0 %v1867
  %v2985 = vpop.f32.mrf.mxu0
  %v2986 = vadd.f32 %v2697, %v2985
  %v2987 = vpop.f32.mrf.mxu0
  %v2988 = vpop.f32.mrf.mxu0
  %v2989 = vadd.f32 %v2700, %v2988
  %v2990 = vpop.f32.mrf.mxu0
  %2991 = vmatprep.mubr.bf16.mxu0 0
  %2992 = vmatmul.mubr.bf16.gmra.mxu0 %v1872
  %v2993 = vpop.f32.mrf.mxu0
  %v2994 = vadd.f32 %v2705, %v2993
  %v2995 = vpop.f32.mrf.mxu0
  %v2996 = vpop.f32.mrf.mxu0
  %v2997 = vadd.f32 %v2708, %v2996
  %v2998 = vpop.f32.mrf.mxu0
  %2999 = vmatprep.mubr.bf16.mxu0 0
  %3000 = vmatmul.mubr.bf16.gmra.mxu0 %v1877
  %v3001 = vpop.f32.mrf.mxu0
  %v3002 = vadd.f32 %v2713, %v3001
  %v3003 = vpop.f32.mrf.mxu0
  %v3004 = vpop.f32.mrf.mxu0
  %v3005 = vadd.f32 %v2716, %v3004
  %v3006 = vpop.f32.mrf.mxu0
  %3007 = vmatprep.mubr.bf16.mxu0 0
  %3008 = vmatmul.mubr.bf16.gmra.mxu0 %v1882
  %v3009 = vpop.f32.mrf.mxu0
  %v3010 = vadd.f32 %v2721, %v3009
  %v3011 = vpop.f32.mrf.mxu0
  %v3012 = vpop.f32.mrf.mxu0
  %v3013 = vadd.f32 %v2724, %v3012
  %v3014 = vpop.f32.mrf.mxu0
  %3015 = vmatprep.mubr.bf16.mxu0 0
  %3016 = vmatmul.mubr.bf16.gmra.mxu0 %v1887
  %v3017 = vpop.f32.mrf.mxu0
  %v3018 = vadd.f32 %v2729, %v3017
  %v3019 = vpop.f32.mrf.mxu0
  %v3020 = vpop.f32.mrf.mxu0
  %v3021 = vadd.f32 %v2732, %v3020
  %v3022 = vpop.f32.mrf.mxu0
  %3023 = vmatprep.mubr.bf16.mxu0 0
  %3024 = vmatmul.mubr.bf16.gmra.mxu0 %v1892
  %v3025 = vpop.f32.mrf.mxu0
  %v3026 = vadd.f32 %v2737, %v3025
  %v3027 = vpop.f32.mrf.mxu0
  %v3028 = vpop.f32.mrf.mxu0
  %v3029 = vadd.f32 %v2740, %v3028
  %v3030 = vpop.f32.mrf.mxu0
  %3031 = vmatprep.mubr.bf16.mxu0 0
  %3032 = vmatmul.mubr.bf16.gmra.mxu0 %v1897
  %v3033 = vpop.f32.mrf.mxu0
  %v3034 = vadd.f32 %v2745, %v3033
  %v3035 = vpop.f32.mrf.mxu0
  %v3036 = vpop.f32.mrf.mxu0
  %v3037 = vadd.f32 %v2748, %v3036
  %v3038 = vpop.f32.mrf.mxu0
  %3039 = vmatprep.mubr.bf16.mxu0 0
  %3040 = vmatmul.mubr.bf16.gmra.mxu0 %v1902
  %v3041 = vpop.f32.mrf.mxu0
  %v3042 = vadd.f32 %v2753, %v3041
  %v3043 = vpop.f32.mrf.mxu0
  %v3044 = vpop.f32.mrf.mxu0
  %v3045 = vadd.f32 %v2756, %v3044
  %v3046 = vpop.f32.mrf.mxu0
  %3047 = vmatprep.mubr.bf16.mxu0 0
  %3048 = vmatmul.mubr.bf16.gmra.mxu0 %v1907
  %v3049 = vpop.f32.mrf.mxu0
  %v3050 = vadd.f32 %v2761, %v3049
  %v3051 = vpop.f32.mrf.mxu0
  %v3052 = vpop.f32.mrf.mxu0
  %v3053 = vadd.f32 %v2764, %v3052
  %v3054 = vpop.f32.mrf.mxu0
  %3055 = vmatprep.mubr.bf16.mxu0 0
  %3056 = vmatmul.mubr.bf16.gmra.mxu0 %v1912
  %v3057 = vpop.f32.mrf.mxu0
  %v3058 = vadd.f32 %v2769, %v3057
  %v3059 = vpop.f32.mrf.mxu0
  %v3060 = vpop.f32.mrf.mxu0
  %v3061 = vadd.f32 %v2772, %v3060
  %v3062 = vpop.f32.mrf.mxu0
  %3063 = vmatprep.mubr.bf16.mxu0 0
  %3064 = vmatmul.mubr.bf16.gmra.mxu0 %v1917
  %v3065 = vpop.f32.mrf.mxu0
  %v3066 = vadd.f32 %v2777, %v3065
  %v3067 = vpop.f32.mrf.mxu0
  %v3068 = vpop.f32.mrf.mxu0
  %v3069 = vadd.f32 %v2780, %v3068
  %v3070 = vpop.f32.mrf.mxu0
  %3071 = vmatprep.mubr.bf16.mxu0 0
  %3072 = vmatmul.mubr.bf16.gmra.mxu0 %v1922
  %v3073 = vpop.f32.mrf.mxu0
  %v3074 = vadd.f32 %v2785, %v3073
  %v3075 = vpop.f32.mrf.mxu0
  %v3076 = vpop.f32.mrf.mxu0
  %v3077 = vadd.f32 %v2788, %v3076
  %v3078 = vpop.f32.mrf.mxu0
  %3079 = vmatprep.mubr.bf16.mxu0 0
  %3080 = vmatmul.mubr.bf16.gmra.mxu0 %v1927
  %v3081 = vpop.f32.mrf.mxu0
  %v3082 = vadd.f32 %v2793, %v3081
  %v3083 = vpop.f32.mrf.mxu0
  %v3084 = vpop.f32.mrf.mxu0
  %v3085 = vadd.f32 %v2796, %v3084
  %v3086 = vpop.f32.mrf.mxu0
  %3087 = vmatprep.mubr.bf16.mxu0 0
  %3088 = vmatmul.mubr.bf16.gmra.mxu0 %v1932
  %v3089 = vpop.f32.mrf.mxu0
  %v3090 = vadd.f32 %v2801, %v3089
  %v3091 = vpop.f32.mrf.mxu0
  %v3092 = vpop.f32.mrf.mxu0
  %v3093 = vadd.f32 %v2804, %v3092
  %v3094 = vpop.f32.mrf.mxu0
  %3095 = vmatprep.mubr.bf16.mxu0 0
  %3096 = vmatmul.mubr.bf16.gmra.mxu0 %v1937
  %v3097 = vpop.f32.mrf.mxu0
  %v3098 = vadd.f32 %v2809, %v3097
  %v3099 = vpop.f32.mrf.mxu0
  %v3100 = vpop.f32.mrf.mxu0
  %v3101 = vadd.f32 %v2812, %v3100
  %v3102 = vpop.f32.mrf.mxu0
  %3103 = vmatprep.mubr.bf16.mxu0 0
  %3104 = vmatmul.mubr.bf16.gmra.mxu0 %v1942
  %v3105 = vpop.f32.mrf.mxu0
  %v3106 = vadd.f32 %v2817, %v3105
  %v3107 = vpop.f32.mrf.mxu0
  %v3108 = vpop.f32.mrf.mxu0
  %v3109 = vadd.f32 %v2820, %v3108
  %v3110 = vpop.f32.mrf.mxu0
  %3111 = vmatprep.mubr.bf16.mxu0 0
  %3112 = vmatmul.mubr.bf16.gmra.mxu0 %v1947
  %v3113 = vpop.f32.mrf.mxu0
  %v3114 = vadd.f32 %v2825, %v3113
  %v3115 = vpop.f32.mrf.mxu0
  %v3116 = vpop.f32.mrf.mxu0
  %v3117 = vadd.f32 %v2828, %v3116
  %v3118 = vpop.f32.mrf.mxu0
  %3119 = vmatprep.mubr.bf16.mxu0 0
  %3120 = vmatmul.mubr.bf16.gmra.mxu0 %v1952
  %v3121 = vpop.f32.mrf.mxu0
  %v3122 = vadd.f32 %v2833, %v3121
  %v3123 = vpop.f32.mrf.mxu0
  %v3124 = vpop.f32.mrf.mxu0
  %v3125 = vadd.f32 %v2836, %v3124
  %v3126 = vpop.f32.mrf.mxu0
  %3127 = vmatprep.mubr.bf16.mxu0 0
  %3128 = vmatmul.mubr.bf16.gmra.mxu0 %v1957
  %v3129 = vpop.f32.mrf.mxu0
  %v3130 = vadd.f32 %v2841, %v3129
  %v3131 = vpop.f32.mrf.mxu0
  %v3132 = vpop.f32.mrf.mxu0
  %v3133 = vadd.f32 %v2844, %v3132
  %v3134 = vpop.f32.mrf.mxu0
  %3135 = vmatprep.mubr.bf16.mxu0 0
  %3136 = vmatmul.mubr.bf16.gmra.mxu0 %v1962
  %v3137 = vpop.f32.mrf.mxu0
  %v3138 = vadd.f32 %v2849, %v3137
  %v3139 = vpop.f32.mrf.mxu0
  %v3140 = vpop.f32.mrf.mxu0
  %v3141 = vadd.f32 %v2852, %v3140
  %v3142 = vpop.f32.mrf.mxu0
  %3143 = vmatprep.mubr.bf16.mxu0 0
  %3144 = vmatmul.mubr.bf16.gmra.mxu0 %v1967
  %v3145 = vpop.f32.mrf.mxu0
  %v3146 = vadd.f32 %v2857, %v3145
  %v3147 = vpop.f32.mrf.mxu0
  %v3148 = vpop.f32.mrf.mxu0
  %v3149 = vadd.f32 %v2860, %v3148
  %v3150 = vpop.f32.mrf.mxu0
  %3151 = vmatprep.mubr.bf16.mxu0 0
  %3152 = vmatmul.mubr.bf16.gmra.mxu0 %v1972
  %v3153 = vpop.f32.mrf.mxu0
  %v3154 = vadd.f32 %v2865, %v3153
  %v3155 = vpop.f32.mrf.mxu0
  %v3156 = vpop.f32.mrf.mxu0
  %v3157 = vadd.f32 %v2868, %v3156
  %v3158 = vpop.f32.mrf.mxu0
  %3159 = vdwg.mxu0
  %3224 = vrot.lane.b32.xlu0 %v2906, 112
  %v3225 = vpop.permute.xlu0 %3224
  %3226 = vrot.lane.b32.xlu0 %v2909, 112
  %v3227 = vpop.permute.xlu0 %3226
  %3228 = vrot.lane.b32.xlu0 %v2914, 112
  %v3229 = vpop.permute.xlu0 %3228
  %3230 = vrot.lane.b32.xlu0 %v2917, 112
  %v3231 = vpop.permute.xlu0 %3230
  %3232 = vrot.lane.b32.xlu0 %v2922, 112
  %v3233 = vpop.permute.xlu0 %3232
  %3234 = vrot.lane.b32.xlu0 %v2925, 112
  %v3235 = vpop.permute.xlu0 %3234
  %3236 = vrot.lane.b32.xlu0 %v2930, 112
  %v3237 = vpop.permute.xlu0 %3236
  %3238 = vrot.lane.b32.xlu0 %v2933, 112
  %v3239 = vpop.permute.xlu0 %3238
  %3240 = vrot.lane.b32.xlu0 %v2938, 112
  %v3241 = vpop.permute.xlu0 %3240
  %3242 = vrot.lane.b32.xlu0 %v2941, 112
  %v3243 = vpop.permute.xlu0 %3242
  %3244 = vrot.lane.b32.xlu0 %v2946, 112
  %v3245 = vpop.permute.xlu0 %3244
  %3246 = vrot.lane.b32.xlu0 %v2949, 112
  %v3247 = vpop.permute.xlu0 %3246
  %3248 = vrot.lane.b32.xlu0 %v2954, 112
  %v3249 = vpop.permute.xlu0 %3248
  %3250 = vrot.lane.b32.xlu0 %v2957, 112
  %v3251 = vpop.permute.xlu0 %3250
  %3252 = vrot.lane.b32.xlu0 %v2962, 112
  %v3253 = vpop.permute.xlu0 %3252
  %3254 = vrot.lane.b32.xlu0 %v2965, 112
  %v3255 = vpop.permute.xlu0 %3254
  %3256 = vrot.lane.b32.xlu0 %v2970, 112
  %v3257 = vpop.permute.xlu0 %3256
  %3258 = vrot.lane.b32.xlu0 %v2973, 112
  %v3259 = vpop.permute.xlu0 %3258
  %3260 = vrot.lane.b32.xlu0 %v2978, 112
  %v3261 = vpop.permute.xlu0 %3260
  %3262 = vrot.lane.b32.xlu0 %v2981, 112
  %v3263 = vpop.permute.xlu0 %3262
  %3264 = vrot.lane.b32.xlu0 %v2986, 112
  %v3265 = vpop.permute.xlu0 %3264
  %3266 = vrot.lane.b32.xlu0 %v2989, 112
  %v3267 = vpop.permute.xlu0 %3266
  %3268 = vrot.lane.b32.xlu0 %v2994, 112
  %v3269 = vpop.permute.xlu0 %3268
  %3270 = vrot.lane.b32.xlu0 %v2997, 112
  %v3271 = vpop.permute.xlu0 %3270
  %3272 = vrot.lane.b32.xlu0 %v3002, 112
  %v3273 = vpop.permute.xlu0 %3272
  %3274 = vrot.lane.b32.xlu0 %v3005, 112
  %v3275 = vpop.permute.xlu0 %3274
  %3276 = vrot.lane.b32.xlu0 %v3010, 112
  %v3277 = vpop.permute.xlu0 %3276
  %3278 = vrot.lane.b32.xlu0 %v3013, 112
  %v3279 = vpop.permute.xlu0 %3278
  %3280 = vrot.lane.b32.xlu0 %v3018, 112
  %v3281 = vpop.permute.xlu0 %3280
  %3282 = vrot.lane.b32.xlu0 %v3021, 112
  %v3283 = vpop.permute.xlu0 %3282
  %3284 = vrot.lane.b32.xlu0 %v3026, 112
  %v3285 = vpop.permute.xlu0 %3284
  %3286 = vrot.lane.b32.xlu0 %v3029, 112
  %v3287 = vpop.permute.xlu0 %3286
  %3288 = vrot.lane.b32.xlu0 %v3034, 112
  %v3289 = vpop.permute.xlu0 %3288
  %3290 = vrot.lane.b32.xlu0 %v3037, 112
  %v3291 = vpop.permute.xlu0 %3290
  %3292 = vrot.lane.b32.xlu0 %v3042, 112
  %v3293 = vpop.permute.xlu0 %3292
  %3294 = vrot.lane.b32.xlu0 %v3045, 112
  %v3295 = vpop.permute.xlu0 %3294
  %3296 = vrot.lane.b32.xlu0 %v3050, 112
  %v3297 = vpop.permute.xlu0 %3296
  %3298 = vrot.lane.b32.xlu0 %v3053, 112
  %v3299 = vpop.permute.xlu0 %3298
  %3300 = vrot.lane.b32.xlu0 %v3058, 112
  %v3301 = vpop.permute.xlu0 %3300
  %3302 = vrot.lane.b32.xlu0 %v3061, 112
  %v3303 = vpop.permute.xlu0 %3302
  %3304 = vrot.lane.b32.xlu0 %v3066, 112
  %v3305 = vpop.permute.xlu0 %3304
  %3306 = vrot.lane.b32.xlu0 %v3069, 112
  %v3307 = vpop.permute.xlu0 %3306
  %3308 = vrot.lane.b32.xlu0 %v3074, 112
  %v3309 = vpop.permute.xlu0 %3308
  %3310 = vrot.lane.b32.xlu0 %v3077, 112
  %v3311 = vpop.permute.xlu0 %3310
  %3312 = vrot.lane.b32.xlu0 %v3082, 112
  %v3313 = vpop.permute.xlu0 %3312
  %3314 = vrot.lane.b32.xlu0 %v3085, 112
  %v3315 = vpop.permute.xlu0 %3314
  %3316 = vrot.lane.b32.xlu0 %v3090, 112
  %v3317 = vpop.permute.xlu0 %3316
  %3318 = vrot.lane.b32.xlu0 %v3093, 112
  %v3319 = vpop.permute.xlu0 %3318
  %3320 = vrot.lane.b32.xlu0 %v3098, 112
  %v3321 = vpop.permute.xlu0 %3320
  %3322 = vrot.lane.b32.xlu0 %v3101, 112
  %v3323 = vpop.permute.xlu0 %3322
  %3324 = vrot.lane.b32.xlu0 %v3106, 112
  %v3325 = vpop.permute.xlu0 %3324
  %3326 = vrot.lane.b32.xlu0 %v3109, 112
  %v3327 = vpop.permute.xlu0 %3326
  %3328 = vrot.lane.b32.xlu0 %v3114, 112
  %v3329 = vpop.permute.xlu0 %3328
  %3330 = vrot.lane.b32.xlu0 %v3117, 112
  %v3331 = vpop.permute.xlu0 %3330
  %3332 = vrot.lane.b32.xlu0 %v3122, 112
  %v3333 = vpop.permute.xlu0 %3332
  %3334 = vrot.lane.b32.xlu0 %v3125, 112
  %v3335 = vpop.permute.xlu0 %3334
  %3336 = vrot.lane.b32.xlu0 %v3130, 112
  %v3337 = vpop.permute.xlu0 %3336
  %3338 = vrot.lane.b32.xlu0 %v3133, 112
  %v3339 = vpop.permute.xlu0 %3338
  %3340 = vrot.lane.b32.xlu0 %v3138, 112
  %v3341 = vpop.permute.xlu0 %3340
  %3342 = vrot.lane.b32.xlu0 %v3141, 112
  %v3343 = vpop.permute.xlu0 %3342
  %3344 = vrot.lane.b32.xlu0 %v3146, 112
  %v3345 = vpop.permute.xlu0 %3344
  %3346 = vrot.lane.b32.xlu0 %v3149, 112
  %v3347 = vpop.permute.xlu0 %3346
  %3348 = vrot.lane.b32.xlu0 %v3154, 112
  %v3349 = vpop.permute.xlu0 %3348
  %3350 = vrot.lane.b32.xlu0 %v3157, 112
  %v3351 = vpop.permute.xlu0 %3350
  %v3416 = vmul.f32 %v2906, %v3225
  %v3417 = vmul.f32 %v2909, %v3227
  %v3418 = vmul.f32 %v2914, %v3229
  %v3419 = vmul.f32 %v2917, %v3231
  %v3420 = vmul.f32 %v2922, %v3233
  %v3421 = vmul.f32 %v2925, %v3235
  %v3422 = vmul.f32 %v2930, %v3237
  %v3423 = vmul.f32 %v2933, %v3239
  %v3424 = vmul.f32 %v2938, %v3241
  %v3425 = vmul.f32 %v2941, %v3243
  %v3426 = vmul.f32 %v2946, %v3245
  %v3427 = vmul.f32 %v2949, %v3247
  %v3428 = vmul.f32 %v2954, %v3249
  %v3429 = vmul.f32 %v2957, %v3251
  %v3430 = vmul.f32 %v2962, %v3253
  %v3431 = vmul.f32 %v2965, %v3255
  %v3432 = vmul.f32 %v2970, %v3257
  %v3433 = vmul.f32 %v2973, %v3259
  %v3434 = vmul.f32 %v2978, %v3261
  %v3435 = vmul.f32 %v2981, %v3263
  %v3436 = vmul.f32 %v2986, %v3265
  %v3437 = vmul.f32 %v2989, %v3267
  %v3438 = vmul.f32 %v2994, %v3269
  %v3439 = vmul.f32 %v2997, %v3271
  %v3440 = vmul.f32 %v3002, %v3273
  %v3441 = vmul.f32 %v3005, %v3275
  %v3442 = vmul.f32 %v3010, %v3277
  %v3443 = vmul.f32 %v3013, %v3279
  %v3444 = vmul.f32 %v3018, %v3281
  %v3445 = vmul.f32 %v3021, %v3283
  %v3446 = vmul.f32 %v3026, %v3285
  %v3447 = vmul.f32 %v3029, %v3287
  %v3448 = vmul.f32 %v3034, %v3289
  %v3449 = vmul.f32 %v3037, %v3291
  %v3450 = vmul.f32 %v3042, %v3293
  %v3451 = vmul.f32 %v3045, %v3295
  %v3452 = vmul.f32 %v3050, %v3297
  %v3453 = vmul.f32 %v3053, %v3299
  %v3454 = vmul.f32 %v3058, %v3301
  %v3455 = vmul.f32 %v3061, %v3303
  %v3456 = vmul.f32 %v3066, %v3305
  %v3457 = vmul.f32 %v3069, %v3307
  %v3458 = vmul.f32 %v3074, %v3309
  %v3459 = vmul.f32 %v3077, %v3311
  %v3460 = vmul.f32 %v3082, %v3313
  %v3461 = vmul.f32 %v3085, %v3315
  %v3462 = vmul.f32 %v3090, %v3317
  %v3463 = vmul.f32 %v3093, %v3319
  %v3464 = vmul.f32 %v3098, %v3321
  %v3465 = vmul.f32 %v3101, %v3323
  %v3466 = vmul.f32 %v3106, %v3325
  %v3467 = vmul.f32 %v3109, %v3327
  %v3468 = vmul.f32 %v3114, %v3329
  %v3469 = vmul.f32 %v3117, %v3331
  %v3470 = vmul.f32 %v3122, %v3333
  %v3471 = vmul.f32 %v3125, %v3335
  %v3472 = vmul.f32 %v3130, %v3337
  %v3473 = vmul.f32 %v3133, %v3339
  %v3474 = vmul.f32 %v3138, %v3341
  %v3475 = vmul.f32 %v3141, %v3343
  %v3476 = vmul.f32 %v3146, %v3345
  %v3477 = vmul.f32 %v3149, %v3347
  %v3478 = vmul.f32 %v3154, %v3349
  %v3479 = vmul.f32 %v3157, %v3351
  %v3480 = vld [vmem:[%s2] sm:$0xff]
  %v3481 = vld [vmem:[%s2 + $0x8] sm:$0xff]
  %3546 = vrot.lane.b32.xlu0 %v3416, 96
  %v3547 = vpop.permute.xlu0 %3546
  %3548 = vrot.lane.b32.xlu0 %v3417, 96
  %v3549 = vpop.permute.xlu0 %3548
  %3550 = vrot.lane.b32.xlu0 %v3418, 96
  %v3551 = vpop.permute.xlu0 %3550
  %3552 = vrot.lane.b32.xlu0 %v3419, 96
  %v3553 = vpop.permute.xlu0 %3552
  %3554 = vrot.lane.b32.xlu0 %v3420, 96
  %v3555 = vpop.permute.xlu0 %3554
  %3556 = vrot.lane.b32.xlu0 %v3421, 96
  %v3557 = vpop.permute.xlu0 %3556
  %3558 = vrot.lane.b32.xlu0 %v3422, 96
  %v3559 = vpop.permute.xlu0 %3558
  %3560 = vrot.lane.b32.xlu0 %v3423, 96
  %v3561 = vpop.permute.xlu0 %3560
  %3562 = vrot.lane.b32.xlu0 %v3424, 96
  %v3563 = vpop.permute.xlu0 %3562
  %3564 = vrot.lane.b32.xlu0 %v3425, 96
  %v3565 = vpop.permute.xlu0 %3564
  %3566 = vrot.lane.b32.xlu0 %v3426, 96
  %v3567 = vpop.permute.xlu0 %3566
  %3568 = vrot.lane.b32.xlu0 %v3427, 96
  %v3569 = vpop.permute.xlu0 %3568
  %3570 = vrot.lane.b32.xlu0 %v3428, 96
  %v3571 = vpop.permute.xlu0 %3570
  %3572 = vrot.lane.b32.xlu0 %v3429, 96
  %v3573 = vpop.permute.xlu0 %3572
  %3574 = vrot.lane.b32.xlu0 %v3430, 96
  %v3575 = vpop.permute.xlu0 %3574
  %3576 = vrot.lane.b32.xlu0 %v3431, 96
  %v3577 = vpop.permute.xlu0 %3576
  %3578 = vrot.lane.b32.xlu0 %v3432, 96
  %v3579 = vpop.permute.xlu0 %3578
  %3580 = vrot.lane.b32.xlu0 %v3433, 96
  %v3581 = vpop.permute.xlu0 %3580
  %3582 = vrot.lane.b32.xlu0 %v3434, 96
  %v3583 = vpop.permute.xlu0 %3582
  %3584 = vrot.lane.b32.xlu0 %v3435, 96
  %v3585 = vpop.permute.xlu0 %3584
  %3586 = vrot.lane.b32.xlu0 %v3436, 96
  %v3587 = vpop.permute.xlu0 %3586
  %3588 = vrot.lane.b32.xlu0 %v3437, 96
  %v3589 = vpop.permute.xlu0 %3588
  %3590 = vrot.lane.b32.xlu0 %v3438, 96
  %v3591 = vpop.permute.xlu0 %3590
  %3592 = vrot.lane.b32.xlu0 %v3439, 96
  %v3593 = vpop.permute.xlu0 %3592
  %3594 = vrot.lane.b32.xlu0 %v3440, 96
  %v3595 = vpop.permute.xlu0 %3594
  %3596 = vrot.lane.b32.xlu0 %v3441, 96
  %v3597 = vpop.permute.xlu0 %3596
  %3598 = vrot.lane.b32.xlu0 %v3442, 96
  %v3599 = vpop.permute.xlu0 %3598
  %3600 = vrot.lane.b32.xlu0 %v3443, 96
  %v3601 = vpop.permute.xlu0 %3600
  %3602 = vrot.lane.b32.xlu0 %v3444, 96
  %v3603 = vpop.permute.xlu0 %3602
  %3604 = vrot.lane.b32.xlu0 %v3445, 96
  %v3605 = vpop.permute.xlu0 %3604
  %3606 = vrot.lane.b32.xlu0 %v3446, 96
  %v3607 = vpop.permute.xlu0 %3606
  %3608 = vrot.lane.b32.xlu0 %v3447, 96
  %v3609 = vpop.permute.xlu0 %3608
  %3610 = vrot.lane.b32.xlu0 %v3448, 96
  %v3611 = vpop.permute.xlu0 %3610
  %3612 = vrot.lane.b32.xlu0 %v3449, 96
  %v3613 = vpop.permute.xlu0 %3612
  %3614 = vrot.lane.b32.xlu0 %v3450, 96
  %v3615 = vpop.permute.xlu0 %3614
  %3616 = vrot.lane.b32.xlu0 %v3451, 96
  %v3617 = vpop.permute.xlu0 %3616
  %3618 = vrot.lane.b32.xlu0 %v3452, 96
  %v3619 = vpop.permute.xlu0 %3618
  %3620 = vrot.lane.b32.xlu0 %v3453, 96
  %v3621 = vpop.permute.xlu0 %3620
  %3622 = vrot.lane.b32.xlu0 %v3454, 96
  %v3623 = vpop.permute.xlu0 %3622
  %3624 = vrot.lane.b32.xlu0 %v3455, 96
  %v3625 = vpop.permute.xlu0 %3624
  %3626 = vrot.lane.b32.xlu0 %v3456, 96
  %v3627 = vpop.permute.xlu0 %3626
  %3628 = vrot.lane.b32.xlu0 %v3457, 96
  %v3629 = vpop.permute.xlu0 %3628
  %3630 = vrot.lane.b32.xlu0 %v3458, 96
  %v3631 = vpop.permute.xlu0 %3630
  %3632 = vrot.lane.b32.xlu0 %v3459, 96
  %v3633 = vpop.permute.xlu0 %3632
  %3634 = vrot.lane.b32.xlu0 %v3460, 96
  %v3635 = vpop.permute.xlu0 %3634
  %3636 = vrot.lane.b32.xlu0 %v3461, 96
  %v3637 = vpop.permute.xlu0 %3636
  %3638 = vrot.lane.b32.xlu0 %v3462, 96
  %v3639 = vpop.permute.xlu0 %3638
  %3640 = vrot.lane.b32.xlu0 %v3463, 96
  %v3641 = vpop.permute.xlu0 %3640
  %3642 = vrot.lane.b32.xlu0 %v3464, 96
  %v3643 = vpop.permute.xlu0 %3642
  %3644 = vrot.lane.b32.xlu0 %v3465, 96
  %v3645 = vpop.permute.xlu0 %3644
  %3646 = vrot.lane.b32.xlu0 %v3466, 96
  %v3647 = vpop.permute.xlu0 %3646
  %3648 = vrot.lane.b32.xlu0 %v3467, 96
  %v3649 = vpop.permute.xlu0 %3648
  %3650 = vrot.lane.b32.xlu0 %v3468, 96
  %v3651 = vpop.permute.xlu0 %3650
  %3652 = vrot.lane.b32.xlu0 %v3469, 96
  %v3653 = vpop.permute.xlu0 %3652
  %3654 = vrot.lane.b32.xlu0 %v3470, 96
  %v3655 = vpop.permute.xlu0 %3654
  %3656 = vrot.lane.b32.xlu0 %v3471, 96
  %v3657 = vpop.permute.xlu0 %3656
  %3658 = vrot.lane.b32.xlu0 %v3472, 96
  %v3659 = vpop.permute.xlu0 %3658
  %3660 = vrot.lane.b32.xlu0 %v3473, 96
  %v3661 = vpop.permute.xlu0 %3660
  %3662 = vrot.lane.b32.xlu0 %v3474, 96
  %v3663 = vpop.permute.xlu0 %3662
  %3664 = vrot.lane.b32.xlu0 %v3475, 96
  %v3665 = vpop.permute.xlu0 %3664
  %3666 = vrot.lane.b32.xlu0 %v3476, 96
  %v3667 = vpop.permute.xlu0 %3666
  %3668 = vrot.lane.b32.xlu0 %v3477, 96
  %v3669 = vpop.permute.xlu0 %3668
  %3670 = vrot.lane.b32.xlu0 %v3478, 96
  %v3671 = vpop.permute.xlu0 %3670
  %3672 = vrot.lane.b32.xlu0 %v3479, 96
  %v3673 = vpop.permute.xlu0 %3672
  %vm3674 = vcmask 130048
  %v3675 = vsel %vm3674, %v3547, 0
  %v3677 = vsel %vm3674, %v3549, 0
  %v3679 = vsel %vm3674, %v3551, 0
  %v3681 = vsel %vm3674, %v3553, 0
  %v3683 = vsel %vm3674, %v3555, 0
  %v3685 = vsel %vm3674, %v3557, 0
  %v3687 = vsel %vm3674, %v3559, 0
  %v3689 = vsel %vm3674, %v3561, 0
  %v3691 = vsel %vm3674, %v3563, 0
  %v3693 = vsel %vm3674, %v3565, 0
  %v3695 = vsel %vm3674, %v3567, 0
  %v3697 = vsel %vm3674, %v3569, 0
  %v3699 = vsel %vm3674, %v3571, 0
  %v3701 = vsel %vm3674, %v3573, 0
  %v3703 = vsel %vm3674, %v3575, 0
  %v3705 = vsel %vm3674, %v3577, 0
  %v3707 = vsel %vm3674, %v3579, 0
  %v3709 = vsel %vm3674, %v3581, 0
  %v3711 = vsel %vm3674, %v3583, 0
  %v3713 = vsel %vm3674, %v3585, 0
  %v3715 = vsel %vm3674, %v3587, 0
  %v3717 = vsel %vm3674, %v3589, 0
  %v3719 = vsel %vm3674, %v3591, 0
  %v3721 = vsel %vm3674, %v3593, 0
  %v3723 = vsel %vm3674, %v3595, 0
  %v3725 = vsel %vm3674, %v3597, 0
  %v3727 = vsel %vm3674, %v3599, 0
  %v3729 = vsel %vm3674, %v3601, 0
  %v3731 = vsel %vm3674, %v3603, 0
  %v3733 = vsel %vm3674, %v3605, 0
  %v3735 = vsel %vm3674, %v3607, 0
  %v3737 = vsel %vm3674, %v3609, 0
  %v3739 = vsel %vm3674, %v3611, 0
  %v3741 = vsel %vm3674, %v3613, 0
  %v3743 = vsel %vm3674, %v3615, 0
  %v3745 = vsel %vm3674, %v3617, 0
  %v3747 = vsel %vm3674, %v3619, 0
  %v3749 = vsel %vm3674, %v3621, 0
  %v3751 = vsel %vm3674, %v3623, 0
  %v3753 = vsel %vm3674, %v3625, 0
  %v3755 = vsel %vm3674, %v3627, 0
  %v3757 = vsel %vm3674, %v3629, 0
  %v3759 = vsel %vm3674, %v3631, 0
  %v3761 = vsel %vm3674, %v3633, 0
  %v3763 = vsel %vm3674, %v3635, 0
  %v3765 = vsel %vm3674, %v3637, 0
  %v3767 = vsel %vm3674, %v3639, 0
  %v3769 = vsel %vm3674, %v3641, 0
  %v3771 = vsel %vm3674, %v3643, 0
  %v3773 = vsel %vm3674, %v3645, 0
  %v3775 = vsel %vm3674, %v3647, 0
  %v3777 = vsel %vm3674, %v3649, 0
  %v3779 = vsel %vm3674, %v3651, 0
  %v3781 = vsel %vm3674, %v3653, 0
  %v3783 = vsel %vm3674, %v3655, 0
  %v3785 = vsel %vm3674, %v3657, 0
  %v3787 = vsel %vm3674, %v3659, 0
  %v3789 = vsel %vm3674, %v3661, 0
  %v3791 = vsel %vm3674, %v3663, 0
  %v3793 = vsel %vm3674, %v3665, 0
  %v3795 = vsel %vm3674, %v3667, 0
  %v3797 = vsel %vm3674, %v3669, 0
  %v3799 = vsel %vm3674, %v3671, 0
  %v3801 = vsel %vm3674, %v3673, 0
  %3803 = vmatprep.subr.mxu0 0.0
  %3804 = vmatpush1.msra.mxu0 0.0
  %3805 = vmatprep.subr.mxu0 0.0
  %3806 = vmatpush1.msra.mxu0 0.0
  %3807 = vmatprep.subr.mxu0 0.0
  %3808 = vmatpush1.msra.mxu0 0.0
  %3809 = vmatprep.subr.mxu0 0.0
  %3810 = vmatpush1.msra.mxu0 0.0
  %3811 = vmatprep.subr.mxu0 0.0
  %3812 = vmatpush1.msra.mxu0 0.0
  %3813 = vmatprep.subr.mxu0 0.0
  %3814 = vmatpush1.msra.mxu0 0.0
  %3815 = vmatprep.subr.mxu0 0.0
  %3816 = vmatpush1.msra.mxu0 0.0
  %3817 = vmatprep.subr.mxu0 0.0
  %3818 = vmatpush1.msra.mxu0 0.0
  %3819 = vmatprep.subr.mxu0 0.0
  %3820 = vmatpush1.msra.mxu0 0.0
  %3821 = vmatprep.subr.mxu0 0.0
  %3822 = vmatpush1.msra.mxu0 0.0
  %3823 = vmatprep.subr.mxu0 0.0
  %3824 = vmatpush1.msra.mxu0 0.0
  %3825 = vmatprep.subr.mxu0 0.0
  %3826 = vmatpush1.msra.mxu0 0.0
  %3827 = vmatprep.subr.mxu0 0.0
  %3828 = vmatpush1.msra.mxu0 0.0
  %3829 = vmatprep.subr.mxu0 0.0
  %3830 = vmatpush1.msra.mxu0 0.0
  %3831 = vmatprep.subr.mxu0 0.0
  %3832 = vmatpush1.msra.mxu0 %v3481
  %3833 = vmatprep.subr.mxu0 0.0
  %3834 = vmatpush1.msra.mxu0 %v3480
  %3835 = vmatprep.subr.mxu0 0.0
  %3836 = vmatpush2.msra.mxu0 0.0
  %3837 = vmatprep.subr.mxu0 0.0
  %3838 = vmatpush2.msra.mxu0 0.0
  %3839 = vmatprep.subr.mxu0 0.0
  %3840 = vmatpush2.msra.mxu0 0.0
  %3841 = vmatprep.subr.mxu0 0.0
  %3842 = vmatpush2.msra.mxu0 0.0
  %3843 = vmatprep.subr.mxu0 0.0
  %3844 = vmatpush2.msra.mxu0 0.0
  %3845 = vmatprep.subr.mxu0 0.0
  %3846 = vmatpush2.msra.mxu0 0.0
  %3847 = vmatprep.subr.mxu0 0.0
  %3848 = vmatpush2.msra.mxu0 0.0
  %3849 = vmatprep.subr.mxu0 0.0
  %3850 = vmatpush2.msra.mxu0 0.0
  %3851 = vmatprep.subr.mxu0 0.0
  %3852 = vmatpush2.msra.mxu0 0.0
  %3853 = vmatprep.subr.mxu0 0.0
  %3854 = vmatpush2.msra.mxu0 0.0
  %3855 = vmatprep.subr.mxu0 0.0
  %3856 = vmatpush2.msra.mxu0 0.0
  %3857 = vmatprep.subr.mxu0 0.0
  %3858 = vmatpush2.msra.mxu0 0.0
  %3859 = vmatprep.subr.mxu0 0.0
  %3860 = vmatpush2.msra.mxu0 0.0
  %3861 = vmatprep.subr.mxu0 0.0
  %3862 = vmatpush2.msra.mxu0 0.0
  %3863 = vmatprep.subr.mxu0 0.0
  %3864 = vmatpush2.msra.mxu0 0.0
  %3865 = vmatprep.subr.mxu0 0.0
  %3866 = vmatpush2.msra.mxu0 0.0
  %3867 = vmatprep.mubr.f32.mxu0 0.0
  %3868 = vmatmul.mubr.f32.gmra.mxu0 %v3675
  %v3869 = vpop.f32.mrf.mxu0
  %v3870 = vadd.f32 0.0, %v3869
  %v3871 = vpop.f32.mrf.mxu0
  %3872 = vmatprep.mubr.f32.mxu0 0.0
  %3873 = vmatmul.mubr.f32.gmra.mxu0 %v3677
  %v3874 = vpop.f32.mrf.mxu0
  %v3875 = vadd.f32 0.0, %v3874
  %v3876 = vpop.f32.mrf.mxu0
  %3877 = vmatprep.mubr.f32.mxu0 0.0
  %3878 = vmatmul.mubr.f32.gmra.mxu0 %v3679
  %v3879 = vpop.f32.mrf.mxu0
  %v3880 = vadd.f32 0.0, %v3879
  %v3881 = vpop.f32.mrf.mxu0
  %3882 = vmatprep.mubr.f32.mxu0 0.0
  %3883 = vmatmul.mubr.f32.gmra.mxu0 %v3681
  %v3884 = vpop.f32.mrf.mxu0
  %v3885 = vadd.f32 0.0, %v3884
  %v3886 = vpop.f32.mrf.mxu0
  %3887 = vmatprep.mubr.f32.mxu0 0.0
  %3888 = vmatmul.mubr.f32.gmra.mxu0 %v3683
  %v3889 = vpop.f32.mrf.mxu0
  %v3890 = vadd.f32 0.0, %v3889
  %v3891 = vpop.f32.mrf.mxu0
  %3892 = vmatprep.mubr.f32.mxu0 0.0
  %3893 = vmatmul.mubr.f32.gmra.mxu0 %v3685
  %v3894 = vpop.f32.mrf.mxu0
  %v3895 = vadd.f32 0.0, %v3894
  %v3896 = vpop.f32.mrf.mxu0
  %3897 = vmatprep.mubr.f32.mxu0 0.0
  %3898 = vmatmul.mubr.f32.gmra.mxu0 %v3687
  %v3899 = vpop.f32.mrf.mxu0
  %v3900 = vadd.f32 0.0, %v3899
  %v3901 = vpop.f32.mrf.mxu0
  %3902 = vmatprep.mubr.f32.mxu0 0.0
  %3903 = vmatmul.mubr.f32.gmra.mxu0 %v3689
  %v3904 = vpop.f32.mrf.mxu0
  %v3905 = vadd.f32 0.0, %v3904
  %v3906 = vpop.f32.mrf.mxu0
  %3907 = vmatprep.mubr.f32.mxu0 0.0
  %3908 = vmatmul.mubr.f32.gmra.mxu0 %v3691
  %v3909 = vpop.f32.mrf.mxu0
  %v3910 = vadd.f32 0.0, %v3909
  %v3911 = vpop.f32.mrf.mxu0
  %3912 = vmatprep.mubr.f32.mxu0 0.0
  %3913 = vmatmul.mubr.f32.gmra.mxu0 %v3693
  %v3914 = vpop.f32.mrf.mxu0
  %v3915 = vadd.f32 0.0, %v3914
  %v3916 = vpop.f32.mrf.mxu0
  %3917 = vmatprep.mubr.f32.mxu0 0.0
  %3918 = vmatmul.mubr.f32.gmra.mxu0 %v3695
  %v3919 = vpop.f32.mrf.mxu0
  %v3920 = vadd.f32 0.0, %v3919
  %v3921 = vpop.f32.mrf.mxu0
  %3922 = vmatprep.mubr.f32.mxu0 0.0
  %3923 = vmatmul.mubr.f32.gmra.mxu0 %v3697
  %v3924 = vpop.f32.mrf.mxu0
  %v3925 = vadd.f32 0.0, %v3924
  %v3926 = vpop.f32.mrf.mxu0
  %3927 = vmatprep.mubr.f32.mxu0 0.0
  %3928 = vmatmul.mubr.f32.gmra.mxu0 %v3699
  %v3929 = vpop.f32.mrf.mxu0
  %v3930 = vadd.f32 0.0, %v3929
  %v3931 = vpop.f32.mrf.mxu0
  %3932 = vmatprep.mubr.f32.mxu0 0.0
  %3933 = vmatmul.mubr.f32.gmra.mxu0 %v3701
  %v3934 = vpop.f32.mrf.mxu0
  %v3935 = vadd.f32 0.0, %v3934
  %v3936 = vpop.f32.mrf.mxu0
  %3937 = vmatprep.mubr.f32.mxu0 0.0
  %3938 = vmatmul.mubr.f32.gmra.mxu0 %v3703
  %v3939 = vpop.f32.mrf.mxu0
  %v3940 = vadd.f32 0.0, %v3939
  %v3941 = vpop.f32.mrf.mxu0
  %3942 = vmatprep.mubr.f32.mxu0 0.0
  %3943 = vmatmul.mubr.f32.gmra.mxu0 %v3705
  %v3944 = vpop.f32.mrf.mxu0
  %v3945 = vadd.f32 0.0, %v3944
  %v3946 = vpop.f32.mrf.mxu0
  %3947 = vmatprep.mubr.f32.mxu0 0.0
  %3948 = vmatmul.mubr.f32.gmra.mxu0 %v3707
  %v3949 = vpop.f32.mrf.mxu0
  %v3950 = vadd.f32 0.0, %v3949
  %v3951 = vpop.f32.mrf.mxu0
  %3952 = vmatprep.mubr.f32.mxu0 0.0
  %3953 = vmatmul.mubr.f32.gmra.mxu0 %v3709
  %v3954 = vpop.f32.mrf.mxu0
  %v3955 = vadd.f32 0.0, %v3954
  %v3956 = vpop.f32.mrf.mxu0
  %3957 = vmatprep.mubr.f32.mxu0 0.0
  %3958 = vmatmul.mubr.f32.gmra.mxu0 %v3711
  %v3959 = vpop.f32.mrf.mxu0
  %v3960 = vadd.f32 0.0, %v3959
  %v3961 = vpop.f32.mrf.mxu0
  %3962 = vmatprep.mubr.f32.mxu0 0.0
  %3963 = vmatmul.mubr.f32.gmra.mxu0 %v3713
  %v3964 = vpop.f32.mrf.mxu0
  %v3965 = vadd.f32 0.0, %v3964
  %v3966 = vpop.f32.mrf.mxu0
  %3967 = vmatprep.mubr.f32.mxu0 0.0
  %3968 = vmatmul.mubr.f32.gmra.mxu0 %v3715
  %v3969 = vpop.f32.mrf.mxu0
  %v3970 = vadd.f32 0.0, %v3969
  %v3971 = vpop.f32.mrf.mxu0
  %3972 = vmatprep.mubr.f32.mxu0 0.0
  %3973 = vmatmul.mubr.f32.gmra.mxu0 %v3717
  %v3974 = vpop.f32.mrf.mxu0
  %v3975 = vadd.f32 0.0, %v3974
  %v3976 = vpop.f32.mrf.mxu0
  %3977 = vmatprep.mubr.f32.mxu0 0.0
  %3978 = vmatmul.mubr.f32.gmra.mxu0 %v3719
  %v3979 = vpop.f32.mrf.mxu0
  %v3980 = vadd.f32 0.0, %v3979
  %v3981 = vpop.f32.mrf.mxu0
  %3982 = vmatprep.mubr.f32.mxu0 0.0
  %3983 = vmatmul.mubr.f32.gmra.mxu0 %v3721
  %v3984 = vpop.f32.mrf.mxu0
  %v3985 = vadd.f32 0.0, %v3984
  %v3986 = vpop.f32.mrf.mxu0
  %3987 = vmatprep.mubr.f32.mxu0 0.0
  %3988 = vmatmul.mubr.f32.gmra.mxu0 %v3723
  %v3989 = vpop.f32.mrf.mxu0
  %v3990 = vadd.f32 0.0, %v3989
  %v3991 = vpop.f32.mrf.mxu0
  %3992 = vmatprep.mubr.f32.mxu0 0.0
  %3993 = vmatmul.mubr.f32.gmra.mxu0 %v3725
  %v3994 = vpop.f32.mrf.mxu0
  %v3995 = vadd.f32 0.0, %v3994
  %v3996 = vpop.f32.mrf.mxu0
  %3997 = vmatprep.mubr.f32.mxu0 0.0
  %3998 = vmatmul.mubr.f32.gmra.mxu0 %v3727
  %v3999 = vpop.f32.mrf.mxu0
  %v4000 = vadd.f32 0.0, %v3999
  %v4001 = vpop.f32.mrf.mxu0
  %4002 = vmatprep.mubr.f32.mxu0 0.0
  %4003 = vmatmul.mubr.f32.gmra.mxu0 %v3729
  %v4004 = vpop.f32.mrf.mxu0
  %v4005 = vadd.f32 0.0, %v4004
  %v4006 = vpop.f32.mrf.mxu0
  %4007 = vmatprep.mubr.f32.mxu0 0.0
  %4008 = vmatmul.mubr.f32.gmra.mxu0 %v3731
  %v4009 = vpop.f32.mrf.mxu0
  %v4010 = vadd.f32 0.0, %v4009
  %v4011 = vpop.f32.mrf.mxu0
  %4012 = vmatprep.mubr.f32.mxu0 0.0
  %4013 = vmatmul.mubr.f32.gmra.mxu0 %v3733
  %v4014 = vpop.f32.mrf.mxu0
  %v4015 = vadd.f32 0.0, %v4014
  %v4016 = vpop.f32.mrf.mxu0
  %4017 = vmatprep.mubr.f32.mxu0 0.0
  %4018 = vmatmul.mubr.f32.gmra.mxu0 %v3735
  %v4019 = vpop.f32.mrf.mxu0
  %v4020 = vadd.f32 0.0, %v4019
  %v4021 = vpop.f32.mrf.mxu0
  %4022 = vmatprep.mubr.f32.mxu0 0.0
  %4023 = vmatmul.mubr.f32.gmra.mxu0 %v3737
  %v4024 = vpop.f32.mrf.mxu0
  %v4025 = vadd.f32 0.0, %v4024
  %v4026 = vpop.f32.mrf.mxu0
  %4027 = vmatprep.mubr.f32.mxu0 0.0
  %4028 = vmatmul.mubr.f32.gmra.mxu0 %v3739
  %v4029 = vpop.f32.mrf.mxu0
  %v4030 = vadd.f32 0.0, %v4029
  %v4031 = vpop.f32.mrf.mxu0
  %4032 = vmatprep.mubr.f32.mxu0 0.0
  %4033 = vmatmul.mubr.f32.gmra.mxu0 %v3741
  %v4034 = vpop.f32.mrf.mxu0
  %v4035 = vadd.f32 0.0, %v4034
  %v4036 = vpop.f32.mrf.mxu0
  %4037 = vmatprep.mubr.f32.mxu0 0.0
  %4038 = vmatmul.mubr.f32.gmra.mxu0 %v3743
  %v4039 = vpop.f32.mrf.mxu0
  %v4040 = vadd.f32 0.0, %v4039
  %v4041 = vpop.f32.mrf.mxu0
  %4042 = vmatprep.mubr.f32.mxu0 0.0
  %4043 = vmatmul.mubr.f32.gmra.mxu0 %v3745
  %v4044 = vpop.f32.mrf.mxu0
  %v4045 = vadd.f32 0.0, %v4044
  %v4046 = vpop.f32.mrf.mxu0
  %4047 = vmatprep.mubr.f32.mxu0 0.0
  %4048 = vmatmul.mubr.f32.gmra.mxu0 %v3747
  %v4049 = vpop.f32.mrf.mxu0
  %v4050 = vadd.f32 0.0, %v4049
  %v4051 = vpop.f32.mrf.mxu0
  %4052 = vmatprep.mubr.f32.mxu0 0.0
  %4053 = vmatmul.mubr.f32.gmra.mxu0 %v3749
  %v4054 = vpop.f32.mrf.mxu0
  %v4055 = vadd.f32 0.0, %v4054
  %v4056 = vpop.f32.mrf.mxu0
  %4057 = vmatprep.mubr.f32.mxu0 0.0
  %4058 = vmatmul.mubr.f32.gmra.mxu0 %v3751
  %v4059 = vpop.f32.mrf.mxu0
  %v4060 = vadd.f32 0.0, %v4059
  %v4061 = vpop.f32.mrf.mxu0
  %4062 = vmatprep.mubr.f32.mxu0 0.0
  %4063 = vmatmul.mubr.f32.gmra.mxu0 %v3753
  %v4064 = vpop.f32.mrf.mxu0
  %v4065 = vadd.f32 0.0, %v4064
  %v4066 = vpop.f32.mrf.mxu0
  %4067 = vmatprep.mubr.f32.mxu0 0.0
  %4068 = vmatmul.mubr.f32.gmra.mxu0 %v3755
  %v4069 = vpop.f32.mrf.mxu0
  %v4070 = vadd.f32 0.0, %v4069
  %v4071 = vpop.f32.mrf.mxu0
  %4072 = vmatprep.mubr.f32.mxu0 0.0
  %4073 = vmatmul.mubr.f32.gmra.mxu0 %v3757
  %v4074 = vpop.f32.mrf.mxu0
  %v4075 = vadd.f32 0.0, %v4074
  %v4076 = vpop.f32.mrf.mxu0
  %4077 = vmatprep.mubr.f32.mxu0 0.0
  %4078 = vmatmul.mubr.f32.gmra.mxu0 %v3759
  %v4079 = vpop.f32.mrf.mxu0
  %v4080 = vadd.f32 0.0, %v4079
  %v4081 = vpop.f32.mrf.mxu0
  %4082 = vmatprep.mubr.f32.mxu0 0.0
  %4083 = vmatmul.mubr.f32.gmra.mxu0 %v3761
  %v4084 = vpop.f32.mrf.mxu0
  %v4085 = vadd.f32 0.0, %v4084
  %v4086 = vpop.f32.mrf.mxu0
  %4087 = vmatprep.mubr.f32.mxu0 0.0
  %4088 = vmatmul.mubr.f32.gmra.mxu0 %v3763
  %v4089 = vpop.f32.mrf.mxu0
  %v4090 = vadd.f32 0.0, %v4089
  %v4091 = vpop.f32.mrf.mxu0
  %4092 = vmatprep.mubr.f32.mxu0 0.0
  %4093 = vmatmul.mubr.f32.gmra.mxu0 %v3765
  %v4094 = vpop.f32.mrf.mxu0
  %v4095 = vadd.f32 0.0, %v4094
  %v4096 = vpop.f32.mrf.mxu0
  %4097 = vmatprep.mubr.f32.mxu0 0.0
  %4098 = vmatmul.mubr.f32.gmra.mxu0 %v3767
  %v4099 = vpop.f32.mrf.mxu0
  %v4100 = vadd.f32 0.0, %v4099
  %v4101 = vpop.f32.mrf.mxu0
  %4102 = vmatprep.mubr.f32.mxu0 0.0
  %4103 = vmatmul.mubr.f32.gmra.mxu0 %v3769
  %v4104 = vpop.f32.mrf.mxu0
  %v4105 = vadd.f32 0.0, %v4104
  %v4106 = vpop.f32.mrf.mxu0
  %4107 = vmatprep.mubr.f32.mxu0 0.0
  %4108 = vmatmul.mubr.f32.gmra.mxu0 %v3771
  %v4109 = vpop.f32.mrf.mxu0
  %v4110 = vadd.f32 0.0, %v4109
  %v4111 = vpop.f32.mrf.mxu0
  %4112 = vmatprep.mubr.f32.mxu0 0.0
  %4113 = vmatmul.mubr.f32.gmra.mxu0 %v3773
  %v4114 = vpop.f32.mrf.mxu0
  %v4115 = vadd.f32 0.0, %v4114
  %v4116 = vpop.f32.mrf.mxu0
  %4117 = vmatprep.mubr.f32.mxu0 0.0
  %4118 = vmatmul.mubr.f32.gmra.mxu0 %v3775
  %v4119 = vpop.f32.mrf.mxu0
  %v4120 = vadd.f32 0.0, %v4119
  %v4121 = vpop.f32.mrf.mxu0
  %4122 = vmatprep.mubr.f32.mxu0 0.0
  %4123 = vmatmul.mubr.f32.gmra.mxu0 %v3777
  %v4124 = vpop.f32.mrf.mxu0
  %v4125 = vadd.f32 0.0, %v4124
  %v4126 = vpop.f32.mrf.mxu0
  %4127 = vmatprep.mubr.f32.mxu0 0.0
  %4128 = vmatmul.mubr.f32.gmra.mxu0 %v3779
  %v4129 = vpop.f32.mrf.mxu0
  %v4130 = vadd.f32 0.0, %v4129
  %v4131 = vpop.f32.mrf.mxu0
  %4132 = vmatprep.mubr.f32.mxu0 0.0
  %4133 = vmatmul.mubr.f32.gmra.mxu0 %v3781
  %v4134 = vpop.f32.mrf.mxu0
  %v4135 = vadd.f32 0.0, %v4134
  %v4136 = vpop.f32.mrf.mxu0
  %4137 = vmatprep.mubr.f32.mxu0 0.0
  %4138 = vmatmul.mubr.f32.gmra.mxu0 %v3783
  %v4139 = vpop.f32.mrf.mxu0
  %v4140 = vadd.f32 0.0, %v4139
  %v4141 = vpop.f32.mrf.mxu0
  %4142 = vmatprep.mubr.f32.mxu0 0.0
  %4143 = vmatmul.mubr.f32.gmra.mxu0 %v3785
  %v4144 = vpop.f32.mrf.mxu0
  %v4145 = vadd.f32 0.0, %v4144
  %v4146 = vpop.f32.mrf.mxu0
  %4147 = vmatprep.mubr.f32.mxu0 0.0
  %4148 = vmatmul.mubr.f32.gmra.mxu0 %v3787
  %v4149 = vpop.f32.mrf.mxu0
  %v4150 = vadd.f32 0.0, %v4149
  %v4151 = vpop.f32.mrf.mxu0
  %4152 = vmatprep.mubr.f32.mxu0 0.0
  %4153 = vmatmul.mubr.f32.gmra.mxu0 %v3789
  %v4154 = vpop.f32.mrf.mxu0
  %v4155 = vadd.f32 0.0, %v4154
  %v4156 = vpop.f32.mrf.mxu0
  %4157 = vmatprep.mubr.f32.mxu0 0.0
  %4158 = vmatmul.mubr.f32.gmra.mxu0 %v3791
  %v4159 = vpop.f32.mrf.mxu0
  %v4160 = vadd.f32 0.0, %v4159
  %v4161 = vpop.f32.mrf.mxu0
  %4162 = vmatprep.mubr.f32.mxu0 0.0
  %4163 = vmatmul.mubr.f32.gmra.mxu0 %v3793
  %v4164 = vpop.f32.mrf.mxu0
  %v4165 = vadd.f32 0.0, %v4164
  %v4166 = vpop.f32.mrf.mxu0
  %4167 = vmatprep.mubr.f32.mxu0 0.0
  %4168 = vmatmul.mubr.f32.gmra.mxu0 %v3795
  %v4169 = vpop.f32.mrf.mxu0
  %v4170 = vadd.f32 0.0, %v4169
  %v4171 = vpop.f32.mrf.mxu0
  %4172 = vmatprep.mubr.f32.mxu0 0.0
  %4173 = vmatmul.mubr.f32.gmra.mxu0 %v3797
  %v4174 = vpop.f32.mrf.mxu0
  %v4175 = vadd.f32 0.0, %v4174
  %v4176 = vpop.f32.mrf.mxu0
  %4177 = vmatprep.mubr.f32.mxu0 0.0
  %4178 = vmatmul.mubr.f32.gmra.mxu0 %v3799
  %v4179 = vpop.f32.mrf.mxu0
  %v4180 = vadd.f32 0.0, %v4179
  %v4181 = vpop.f32.mrf.mxu0
  %4182 = vmatprep.mubr.f32.mxu0 0.0
  %4183 = vmatmul.mubr.f32.gmra.mxu0 %v3801
  %v4184 = vpop.f32.mrf.mxu0
  %v4185 = vadd.f32 0.0, %v4184
  %v4186 = vpop.f32.mrf.mxu0
  %4187 = vdwg.mxu0
  %v4188 = vadd.f32 %v2906, %v3870
  %v4189 = vadd.f32 %v2909, %v3875
  %v4190 = vadd.f32 %v2914, %v3880
  %v4191 = vadd.f32 %v2917, %v3885
  %v4192 = vadd.f32 %v2922, %v3890
  %v4193 = vadd.f32 %v2925, %v3895
  %v4194 = vadd.f32 %v2930, %v3900
  %v4195 = vadd.f32 %v2933, %v3905
  %v4196 = vadd.f32 %v2938, %v3910
  %v4197 = vadd.f32 %v2941, %v3915
  %v4198 = vadd.f32 %v2946, %v3920
  %v4199 = vadd.f32 %v2949, %v3925
  %v4200 = vadd.f32 %v2954, %v3930
  %v4201 = vadd.f32 %v2957, %v3935
  %v4202 = vadd.f32 %v2962, %v3940
  %v4203 = vadd.f32 %v2965, %v3945
  %v4204 = vadd.f32 %v2970, %v3950
  %v4205 = vadd.f32 %v2973, %v3955
  %v4206 = vadd.f32 %v2978, %v3960
  %v4207 = vadd.f32 %v2981, %v3965
  %v4208 = vadd.f32 %v2986, %v3970
  %v4209 = vadd.f32 %v2989, %v3975
  %v4210 = vadd.f32 %v2994, %v3980
  %v4211 = vadd.f32 %v2997, %v3985
  %v4212 = vadd.f32 %v3002, %v3990
  %v4213 = vadd.f32 %v3005, %v3995
  %v4214 = vadd.f32 %v3010, %v4000
  %v4215 = vadd.f32 %v3013, %v4005
  %v4216 = vadd.f32 %v3018, %v4010
  %v4217 = vadd.f32 %v3021, %v4015
  %v4218 = vadd.f32 %v3026, %v4020
  %v4219 = vadd.f32 %v3029, %v4025
  %v4220 = vadd.f32 %v3034, %v4030
  %v4221 = vadd.f32 %v3037, %v4035
  %v4222 = vadd.f32 %v3042, %v4040
  %v4223 = vadd.f32 %v3045, %v4045
  %v4224 = vadd.f32 %v3050, %v4050
  %v4225 = vadd.f32 %v3053, %v4055
  %v4226 = vadd.f32 %v3058, %v4060
  %v4227 = vadd.f32 %v3061, %v4065
  %v4228 = vadd.f32 %v3066, %v4070
  %v4229 = vadd.f32 %v3069, %v4075
  %v4230 = vadd.f32 %v3074, %v4080
  %v4231 = vadd.f32 %v3077, %v4085
  %v4232 = vadd.f32 %v3082, %v4090
  %v4233 = vadd.f32 %v3085, %v4095
  %v4234 = vadd.f32 %v3090, %v4100
  %v4235 = vadd.f32 %v3093, %v4105
  %v4236 = vadd.f32 %v3098, %v4110
  %v4237 = vadd.f32 %v3101, %v4115
  %v4238 = vadd.f32 %v3106, %v4120
  %v4239 = vadd.f32 %v3109, %v4125
  %v4240 = vadd.f32 %v3114, %v4130
  %v4241 = vadd.f32 %v3117, %v4135
  %v4242 = vadd.f32 %v3122, %v4140
  %v4243 = vadd.f32 %v3125, %v4145
  %v4244 = vadd.f32 %v3130, %v4150
  %v4245 = vadd.f32 %v3133, %v4155
  %v4246 = vadd.f32 %v3138, %v4160
  %v4247 = vadd.f32 %v3141, %v4165
  %v4248 = vadd.f32 %v3146, %v4170
  %v4249 = vadd.f32 %v3149, %v4175
  %v4250 = vadd.f32 %v3154, %v4180
  %v4251 = vadd.f32 %v3157, %v4185
  %v4252 = vld [vmem:[%s2 + $0x50] sm:$0x1]
  %v4253 = vlaneseq
  %v4254 = vshrl.u32 %v4253, 7
  %v4255 = vsub.s32 0, %v4254
  %v4256 = vrot.slane %v4252, %v4255
  %v4257 = vadd.f32 %v4188, %v4256
  %v4258 = vadd.f32 %v4189, %v4256
  %v4259 = vadd.f32 %v4190, %v4256
  %v4260 = vadd.f32 %v4191, %v4256
  %v4261 = vadd.f32 %v4192, %v4256
  %v4262 = vadd.f32 %v4193, %v4256
  %v4263 = vadd.f32 %v4194, %v4256
  %v4264 = vadd.f32 %v4195, %v4256
  %v4265 = vadd.f32 %v4196, %v4256
  %v4266 = vadd.f32 %v4197, %v4256
  %v4267 = vadd.f32 %v4198, %v4256
  %v4268 = vadd.f32 %v4199, %v4256
  %v4269 = vadd.f32 %v4200, %v4256
  %v4270 = vadd.f32 %v4201, %v4256
  %v4271 = vadd.f32 %v4202, %v4256
  %v4272 = vadd.f32 %v4203, %v4256
  %v4273 = vadd.f32 %v4204, %v4256
  %v4274 = vadd.f32 %v4205, %v4256
  %v4275 = vadd.f32 %v4206, %v4256
  %v4276 = vadd.f32 %v4207, %v4256
  %v4277 = vadd.f32 %v4208, %v4256
  %v4278 = vadd.f32 %v4209, %v4256
  %v4279 = vadd.f32 %v4210, %v4256
  %v4280 = vadd.f32 %v4211, %v4256
  %v4281 = vadd.f32 %v4212, %v4256
  %v4282 = vadd.f32 %v4213, %v4256
  %v4283 = vadd.f32 %v4214, %v4256
  %v4284 = vadd.f32 %v4215, %v4256
  %v4285 = vadd.f32 %v4216, %v4256
  %v4286 = vadd.f32 %v4217, %v4256
  %v4287 = vadd.f32 %v4218, %v4256
  %v4288 = vadd.f32 %v4219, %v4256
  %v4289 = vadd.f32 %v4220, %v4256
  %v4290 = vadd.f32 %v4221, %v4256
  %v4291 = vadd.f32 %v4222, %v4256
  %v4292 = vadd.f32 %v4223, %v4256
  %v4293 = vadd.f32 %v4224, %v4256
  %v4294 = vadd.f32 %v4225, %v4256
  %v4295 = vadd.f32 %v4226, %v4256
  %v4296 = vadd.f32 %v4227, %v4256
  %v4297 = vadd.f32 %v4228, %v4256
  %v4298 = vadd.f32 %v4229, %v4256
  %v4299 = vadd.f32 %v4230, %v4256
  %v4300 = vadd.f32 %v4231, %v4256
  %v4301 = vadd.f32 %v4232, %v4256
  %v4302 = vadd.f32 %v4233, %v4256
  %v4303 = vadd.f32 %v4234, %v4256
  %v4304 = vadd.f32 %v4235, %v4256
  %v4305 = vadd.f32 %v4236, %v4256
  %v4306 = vadd.f32 %v4237, %v4256
  %v4307 = vadd.f32 %v4238, %v4256
  %v4308 = vadd.f32 %v4239, %v4256
  %v4309 = vadd.f32 %v4240, %v4256
  %v4310 = vadd.f32 %v4241, %v4256
  %v4311 = vadd.f32 %v4242, %v4256
  %v4312 = vadd.f32 %v4243, %v4256
  %v4313 = vadd.f32 %v4244, %v4256
  %v4314 = vadd.f32 %v4245, %v4256
  %v4315 = vadd.f32 %v4246, %v4256
  %v4316 = vadd.f32 %v4247, %v4256
  %v4317 = vadd.f32 %v4248, %v4256
  %v4318 = vadd.f32 %v4249, %v4256
  %v4319 = vadd.f32 %v4250, %v4256
  %v4320 = vadd.f32 %v4251, %v4256
  %v4321 = vmax.f32 %v4257, 0.0
  %v4322 = vmax.f32 %v4258, 0.0
  %v4323 = vmax.f32 %v4259, 0.0
  %v4324 = vmax.f32 %v4260, 0.0
  %v4325 = vmax.f32 %v4261, 0.0
  %v4326 = vmax.f32 %v4262, 0.0
  %v4327 = vmax.f32 %v4263, 0.0
  %v4328 = vmax.f32 %v4264, 0.0
  %v4329 = vmax.f32 %v4265, 0.0
  %v4330 = vmax.f32 %v4266, 0.0
  %v4331 = vmax.f32 %v4267, 0.0
  %v4332 = vmax.f32 %v4268, 0.0
  %v4333 = vmax.f32 %v4269, 0.0
  %v4334 = vmax.f32 %v4270, 0.0
  %v4335 = vmax.f32 %v4271, 0.0
  %v4336 = vmax.f32 %v4272, 0.0
  %v4337 = vmax.f32 %v4273, 0.0
  %v4338 = vmax.f32 %v4274, 0.0
  %v4339 = vmax.f32 %v4275, 0.0
  %v4340 = vmax.f32 %v4276, 0.0
  %v4341 = vmax.f32 %v4277, 0.0
  %v4342 = vmax.f32 %v4278, 0.0
  %v4343 = vmax.f32 %v4279, 0.0
  %v4344 = vmax.f32 %v4280, 0.0
  %v4345 = vmax.f32 %v4281, 0.0
  %v4346 = vmax.f32 %v4282, 0.0
  %v4347 = vmax.f32 %v4283, 0.0
  %v4348 = vmax.f32 %v4284, 0.0
  %v4349 = vmax.f32 %v4285, 0.0
  %v4350 = vmax.f32 %v4286, 0.0
  %v4351 = vmax.f32 %v4287, 0.0
  %v4352 = vmax.f32 %v4288, 0.0
  %v4353 = vmax.f32 %v4289, 0.0
  %v4354 = vmax.f32 %v4290, 0.0
  %v4355 = vmax.f32 %v4291, 0.0
  %v4356 = vmax.f32 %v4292, 0.0
  %v4357 = vmax.f32 %v4293, 0.0
  %v4358 = vmax.f32 %v4294, 0.0
  %v4359 = vmax.f32 %v4295, 0.0
  %v4360 = vmax.f32 %v4296, 0.0
  %v4361 = vmax.f32 %v4297, 0.0
  %v4362 = vmax.f32 %v4298, 0.0
  %v4363 = vmax.f32 %v4299, 0.0
  %v4364 = vmax.f32 %v4300, 0.0
  %v4365 = vmax.f32 %v4301, 0.0
  %v4366 = vmax.f32 %v4302, 0.0
  %v4367 = vmax.f32 %v4303, 0.0
  %v4368 = vmax.f32 %v4304, 0.0
  %v4369 = vmax.f32 %v4305, 0.0
  %v4370 = vmax.f32 %v4306, 0.0
  %v4371 = vmax.f32 %v4307, 0.0
  %v4372 = vmax.f32 %v4308, 0.0
  %v4373 = vmax.f32 %v4309, 0.0
  %v4374 = vmax.f32 %v4310, 0.0
  %v4375 = vmax.f32 %v4311, 0.0
  %v4376 = vmax.f32 %v4312, 0.0
  %v4377 = vmax.f32 %v4313, 0.0
  %v4378 = vmax.f32 %v4314, 0.0
  %v4379 = vmax.f32 %v4315, 0.0
  %v4380 = vmax.f32 %v4316, 0.0
  %v4381 = vmax.f32 %v4317, 0.0
  %v4382 = vmax.f32 %v4318, 0.0
  %v4383 = vmax.f32 %v4319, 0.0
  %v4384 = vmax.f32 %v4320, 0.0
  %v4385 = vld [vmem:[%s2 + $0x10] sm:$0xff]
  %v4386 = vld [vmem:[%s2 + $0x18] sm:$0xff]
  %v4387 = vld [vmem:[%s2 + $0x20] sm:$0xff]
  %v4388 = vld [vmem:[%s2 + $0x28] sm:$0xff]
  %v4389 = vld [vmem:[%s2 + $0x51] sm:$0x1]
  %v4390 = vlaneseq
  %v4391 = vshrl.u32 %v4390, 7
  %v4392 = vsub.s32 0, %v4391
  %v4393 = vrot.slane %v4389, %v4392
  %vm4394 = vcmask 261120
  %v4396 = vsel %vm4394, %v4321, 0
  %v4399 = vsel %vm4394, %v4322, 0
  %v4402 = vsel %vm4394, %v4323, 0
  %v4405 = vsel %vm4394, %v4324, 0
  %v4408 = vsel %vm4394, %v4325, 0
  %v4411 = vsel %vm4394, %v4326, 0
  %v4414 = vsel %vm4394, %v4327, 0
  %v4417 = vsel %vm4394, %v4328, 0
  %v4420 = vsel %vm4394, %v4329, 0
  %v4423 = vsel %vm4394, %v4330, 0
  %v4426 = vsel %vm4394, %v4331, 0
  %v4429 = vsel %vm4394, %v4332, 0
  %v4432 = vsel %vm4394, %v4333, 0
  %v4435 = vsel %vm4394, %v4334, 0
  %v4438 = vsel %vm4394, %v4335, 0
  %v4441 = vsel %vm4394, %v4336, 0
  %v4444 = vsel %vm4394, %v4337, 0
  %v4447 = vsel %vm4394, %v4338, 0
  %v4450 = vsel %vm4394, %v4339, 0
  %v4453 = vsel %vm4394, %v4340, 0
  %v4456 = vsel %vm4394, %v4341, 0
  %v4459 = vsel %vm4394, %v4342, 0
  %v4462 = vsel %vm4394, %v4343, 0
  %v4465 = vsel %vm4394, %v4344, 0
  %v4468 = vsel %vm4394, %v4345, 0
  %v4471 = vsel %vm4394, %v4346, 0
  %v4474 = vsel %vm4394, %v4347, 0
  %v4477 = vsel %vm4394, %v4348, 0
  %v4480 = vsel %vm4394, %v4349, 0
  %v4483 = vsel %vm4394, %v4350, 0
  %v4486 = vsel %vm4394, %v4351, 0
  %v4489 = vsel %vm4394, %v4352, 0
  %v4492 = vsel %vm4394, %v4353, 0
  %v4495 = vsel %vm4394, %v4354, 0
  %v4498 = vsel %vm4394, %v4355, 0
  %v4501 = vsel %vm4394, %v4356, 0
  %v4504 = vsel %vm4394, %v4357, 0
  %v4507 = vsel %vm4394, %v4358, 0
  %v4510 = vsel %vm4394, %v4359, 0
  %v4513 = vsel %vm4394, %v4360, 0
  %v4516 = vsel %vm4394, %v4361, 0
  %v4519 = vsel %vm4394, %v4362, 0
  %v4522 = vsel %vm4394, %v4363, 0
  %v4525 = vsel %vm4394, %v4364, 0
  %v4528 = vsel %vm4394, %v4365, 0
  %v4531 = vsel %vm4394, %v4366, 0
  %v4534 = vsel %vm4394, %v4367, 0
  %v4537 = vsel %vm4394, %v4368, 0
  %v4540 = vsel %vm4394, %v4369, 0
  %v4543 = vsel %vm4394, %v4370, 0
  %v4546 = vsel %vm4394, %v4371, 0
  %v4549 = vsel %vm4394, %v4372, 0
  %v4552 = vsel %vm4394, %v4373, 0
  %v4555 = vsel %vm4394, %v4374, 0
  %v4558 = vsel %vm4394, %v4375, 0
  %v4561 = vsel %vm4394, %v4376, 0
  %v4564 = vsel %vm4394, %v4377, 0
  %v4567 = vsel %vm4394, %v4378, 0
  %v4570 = vsel %vm4394, %v4379, 0
  %v4573 = vsel %vm4394, %v4380, 0
  %v4576 = vsel %vm4394, %v4381, 0
  %v4579 = vsel %vm4394, %v4382, 0
  %v4582 = vsel %vm4394, %v4383, 0
  %v4585 = vsel %vm4394, %v4384, 0
  %4587 = vmatprep.subr.mxu0 0.0
  %4588 = vmatpush1.msra.mxu0 0.0
  %4589 = vmatprep.subr.mxu0 0.0
  %4590 = vmatpush1.msra.mxu0 0.0
  %4591 = vmatprep.subr.mxu0 0.0
  %4592 = vmatpush1.msra.mxu0 0.0
  %4593 = vmatprep.subr.mxu0 0.0
  %4594 = vmatpush1.msra.mxu0 0.0
  %4595 = vmatprep.subr.mxu0 0.0
  %4596 = vmatpush1.msra.mxu0 0.0
  %4597 = vmatprep.subr.mxu0 0.0
  %4598 = vmatpush1.msra.mxu0 0.0
  %4599 = vmatprep.subr.mxu0 0.0
  %4600 = vmatpush1.msra.mxu0 0.0
  %4601 = vmatprep.subr.mxu0 0.0
  %4602 = vmatpush1.msra.mxu0 0.0
  %4603 = vmatprep.subr.mxu0 0.0
  %4604 = vmatpush1.msra.mxu0 0.0
  %4605 = vmatprep.subr.mxu0 0.0
  %4606 = vmatpush1.msra.mxu0 0.0
  %4607 = vmatprep.subr.mxu0 0.0
  %4608 = vmatpush1.msra.mxu0 0.0
  %4609 = vmatprep.subr.mxu0 0.0
  %4610 = vmatpush1.msra.mxu0 0.0
  %4611 = vmatprep.subr.mxu0 0.0
  %4612 = vmatpush1.msra.mxu0 %v4388
  %4613 = vmatprep.subr.mxu0 0.0
  %4614 = vmatpush1.msra.mxu0 %v4387
  %4615 = vmatprep.subr.mxu0 0.0
  %4616 = vmatpush1.msra.mxu0 %v4386
  %4617 = vmatprep.subr.mxu0 0.0
  %4618 = vmatpush1.msra.mxu0 %v4385
  %4619 = vmatprep.subr.mxu0 0.0
  %4620 = vmatpush2.msra.mxu0 0.0
  %4621 = vmatprep.subr.mxu0 0.0
  %4622 = vmatpush2.msra.mxu0 0.0
  %4623 = vmatprep.subr.mxu0 0.0
  %4624 = vmatpush2.msra.mxu0 0.0
  %4625 = vmatprep.subr.mxu0 0.0
  %4626 = vmatpush2.msra.mxu0 0.0
  %4627 = vmatprep.subr.mxu0 0.0
  %4628 = vmatpush2.msra.mxu0 0.0
  %4629 = vmatprep.subr.mxu0 0.0
  %4630 = vmatpush2.msra.mxu0 0.0
  %4631 = vmatprep.subr.mxu0 0.0
  %4632 = vmatpush2.msra.mxu0 0.0
  %4633 = vmatprep.subr.mxu0 0.0
  %4634 = vmatpush2.msra.mxu0 0.0
  %4635 = vmatprep.subr.mxu0 0.0
  %4636 = vmatpush2.msra.mxu0 0.0
  %4637 = vmatprep.subr.mxu0 0.0
  %4638 = vmatpush2.msra.mxu0 0.0
  %4639 = vmatprep.subr.mxu0 0.0
  %4640 = vmatpush2.msra.mxu0 0.0
  %4641 = vmatprep.subr.mxu0 0.0
  %4642 = vmatpush2.msra.mxu0 0.0
  %4643 = vmatprep.subr.mxu0 0.0
  %4644 = vmatpush2.msra.mxu0 0.0
  %4645 = vmatprep.subr.mxu0 0.0
  %4646 = vmatpush2.msra.mxu0 0.0
  %4647 = vmatprep.subr.mxu0 0.0
  %4648 = vmatpush2.msra.mxu0 0.0
  %4649 = vmatprep.subr.mxu0 0.0
  %4650 = vmatpush2.msra.mxu0 0.0
  %4651 = vmatprep.mubr.f32.mxu0 0.0
  %4652 = vmatmul.mubr.f32.gmra.mxu0 %v4396
  %v4653 = vpop.f32.mrf.mxu0
  %v4654 = vadd.f32 %v4393, %v4653
  %v4655 = vpop.f32.mrf.mxu0
  %4656 = vmatprep.mubr.f32.mxu0 0.0
  %4657 = vmatmul.mubr.f32.gmra.mxu0 %v4399
  %v4658 = vpop.f32.mrf.mxu0
  %v4659 = vadd.f32 %v4393, %v4658
  %v4660 = vpop.f32.mrf.mxu0
  %4661 = vmatprep.mubr.f32.mxu0 0.0
  %4662 = vmatmul.mubr.f32.gmra.mxu0 %v4402
  %v4663 = vpop.f32.mrf.mxu0
  %v4664 = vadd.f32 %v4393, %v4663
  %v4665 = vpop.f32.mrf.mxu0
  %4666 = vmatprep.mubr.f32.mxu0 0.0
  %4667 = vmatmul.mubr.f32.gmra.mxu0 %v4405
  %v4668 = vpop.f32.mrf.mxu0
  %v4669 = vadd.f32 %v4393, %v4668
  %v4670 = vpop.f32.mrf.mxu0
  %4671 = vmatprep.mubr.f32.mxu0 0.0
  %4672 = vmatmul.mubr.f32.gmra.mxu0 %v4408
  %v4673 = vpop.f32.mrf.mxu0
  %v4674 = vadd.f32 %v4393, %v4673
  %v4675 = vpop.f32.mrf.mxu0
  %4676 = vmatprep.mubr.f32.mxu0 0.0
  %4677 = vmatmul.mubr.f32.gmra.mxu0 %v4411
  %v4678 = vpop.f32.mrf.mxu0
  %v4679 = vadd.f32 %v4393, %v4678
  %v4680 = vpop.f32.mrf.mxu0
  %4681 = vmatprep.mubr.f32.mxu0 0.0
  %4682 = vmatmul.mubr.f32.gmra.mxu0 %v4414
  %v4683 = vpop.f32.mrf.mxu0
  %v4684 = vadd.f32 %v4393, %v4683
  %v4685 = vpop.f32.mrf.mxu0
  %4686 = vmatprep.mubr.f32.mxu0 0.0
  %4687 = vmatmul.mubr.f32.gmra.mxu0 %v4417
  %v4688 = vpop.f32.mrf.mxu0
  %v4689 = vadd.f32 %v4393, %v4688
  %v4690 = vpop.f32.mrf.mxu0
  %4691 = vmatprep.mubr.f32.mxu0 0.0
  %4692 = vmatmul.mubr.f32.gmra.mxu0 %v4420
  %v4693 = vpop.f32.mrf.mxu0
  %v4694 = vadd.f32 %v4393, %v4693
  %v4695 = vpop.f32.mrf.mxu0
  %4696 = vmatprep.mubr.f32.mxu0 0.0
  %4697 = vmatmul.mubr.f32.gmra.mxu0 %v4423
  %v4698 = vpop.f32.mrf.mxu0
  %v4699 = vadd.f32 %v4393, %v4698
  %v4700 = vpop.f32.mrf.mxu0
  %4701 = vmatprep.mubr.f32.mxu0 0.0
  %4702 = vmatmul.mubr.f32.gmra.mxu0 %v4426
  %v4703 = vpop.f32.mrf.mxu0
  %v4704 = vadd.f32 %v4393, %v4703
  %v4705 = vpop.f32.mrf.mxu0
  %4706 = vmatprep.mubr.f32.mxu0 0.0
  %4707 = vmatmul.mubr.f32.gmra.mxu0 %v4429
  %v4708 = vpop.f32.mrf.mxu0
  %v4709 = vadd.f32 %v4393, %v4708
  %v4710 = vpop.f32.mrf.mxu0
  %4711 = vmatprep.mubr.f32.mxu0 0.0
  %4712 = vmatmul.mubr.f32.gmra.mxu0 %v4432
  %v4713 = vpop.f32.mrf.mxu0
  %v4714 = vadd.f32 %v4393, %v4713
  %v4715 = vpop.f32.mrf.mxu0
  %4716 = vmatprep.mubr.f32.mxu0 0.0
  %4717 = vmatmul.mubr.f32.gmra.mxu0 %v4435
  %v4718 = vpop.f32.mrf.mxu0
  %v4719 = vadd.f32 %v4393, %v4718
  %v4720 = vpop.f32.mrf.mxu0
  %4721 = vmatprep.mubr.f32.mxu0 0.0
  %4722 = vmatmul.mubr.f32.gmra.mxu0 %v4438
  %v4723 = vpop.f32.mrf.mxu0
  %v4724 = vadd.f32 %v4393, %v4723
  %v4725 = vpop.f32.mrf.mxu0
  %4726 = vmatprep.mubr.f32.mxu0 0.0
  %4727 = vmatmul.mubr.f32.gmra.mxu0 %v4441
  %v4728 = vpop.f32.mrf.mxu0
  %v4729 = vadd.f32 %v4393, %v4728
  %v4730 = vpop.f32.mrf.mxu0
  %4731 = vmatprep.mubr.f32.mxu0 0.0
  %4732 = vmatmul.mubr.f32.gmra.mxu0 %v4444
  %v4733 = vpop.f32.mrf.mxu0
  %v4734 = vadd.f32 %v4393, %v4733
  %v4735 = vpop.f32.mrf.mxu0
  %4736 = vmatprep.mubr.f32.mxu0 0.0
  %4737 = vmatmul.mubr.f32.gmra.mxu0 %v4447
  %v4738 = vpop.f32.mrf.mxu0
  %v4739 = vadd.f32 %v4393, %v4738
  %v4740 = vpop.f32.mrf.mxu0
  %4741 = vmatprep.mubr.f32.mxu0 0.0
  %4742 = vmatmul.mubr.f32.gmra.mxu0 %v4450
  %v4743 = vpop.f32.mrf.mxu0
  %v4744 = vadd.f32 %v4393, %v4743
  %v4745 = vpop.f32.mrf.mxu0
  %4746 = vmatprep.mubr.f32.mxu0 0.0
  %4747 = vmatmul.mubr.f32.gmra.mxu0 %v4453
  %v4748 = vpop.f32.mrf.mxu0
  %v4749 = vadd.f32 %v4393, %v4748
  %v4750 = vpop.f32.mrf.mxu0
  %4751 = vmatprep.mubr.f32.mxu0 0.0
  %4752 = vmatmul.mubr.f32.gmra.mxu0 %v4456
  %v4753 = vpop.f32.mrf.mxu0
  %v4754 = vadd.f32 %v4393, %v4753
  %v4755 = vpop.f32.mrf.mxu0
  %4756 = vmatprep.mubr.f32.mxu0 0.0
  %4757 = vmatmul.mubr.f32.gmra.mxu0 %v4459
  %v4758 = vpop.f32.mrf.mxu0
  %v4759 = vadd.f32 %v4393, %v4758
  %v4760 = vpop.f32.mrf.mxu0
  %4761 = vmatprep.mubr.f32.mxu0 0.0
  %4762 = vmatmul.mubr.f32.gmra.mxu0 %v4462
  %v4763 = vpop.f32.mrf.mxu0
  %v4764 = vadd.f32 %v4393, %v4763
  %v4765 = vpop.f32.mrf.mxu0
  %4766 = vmatprep.mubr.f32.mxu0 0.0
  %4767 = vmatmul.mubr.f32.gmra.mxu0 %v4465
  %v4768 = vpop.f32.mrf.mxu0
  %v4769 = vadd.f32 %v4393, %v4768
  %v4770 = vpop.f32.mrf.mxu0
  %4771 = vmatprep.mubr.f32.mxu0 0.0
  %4772 = vmatmul.mubr.f32.gmra.mxu0 %v4468
  %v4773 = vpop.f32.mrf.mxu0
  %v4774 = vadd.f32 %v4393, %v4773
  %v4775 = vpop.f32.mrf.mxu0
  %4776 = vmatprep.mubr.f32.mxu0 0.0
  %4777 = vmatmul.mubr.f32.gmra.mxu0 %v4471
  %v4778 = vpop.f32.mrf.mxu0
  %v4779 = vadd.f32 %v4393, %v4778
  %v4780 = vpop.f32.mrf.mxu0
  %4781 = vmatprep.mubr.f32.mxu0 0.0
  %4782 = vmatmul.mubr.f32.gmra.mxu0 %v4474
  %v4783 = vpop.f32.mrf.mxu0
  %v4784 = vadd.f32 %v4393, %v4783
  %v4785 = vpop.f32.mrf.mxu0
  %4786 = vmatprep.mubr.f32.mxu0 0.0
  %4787 = vmatmul.mubr.f32.gmra.mxu0 %v4477
  %v4788 = vpop.f32.mrf.mxu0
  %v4789 = vadd.f32 %v4393, %v4788
  %v4790 = vpop.f32.mrf.mxu0
  %4791 = vmatprep.mubr.f32.mxu0 0.0
  %4792 = vmatmul.mubr.f32.gmra.mxu0 %v4480
  %v4793 = vpop.f32.mrf.mxu0
  %v4794 = vadd.f32 %v4393, %v4793
  %v4795 = vpop.f32.mrf.mxu0
  %4796 = vmatprep.mubr.f32.mxu0 0.0
  %4797 = vmatmul.mubr.f32.gmra.mxu0 %v4483
  %v4798 = vpop.f32.mrf.mxu0
  %v4799 = vadd.f32 %v4393, %v4798
  %v4800 = vpop.f32.mrf.mxu0
  %4801 = vmatprep.mubr.f32.mxu0 0.0
  %4802 = vmatmul.mubr.f32.gmra.mxu0 %v4486
  %v4803 = vpop.f32.mrf.mxu0
  %v4804 = vadd.f32 %v4393, %v4803
  %v4805 = vpop.f32.mrf.mxu0
  %4806 = vmatprep.mubr.f32.mxu0 0.0
  %4807 = vmatmul.mubr.f32.gmra.mxu0 %v4489
  %v4808 = vpop.f32.mrf.mxu0
  %v4809 = vadd.f32 %v4393, %v4808
  %v4810 = vpop.f32.mrf.mxu0
  %4811 = vmatprep.mubr.f32.mxu0 0.0
  %4812 = vmatmul.mubr.f32.gmra.mxu0 %v4492
  %v4813 = vpop.f32.mrf.mxu0
  %v4814 = vadd.f32 %v4393, %v4813
  %v4815 = vpop.f32.mrf.mxu0
  %4816 = vmatprep.mubr.f32.mxu0 0.0
  %4817 = vmatmul.mubr.f32.gmra.mxu0 %v4495
  %v4818 = vpop.f32.mrf.mxu0
  %v4819 = vadd.f32 %v4393, %v4818
  %v4820 = vpop.f32.mrf.mxu0
  %4821 = vmatprep.mubr.f32.mxu0 0.0
  %4822 = vmatmul.mubr.f32.gmra.mxu0 %v4498
  %v4823 = vpop.f32.mrf.mxu0
  %v4824 = vadd.f32 %v4393, %v4823
  %v4825 = vpop.f32.mrf.mxu0
  %4826 = vmatprep.mubr.f32.mxu0 0.0
  %4827 = vmatmul.mubr.f32.gmra.mxu0 %v4501
  %v4828 = vpop.f32.mrf.mxu0
  %v4829 = vadd.f32 %v4393, %v4828
  %v4830 = vpop.f32.mrf.mxu0
  %4831 = vmatprep.mubr.f32.mxu0 0.0
  %4832 = vmatmul.mubr.f32.gmra.mxu0 %v4504
  %v4833 = vpop.f32.mrf.mxu0
  %v4834 = vadd.f32 %v4393, %v4833
  %v4835 = vpop.f32.mrf.mxu0
  %4836 = vmatprep.mubr.f32.mxu0 0.0
  %4837 = vmatmul.mubr.f32.gmra.mxu0 %v4507
  %v4838 = vpop.f32.mrf.mxu0
  %v4839 = vadd.f32 %v4393, %v4838
  %v4840 = vpop.f32.mrf.mxu0
  %4841 = vmatprep.mubr.f32.mxu0 0.0
  %4842 = vmatmul.mubr.f32.gmra.mxu0 %v4510
  %v4843 = vpop.f32.mrf.mxu0
  %v4844 = vadd.f32 %v4393, %v4843
  %v4845 = vpop.f32.mrf.mxu0
  %4846 = vmatprep.mubr.f32.mxu0 0.0
  %4847 = vmatmul.mubr.f32.gmra.mxu0 %v4513
  %v4848 = vpop.f32.mrf.mxu0
  %v4849 = vadd.f32 %v4393, %v4848
  %v4850 = vpop.f32.mrf.mxu0
  %4851 = vmatprep.mubr.f32.mxu0 0.0
  %4852 = vmatmul.mubr.f32.gmra.mxu0 %v4516
  %v4853 = vpop.f32.mrf.mxu0
  %v4854 = vadd.f32 %v4393, %v4853
  %v4855 = vpop.f32.mrf.mxu0
  %4856 = vmatprep.mubr.f32.mxu0 0.0
  %4857 = vmatmul.mubr.f32.gmra.mxu0 %v4519
  %v4858 = vpop.f32.mrf.mxu0
  %v4859 = vadd.f32 %v4393, %v4858
  %v4860 = vpop.f32.mrf.mxu0
  %4861 = vmatprep.mubr.f32.mxu0 0.0
  %4862 = vmatmul.mubr.f32.gmra.mxu0 %v4522
  %v4863 = vpop.f32.mrf.mxu0
  %v4864 = vadd.f32 %v4393, %v4863
  %v4865 = vpop.f32.mrf.mxu0
  %4866 = vmatprep.mubr.f32.mxu0 0.0
  %4867 = vmatmul.mubr.f32.gmra.mxu0 %v4525
  %v4868 = vpop.f32.mrf.mxu0
  %v4869 = vadd.f32 %v4393, %v4868
  %v4870 = vpop.f32.mrf.mxu0
  %4871 = vmatprep.mubr.f32.mxu0 0.0
  %4872 = vmatmul.mubr.f32.gmra.mxu0 %v4528
  %v4873 = vpop.f32.mrf.mxu0
  %v4874 = vadd.f32 %v4393, %v4873
  %v4875 = vpop.f32.mrf.mxu0
  %4876 = vmatprep.mubr.f32.mxu0 0.0
  %4877 = vmatmul.mubr.f32.gmra.mxu0 %v4531
  %v4878 = vpop.f32.mrf.mxu0
  %v4879 = vadd.f32 %v4393, %v4878
  %v4880 = vpop.f32.mrf.mxu0
  %4881 = vmatprep.mubr.f32.mxu0 0.0
  %4882 = vmatmul.mubr.f32.gmra.mxu0 %v4534
  %v4883 = vpop.f32.mrf.mxu0
  %v4884 = vadd.f32 %v4393, %v4883
  %v4885 = vpop.f32.mrf.mxu0
  %4886 = vmatprep.mubr.f32.mxu0 0.0
  %4887 = vmatmul.mubr.f32.gmra.mxu0 %v4537
  %v4888 = vpop.f32.mrf.mxu0
  %v4889 = vadd.f32 %v4393, %v4888
  %v4890 = vpop.f32.mrf.mxu0
  %4891 = vmatprep.mubr.f32.mxu0 0.0
  %4892 = vmatmul.mubr.f32.gmra.mxu0 %v4540
  %v4893 = vpop.f32.mrf.mxu0
  %v4894 = vadd.f32 %v4393, %v4893
  %v4895 = vpop.f32.mrf.mxu0
  %4896 = vmatprep.mubr.f32.mxu0 0.0
  %4897 = vmatmul.mubr.f32.gmra.mxu0 %v4543
  %v4898 = vpop.f32.mrf.mxu0
  %v4899 = vadd.f32 %v4393, %v4898
  %v4900 = vpop.f32.mrf.mxu0
  %4901 = vmatprep.mubr.f32.mxu0 0.0
  %4902 = vmatmul.mubr.f32.gmra.mxu0 %v4546
  %v4903 = vpop.f32.mrf.mxu0
  %v4904 = vadd.f32 %v4393, %v4903
  %v4905 = vpop.f32.mrf.mxu0
  %4906 = vmatprep.mubr.f32.mxu0 0.0
  %4907 = vmatmul.mubr.f32.gmra.mxu0 %v4549
  %v4908 = vpop.f32.mrf.mxu0
  %v4909 = vadd.f32 %v4393, %v4908
  %v4910 = vpop.f32.mrf.mxu0
  %4911 = vmatprep.mubr.f32.mxu0 0.0
  %4912 = vmatmul.mubr.f32.gmra.mxu0 %v4552
  %v4913 = vpop.f32.mrf.mxu0
  %v4914 = vadd.f32 %v4393, %v4913
  %v4915 = vpop.f32.mrf.mxu0
  %4916 = vmatprep.mubr.f32.mxu0 0.0
  %4917 = vmatmul.mubr.f32.gmra.mxu0 %v4555
  %v4918 = vpop.f32.mrf.mxu0
  %v4919 = vadd.f32 %v4393, %v4918
  %v4920 = vpop.f32.mrf.mxu0
  %4921 = vmatprep.mubr.f32.mxu0 0.0
  %4922 = vmatmul.mubr.f32.gmra.mxu0 %v4558
  %v4923 = vpop.f32.mrf.mxu0
  %v4924 = vadd.f32 %v4393, %v4923
  %v4925 = vpop.f32.mrf.mxu0
  %4926 = vmatprep.mubr.f32.mxu0 0.0
  %4927 = vmatmul.mubr.f32.gmra.mxu0 %v4561
  %v4928 = vpop.f32.mrf.mxu0
  %v4929 = vadd.f32 %v4393, %v4928
  %v4930 = vpop.f32.mrf.mxu0
  %4931 = vmatprep.mubr.f32.mxu0 0.0
  %4932 = vmatmul.mubr.f32.gmra.mxu0 %v4564
  %v4933 = vpop.f32.mrf.mxu0
  %v4934 = vadd.f32 %v4393, %v4933
  %v4935 = vpop.f32.mrf.mxu0
  %4936 = vmatprep.mubr.f32.mxu0 0.0
  %4937 = vmatmul.mubr.f32.gmra.mxu0 %v4567
  %v4938 = vpop.f32.mrf.mxu0
  %v4939 = vadd.f32 %v4393, %v4938
  %v4940 = vpop.f32.mrf.mxu0
  %4941 = vmatprep.mubr.f32.mxu0 0.0
  %4942 = vmatmul.mubr.f32.gmra.mxu0 %v4570
  %v4943 = vpop.f32.mrf.mxu0
  %v4944 = vadd.f32 %v4393, %v4943
  %v4945 = vpop.f32.mrf.mxu0
  %4946 = vmatprep.mubr.f32.mxu0 0.0
  %4947 = vmatmul.mubr.f32.gmra.mxu0 %v4573
  %v4948 = vpop.f32.mrf.mxu0
  %v4949 = vadd.f32 %v4393, %v4948
  %v4950 = vpop.f32.mrf.mxu0
  %4951 = vmatprep.mubr.f32.mxu0 0.0
  %4952 = vmatmul.mubr.f32.gmra.mxu0 %v4576
  %v4953 = vpop.f32.mrf.mxu0
  %v4954 = vadd.f32 %v4393, %v4953
  %v4955 = vpop.f32.mrf.mxu0
  %4956 = vmatprep.mubr.f32.mxu0 0.0
  %4957 = vmatmul.mubr.f32.gmra.mxu0 %v4579
  %v4958 = vpop.f32.mrf.mxu0
  %v4959 = vadd.f32 %v4393, %v4958
  %v4960 = vpop.f32.mrf.mxu0
  %4961 = vmatprep.mubr.f32.mxu0 0.0
  %4962 = vmatmul.mubr.f32.gmra.mxu0 %v4582
  %v4963 = vpop.f32.mrf.mxu0
  %v4964 = vadd.f32 %v4393, %v4963
  %v4965 = vpop.f32.mrf.mxu0
  %4966 = vmatprep.mubr.f32.mxu0 0.0
  %4967 = vmatmul.mubr.f32.gmra.mxu0 %v4585
  %v4968 = vpop.f32.mrf.mxu0
  %v4969 = vadd.f32 %v4393, %v4968
  %v4970 = vpop.f32.mrf.mxu0
  %4971 = vdwg.mxu0
  %v4972 = vmax.f32 %v4654, 0.0
  %v4973 = vmax.f32 %v4659, 0.0
  %v4974 = vmax.f32 %v4664, 0.0
  %v4975 = vmax.f32 %v4669, 0.0
  %v4976 = vmax.f32 %v4674, 0.0
  %v4977 = vmax.f32 %v4679, 0.0
  %v4978 = vmax.f32 %v4684, 0.0
  %v4979 = vmax.f32 %v4689, 0.0
  %v4980 = vmax.f32 %v4694, 0.0
  %v4981 = vmax.f32 %v4699, 0.0
  %v4982 = vmax.f32 %v4704, 0.0
  %v4983 = vmax.f32 %v4709, 0.0
  %v4984 = vmax.f32 %v4714, 0.0
  %v4985 = vmax.f32 %v4719, 0.0
  %v4986 = vmax.f32 %v4724, 0.0
  %v4987 = vmax.f32 %v4729, 0.0
  %v4988 = vmax.f32 %v4734, 0.0
  %v4989 = vmax.f32 %v4739, 0.0
  %v4990 = vmax.f32 %v4744, 0.0
  %v4991 = vmax.f32 %v4749, 0.0
  %v4992 = vmax.f32 %v4754, 0.0
  %v4993 = vmax.f32 %v4759, 0.0
  %v4994 = vmax.f32 %v4764, 0.0
  %v4995 = vmax.f32 %v4769, 0.0
  %v4996 = vmax.f32 %v4774, 0.0
  %v4997 = vmax.f32 %v4779, 0.0
  %v4998 = vmax.f32 %v4784, 0.0
  %v4999 = vmax.f32 %v4789, 0.0
  %v5000 = vmax.f32 %v4794, 0.0
  %v5001 = vmax.f32 %v4799, 0.0
  %v5002 = vmax.f32 %v4804, 0.0
  %v5003 = vmax.f32 %v4809, 0.0
  %v5004 = vmax.f32 %v4814, 0.0
  %v5005 = vmax.f32 %v4819, 0.0
  %v5006 = vmax.f32 %v4824, 0.0
  %v5007 = vmax.f32 %v4829, 0.0
  %v5008 = vmax.f32 %v4834, 0.0
  %v5009 = vmax.f32 %v4839, 0.0
  %v5010 = vmax.f32 %v4844, 0.0
  %v5011 = vmax.f32 %v4849, 0.0
  %v5012 = vmax.f32 %v4854, 0.0
  %v5013 = vmax.f32 %v4859, 0.0
  %v5014 = vmax.f32 %v4864, 0.0
  %v5015 = vmax.f32 %v4869, 0.0
  %v5016 = vmax.f32 %v4874, 0.0
  %v5017 = vmax.f32 %v4879, 0.0
  %v5018 = vmax.f32 %v4884, 0.0
  %v5019 = vmax.f32 %v4889, 0.0
  %v5020 = vmax.f32 %v4894, 0.0
  %v5021 = vmax.f32 %v4899, 0.0
  %v5022 = vmax.f32 %v4904, 0.0
  %v5023 = vmax.f32 %v4909, 0.0
  %v5024 = vmax.f32 %v4914, 0.0
  %v5025 = vmax.f32 %v4919, 0.0
  %v5026 = vmax.f32 %v4924, 0.0
  %v5027 = vmax.f32 %v4929, 0.0
  %v5028 = vmax.f32 %v4934, 0.0
  %v5029 = vmax.f32 %v4939, 0.0
  %v5030 = vmax.f32 %v4944, 0.0
  %v5031 = vmax.f32 %v4949, 0.0
  %v5032 = vmax.f32 %v4954, 0.0
  %v5033 = vmax.f32 %v4959, 0.0
  %v5034 = vmax.f32 %v4964, 0.0
  %v5035 = vmax.f32 %v4969, 0.0
  %v5036 = vld [vmem:[%s2 + $0x30] sm:$0xff]
  %v5037 = vld [vmem:[%s2 + $0x38] sm:$0xff]
  %v5038 = vld [vmem:[%s2 + $0x40] sm:$0xff]
  %v5039 = vld [vmem:[%s2 + $0x48] sm:$0xff]
  %v5040 = vld [vmem:[%s2 + $0x52] sm:$0x1]
  %v5041 = vlaneseq
  %v5042 = vshrl.u32 %v5041, 7
  %v5043 = vsub.s32 0, %v5042
  %v5044 = vrot.slane %v5040, %v5043
  %v5046 = vsel %vm4394, %v4972, 0
  %v5049 = vsel %vm4394, %v4973, 0
  %v5052 = vsel %vm4394, %v4974, 0
  %v5055 = vsel %vm4394, %v4975, 0
  %v5058 = vsel %vm4394, %v4976, 0
  %v5061 = vsel %vm4394, %v4977, 0
  %v5064 = vsel %vm4394, %v4978, 0
  %v5067 = vsel %vm4394, %v4979, 0
  %v5070 = vsel %vm4394, %v4980, 0
  %v5073 = vsel %vm4394, %v4981, 0
  %v5076 = vsel %vm4394, %v4982, 0
  %v5079 = vsel %vm4394, %v4983, 0
  %v5082 = vsel %vm4394, %v4984, 0
  %v5085 = vsel %vm4394, %v4985, 0
  %v5088 = vsel %vm4394, %v4986, 0
  %v5091 = vsel %vm4394, %v4987, 0
  %v5094 = vsel %vm4394, %v4988, 0
  %v5097 = vsel %vm4394, %v4989, 0
  %v5100 = vsel %vm4394, %v4990, 0
  %v5103 = vsel %vm4394, %v4991, 0
  %v5106 = vsel %vm4394, %v4992, 0
  %v5109 = vsel %vm4394, %v4993, 0
  %v5112 = vsel %vm4394, %v4994, 0
  %v5115 = vsel %vm4394, %v4995, 0
  %v5118 = vsel %vm4394, %v4996, 0
  %v5121 = vsel %vm4394, %v4997, 0
  %v5124 = vsel %vm4394, %v4998, 0
  %v5127 = vsel %vm4394, %v4999, 0
  %v5130 = vsel %vm4394, %v5000, 0
  %v5133 = vsel %vm4394, %v5001, 0
  %v5136 = vsel %vm4394, %v5002, 0
  %v5139 = vsel %vm4394, %v5003, 0
  %v5142 = vsel %vm4394, %v5004, 0
  %v5145 = vsel %vm4394, %v5005, 0
  %v5148 = vsel %vm4394, %v5006, 0
  %v5151 = vsel %vm4394, %v5007, 0
  %v5154 = vsel %vm4394, %v5008, 0
  %v5157 = vsel %vm4394, %v5009, 0
  %v5160 = vsel %vm4394, %v5010, 0
  %v5163 = vsel %vm4394, %v5011, 0
  %v5166 = vsel %vm4394, %v5012, 0
  %v5169 = vsel %vm4394, %v5013, 0
  %v5172 = vsel %vm4394, %v5014, 0
  %v5175 = vsel %vm4394, %v5015, 0
  %v5178 = vsel %vm4394, %v5016, 0
  %v5181 = vsel %vm4394, %v5017, 0
  %v5184 = vsel %vm4394, %v5018, 0
  %v5187 = vsel %vm4394, %v5019, 0
  %v5190 = vsel %vm4394, %v5020, 0
  %v5193 = vsel %vm4394, %v5021, 0
  %v5196 = vsel %vm4394, %v5022, 0
  %v5199 = vsel %vm4394, %v5023, 0
  %v5202 = vsel %vm4394, %v5024, 0
  %v5205 = vsel %vm4394, %v5025, 0
  %v5208 = vsel %vm4394, %v5026, 0
  %v5211 = vsel %vm4394, %v5027, 0
  %v5214 = vsel %vm4394, %v5028, 0
  %v5217 = vsel %vm4394, %v5029, 0
  %v5220 = vsel %vm4394, %v5030, 0
  %v5223 = vsel %vm4394, %v5031, 0
  %v5226 = vsel %vm4394, %v5032, 0
  %v5229 = vsel %vm4394, %v5033, 0
  %v5232 = vsel %vm4394, %v5034, 0
  %v5235 = vsel %vm4394, %v5035, 0
  %5237 = vmatprep.subr.mxu0 0.0
  %5238 = vmatpush1.msra.mxu0 0.0
  %5239 = vmatprep.subr.mxu0 0.0
  %5240 = vmatpush1.msra.mxu0 0.0
  %5241 = vmatprep.subr.mxu0 0.0
  %5242 = vmatpush1.msra.mxu0 0.0
  %5243 = vmatprep.subr.mxu0 0.0
  %5244 = vmatpush1.msra.mxu0 0.0
  %5245 = vmatprep.subr.mxu0 0.0
  %5246 = vmatpush1.msra.mxu0 0.0
  %5247 = vmatprep.subr.mxu0 0.0
  %5248 = vmatpush1.msra.mxu0 0.0
  %5249 = vmatprep.subr.mxu0 0.0
  %5250 = vmatpush1.msra.mxu0 0.0
  %5251 = vmatprep.subr.mxu0 0.0
  %5252 = vmatpush1.msra.mxu0 0.0
  %5253 = vmatprep.subr.mxu0 0.0
  %5254 = vmatpush1.msra.mxu0 0.0
  %5255 = vmatprep.subr.mxu0 0.0
  %5256 = vmatpush1.msra.mxu0 0.0
  %5257 = vmatprep.subr.mxu0 0.0
  %5258 = vmatpush1.msra.mxu0 0.0
  %5259 = vmatprep.subr.mxu0 0.0
  %5260 = vmatpush1.msra.mxu0 0.0
  %5261 = vmatprep.subr.mxu0 0.0
  %5262 = vmatpush1.msra.mxu0 %v5039
  %5263 = vmatprep.subr.mxu0 0.0
  %5264 = vmatpush1.msra.mxu0 %v5038
  %5265 = vmatprep.subr.mxu0 0.0
  %5266 = vmatpush1.msra.mxu0 %v5037
  %5267 = vmatprep.subr.mxu0 0.0
  %5268 = vmatpush1.msra.mxu0 %v5036
  %5269 = vmatprep.subr.mxu0 0.0
  %5270 = vmatpush2.msra.mxu0 0.0
  %5271 = vmatprep.subr.mxu0 0.0
  %5272 = vmatpush2.msra.mxu0 0.0
  %5273 = vmatprep.subr.mxu0 0.0
  %5274 = vmatpush2.msra.mxu0 0.0
  %5275 = vmatprep.subr.mxu0 0.0
  %5276 = vmatpush2.msra.mxu0 0.0
  %5277 = vmatprep.subr.mxu0 0.0
  %5278 = vmatpush2.msra.mxu0 0.0
  %5279 = vmatprep.subr.mxu0 0.0
  %5280 = vmatpush2.msra.mxu0 0.0
  %5281 = vmatprep.subr.mxu0 0.0
  %5282 = vmatpush2.msra.mxu0 0.0
  %5283 = vmatprep.subr.mxu0 0.0
  %5284 = vmatpush2.msra.mxu0 0.0
  %5285 = vmatprep.subr.mxu0 0.0
  %5286 = vmatpush2.msra.mxu0 0.0
  %5287 = vmatprep.subr.mxu0 0.0
  %5288 = vmatpush2.msra.mxu0 0.0
  %5289 = vmatprep.subr.mxu0 0.0
  %5290 = vmatpush2.msra.mxu0 0.0
  %5291 = vmatprep.subr.mxu0 0.0
  %5292 = vmatpush2.msra.mxu0 0.0
  %5293 = vmatprep.subr.mxu0 0.0
  %5294 = vmatpush2.msra.mxu0 0.0
  %5295 = vmatprep.subr.mxu0 0.0
  %5296 = vmatpush2.msra.mxu0 0.0
  %5297 = vmatprep.subr.mxu0 0.0
  %5298 = vmatpush2.msra.mxu0 0.0
  %5299 = vmatprep.subr.mxu0 0.0
  %5300 = vmatpush2.msra.mxu0 0.0
  %5301 = vmatprep.mubr.f32.mxu0 0.0
  %5302 = vmatmul.mubr.f32.gmra.mxu0 %v5046
  %v5303 = vpop.f32.mrf.mxu0
  %v5304 = vadd.f32 %v5044, %v5303
  %v5305 = vpop.f32.mrf.mxu0
  %5306 = vmatprep.mubr.f32.mxu0 0.0
  %5307 = vmatmul.mubr.f32.gmra.mxu0 %v5049
  %v5308 = vpop.f32.mrf.mxu0
  %v5309 = vadd.f32 %v5044, %v5308
  %v5310 = vpop.f32.mrf.mxu0
  %5311 = vmatprep.mubr.f32.mxu0 0.0
  %5312 = vmatmul.mubr.f32.gmra.mxu0 %v5052
  %v5313 = vpop.f32.mrf.mxu0
  %v5314 = vadd.f32 %v5044, %v5313
  %v5315 = vpop.f32.mrf.mxu0
  %5316 = vmatprep.mubr.f32.mxu0 0.0
  %5317 = vmatmul.mubr.f32.gmra.mxu0 %v5055
  %v5318 = vpop.f32.mrf.mxu0
  %v5319 = vadd.f32 %v5044, %v5318
  %v5320 = vpop.f32.mrf.mxu0
  %5321 = vmatprep.mubr.f32.mxu0 0.0
  %5322 = vmatmul.mubr.f32.gmra.mxu0 %v5058
  %v5323 = vpop.f32.mrf.mxu0
  %v5324 = vadd.f32 %v5044, %v5323
  %v5325 = vpop.f32.mrf.mxu0
  %5326 = vmatprep.mubr.f32.mxu0 0.0
  %5327 = vmatmul.mubr.f32.gmra.mxu0 %v5061
  %v5328 = vpop.f32.mrf.mxu0
  %v5329 = vadd.f32 %v5044, %v5328
  %v5330 = vpop.f32.mrf.mxu0
  %5331 = vmatprep.mubr.f32.mxu0 0.0
  %5332 = vmatmul.mubr.f32.gmra.mxu0 %v5064
  %v5333 = vpop.f32.mrf.mxu0
  %v5334 = vadd.f32 %v5044, %v5333
  %v5335 = vpop.f32.mrf.mxu0
  %5336 = vmatprep.mubr.f32.mxu0 0.0
  %5337 = vmatmul.mubr.f32.gmra.mxu0 %v5067
  %v5338 = vpop.f32.mrf.mxu0
  %v5339 = vadd.f32 %v5044, %v5338
  %v5340 = vpop.f32.mrf.mxu0
  %5341 = vmatprep.mubr.f32.mxu0 0.0
  %5342 = vmatmul.mubr.f32.gmra.mxu0 %v5070
  %v5343 = vpop.f32.mrf.mxu0
  %v5344 = vadd.f32 %v5044, %v5343
  %v5345 = vpop.f32.mrf.mxu0
  %5346 = vmatprep.mubr.f32.mxu0 0.0
  %5347 = vmatmul.mubr.f32.gmra.mxu0 %v5073
  %v5348 = vpop.f32.mrf.mxu0
  %v5349 = vadd.f32 %v5044, %v5348
  %v5350 = vpop.f32.mrf.mxu0
  %5351 = vmatprep.mubr.f32.mxu0 0.0
  %5352 = vmatmul.mubr.f32.gmra.mxu0 %v5076
  %v5353 = vpop.f32.mrf.mxu0
  %v5354 = vadd.f32 %v5044, %v5353
  %v5355 = vpop.f32.mrf.mxu0
  %5356 = vmatprep.mubr.f32.mxu0 0.0
  %5357 = vmatmul.mubr.f32.gmra.mxu0 %v5079
  %v5358 = vpop.f32.mrf.mxu0
  %v5359 = vadd.f32 %v5044, %v5358
  %v5360 = vpop.f32.mrf.mxu0
  %5361 = vmatprep.mubr.f32.mxu0 0.0
  %5362 = vmatmul.mubr.f32.gmra.mxu0 %v5082
  %v5363 = vpop.f32.mrf.mxu0
  %v5364 = vadd.f32 %v5044, %v5363
  %v5365 = vpop.f32.mrf.mxu0
  %5366 = vmatprep.mubr.f32.mxu0 0.0
  %5367 = vmatmul.mubr.f32.gmra.mxu0 %v5085
  %v5368 = vpop.f32.mrf.mxu0
  %v5369 = vadd.f32 %v5044, %v5368
  %v5370 = vpop.f32.mrf.mxu0
  %5371 = vmatprep.mubr.f32.mxu0 0.0
  %5372 = vmatmul.mubr.f32.gmra.mxu0 %v5088
  %v5373 = vpop.f32.mrf.mxu0
  %v5374 = vadd.f32 %v5044, %v5373
  %v5375 = vpop.f32.mrf.mxu0
  %5376 = vmatprep.mubr.f32.mxu0 0.0
  %5377 = vmatmul.mubr.f32.gmra.mxu0 %v5091
  %v5378 = vpop.f32.mrf.mxu0
  %v5379 = vadd.f32 %v5044, %v5378
  %v5380 = vpop.f32.mrf.mxu0
  %5381 = vmatprep.mubr.f32.mxu0 0.0
  %5382 = vmatmul.mubr.f32.gmra.mxu0 %v5094
  %v5383 = vpop.f32.mrf.mxu0
  %v5384 = vadd.f32 %v5044, %v5383
  %v5385 = vpop.f32.mrf.mxu0
  %5386 = vmatprep.mubr.f32.mxu0 0.0
  %5387 = vmatmul.mubr.f32.gmra.mxu0 %v5097
  %v5388 = vpop.f32.mrf.mxu0
  %v5389 = vadd.f32 %v5044, %v5388
  %v5390 = vpop.f32.mrf.mxu0
  %5391 = vmatprep.mubr.f32.mxu0 0.0
  %5392 = vmatmul.mubr.f32.gmra.mxu0 %v5100
  %v5393 = vpop.f32.mrf.mxu0
  %v5394 = vadd.f32 %v5044, %v5393
  %v5395 = vpop.f32.mrf.mxu0
  %5396 = vmatprep.mubr.f32.mxu0 0.0
  %5397 = vmatmul.mubr.f32.gmra.mxu0 %v5103
  %v5398 = vpop.f32.mrf.mxu0
  %v5399 = vadd.f32 %v5044, %v5398
  %v5400 = vpop.f32.mrf.mxu0
  %5401 = vmatprep.mubr.f32.mxu0 0.0
  %5402 = vmatmul.mubr.f32.gmra.mxu0 %v5106
  %v5403 = vpop.f32.mrf.mxu0
  %v5404 = vadd.f32 %v5044, %v5403
  %v5405 = vpop.f32.mrf.mxu0
  %5406 = vmatprep.mubr.f32.mxu0 0.0
  %5407 = vmatmul.mubr.f32.gmra.mxu0 %v5109
  %v5408 = vpop.f32.mrf.mxu0
  %v5409 = vadd.f32 %v5044, %v5408
  %v5410 = vpop.f32.mrf.mxu0
  %5411 = vmatprep.mubr.f32.mxu0 0.0
  %5412 = vmatmul.mubr.f32.gmra.mxu0 %v5112
  %v5413 = vpop.f32.mrf.mxu0
  %v5414 = vadd.f32 %v5044, %v5413
  %v5415 = vpop.f32.mrf.mxu0
  %5416 = vmatprep.mubr.f32.mxu0 0.0
  %5417 = vmatmul.mubr.f32.gmra.mxu0 %v5115
  %v5418 = vpop.f32.mrf.mxu0
  %v5419 = vadd.f32 %v5044, %v5418
  %v5420 = vpop.f32.mrf.mxu0
  %5421 = vmatprep.mubr.f32.mxu0 0.0
  %5422 = vmatmul.mubr.f32.gmra.mxu0 %v5118
  %v5423 = vpop.f32.mrf.mxu0
  %v5424 = vadd.f32 %v5044, %v5423
  %v5425 = vpop.f32.mrf.mxu0
  %5426 = vmatprep.mubr.f32.mxu0 0.0
  %5427 = vmatmul.mubr.f32.gmra.mxu0 %v5121
  %v5428 = vpop.f32.mrf.mxu0
  %v5429 = vadd.f32 %v5044, %v5428
  %v5430 = vpop.f32.mrf.mxu0
  %5431 = vmatprep.mubr.f32.mxu0 0.0
  %5432 = vmatmul.mubr.f32.gmra.mxu0 %v5124
  %v5433 = vpop.f32.mrf.mxu0
  %v5434 = vadd.f32 %v5044, %v5433
  %v5435 = vpop.f32.mrf.mxu0
  %5436 = vmatprep.mubr.f32.mxu0 0.0
  %5437 = vmatmul.mubr.f32.gmra.mxu0 %v5127
  %v5438 = vpop.f32.mrf.mxu0
  %v5439 = vadd.f32 %v5044, %v5438
  %v5440 = vpop.f32.mrf.mxu0
  %5441 = vmatprep.mubr.f32.mxu0 0.0
  %5442 = vmatmul.mubr.f32.gmra.mxu0 %v5130
  %v5443 = vpop.f32.mrf.mxu0
  %v5444 = vadd.f32 %v5044, %v5443
  %v5445 = vpop.f32.mrf.mxu0
  %5446 = vmatprep.mubr.f32.mxu0 0.0
  %5447 = vmatmul.mubr.f32.gmra.mxu0 %v5133
  %v5448 = vpop.f32.mrf.mxu0
  %v5449 = vadd.f32 %v5044, %v5448
  %v5450 = vpop.f32.mrf.mxu0
  %5451 = vmatprep.mubr.f32.mxu0 0.0
  %5452 = vmatmul.mubr.f32.gmra.mxu0 %v5136
  %v5453 = vpop.f32.mrf.mxu0
  %v5454 = vadd.f32 %v5044, %v5453
  %v5455 = vpop.f32.mrf.mxu0
  %5456 = vmatprep.mubr.f32.mxu0 0.0
  %5457 = vmatmul.mubr.f32.gmra.mxu0 %v5139
  %v5458 = vpop.f32.mrf.mxu0
  %v5459 = vadd.f32 %v5044, %v5458
  %v5460 = vpop.f32.mrf.mxu0
  %5461 = vmatprep.mubr.f32.mxu0 0.0
  %5462 = vmatmul.mubr.f32.gmra.mxu0 %v5142
  %v5463 = vpop.f32.mrf.mxu0
  %v5464 = vadd.f32 %v5044, %v5463
  %v5465 = vpop.f32.mrf.mxu0
  %5466 = vmatprep.mubr.f32.mxu0 0.0
  %5467 = vmatmul.mubr.f32.gmra.mxu0 %v5145
  %v5468 = vpop.f32.mrf.mxu0
  %v5469 = vadd.f32 %v5044, %v5468
  %v5470 = vpop.f32.mrf.mxu0
  %5471 = vmatprep.mubr.f32.mxu0 0.0
  %5472 = vmatmul.mubr.f32.gmra.mxu0 %v5148
  %v5473 = vpop.f32.mrf.mxu0
  %v5474 = vadd.f32 %v5044, %v5473
  %v5475 = vpop.f32.mrf.mxu0
  %5476 = vmatprep.mubr.f32.mxu0 0.0
  %5477 = vmatmul.mubr.f32.gmra.mxu0 %v5151
  %v5478 = vpop.f32.mrf.mxu0
  %v5479 = vadd.f32 %v5044, %v5478
  %v5480 = vpop.f32.mrf.mxu0
  %5481 = vmatprep.mubr.f32.mxu0 0.0
  %5482 = vmatmul.mubr.f32.gmra.mxu0 %v5154
  %v5483 = vpop.f32.mrf.mxu0
  %v5484 = vadd.f32 %v5044, %v5483
  %v5485 = vpop.f32.mrf.mxu0
  %5486 = vmatprep.mubr.f32.mxu0 0.0
  %5487 = vmatmul.mubr.f32.gmra.mxu0 %v5157
  %v5488 = vpop.f32.mrf.mxu0
  %v5489 = vadd.f32 %v5044, %v5488
  %v5490 = vpop.f32.mrf.mxu0
  %5491 = vmatprep.mubr.f32.mxu0 0.0
  %5492 = vmatmul.mubr.f32.gmra.mxu0 %v5160
  %v5493 = vpop.f32.mrf.mxu0
  %v5494 = vadd.f32 %v5044, %v5493
  %v5495 = vpop.f32.mrf.mxu0
  %5496 = vmatprep.mubr.f32.mxu0 0.0
  %5497 = vmatmul.mubr.f32.gmra.mxu0 %v5163
  %v5498 = vpop.f32.mrf.mxu0
  %v5499 = vadd.f32 %v5044, %v5498
  %v5500 = vpop.f32.mrf.mxu0
  %5501 = vmatprep.mubr.f32.mxu0 0.0
  %5502 = vmatmul.mubr.f32.gmra.mxu0 %v5166
  %v5503 = vpop.f32.mrf.mxu0
  %v5504 = vadd.f32 %v5044, %v5503
  %v5505 = vpop.f32.mrf.mxu0
  %5506 = vmatprep.mubr.f32.mxu0 0.0
  %5507 = vmatmul.mubr.f32.gmra.mxu0 %v5169
  %v5508 = vpop.f32.mrf.mxu0
  %v5509 = vadd.f32 %v5044, %v5508
  %v5510 = vpop.f32.mrf.mxu0
  %5511 = vmatprep.mubr.f32.mxu0 0.0
  %5512 = vmatmul.mubr.f32.gmra.mxu0 %v5172
  %v5513 = vpop.f32.mrf.mxu0
  %v5514 = vadd.f32 %v5044, %v5513
  %v5515 = vpop.f32.mrf.mxu0
  %5516 = vmatprep.mubr.f32.mxu0 0.0
  %5517 = vmatmul.mubr.f32.gmra.mxu0 %v5175
  %v5518 = vpop.f32.mrf.mxu0
  %v5519 = vadd.f32 %v5044, %v5518
  %v5520 = vpop.f32.mrf.mxu0
  %5521 = vmatprep.mubr.f32.mxu0 0.0
  %5522 = vmatmul.mubr.f32.gmra.mxu0 %v5178
  %v5523 = vpop.f32.mrf.mxu0
  %v5524 = vadd.f32 %v5044, %v5523
  %v5525 = vpop.f32.mrf.mxu0
  %5526 = vmatprep.mubr.f32.mxu0 0.0
  %5527 = vmatmul.mubr.f32.gmra.mxu0 %v5181
  %v5528 = vpop.f32.mrf.mxu0
  %v5529 = vadd.f32 %v5044, %v5528
  %v5530 = vpop.f32.mrf.mxu0
  %5531 = vmatprep.mubr.f32.mxu0 0.0
  %5532 = vmatmul.mubr.f32.gmra.mxu0 %v5184
  %v5533 = vpop.f32.mrf.mxu0
  %v5534 = vadd.f32 %v5044, %v5533
  %v5535 = vpop.f32.mrf.mxu0
  %5536 = vmatprep.mubr.f32.mxu0 0.0
  %5537 = vmatmul.mubr.f32.gmra.mxu0 %v5187
  %v5538 = vpop.f32.mrf.mxu0
  %v5539 = vadd.f32 %v5044, %v5538
  %v5540 = vpop.f32.mrf.mxu0
  %5541 = vmatprep.mubr.f32.mxu0 0.0
  %5542 = vmatmul.mubr.f32.gmra.mxu0 %v5190
  %v5543 = vpop.f32.mrf.mxu0
  %v5544 = vadd.f32 %v5044, %v5543
  %v5545 = vpop.f32.mrf.mxu0
  %5546 = vmatprep.mubr.f32.mxu0 0.0
  %5547 = vmatmul.mubr.f32.gmra.mxu0 %v5193
  %v5548 = vpop.f32.mrf.mxu0
  %v5549 = vadd.f32 %v5044, %v5548
  %v5550 = vpop.f32.mrf.mxu0
  %5551 = vmatprep.mubr.f32.mxu0 0.0
  %5552 = vmatmul.mubr.f32.gmra.mxu0 %v5196
  %v5553 = vpop.f32.mrf.mxu0
  %v5554 = vadd.f32 %v5044, %v5553
  %v5555 = vpop.f32.mrf.mxu0
  %5556 = vmatprep.mubr.f32.mxu0 0.0
  %5557 = vmatmul.mubr.f32.gmra.mxu0 %v5199
  %v5558 = vpop.f32.mrf.mxu0
  %v5559 = vadd.f32 %v5044, %v5558
  %v5560 = vpop.f32.mrf.mxu0
  %5561 = vmatprep.mubr.f32.mxu0 0.0
  %5562 = vmatmul.mubr.f32.gmra.mxu0 %v5202
  %v5563 = vpop.f32.mrf.mxu0
  %v5564 = vadd.f32 %v5044, %v5563
  %v5565 = vpop.f32.mrf.mxu0
  %5566 = vmatprep.mubr.f32.mxu0 0.0
  %5567 = vmatmul.mubr.f32.gmra.mxu0 %v5205
  %v5568 = vpop.f32.mrf.mxu0
  %v5569 = vadd.f32 %v5044, %v5568
  %v5570 = vpop.f32.mrf.mxu0
  %5571 = vmatprep.mubr.f32.mxu0 0.0
  %5572 = vmatmul.mubr.f32.gmra.mxu0 %v5208
  %v5573 = vpop.f32.mrf.mxu0
  %v5574 = vadd.f32 %v5044, %v5573
  %v5575 = vpop.f32.mrf.mxu0
  %5576 = vmatprep.mubr.f32.mxu0 0.0
  %5577 = vmatmul.mubr.f32.gmra.mxu0 %v5211
  %v5578 = vpop.f32.mrf.mxu0
  %v5579 = vadd.f32 %v5044, %v5578
  %v5580 = vpop.f32.mrf.mxu0
  %5581 = vmatprep.mubr.f32.mxu0 0.0
  %5582 = vmatmul.mubr.f32.gmra.mxu0 %v5214
  %v5583 = vpop.f32.mrf.mxu0
  %v5584 = vadd.f32 %v5044, %v5583
  %v5585 = vpop.f32.mrf.mxu0
  %5586 = vmatprep.mubr.f32.mxu0 0.0
  %5587 = vmatmul.mubr.f32.gmra.mxu0 %v5217
  %v5588 = vpop.f32.mrf.mxu0
  %v5589 = vadd.f32 %v5044, %v5588
  %v5590 = vpop.f32.mrf.mxu0
  %5591 = vmatprep.mubr.f32.mxu0 0.0
  %5592 = vmatmul.mubr.f32.gmra.mxu0 %v5220
  %v5593 = vpop.f32.mrf.mxu0
  %v5594 = vadd.f32 %v5044, %v5593
  %v5595 = vpop.f32.mrf.mxu0
  %5596 = vmatprep.mubr.f32.mxu0 0.0
  %5597 = vmatmul.mubr.f32.gmra.mxu0 %v5223
  %v5598 = vpop.f32.mrf.mxu0
  %v5599 = vadd.f32 %v5044, %v5598
  %v5600 = vpop.f32.mrf.mxu0
  %5601 = vmatprep.mubr.f32.mxu0 0.0
  %5602 = vmatmul.mubr.f32.gmra.mxu0 %v5226
  %v5603 = vpop.f32.mrf.mxu0
  %v5604 = vadd.f32 %v5044, %v5603
  %v5605 = vpop.f32.mrf.mxu0
  %5606 = vmatprep.mubr.f32.mxu0 0.0
  %5607 = vmatmul.mubr.f32.gmra.mxu0 %v5229
  %v5608 = vpop.f32.mrf.mxu0
  %v5609 = vadd.f32 %v5044, %v5608
  %v5610 = vpop.f32.mrf.mxu0
  %5611 = vmatprep.mubr.f32.mxu0 0.0
  %5612 = vmatmul.mubr.f32.gmra.mxu0 %v5232
  %v5613 = vpop.f32.mrf.mxu0
  %v5614 = vadd.f32 %v5044, %v5613
  %v5615 = vpop.f32.mrf.mxu0
  %5616 = vmatprep.mubr.f32.mxu0 0.0
  %5617 = vmatmul.mubr.f32.gmra.mxu0 %v5235
  %v5618 = vpop.f32.mrf.mxu0
  %v5619 = vadd.f32 %v5044, %v5618
  %v5620 = vpop.f32.mrf.mxu0
  %5621 = vdwg.mxu0
  %v5622 = vmax.f32 %v5304, 0.0
  %v5623 = vmax.f32 %v5309, 0.0
  %v5624 = vmax.f32 %v5314, 0.0
  %v5625 = vmax.f32 %v5319, 0.0
  %v5626 = vmax.f32 %v5324, 0.0
  %v5627 = vmax.f32 %v5329, 0.0
  %v5628 = vmax.f32 %v5334, 0.0
  %v5629 = vmax.f32 %v5339, 0.0
  %v5630 = vmax.f32 %v5344, 0.0
  %v5631 = vmax.f32 %v5349, 0.0
  %v5632 = vmax.f32 %v5354, 0.0
  %v5633 = vmax.f32 %v5359, 0.0
  %v5634 = vmax.f32 %v5364, 0.0
  %v5635 = vmax.f32 %v5369, 0.0
  %v5636 = vmax.f32 %v5374, 0.0
  %v5637 = vmax.f32 %v5379, 0.0
  %v5638 = vmax.f32 %v5384, 0.0
  %v5639 = vmax.f32 %v5389, 0.0
  %v5640 = vmax.f32 %v5394, 0.0
  %v5641 = vmax.f32 %v5399, 0.0
  %v5642 = vmax.f32 %v5404, 0.0
  %v5643 = vmax.f32 %v5409, 0.0
  %v5644 = vmax.f32 %v5414, 0.0
  %v5645 = vmax.f32 %v5419, 0.0
  %v5646 = vmax.f32 %v5424, 0.0
  %v5647 = vmax.f32 %v5429, 0.0
  %v5648 = vmax.f32 %v5434, 0.0
  %v5649 = vmax.f32 %v5439, 0.0
  %v5650 = vmax.f32 %v5444, 0.0
  %v5651 = vmax.f32 %v5449, 0.0
  %v5652 = vmax.f32 %v5454, 0.0
  %v5653 = vmax.f32 %v5459, 0.0
  %v5654 = vmax.f32 %v5464, 0.0
  %v5655 = vmax.f32 %v5469, 0.0
  %v5656 = vmax.f32 %v5474, 0.0
  %v5657 = vmax.f32 %v5479, 0.0
  %v5658 = vmax.f32 %v5484, 0.0
  %v5659 = vmax.f32 %v5489, 0.0
  %v5660 = vmax.f32 %v5494, 0.0
  %v5661 = vmax.f32 %v5499, 0.0
  %v5662 = vmax.f32 %v5504, 0.0
  %v5663 = vmax.f32 %v5509, 0.0
  %v5664 = vmax.f32 %v5514, 0.0
  %v5665 = vmax.f32 %v5519, 0.0
  %v5666 = vmax.f32 %v5524, 0.0
  %v5667 = vmax.f32 %v5529, 0.0
  %v5668 = vmax.f32 %v5534, 0.0
  %v5669 = vmax.f32 %v5539, 0.0
  %v5670 = vmax.f32 %v5544, 0.0
  %v5671 = vmax.f32 %v5549, 0.0
  %v5672 = vmax.f32 %v5554, 0.0
  %v5673 = vmax.f32 %v5559, 0.0
  %v5674 = vmax.f32 %v5564, 0.0
  %v5675 = vmax.f32 %v5569, 0.0
  %v5676 = vmax.f32 %v5574, 0.0
  %v5677 = vmax.f32 %v5579, 0.0
  %v5678 = vmax.f32 %v5584, 0.0
  %v5679 = vmax.f32 %v5589, 0.0
  %v5680 = vmax.f32 %v5594, 0.0
  %v5681 = vmax.f32 %v5599, 0.0
  %v5682 = vmax.f32 %v5604, 0.0
  %v5683 = vmax.f32 %v5609, 0.0
  %v5684 = vmax.f32 %v5614, 0.0
  %v5685 = vmax.f32 %v5619, 0.0
  %v5686 = vld [vmem:[%s2 + $0x53] sm:$0x1]
  %v5687 = vlaneseq
  %v5688 = vshrl.u32 %v5687, 7
  %v5689 = vsub.s32 0, %v5688
  %v5690 = vrot.slane %v5686, %v5689
  %v5691 = vmul.f32 %v5622, %v5690
  %v5692 = vmul.f32 %v5623, %v5690
  %v5693 = vmul.f32 %v5624, %v5690
  %v5694 = vmul.f32 %v5625, %v5690
  %v5695 = vmul.f32 %v5626, %v5690
  %v5696 = vmul.f32 %v5627, %v5690
  %v5697 = vmul.f32 %v5628, %v5690
  %v5698 = vmul.f32 %v5629, %v5690
  %v5699 = vmul.f32 %v5630, %v5690
  %v5700 = vmul.f32 %v5631, %v5690
  %v5701 = vmul.f32 %v5632, %v5690
  %v5702 = vmul.f32 %v5633, %v5690
  %v5703 = vmul.f32 %v5634, %v5690
  %v5704 = vmul.f32 %v5635, %v5690
  %v5705 = vmul.f32 %v5636, %v5690
  %v5706 = vmul.f32 %v5637, %v5690
  %v5707 = vmul.f32 %v5638, %v5690
  %v5708 = vmul.f32 %v5639, %v5690
  %v5709 = vmul.f32 %v5640, %v5690
  %v5710 = vmul.f32 %v5641, %v5690
  %v5711 = vmul.f32 %v5642, %v5690
  %v5712 = vmul.f32 %v5643, %v5690
  %v5713 = vmul.f32 %v5644, %v5690
  %v5714 = vmul.f32 %v5645, %v5690
  %v5715 = vmul.f32 %v5646, %v5690
  %v5716 = vmul.f32 %v5647, %v5690
  %v5717 = vmul.f32 %v5648, %v5690
  %v5718 = vmul.f32 %v5649, %v5690
  %v5719 = vmul.f32 %v5650, %v5690
  %v5720 = vmul.f32 %v5651, %v5690
  %v5721 = vmul.f32 %v5652, %v5690
  %v5722 = vmul.f32 %v5653, %v5690
  %v5723 = vmul.f32 %v5654, %v5690
  %v5724 = vmul.f32 %v5655, %v5690
  %v5725 = vmul.f32 %v5656, %v5690
  %v5726 = vmul.f32 %v5657, %v5690
  %v5727 = vmul.f32 %v5658, %v5690
  %v5728 = vmul.f32 %v5659, %v5690
  %v5729 = vmul.f32 %v5660, %v5690
  %v5730 = vmul.f32 %v5661, %v5690
  %v5731 = vmul.f32 %v5662, %v5690
  %v5732 = vmul.f32 %v5663, %v5690
  %v5733 = vmul.f32 %v5664, %v5690
  %v5734 = vmul.f32 %v5665, %v5690
  %v5735 = vmul.f32 %v5666, %v5690
  %v5736 = vmul.f32 %v5667, %v5690
  %v5737 = vmul.f32 %v5668, %v5690
  %v5738 = vmul.f32 %v5669, %v5690
  %v5739 = vmul.f32 %v5670, %v5690
  %v5740 = vmul.f32 %v5671, %v5690
  %v5741 = vmul.f32 %v5672, %v5690
  %v5742 = vmul.f32 %v5673, %v5690
  %v5743 = vmul.f32 %v5674, %v5690
  %v5744 = vmul.f32 %v5675, %v5690
  %v5745 = vmul.f32 %v5676, %v5690
  %v5746 = vmul.f32 %v5677, %v5690
  %v5747 = vmul.f32 %v5678, %v5690
  %v5748 = vmul.f32 %v5679, %v5690
  %v5749 = vmul.f32 %v5680, %v5690
  %v5750 = vmul.f32 %v5681, %v5690
  %v5751 = vmul.f32 %v5682, %v5690
  %v5752 = vmul.f32 %v5683, %v5690
  %v5753 = vmul.f32 %v5684, %v5690
  %v5754 = vmul.f32 %v5685, %v5690
  %v5755 = vsel %vm3674, %v5691, 0.0
  %5756 = vadd.xlane.f32.xlu0 %v5755
  %v5757 = vpop.xlane.xlu0 %5756
  %v5758 = vsel %vm3674, %v5692, 0.0
  %5759 = vadd.xlane.f32.xlu0 %v5758
  %v5760 = vpop.xlane.xlu0 %5759
  %v5761 = vsel %vm3674, %v5693, 0.0
  %5762 = vadd.xlane.f32.xlu0 %v5761
  %v5763 = vpop.xlane.xlu0 %5762
  %v5764 = vsel %vm3674, %v5694, 0.0
  %5765 = vadd.xlane.f32.xlu0 %v5764
  %v5766 = vpop.xlane.xlu0 %5765
  %v5767 = vsel %vm3674, %v5695, 0.0
  %5768 = vadd.xlane.f32.xlu0 %v5767
  %v5769 = vpop.xlane.xlu0 %5768
  %v5770 = vsel %vm3674, %v5696, 0.0
  %5771 = vadd.xlane.f32.xlu0 %v5770
  %v5772 = vpop.xlane.xlu0 %5771
  %v5773 = vsel %vm3674, %v5697, 0.0
  %5774 = vadd.xlane.f32.xlu0 %v5773
  %v5775 = vpop.xlane.xlu0 %5774
  %v5776 = vsel %vm3674, %v5698, 0.0
  %5777 = vadd.xlane.f32.xlu0 %v5776
  %v5778 = vpop.xlane.xlu0 %5777
  %v5779 = vsel %vm3674, %v5699, 0.0
  %5780 = vadd.xlane.f32.xlu0 %v5779
  %v5781 = vpop.xlane.xlu0 %5780
  %v5782 = vsel %vm3674, %v5700, 0.0
  %5783 = vadd.xlane.f32.xlu0 %v5782
  %v5784 = vpop.xlane.xlu0 %5783
  %v5785 = vsel %vm3674, %v5701, 0.0
  %5786 = vadd.xlane.f32.xlu0 %v5785
  %v5787 = vpop.xlane.xlu0 %5786
  %v5788 = vsel %vm3674, %v5702, 0.0
  %5789 = vadd.xlane.f32.xlu0 %v5788
  %v5790 = vpop.xlane.xlu0 %5789
  %v5791 = vsel %vm3674, %v5703, 0.0
  %5792 = vadd.xlane.f32.xlu0 %v5791
  %v5793 = vpop.xlane.xlu0 %5792
  %v5794 = vsel %vm3674, %v5704, 0.0
  %5795 = vadd.xlane.f32.xlu0 %v5794
  %v5796 = vpop.xlane.xlu0 %5795
  %v5797 = vsel %vm3674, %v5705, 0.0
  %5798 = vadd.xlane.f32.xlu0 %v5797
  %v5799 = vpop.xlane.xlu0 %5798
  %v5800 = vsel %vm3674, %v5706, 0.0
  %5801 = vadd.xlane.f32.xlu0 %v5800
  %v5802 = vpop.xlane.xlu0 %5801
  %v5803 = vsel %vm3674, %v5707, 0.0
  %5804 = vadd.xlane.f32.xlu0 %v5803
  %v5805 = vpop.xlane.xlu0 %5804
  %v5806 = vsel %vm3674, %v5708, 0.0
  %5807 = vadd.xlane.f32.xlu0 %v5806
  %v5808 = vpop.xlane.xlu0 %5807
  %v5809 = vsel %vm3674, %v5709, 0.0
  %5810 = vadd.xlane.f32.xlu0 %v5809
  %v5811 = vpop.xlane.xlu0 %5810
  %v5812 = vsel %vm3674, %v5710, 0.0
  %5813 = vadd.xlane.f32.xlu0 %v5812
  %v5814 = vpop.xlane.xlu0 %5813
  %v5815 = vsel %vm3674, %v5711, 0.0
  %5816 = vadd.xlane.f32.xlu0 %v5815
  %v5817 = vpop.xlane.xlu0 %5816
  %v5818 = vsel %vm3674, %v5712, 0.0
  %5819 = vadd.xlane.f32.xlu0 %v5818
  %v5820 = vpop.xlane.xlu0 %5819
  %v5821 = vsel %vm3674, %v5713, 0.0
  %5822 = vadd.xlane.f32.xlu0 %v5821
  %v5823 = vpop.xlane.xlu0 %5822
  %v5824 = vsel %vm3674, %v5714, 0.0
  %5825 = vadd.xlane.f32.xlu0 %v5824
  %v5826 = vpop.xlane.xlu0 %5825
  %v5827 = vsel %vm3674, %v5715, 0.0
  %5828 = vadd.xlane.f32.xlu0 %v5827
  %v5829 = vpop.xlane.xlu0 %5828
  %v5830 = vsel %vm3674, %v5716, 0.0
  %5831 = vadd.xlane.f32.xlu0 %v5830
  %v5832 = vpop.xlane.xlu0 %5831
  %v5833 = vsel %vm3674, %v5717, 0.0
  %5834 = vadd.xlane.f32.xlu0 %v5833
  %v5835 = vpop.xlane.xlu0 %5834
  %v5836 = vsel %vm3674, %v5718, 0.0
  %5837 = vadd.xlane.f32.xlu0 %v5836
  %v5838 = vpop.xlane.xlu0 %5837
  %v5839 = vsel %vm3674, %v5719, 0.0
  %5840 = vadd.xlane.f32.xlu0 %v5839
  %v5841 = vpop.xlane.xlu0 %5840
  %v5842 = vsel %vm3674, %v5720, 0.0
  %5843 = vadd.xlane.f32.xlu0 %v5842
  %v5844 = vpop.xlane.xlu0 %5843
  %v5845 = vsel %vm3674, %v5721, 0.0
  %5846 = vadd.xlane.f32.xlu0 %v5845
  %v5847 = vpop.xlane.xlu0 %5846
  %v5848 = vsel %vm3674, %v5722, 0.0
  %5849 = vadd.xlane.f32.xlu0 %v5848
  %v5850 = vpop.xlane.xlu0 %5849
  %v5851 = vsel %vm3674, %v5723, 0.0
  %5852 = vadd.xlane.f32.xlu0 %v5851
  %v5853 = vpop.xlane.xlu0 %5852
  %v5854 = vsel %vm3674, %v5724, 0.0
  %5855 = vadd.xlane.f32.xlu0 %v5854
  %v5856 = vpop.xlane.xlu0 %5855
  %v5857 = vsel %vm3674, %v5725, 0.0
  %5858 = vadd.xlane.f32.xlu0 %v5857
  %v5859 = vpop.xlane.xlu0 %5858
  %v5860 = vsel %vm3674, %v5726, 0.0
  %5861 = vadd.xlane.f32.xlu0 %v5860
  %v5862 = vpop.xlane.xlu0 %5861
  %v5863 = vsel %vm3674, %v5727, 0.0
  %5864 = vadd.xlane.f32.xlu0 %v5863
  %v5865 = vpop.xlane.xlu0 %5864
  %v5866 = vsel %vm3674, %v5728, 0.0
  %5867 = vadd.xlane.f32.xlu0 %v5866
  %v5868 = vpop.xlane.xlu0 %5867
  %v5869 = vsel %vm3674, %v5729, 0.0
  %5870 = vadd.xlane.f32.xlu0 %v5869
  %v5871 = vpop.xlane.xlu0 %5870
  %v5872 = vsel %vm3674, %v5730, 0.0
  %5873 = vadd.xlane.f32.xlu0 %v5872
  %v5874 = vpop.xlane.xlu0 %5873
  %v5875 = vsel %vm3674, %v5731, 0.0
  %5876 = vadd.xlane.f32.xlu0 %v5875
  %v5877 = vpop.xlane.xlu0 %5876
  %v5878 = vsel %vm3674, %v5732, 0.0
  %5879 = vadd.xlane.f32.xlu0 %v5878
  %v5880 = vpop.xlane.xlu0 %5879
  %v5881 = vsel %vm3674, %v5733, 0.0
  %5882 = vadd.xlane.f32.xlu0 %v5881
  %v5883 = vpop.xlane.xlu0 %5882
  %v5884 = vsel %vm3674, %v5734, 0.0
  %5885 = vadd.xlane.f32.xlu0 %v5884
  %v5886 = vpop.xlane.xlu0 %5885
  %v5887 = vsel %vm3674, %v5735, 0.0
  %5888 = vadd.xlane.f32.xlu0 %v5887
  %v5889 = vpop.xlane.xlu0 %5888
  %v5890 = vsel %vm3674, %v5736, 0.0
  %5891 = vadd.xlane.f32.xlu0 %v5890
  %v5892 = vpop.xlane.xlu0 %5891
  %v5893 = vsel %vm3674, %v5737, 0.0
  %5894 = vadd.xlane.f32.xlu0 %v5893
  %v5895 = vpop.xlane.xlu0 %5894
  %v5896 = vsel %vm3674, %v5738, 0.0
  %5897 = vadd.xlane.f32.xlu0 %v5896
  %v5898 = vpop.xlane.xlu0 %5897
  %v5899 = vsel %vm3674, %v5739, 0.0
  %5900 = vadd.xlane.f32.xlu0 %v5899
  %v5901 = vpop.xlane.xlu0 %5900
  %v5902 = vsel %vm3674, %v5740, 0.0
  %5903 = vadd.xlane.f32.xlu0 %v5902
  %v5904 = vpop.xlane.xlu0 %5903
  %v5905 = vsel %vm3674, %v5741, 0.0
  %5906 = vadd.xlane.f32.xlu0 %v5905
  %v5907 = vpop.xlane.xlu0 %5906
  %v5908 = vsel %vm3674, %v5742, 0.0
  %5909 = vadd.xlane.f32.xlu0 %v5908
  %v5910 = vpop.xlane.xlu0 %5909
  %v5911 = vsel %vm3674, %v5743, 0.0
  %5912 = vadd.xlane.f32.xlu0 %v5911
  %v5913 = vpop.xlane.xlu0 %5912
  %v5914 = vsel %vm3674, %v5744, 0.0
  %5915 = vadd.xlane.f32.xlu0 %v5914
  %v5916 = vpop.xlane.xlu0 %5915
  %v5917 = vsel %vm3674, %v5745, 0.0
  %5918 = vadd.xlane.f32.xlu0 %v5917
  %v5919 = vpop.xlane.xlu0 %5918
  %v5920 = vsel %vm3674, %v5746, 0.0
  %5921 = vadd.xlane.f32.xlu0 %v5920
  %v5922 = vpop.xlane.xlu0 %5921
  %v5923 = vsel %vm3674, %v5747, 0.0
  %5924 = vadd.xlane.f32.xlu0 %v5923
  %v5925 = vpop.xlane.xlu0 %5924
  %v5926 = vsel %vm3674, %v5748, 0.0
  %5927 = vadd.xlane.f32.xlu0 %v5926
  %v5928 = vpop.xlane.xlu0 %5927
  %v5929 = vsel %vm3674, %v5749, 0.0
  %5930 = vadd.xlane.f32.xlu0 %v5929
  %v5931 = vpop.xlane.xlu0 %5930
  %v5932 = vsel %vm3674, %v5750, 0.0
  %5933 = vadd.xlane.f32.xlu0 %v5932
  %v5934 = vpop.xlane.xlu0 %5933
  %v5935 = vsel %vm3674, %v5751, 0.0
  %5936 = vadd.xlane.f32.xlu0 %v5935
  %v5937 = vpop.xlane.xlu0 %5936
  %v5938 = vsel %vm3674, %v5752, 0.0
  %5939 = vadd.xlane.f32.xlu0 %v5938
  %v5940 = vpop.xlane.xlu0 %5939
  %v5941 = vsel %vm3674, %v5753, 0.0
  %5942 = vadd.xlane.f32.xlu0 %v5941
  %v5943 = vpop.xlane.xlu0 %5942
  %v5944 = vsel %vm3674, %v5754, 0.0
  %5945 = vadd.xlane.f32.xlu0 %v5944
  %v5946 = vpop.xlane.xlu0 %5945
  %v5947 = vld [vmem:[%s2 + $0x54] sm:$0x1]
  %v5948 = vlaneseq
  %v5949 = vshrl.u32 %v5948, 7
  %v5950 = vsub.s32 0, %v5949
  %v5951 = vrot.slane %v5947, %v5950
  %v5952 = vadd.f32 %v5757, %v5951
  %v5953 = vadd.f32 %v5760, %v5951
  %v5954 = vadd.f32 %v5763, %v5951
  %v5955 = vadd.f32 %v5766, %v5951
  %v5956 = vadd.f32 %v5769, %v5951
  %v5957 = vadd.f32 %v5772, %v5951
  %v5958 = vadd.f32 %v5775, %v5951
  %v5959 = vadd.f32 %v5778, %v5951
  %v5960 = vadd.f32 %v5781, %v5951
  %v5961 = vadd.f32 %v5784, %v5951
  %v5962 = vadd.f32 %v5787, %v5951
  %v5963 = vadd.f32 %v5790, %v5951
  %v5964 = vadd.f32 %v5793, %v5951
  %v5965 = vadd.f32 %v5796, %v5951
  %v5966 = vadd.f32 %v5799, %v5951
  %v5967 = vadd.f32 %v5802, %v5951
  %v5968 = vadd.f32 %v5805, %v5951
  %v5969 = vadd.f32 %v5808, %v5951
  %v5970 = vadd.f32 %v5811, %v5951
  %v5971 = vadd.f32 %v5814, %v5951
  %v5972 = vadd.f32 %v5817, %v5951
  %v5973 = vadd.f32 %v5820, %v5951
  %v5974 = vadd.f32 %v5823, %v5951
  %v5975 = vadd.f32 %v5826, %v5951
  %v5976 = vadd.f32 %v5829, %v5951
  %v5977 = vadd.f32 %v5832, %v5951
  %v5978 = vadd.f32 %v5835, %v5951
  %v5979 = vadd.f32 %v5838, %v5951
  %v5980 = vadd.f32 %v5841, %v5951
  %v5981 = vadd.f32 %v5844, %v5951
  %v5982 = vadd.f32 %v5847, %v5951
  %v5983 = vadd.f32 %v5850, %v5951
  %v5984 = vadd.f32 %v5853, %v5951
  %v5985 = vadd.f32 %v5856, %v5951
  %v5986 = vadd.f32 %v5859, %v5951
  %v5987 = vadd.f32 %v5862, %v5951
  %v5988 = vadd.f32 %v5865, %v5951
  %v5989 = vadd.f32 %v5868, %v5951
  %v5990 = vadd.f32 %v5871, %v5951
  %v5991 = vadd.f32 %v5874, %v5951
  %v5992 = vadd.f32 %v5877, %v5951
  %v5993 = vadd.f32 %v5880, %v5951
  %v5994 = vadd.f32 %v5883, %v5951
  %v5995 = vadd.f32 %v5886, %v5951
  %v5996 = vadd.f32 %v5889, %v5951
  %v5997 = vadd.f32 %v5892, %v5951
  %v5998 = vadd.f32 %v5895, %v5951
  %v5999 = vadd.f32 %v5898, %v5951
  %v6000 = vadd.f32 %v5901, %v5951
  %v6001 = vadd.f32 %v5904, %v5951
  %v6002 = vadd.f32 %v5907, %v5951
  %v6003 = vadd.f32 %v5910, %v5951
  %v6004 = vadd.f32 %v5913, %v5951
  %v6005 = vadd.f32 %v5916, %v5951
  %v6006 = vadd.f32 %v5919, %v5951
  %v6007 = vadd.f32 %v5922, %v5951
  %v6008 = vadd.f32 %v5925, %v5951
  %v6009 = vadd.f32 %v5928, %v5951
  %v6010 = vadd.f32 %v5931, %v5951
  %v6011 = vadd.f32 %v5934, %v5951
  %v6012 = vadd.f32 %v5937, %v5951
  %v6013 = vadd.f32 %v5940, %v5951
  %v6014 = vadd.f32 %v5943, %v5951
  %v6015 = vadd.f32 %v5946, %v5951
  %v6016 = vxor.u32 %v5952, 2147483648
  %v6017 = vxor.u32 %v5953, 2147483648
  %v6018 = vxor.u32 %v5954, 2147483648
  %v6019 = vxor.u32 %v5955, 2147483648
  %v6020 = vxor.u32 %v5956, 2147483648
  %v6021 = vxor.u32 %v5957, 2147483648
  %v6022 = vxor.u32 %v5958, 2147483648
  %v6023 = vxor.u32 %v5959, 2147483648
  %v6024 = vxor.u32 %v5960, 2147483648
  %v6025 = vxor.u32 %v5961, 2147483648
  %v6026 = vxor.u32 %v5962, 2147483648
  %v6027 = vxor.u32 %v5963, 2147483648
  %v6028 = vxor.u32 %v5964, 2147483648
  %v6029 = vxor.u32 %v5965, 2147483648
  %v6030 = vxor.u32 %v5966, 2147483648
  %v6031 = vxor.u32 %v5967, 2147483648
  %v6032 = vxor.u32 %v5968, 2147483648
  %v6033 = vxor.u32 %v5969, 2147483648
  %v6034 = vxor.u32 %v5970, 2147483648
  %v6035 = vxor.u32 %v5971, 2147483648
  %v6036 = vxor.u32 %v5972, 2147483648
  %v6037 = vxor.u32 %v5973, 2147483648
  %v6038 = vxor.u32 %v5974, 2147483648
  %v6039 = vxor.u32 %v5975, 2147483648
  %v6040 = vxor.u32 %v5976, 2147483648
  %v6041 = vxor.u32 %v5977, 2147483648
  %v6042 = vxor.u32 %v5978, 2147483648
  %v6043 = vxor.u32 %v5979, 2147483648
  %v6044 = vxor.u32 %v5980, 2147483648
  %v6045 = vxor.u32 %v5981, 2147483648
  %v6046 = vxor.u32 %v5982, 2147483648
  %v6047 = vxor.u32 %v5983, 2147483648
  %v6048 = vxor.u32 %v5984, 2147483648
  %v6049 = vxor.u32 %v5985, 2147483648
  %v6050 = vxor.u32 %v5986, 2147483648
  %v6051 = vxor.u32 %v5987, 2147483648
  %v6052 = vxor.u32 %v5988, 2147483648
  %v6053 = vxor.u32 %v5989, 2147483648
  %v6054 = vxor.u32 %v5990, 2147483648
  %v6055 = vxor.u32 %v5991, 2147483648
  %v6056 = vxor.u32 %v5992, 2147483648
  %v6057 = vxor.u32 %v5993, 2147483648
  %v6058 = vxor.u32 %v5994, 2147483648
  %v6059 = vxor.u32 %v5995, 2147483648
  %v6060 = vxor.u32 %v5996, 2147483648
  %v6061 = vxor.u32 %v5997, 2147483648
  %v6062 = vxor.u32 %v5998, 2147483648
  %v6063 = vxor.u32 %v5999, 2147483648
  %v6064 = vxor.u32 %v6000, 2147483648
  %v6065 = vxor.u32 %v6001, 2147483648
  %v6066 = vxor.u32 %v6002, 2147483648
  %v6067 = vxor.u32 %v6003, 2147483648
  %v6068 = vxor.u32 %v6004, 2147483648
  %v6069 = vxor.u32 %v6005, 2147483648
  %v6070 = vxor.u32 %v6006, 2147483648
  %v6071 = vxor.u32 %v6007, 2147483648
  %v6072 = vxor.u32 %v6008, 2147483648
  %v6073 = vxor.u32 %v6009, 2147483648
  %v6074 = vxor.u32 %v6010, 2147483648
  %v6075 = vxor.u32 %v6011, 2147483648
  %v6076 = vxor.u32 %v6012, 2147483648
  %v6077 = vxor.u32 %v6013, 2147483648
  %v6078 = vxor.u32 %v6014, 2147483648
  %v6079 = vxor.u32 %v6015, 2147483648
  %v6080 = vmul.f32 %v6016, 1.442695
  %v6081 = vpow.pop %v6080
  %v6082 = vmul.f32 %v6017, 1.442695
  %v6083 = vpow.pop %v6082
  %v6084 = vmul.f32 %v6018, 1.442695
  %v6085 = vpow.pop %v6084
  %v6086 = vmul.f32 %v6019, 1.442695
  %v6087 = vpow.pop %v6086
  %v6088 = vmul.f32 %v6020, 1.442695
  %v6089 = vpow.pop %v6088
  %v6090 = vmul.f32 %v6021, 1.442695
  %v6091 = vpow.pop %v6090
  %v6092 = vmul.f32 %v6022, 1.442695
  %v6093 = vpow.pop %v6092
  %v6094 = vmul.f32 %v6023, 1.442695
  %v6095 = vpow.pop %v6094
  %v6096 = vmul.f32 %v6024, 1.442695
  %v6097 = vpow.pop %v6096
  %v6098 = vmul.f32 %v6025, 1.442695
  %v6099 = vpow.pop %v6098
  %v6100 = vmul.f32 %v6026, 1.442695
  %v6101 = vpow.pop %v6100
  %v6102 = vmul.f32 %v6027, 1.442695
  %v6103 = vpow.pop %v6102
  %v6104 = vmul.f32 %v6028, 1.442695
  %v6105 = vpow.pop %v6104
  %v6106 = vmul.f32 %v6029, 1.442695
  %v6107 = vpow.pop %v6106
  %v6108 = vmul.f32 %v6030, 1.442695
  %v6109 = vpow.pop %v6108
  %v6110 = vmul.f32 %v6031, 1.442695
  %v6111 = vpow.pop %v6110
  %v6112 = vmul.f32 %v6032, 1.442695
  %v6113 = vpow.pop %v6112
  %v6114 = vmul.f32 %v6033, 1.442695
  %v6115 = vpow.pop %v6114
  %v6116 = vmul.f32 %v6034, 1.442695
  %v6117 = vpow.pop %v6116
  %v6118 = vmul.f32 %v6035, 1.442695
  %v6119 = vpow.pop %v6118
  %v6120 = vmul.f32 %v6036, 1.442695
  %v6121 = vpow.pop %v6120
  %v6122 = vmul.f32 %v6037, 1.442695
  %v6123 = vpow.pop %v6122
  %v6124 = vmul.f32 %v6038, 1.442695
  %v6125 = vpow.pop %v6124
  %v6126 = vmul.f32 %v6039, 1.442695
  %v6127 = vpow.pop %v6126
  %v6128 = vmul.f32 %v6040, 1.442695
  %v6129 = vpow.pop %v6128
  %v6130 = vmul.f32 %v6041, 1.442695
  %v6131 = vpow.pop %v6130
  %v6132 = vmul.f32 %v6042, 1.442695
  %v6133 = vpow.pop %v6132
  %v6134 = vmul.f32 %v6043, 1.442695
  %v6135 = vpow.pop %v6134
  %v6136 = vmul.f32 %v6044, 1.442695
  %v6137 = vpow.pop %v6136
  %v6138 = vmul.f32 %v6045, 1.442695
  %v6139 = vpow.pop %v6138
  %v6140 = vmul.f32 %v6046, 1.442695
  %v6141 = vpow.pop %v6140
  %v6142 = vmul.f32 %v6047, 1.442695
  %v6143 = vpow.pop %v6142
  %v6144 = vmul.f32 %v6048, 1.442695
  %v6145 = vpow.pop %v6144
  %v6146 = vmul.f32 %v6049, 1.442695
  %v6147 = vpow.pop %v6146
  %v6148 = vmul.f32 %v6050, 1.442695
  %v6149 = vpow.pop %v6148
  %v6150 = vmul.f32 %v6051, 1.442695
  %v6151 = vpow.pop %v6150
  %v6152 = vmul.f32 %v6052, 1.442695
  %v6153 = vpow.pop %v6152
  %v6154 = vmul.f32 %v6053, 1.442695
  %v6155 = vpow.pop %v6154
  %v6156 = vmul.f32 %v6054, 1.442695
  %v6157 = vpow.pop %v6156
  %v6158 = vmul.f32 %v6055, 1.442695
  %v6159 = vpow.pop %v6158
  %v6160 = vmul.f32 %v6056, 1.442695
  %v6161 = vpow.pop %v6160
  %v6162 = vmul.f32 %v6057, 1.442695
  %v6163 = vpow.pop %v6162
  %v6164 = vmul.f32 %v6058, 1.442695
  %v6165 = vpow.pop %v6164
  %v6166 = vmul.f32 %v6059, 1.442695
  %v6167 = vpow.pop %v6166
  %v6168 = vmul.f32 %v6060, 1.442695
  %v6169 = vpow.pop %v6168
  %v6170 = vmul.f32 %v6061, 1.442695
  %v6171 = vpow.pop %v6170
  %v6172 = vmul.f32 %v6062, 1.442695
  %v6173 = vpow.pop %v6172
  %v6174 = vmul.f32 %v6063, 1.442695
  %v6175 = vpow.pop %v6174
  %v6176 = vmul.f32 %v6064, 1.442695
  %v6177 = vpow.pop %v6176
  %v6178 = vmul.f32 %v6065, 1.442695
  %v6179 = vpow.pop %v6178
  %v6180 = vmul.f32 %v6066, 1.442695
  %v6181 = vpow.pop %v6180
  %v6182 = vmul.f32 %v6067, 1.442695
  %v6183 = vpow.pop %v6182
  %v6184 = vmul.f32 %v6068, 1.442695
  %v6185 = vpow.pop %v6184
  %v6186 = vmul.f32 %v6069, 1.442695
  %v6187 = vpow.pop %v6186
  %v6188 = vmul.f32 %v6070, 1.442695
  %v6189 = vpow.pop %v6188
  %v6190 = vmul.f32 %v6071, 1.442695
  %v6191 = vpow.pop %v6190
  %v6192 = vmul.f32 %v6072, 1.442695
  %v6193 = vpow.pop %v6192
  %v6194 = vmul.f32 %v6073, 1.442695
  %v6195 = vpow.pop %v6194
  %v6196 = vmul.f32 %v6074, 1.442695
  %v6197 = vpow.pop %v6196
  %v6198 = vmul.f32 %v6075, 1.442695
  %v6199 = vpow.pop %v6198
  %v6200 = vmul.f32 %v6076, 1.442695
  %v6201 = vpow.pop %v6200
  %v6202 = vmul.f32 %v6077, 1.442695
  %v6203 = vpow.pop %v6202
  %v6204 = vmul.f32 %v6078, 1.442695
  %v6205 = vpow.pop %v6204
  %v6206 = vmul.f32 %v6079, 1.442695
  %v6207 = vpow.pop %v6206
  %v6208 = vadd.f32 %v6081, 1.0
  %v6209 = vadd.f32 %v6083, 1.0
  %v6210 = vadd.f32 %v6085, 1.0
  %v6211 = vadd.f32 %v6087, 1.0
  %v6212 = vadd.f32 %v6089, 1.0
  %v6213 = vadd.f32 %v6091, 1.0
  %v6214 = vadd.f32 %v6093, 1.0
  %v6215 = vadd.f32 %v6095, 1.0
  %v6216 = vadd.f32 %v6097, 1.0
  %v6217 = vadd.f32 %v6099, 1.0
  %v6218 = vadd.f32 %v6101, 1.0
  %v6219 = vadd.f32 %v6103, 1.0
  %v6220 = vadd.f32 %v6105, 1.0
  %v6221 = vadd.f32 %v6107, 1.0
  %v6222 = vadd.f32 %v6109, 1.0
  %v6223 = vadd.f32 %v6111, 1.0
  %v6224 = vadd.f32 %v6113, 1.0
  %v6225 = vadd.f32 %v6115, 1.0
  %v6226 = vadd.f32 %v6117, 1.0
  %v6227 = vadd.f32 %v6119, 1.0
  %v6228 = vadd.f32 %v6121, 1.0
  %v6229 = vadd.f32 %v6123, 1.0
  %v6230 = vadd.f32 %v6125, 1.0
  %v6231 = vadd.f32 %v6127, 1.0
  %v6232 = vadd.f32 %v6129, 1.0
  %v6233 = vadd.f32 %v6131, 1.0
  %v6234 = vadd.f32 %v6133, 1.0
  %v6235 = vadd.f32 %v6135, 1.0
  %v6236 = vadd.f32 %v6137, 1.0
  %v6237 = vadd.f32 %v6139, 1.0
  %v6238 = vadd.f32 %v6141, 1.0
  %v6239 = vadd.f32 %v6143, 1.0
  %v6240 = vadd.f32 %v6145, 1.0
  %v6241 = vadd.f32 %v6147, 1.0
  %v6242 = vadd.f32 %v6149, 1.0
  %v6243 = vadd.f32 %v6151, 1.0
  %v6244 = vadd.f32 %v6153, 1.0
  %v6245 = vadd.f32 %v6155, 1.0
  %v6246 = vadd.f32 %v6157, 1.0
  %v6247 = vadd.f32 %v6159, 1.0
  %v6248 = vadd.f32 %v6161, 1.0
  %v6249 = vadd.f32 %v6163, 1.0
  %v6250 = vadd.f32 %v6165, 1.0
  %v6251 = vadd.f32 %v6167, 1.0
  %v6252 = vadd.f32 %v6169, 1.0
  %v6253 = vadd.f32 %v6171, 1.0
  %v6254 = vadd.f32 %v6173, 1.0
  %v6255 = vadd.f32 %v6175, 1.0
  %v6256 = vadd.f32 %v6177, 1.0
  %v6257 = vadd.f32 %v6179, 1.0
  %v6258 = vadd.f32 %v6181, 1.0
  %v6259 = vadd.f32 %v6183, 1.0
  %v6260 = vadd.f32 %v6185, 1.0
  %v6261 = vadd.f32 %v6187, 1.0
  %v6262 = vadd.f32 %v6189, 1.0
  %v6263 = vadd.f32 %v6191, 1.0
  %v6264 = vadd.f32 %v6193, 1.0
  %v6265 = vadd.f32 %v6195, 1.0
  %v6266 = vadd.f32 %v6197, 1.0
  %v6267 = vadd.f32 %v6199, 1.0
  %v6268 = vadd.f32 %v6201, 1.0
  %v6269 = vadd.f32 %v6203, 1.0
  %v6270 = vadd.f32 %v6205, 1.0
  %v6271 = vadd.f32 %v6207, 1.0
  %v6272 = vrcp.pop %v6208
  %v6273 = vmul.f32 1.0, %v6272
  %v6274 = vrcp.pop %v6209
  %v6275 = vmul.f32 1.0, %v6274
  %v6276 = vrcp.pop %v6210
  %v6277 = vmul.f32 1.0, %v6276
  %v6278 = vrcp.pop %v6211
  %v6279 = vmul.f32 1.0, %v6278
  %v6280 = vrcp.pop %v6212
  %v6281 = vmul.f32 1.0, %v6280
  %v6282 = vrcp.pop %v6213
  %v6283 = vmul.f32 1.0, %v6282
  %v6284 = vrcp.pop %v6214
  %v6285 = vmul.f32 1.0, %v6284
  %v6286 = vrcp.pop %v6215
  %v6287 = vmul.f32 1.0, %v6286
  %v6288 = vrcp.pop %v6216
  %v6289 = vmul.f32 1.0, %v6288
  %v6290 = vrcp.pop %v6217
  %v6291 = vmul.f32 1.0, %v6290
  %v6292 = vrcp.pop %v6218
  %v6293 = vmul.f32 1.0, %v6292
  %v6294 = vrcp.pop %v6219
  %v6295 = vmul.f32 1.0, %v6294
  %v6296 = vrcp.pop %v6220
  %v6297 = vmul.f32 1.0, %v6296
  %v6298 = vrcp.pop %v6221
  %v6299 = vmul.f32 1.0, %v6298
  %v6300 = vrcp.pop %v6222
  %v6301 = vmul.f32 1.0, %v6300
  %v6302 = vrcp.pop %v6223
  %v6303 = vmul.f32 1.0, %v6302
  %v6304 = vrcp.pop %v6224
  %v6305 = vmul.f32 1.0, %v6304
  %v6306 = vrcp.pop %v6225
  %v6307 = vmul.f32 1.0, %v6306
  %v6308 = vrcp.pop %v6226
  %v6309 = vmul.f32 1.0, %v6308
  %v6310 = vrcp.pop %v6227
  %v6311 = vmul.f32 1.0, %v6310
  %v6312 = vrcp.pop %v6228
  %v6313 = vmul.f32 1.0, %v6312
  %v6314 = vrcp.pop %v6229
  %v6315 = vmul.f32 1.0, %v6314
  %v6316 = vrcp.pop %v6230
  %v6317 = vmul.f32 1.0, %v6316
  %v6318 = vrcp.pop %v6231
  %v6319 = vmul.f32 1.0, %v6318
  %v6320 = vrcp.pop %v6232
  %v6321 = vmul.f32 1.0, %v6320
  %v6322 = vrcp.pop %v6233
  %v6323 = vmul.f32 1.0, %v6322
  %v6324 = vrcp.pop %v6234
  %v6325 = vmul.f32 1.0, %v6324
  %v6326 = vrcp.pop %v6235
  %v6327 = vmul.f32 1.0, %v6326
  %v6328 = vrcp.pop %v6236
  %v6329 = vmul.f32 1.0, %v6328
  %v6330 = vrcp.pop %v6237
  %v6331 = vmul.f32 1.0, %v6330
  %v6332 = vrcp.pop %v6238
  %v6333 = vmul.f32 1.0, %v6332
  %v6334 = vrcp.pop %v6239
  %v6335 = vmul.f32 1.0, %v6334
  %v6336 = vrcp.pop %v6240
  %v6337 = vmul.f32 1.0, %v6336
  %v6338 = vrcp.pop %v6241
  %v6339 = vmul.f32 1.0, %v6338
  %v6340 = vrcp.pop %v6242
  %v6341 = vmul.f32 1.0, %v6340
  %v6342 = vrcp.pop %v6243
  %v6343 = vmul.f32 1.0, %v6342
  %v6344 = vrcp.pop %v6244
  %v6345 = vmul.f32 1.0, %v6344
  %v6346 = vrcp.pop %v6245
  %v6347 = vmul.f32 1.0, %v6346
  %v6348 = vrcp.pop %v6246
  %v6349 = vmul.f32 1.0, %v6348
  %v6350 = vrcp.pop %v6247
  %v6351 = vmul.f32 1.0, %v6350
  %v6352 = vrcp.pop %v6248
  %v6353 = vmul.f32 1.0, %v6352
  %v6354 = vrcp.pop %v6249
  %v6355 = vmul.f32 1.0, %v6354
  %v6356 = vrcp.pop %v6250
  %v6357 = vmul.f32 1.0, %v6356
  %v6358 = vrcp.pop %v6251
  %v6359 = vmul.f32 1.0, %v6358
  %v6360 = vrcp.pop %v6252
  %v6361 = vmul.f32 1.0, %v6360
  %v6362 = vrcp.pop %v6253
  %v6363 = vmul.f32 1.0, %v6362
  %v6364 = vrcp.pop %v6254
  %v6365 = vmul.f32 1.0, %v6364
  %v6366 = vrcp.pop %v6255
  %v6367 = vmul.f32 1.0, %v6366
  %v6368 = vrcp.pop %v6256
  %v6369 = vmul.f32 1.0, %v6368
  %v6370 = vrcp.pop %v6257
  %v6371 = vmul.f32 1.0, %v6370
  %v6372 = vrcp.pop %v6258
  %v6373 = vmul.f32 1.0, %v6372
  %v6374 = vrcp.pop %v6259
  %v6375 = vmul.f32 1.0, %v6374
  %v6376 = vrcp.pop %v6260
  %v6377 = vmul.f32 1.0, %v6376
  %v6378 = vrcp.pop %v6261
  %v6379 = vmul.f32 1.0, %v6378
  %v6380 = vrcp.pop %v6262
  %v6381 = vmul.f32 1.0, %v6380
  %v6382 = vrcp.pop %v6263
  %v6383 = vmul.f32 1.0, %v6382
  %v6384 = vrcp.pop %v6264
  %v6385 = vmul.f32 1.0, %v6384
  %v6386 = vrcp.pop %v6265
  %v6387 = vmul.f32 1.0, %v6386
  %v6388 = vrcp.pop %v6266
  %v6389 = vmul.f32 1.0, %v6388
  %v6390 = vrcp.pop %v6267
  %v6391 = vmul.f32 1.0, %v6390
  %v6392 = vrcp.pop %v6268
  %v6393 = vmul.f32 1.0, %v6392
  %v6394 = vrcp.pop %v6269
  %v6395 = vmul.f32 1.0, %v6394
  %v6396 = vrcp.pop %v6270
  %v6397 = vmul.f32 1.0, %v6396
  %v6398 = vrcp.pop %v6271
  %v6399 = vmul.f32 1.0, %v6398
  %v6464 = vcombine.high %v6273, %v6273
  %v6466 = vunpack.c.l.s4 1966171168
  %v6467 = vunpack.c.0.s8 %v6466
  %v6468 = vlaneseq
  %v6469 = vshrl.u32 %v6468, 7
  %v6470 = vsub.s32 %v6467, %v6469
  %v6471 = vrot.slane %v6273, %v6470
  %v6473 = vunpack.c.l.s4 1966171168
  %v6474 = vunpack.c.0.s8 %v6473
  %v6475 = vlaneseq
  %v6476 = vshrl.u32 %v6475, 7
  %v6477 = vsub.s32 %v6474, %v6476
  %v6478 = vrot.slane %v6464, %v6477
  %v6479 = vcombine.high %v6471, %v6471
  %v6480 = vcombine.high %v6478, %v6478
  %v6482 = vunpack.c.l.s4 1966171168
  %v6483 = vunpack.c.0.s8 %v6482
  %v6484 = vlaneseq
  %v6485 = vshrl.u32 %v6484, 7
  %v6486 = vsub.s32 %v6483, %v6485
  %v6487 = vrot.slane %v6471, %v6486
  %v6489 = vunpack.c.l.s4 1966171168
  %v6490 = vunpack.c.0.s8 %v6489
  %v6491 = vlaneseq
  %v6492 = vshrl.u32 %v6491, 7
  %v6493 = vsub.s32 %v6490, %v6492
  %v6494 = vrot.slane %v6478, %v6493
  %v6496 = vunpack.c.l.s4 1966171168
  %v6497 = vunpack.c.0.s8 %v6496
  %v6498 = vlaneseq
  %v6499 = vshrl.u32 %v6498, 7
  %v6500 = vsub.s32 %v6497, %v6499
  %v6501 = vrot.slane %v6479, %v6500
  %v6503 = vunpack.c.l.s4 1966171168
  %v6504 = vunpack.c.0.s8 %v6503
  %v6505 = vlaneseq
  %v6506 = vshrl.u32 %v6505, 7
  %v6507 = vsub.s32 %v6504, %v6506
  %v6508 = vrot.slane %v6480, %v6507
  %v6509 = vcombine.high %v6487, %v6487
  %v6510 = vcombine.high %v6494, %v6494
  %v6511 = vcombine.high %v6501, %v6501
  %v6512 = vcombine.high %v6508, %v6508
  %v6513 = vcombine.high %v6275, %v6275
  %v6515 = vunpack.c.l.s4 1966171168
  %v6516 = vunpack.c.0.s8 %v6515
  %v6517 = vlaneseq
  %v6518 = vshrl.u32 %v6517, 7
  %v6519 = vsub.s32 %v6516, %v6518
  %v6520 = vrot.slane %v6275, %v6519
  %v6522 = vunpack.c.l.s4 1966171168
  %v6523 = vunpack.c.0.s8 %v6522
  %v6524 = vlaneseq
  %v6525 = vshrl.u32 %v6524, 7
  %v6526 = vsub.s32 %v6523, %v6525
  %v6527 = vrot.slane %v6513, %v6526
  %v6528 = vcombine.high %v6520, %v6520
  %v6529 = vcombine.high %v6527, %v6527
  %v6531 = vunpack.c.l.s4 1966171168
  %v6532 = vunpack.c.0.s8 %v6531
  %v6533 = vlaneseq
  %v6534 = vshrl.u32 %v6533, 7
  %v6535 = vsub.s32 %v6532, %v6534
  %v6536 = vrot.slane %v6520, %v6535
  %v6538 = vunpack.c.l.s4 1966171168
  %v6539 = vunpack.c.0.s8 %v6538
  %v6540 = vlaneseq
  %v6541 = vshrl.u32 %v6540, 7
  %v6542 = vsub.s32 %v6539, %v6541
  %v6543 = vrot.slane %v6527, %v6542
  %v6545 = vunpack.c.l.s4 1966171168
  %v6546 = vunpack.c.0.s8 %v6545
  %v6547 = vlaneseq
  %v6548 = vshrl.u32 %v6547, 7
  %v6549 = vsub.s32 %v6546, %v6548
  %v6550 = vrot.slane %v6528, %v6549
  %v6552 = vunpack.c.l.s4 1966171168
  %v6553 = vunpack.c.0.s8 %v6552
  %v6554 = vlaneseq
  %v6555 = vshrl.u32 %v6554, 7
  %v6556 = vsub.s32 %v6553, %v6555
  %v6557 = vrot.slane %v6529, %v6556
  %v6558 = vcombine.high %v6536, %v6536
  %v6559 = vcombine.high %v6543, %v6543
  %v6560 = vcombine.high %v6550, %v6550
  %v6561 = vcombine.high %v6557, %v6557
  %v6562 = vcombine.high %v6277, %v6277
  %v6564 = vunpack.c.l.s4 1966171168
  %v6565 = vunpack.c.0.s8 %v6564
  %v6566 = vlaneseq
  %v6567 = vshrl.u32 %v6566, 7
  %v6568 = vsub.s32 %v6565, %v6567
  %v6569 = vrot.slane %v6277, %v6568
  %v6571 = vunpack.c.l.s4 1966171168
  %v6572 = vunpack.c.0.s8 %v6571
  %v6573 = vlaneseq
  %v6574 = vshrl.u32 %v6573, 7
  %v6575 = vsub.s32 %v6572, %v6574
  %v6576 = vrot.slane %v6562, %v6575
  %v6577 = vcombine.high %v6569, %v6569
  %v6578 = vcombine.high %v6576, %v6576
  %v6580 = vunpack.c.l.s4 1966171168
  %v6581 = vunpack.c.0.s8 %v6580
  %v6582 = vlaneseq
  %v6583 = vshrl.u32 %v6582, 7
  %v6584 = vsub.s32 %v6581, %v6583
  %v6585 = vrot.slane %v6569, %v6584
  %v6587 = vunpack.c.l.s4 1966171168
  %v6588 = vunpack.c.0.s8 %v6587
  %v6589 = vlaneseq
  %v6590 = vshrl.u32 %v6589, 7
  %v6591 = vsub.s32 %v6588, %v6590
  %v6592 = vrot.slane %v6576, %v6591
  %v6594 = vunpack.c.l.s4 1966171168
  %v6595 = vunpack.c.0.s8 %v6594
  %v6596 = vlaneseq
  %v6597 = vshrl.u32 %v6596, 7
  %v6598 = vsub.s32 %v6595, %v6597
  %v6599 = vrot.slane %v6577, %v6598
  %v6601 = vunpack.c.l.s4 1966171168
  %v6602 = vunpack.c.0.s8 %v6601
  %v6603 = vlaneseq
  %v6604 = vshrl.u32 %v6603, 7
  %v6605 = vsub.s32 %v6602, %v6604
  %v6606 = vrot.slane %v6578, %v6605
  %v6607 = vcombine.high %v6585, %v6585
  %v6608 = vcombine.high %v6592, %v6592
  %v6609 = vcombine.high %v6599, %v6599
  %v6610 = vcombine.high %v6606, %v6606
  %v6611 = vcombine.high %v6279, %v6279
  %v6613 = vunpack.c.l.s4 1966171168
  %v6614 = vunpack.c.0.s8 %v6613
  %v6615 = vlaneseq
  %v6616 = vshrl.u32 %v6615, 7
  %v6617 = vsub.s32 %v6614, %v6616
  %v6618 = vrot.slane %v6279, %v6617
  %v6620 = vunpack.c.l.s4 1966171168
  %v6621 = vunpack.c.0.s8 %v6620
  %v6622 = vlaneseq
  %v6623 = vshrl.u32 %v6622, 7
  %v6624 = vsub.s32 %v6621, %v6623
  %v6625 = vrot.slane %v6611, %v6624
  %v6626 = vcombine.high %v6618, %v6618
  %v6627 = vcombine.high %v6625, %v6625
  %v6629 = vunpack.c.l.s4 1966171168
  %v6630 = vunpack.c.0.s8 %v6629
  %v6631 = vlaneseq
  %v6632 = vshrl.u32 %v6631, 7
  %v6633 = vsub.s32 %v6630, %v6632
  %v6634 = vrot.slane %v6618, %v6633
  %v6636 = vunpack.c.l.s4 1966171168
  %v6637 = vunpack.c.0.s8 %v6636
  %v6638 = vlaneseq
  %v6639 = vshrl.u32 %v6638, 7
  %v6640 = vsub.s32 %v6637, %v6639
  %v6641 = vrot.slane %v6625, %v6640
  %v6643 = vunpack.c.l.s4 1966171168
  %v6644 = vunpack.c.0.s8 %v6643
  %v6645 = vlaneseq
  %v6646 = vshrl.u32 %v6645, 7
  %v6647 = vsub.s32 %v6644, %v6646
  %v6648 = vrot.slane %v6626, %v6647
  %v6650 = vunpack.c.l.s4 1966171168
  %v6651 = vunpack.c.0.s8 %v6650
  %v6652 = vlaneseq
  %v6653 = vshrl.u32 %v6652, 7
  %v6654 = vsub.s32 %v6651, %v6653
  %v6655 = vrot.slane %v6627, %v6654
  %v6656 = vcombine.high %v6634, %v6634
  %v6657 = vcombine.high %v6641, %v6641
  %v6658 = vcombine.high %v6648, %v6648
  %v6659 = vcombine.high %v6655, %v6655
  %v6660 = vcombine.high %v6281, %v6281
  %v6662 = vunpack.c.l.s4 1966171168
  %v6663 = vunpack.c.0.s8 %v6662
  %v6664 = vlaneseq
  %v6665 = vshrl.u32 %v6664, 7
  %v6666 = vsub.s32 %v6663, %v6665
  %v6667 = vrot.slane %v6281, %v6666
  %v6669 = vunpack.c.l.s4 1966171168
  %v6670 = vunpack.c.0.s8 %v6669
  %v6671 = vlaneseq
  %v6672 = vshrl.u32 %v6671, 7
  %v6673 = vsub.s32 %v6670, %v6672
  %v6674 = vrot.slane %v6660, %v6673
  %v6675 = vcombine.high %v6667, %v6667
  %v6676 = vcombine.high %v6674, %v6674
  %v6678 = vunpack.c.l.s4 1966171168
  %v6679 = vunpack.c.0.s8 %v6678
  %v6680 = vlaneseq
  %v6681 = vshrl.u32 %v6680, 7
  %v6682 = vsub.s32 %v6679, %v6681
  %v6683 = vrot.slane %v6667, %v6682
  %v6685 = vunpack.c.l.s4 1966171168
  %v6686 = vunpack.c.0.s8 %v6685
  %v6687 = vlaneseq
  %v6688 = vshrl.u32 %v6687, 7
  %v6689 = vsub.s32 %v6686, %v6688
  %v6690 = vrot.slane %v6674, %v6689
  %v6692 = vunpack.c.l.s4 1966171168
  %v6693 = vunpack.c.0.s8 %v6692
  %v6694 = vlaneseq
  %v6695 = vshrl.u32 %v6694, 7
  %v6696 = vsub.s32 %v6693, %v6695
  %v6697 = vrot.slane %v6675, %v6696
  %v6699 = vunpack.c.l.s4 1966171168
  %v6700 = vunpack.c.0.s8 %v6699
  %v6701 = vlaneseq
  %v6702 = vshrl.u32 %v6701, 7
  %v6703 = vsub.s32 %v6700, %v6702
  %v6704 = vrot.slane %v6676, %v6703
  %v6705 = vcombine.high %v6683, %v6683
  %v6706 = vcombine.high %v6690, %v6690
  %v6707 = vcombine.high %v6697, %v6697
  %v6708 = vcombine.high %v6704, %v6704
  %v6709 = vcombine.high %v6283, %v6283
  %v6711 = vunpack.c.l.s4 1966171168
  %v6712 = vunpack.c.0.s8 %v6711
  %v6713 = vlaneseq
  %v6714 = vshrl.u32 %v6713, 7
  %v6715 = vsub.s32 %v6712, %v6714
  %v6716 = vrot.slane %v6283, %v6715
  %v6718 = vunpack.c.l.s4 1966171168
  %v6719 = vunpack.c.0.s8 %v6718
  %v6720 = vlaneseq
  %v6721 = vshrl.u32 %v6720, 7
  %v6722 = vsub.s32 %v6719, %v6721
  %v6723 = vrot.slane %v6709, %v6722
  %v6724 = vcombine.high %v6716, %v6716
  %v6725 = vcombine.high %v6723, %v6723
  %v6727 = vunpack.c.l.s4 1966171168
  %v6728 = vunpack.c.0.s8 %v6727
  %v6729 = vlaneseq
  %v6730 = vshrl.u32 %v6729, 7
  %v6731 = vsub.s32 %v6728, %v6730
  %v6732 = vrot.slane %v6716, %v6731
  %v6734 = vunpack.c.l.s4 1966171168
  %v6735 = vunpack.c.0.s8 %v6734
  %v6736 = vlaneseq
  %v6737 = vshrl.u32 %v6736, 7
  %v6738 = vsub.s32 %v6735, %v6737
  %v6739 = vrot.slane %v6723, %v6738
  %v6741 = vunpack.c.l.s4 1966171168
  %v6742 = vunpack.c.0.s8 %v6741
  %v6743 = vlaneseq
  %v6744 = vshrl.u32 %v6743, 7
  %v6745 = vsub.s32 %v6742, %v6744
  %v6746 = vrot.slane %v6724, %v6745
  %v6748 = vunpack.c.l.s4 1966171168
  %v6749 = vunpack.c.0.s8 %v6748
  %v6750 = vlaneseq
  %v6751 = vshrl.u32 %v6750, 7
  %v6752 = vsub.s32 %v6749, %v6751
  %v6753 = vrot.slane %v6725, %v6752
  %v6754 = vcombine.high %v6732, %v6732
  %v6755 = vcombine.high %v6739, %v6739
  %v6756 = vcombine.high %v6746, %v6746
  %v6757 = vcombine.high %v6753, %v6753
  %v6758 = vcombine.high %v6285, %v6285
  %v6760 = vunpack.c.l.s4 1966171168
  %v6761 = vunpack.c.0.s8 %v6760
  %v6762 = vlaneseq
  %v6763 = vshrl.u32 %v6762, 7
  %v6764 = vsub.s32 %v6761, %v6763
  %v6765 = vrot.slane %v6285, %v6764
  %v6767 = vunpack.c.l.s4 1966171168
  %v6768 = vunpack.c.0.s8 %v6767
  %v6769 = vlaneseq
  %v6770 = vshrl.u32 %v6769, 7
  %v6771 = vsub.s32 %v6768, %v6770
  %v6772 = vrot.slane %v6758, %v6771
  %v6773 = vcombine.high %v6765, %v6765
  %v6774 = vcombine.high %v6772, %v6772
  %v6776 = vunpack.c.l.s4 1966171168
  %v6777 = vunpack.c.0.s8 %v6776
  %v6778 = vlaneseq
  %v6779 = vshrl.u32 %v6778, 7
  %v6780 = vsub.s32 %v6777, %v6779
  %v6781 = vrot.slane %v6765, %v6780
  %v6783 = vunpack.c.l.s4 1966171168
  %v6784 = vunpack.c.0.s8 %v6783
  %v6785 = vlaneseq
  %v6786 = vshrl.u32 %v6785, 7
  %v6787 = vsub.s32 %v6784, %v6786
  %v6788 = vrot.slane %v6772, %v6787
  %v6790 = vunpack.c.l.s4 1966171168
  %v6791 = vunpack.c.0.s8 %v6790
  %v6792 = vlaneseq
  %v6793 = vshrl.u32 %v6792, 7
  %v6794 = vsub.s32 %v6791, %v6793
  %v6795 = vrot.slane %v6773, %v6794
  %v6797 = vunpack.c.l.s4 1966171168
  %v6798 = vunpack.c.0.s8 %v6797
  %v6799 = vlaneseq
  %v6800 = vshrl.u32 %v6799, 7
  %v6801 = vsub.s32 %v6798, %v6800
  %v6802 = vrot.slane %v6774, %v6801
  %v6803 = vcombine.high %v6781, %v6781
  %v6804 = vcombine.high %v6788, %v6788
  %v6805 = vcombine.high %v6795, %v6795
  %v6806 = vcombine.high %v6802, %v6802
  %v6807 = vcombine.high %v6287, %v6287
  %v6809 = vunpack.c.l.s4 1966171168
  %v6810 = vunpack.c.0.s8 %v6809
  %v6811 = vlaneseq
  %v6812 = vshrl.u32 %v6811, 7
  %v6813 = vsub.s32 %v6810, %v6812
  %v6814 = vrot.slane %v6287, %v6813
  %v6816 = vunpack.c.l.s4 1966171168
  %v6817 = vunpack.c.0.s8 %v6816
  %v6818 = vlaneseq
  %v6819 = vshrl.u32 %v6818, 7
  %v6820 = vsub.s32 %v6817, %v6819
  %v6821 = vrot.slane %v6807, %v6820
  %v6822 = vcombine.high %v6814, %v6814
  %v6823 = vcombine.high %v6821, %v6821
  %v6825 = vunpack.c.l.s4 1966171168
  %v6826 = vunpack.c.0.s8 %v6825
  %v6827 = vlaneseq
  %v6828 = vshrl.u32 %v6827, 7
  %v6829 = vsub.s32 %v6826, %v6828
  %v6830 = vrot.slane %v6814, %v6829
  %v6832 = vunpack.c.l.s4 1966171168
  %v6833 = vunpack.c.0.s8 %v6832
  %v6834 = vlaneseq
  %v6835 = vshrl.u32 %v6834, 7
  %v6836 = vsub.s32 %v6833, %v6835
  %v6837 = vrot.slane %v6821, %v6836
  %v6839 = vunpack.c.l.s4 1966171168
  %v6840 = vunpack.c.0.s8 %v6839
  %v6841 = vlaneseq
  %v6842 = vshrl.u32 %v6841, 7
  %v6843 = vsub.s32 %v6840, %v6842
  %v6844 = vrot.slane %v6822, %v6843
  %v6846 = vunpack.c.l.s4 1966171168
  %v6847 = vunpack.c.0.s8 %v6846
  %v6848 = vlaneseq
  %v6849 = vshrl.u32 %v6848, 7
  %v6850 = vsub.s32 %v6847, %v6849
  %v6851 = vrot.slane %v6823, %v6850
  %v6852 = vcombine.high %v6830, %v6830
  %v6853 = vcombine.high %v6837, %v6837
  %v6854 = vcombine.high %v6844, %v6844
  %v6855 = vcombine.high %v6851, %v6851
  %v6856 = vcombine.high %v6289, %v6289
  %v6858 = vunpack.c.l.s4 1966171168
  %v6859 = vunpack.c.0.s8 %v6858
  %v6860 = vlaneseq
  %v6861 = vshrl.u32 %v6860, 7
  %v6862 = vsub.s32 %v6859, %v6861
  %v6863 = vrot.slane %v6289, %v6862
  %v6865 = vunpack.c.l.s4 1966171168
  %v6866 = vunpack.c.0.s8 %v6865
  %v6867 = vlaneseq
  %v6868 = vshrl.u32 %v6867, 7
  %v6869 = vsub.s32 %v6866, %v6868
  %v6870 = vrot.slane %v6856, %v6869
  %v6871 = vcombine.high %v6863, %v6863
  %v6872 = vcombine.high %v6870, %v6870
  %v6874 = vunpack.c.l.s4 1966171168
  %v6875 = vunpack.c.0.s8 %v6874
  %v6876 = vlaneseq
  %v6877 = vshrl.u32 %v6876, 7
  %v6878 = vsub.s32 %v6875, %v6877
  %v6879 = vrot.slane %v6863, %v6878
  %v6881 = vunpack.c.l.s4 1966171168
  %v6882 = vunpack.c.0.s8 %v6881
  %v6883 = vlaneseq
  %v6884 = vshrl.u32 %v6883, 7
  %v6885 = vsub.s32 %v6882, %v6884
  %v6886 = vrot.slane %v6870, %v6885
  %v6888 = vunpack.c.l.s4 1966171168
  %v6889 = vunpack.c.0.s8 %v6888
  %v6890 = vlaneseq
  %v6891 = vshrl.u32 %v6890, 7
  %v6892 = vsub.s32 %v6889, %v6891
  %v6893 = vrot.slane %v6871, %v6892
  %v6895 = vunpack.c.l.s4 1966171168
  %v6896 = vunpack.c.0.s8 %v6895
  %v6897 = vlaneseq
  %v6898 = vshrl.u32 %v6897, 7
  %v6899 = vsub.s32 %v6896, %v6898
  %v6900 = vrot.slane %v6872, %v6899
  %v6901 = vcombine.high %v6879, %v6879
  %v6902 = vcombine.high %v6886, %v6886
  %v6903 = vcombine.high %v6893, %v6893
  %v6904 = vcombine.high %v6900, %v6900
  %v6905 = vcombine.high %v6291, %v6291
  %v6907 = vunpack.c.l.s4 1966171168
  %v6908 = vunpack.c.0.s8 %v6907
  %v6909 = vlaneseq
  %v6910 = vshrl.u32 %v6909, 7
  %v6911 = vsub.s32 %v6908, %v6910
  %v6912 = vrot.slane %v6291, %v6911
  %v6914 = vunpack.c.l.s4 1966171168
  %v6915 = vunpack.c.0.s8 %v6914
  %v6916 = vlaneseq
  %v6917 = vshrl.u32 %v6916, 7
  %v6918 = vsub.s32 %v6915, %v6917
  %v6919 = vrot.slane %v6905, %v6918
  %v6920 = vcombine.high %v6912, %v6912
  %v6921 = vcombine.high %v6919, %v6919
  %v6923 = vunpack.c.l.s4 1966171168
  %v6924 = vunpack.c.0.s8 %v6923
  %v6925 = vlaneseq
  %v6926 = vshrl.u32 %v6925, 7
  %v6927 = vsub.s32 %v6924, %v6926
  %v6928 = vrot.slane %v6912, %v6927
  %v6930 = vunpack.c.l.s4 1966171168
  %v6931 = vunpack.c.0.s8 %v6930
  %v6932 = vlaneseq
  %v6933 = vshrl.u32 %v6932, 7
  %v6934 = vsub.s32 %v6931, %v6933
  %v6935 = vrot.slane %v6919, %v6934
  %v6937 = vunpack.c.l.s4 1966171168
  %v6938 = vunpack.c.0.s8 %v6937
  %v6939 = vlaneseq
  %v6940 = vshrl.u32 %v6939, 7
  %v6941 = vsub.s32 %v6938, %v6940
  %v6942 = vrot.slane %v6920, %v6941
  %v6944 = vunpack.c.l.s4 1966171168
  %v6945 = vunpack.c.0.s8 %v6944
  %v6946 = vlaneseq
  %v6947 = vshrl.u32 %v6946, 7
  %v6948 = vsub.s32 %v6945, %v6947
  %v6949 = vrot.slane %v6921, %v6948
  %v6950 = vcombine.high %v6928, %v6928
  %v6951 = vcombine.high %v6935, %v6935
  %v6952 = vcombine.high %v6942, %v6942
  %v6953 = vcombine.high %v6949, %v6949
  %v6954 = vcombine.high %v6293, %v6293
  %v6956 = vunpack.c.l.s4 1966171168
  %v6957 = vunpack.c.0.s8 %v6956
  %v6958 = vlaneseq
  %v6959 = vshrl.u32 %v6958, 7
  %v6960 = vsub.s32 %v6957, %v6959
  %v6961 = vrot.slane %v6293, %v6960
  %v6963 = vunpack.c.l.s4 1966171168
  %v6964 = vunpack.c.0.s8 %v6963
  %v6965 = vlaneseq
  %v6966 = vshrl.u32 %v6965, 7
  %v6967 = vsub.s32 %v6964, %v6966
  %v6968 = vrot.slane %v6954, %v6967
  %v6969 = vcombine.high %v6961, %v6961
  %v6970 = vcombine.high %v6968, %v6968
  %v6972 = vunpack.c.l.s4 1966171168
  %v6973 = vunpack.c.0.s8 %v6972
  %v6974 = vlaneseq
  %v6975 = vshrl.u32 %v6974, 7
  %v6976 = vsub.s32 %v6973, %v6975
  %v6977 = vrot.slane %v6961, %v6976
  %v6979 = vunpack.c.l.s4 1966171168
  %v6980 = vunpack.c.0.s8 %v6979
  %v6981 = vlaneseq
  %v6982 = vshrl.u32 %v6981, 7
  %v6983 = vsub.s32 %v6980, %v6982
  %v6984 = vrot.slane %v6968, %v6983
  %v6986 = vunpack.c.l.s4 1966171168
  %v6987 = vunpack.c.0.s8 %v6986
  %v6988 = vlaneseq
  %v6989 = vshrl.u32 %v6988, 7
  %v6990 = vsub.s32 %v6987, %v6989
  %v6991 = vrot.slane %v6969, %v6990
  %v6993 = vunpack.c.l.s4 1966171168
  %v6994 = vunpack.c.0.s8 %v6993
  %v6995 = vlaneseq
  %v6996 = vshrl.u32 %v6995, 7
  %v6997 = vsub.s32 %v6994, %v6996
  %v6998 = vrot.slane %v6970, %v6997
  %v6999 = vcombine.high %v6977, %v6977
  %v7000 = vcombine.high %v6984, %v6984
  %v7001 = vcombine.high %v6991, %v6991
  %v7002 = vcombine.high %v6998, %v6998
  %v7003 = vcombine.high %v6295, %v6295
  %v7005 = vunpack.c.l.s4 1966171168
  %v7006 = vunpack.c.0.s8 %v7005
  %v7007 = vlaneseq
  %v7008 = vshrl.u32 %v7007, 7
  %v7009 = vsub.s32 %v7006, %v7008
  %v7010 = vrot.slane %v6295, %v7009
  %v7012 = vunpack.c.l.s4 1966171168
  %v7013 = vunpack.c.0.s8 %v7012
  %v7014 = vlaneseq
  %v7015 = vshrl.u32 %v7014, 7
  %v7016 = vsub.s32 %v7013, %v7015
  %v7017 = vrot.slane %v7003, %v7016
  %v7018 = vcombine.high %v7010, %v7010
  %v7019 = vcombine.high %v7017, %v7017
  %v7021 = vunpack.c.l.s4 1966171168
  %v7022 = vunpack.c.0.s8 %v7021
  %v7023 = vlaneseq
  %v7024 = vshrl.u32 %v7023, 7
  %v7025 = vsub.s32 %v7022, %v7024
  %v7026 = vrot.slane %v7010, %v7025
  %v7028 = vunpack.c.l.s4 1966171168
  %v7029 = vunpack.c.0.s8 %v7028
  %v7030 = vlaneseq
  %v7031 = vshrl.u32 %v7030, 7
  %v7032 = vsub.s32 %v7029, %v7031
  %v7033 = vrot.slane %v7017, %v7032
  %v7035 = vunpack.c.l.s4 1966171168
  %v7036 = vunpack.c.0.s8 %v7035
  %v7037 = vlaneseq
  %v7038 = vshrl.u32 %v7037, 7
  %v7039 = vsub.s32 %v7036, %v7038
  %v7040 = vrot.slane %v7018, %v7039
  %v7042 = vunpack.c.l.s4 1966171168
  %v7043 = vunpack.c.0.s8 %v7042
  %v7044 = vlaneseq
  %v7045 = vshrl.u32 %v7044, 7
  %v7046 = vsub.s32 %v7043, %v7045
  %v7047 = vrot.slane %v7019, %v7046
  %v7048 = vcombine.high %v7026, %v7026
  %v7049 = vcombine.high %v7033, %v7033
  %v7050 = vcombine.high %v7040, %v7040
  %v7051 = vcombine.high %v7047, %v7047
  %v7052 = vcombine.high %v6297, %v6297
  %v7054 = vunpack.c.l.s4 1966171168
  %v7055 = vunpack.c.0.s8 %v7054
  %v7056 = vlaneseq
  %v7057 = vshrl.u32 %v7056, 7
  %v7058 = vsub.s32 %v7055, %v7057
  %v7059 = vrot.slane %v6297, %v7058
  %v7061 = vunpack.c.l.s4 1966171168
  %v7062 = vunpack.c.0.s8 %v7061
  %v7063 = vlaneseq
  %v7064 = vshrl.u32 %v7063, 7
  %v7065 = vsub.s32 %v7062, %v7064
  %v7066 = vrot.slane %v7052, %v7065
  %v7067 = vcombine.high %v7059, %v7059
  %v7068 = vcombine.high %v7066, %v7066
  %v7070 = vunpack.c.l.s4 1966171168
  %v7071 = vunpack.c.0.s8 %v7070
  %v7072 = vlaneseq
  %v7073 = vshrl.u32 %v7072, 7
  %v7074 = vsub.s32 %v7071, %v7073
  %v7075 = vrot.slane %v7059, %v7074
  %v7077 = vunpack.c.l.s4 1966171168
  %v7078 = vunpack.c.0.s8 %v7077
  %v7079 = vlaneseq
  %v7080 = vshrl.u32 %v7079, 7
  %v7081 = vsub.s32 %v7078, %v7080
  %v7082 = vrot.slane %v7066, %v7081
  %v7084 = vunpack.c.l.s4 1966171168
  %v7085 = vunpack.c.0.s8 %v7084
  %v7086 = vlaneseq
  %v7087 = vshrl.u32 %v7086, 7
  %v7088 = vsub.s32 %v7085, %v7087
  %v7089 = vrot.slane %v7067, %v7088
  %v7091 = vunpack.c.l.s4 1966171168
  %v7092 = vunpack.c.0.s8 %v7091
  %v7093 = vlaneseq
  %v7094 = vshrl.u32 %v7093, 7
  %v7095 = vsub.s32 %v7092, %v7094
  %v7096 = vrot.slane %v7068, %v7095
  %v7097 = vcombine.high %v7075, %v7075
  %v7098 = vcombine.high %v7082, %v7082
  %v7099 = vcombine.high %v7089, %v7089
  %v7100 = vcombine.high %v7096, %v7096
  %v7101 = vcombine.high %v6299, %v6299
  %v7103 = vunpack.c.l.s4 1966171168
  %v7104 = vunpack.c.0.s8 %v7103
  %v7105 = vlaneseq
  %v7106 = vshrl.u32 %v7105, 7
  %v7107 = vsub.s32 %v7104, %v7106
  %v7108 = vrot.slane %v6299, %v7107
  %v7110 = vunpack.c.l.s4 1966171168
  %v7111 = vunpack.c.0.s8 %v7110
  %v7112 = vlaneseq
  %v7113 = vshrl.u32 %v7112, 7
  %v7114 = vsub.s32 %v7111, %v7113
  %v7115 = vrot.slane %v7101, %v7114
  %v7116 = vcombine.high %v7108, %v7108
  %v7117 = vcombine.high %v7115, %v7115
  %v7119 = vunpack.c.l.s4 1966171168
  %v7120 = vunpack.c.0.s8 %v7119
  %v7121 = vlaneseq
  %v7122 = vshrl.u32 %v7121, 7
  %v7123 = vsub.s32 %v7120, %v7122
  %v7124 = vrot.slane %v7108, %v7123
  %v7126 = vunpack.c.l.s4 1966171168
  %v7127 = vunpack.c.0.s8 %v7126
  %v7128 = vlaneseq
  %v7129 = vshrl.u32 %v7128, 7
  %v7130 = vsub.s32 %v7127, %v7129
  %v7131 = vrot.slane %v7115, %v7130
  %v7133 = vunpack.c.l.s4 1966171168
  %v7134 = vunpack.c.0.s8 %v7133
  %v7135 = vlaneseq
  %v7136 = vshrl.u32 %v7135, 7
  %v7137 = vsub.s32 %v7134, %v7136
  %v7138 = vrot.slane %v7116, %v7137
  %v7140 = vunpack.c.l.s4 1966171168
  %v7141 = vunpack.c.0.s8 %v7140
  %v7142 = vlaneseq
  %v7143 = vshrl.u32 %v7142, 7
  %v7144 = vsub.s32 %v7141, %v7143
  %v7145 = vrot.slane %v7117, %v7144
  %v7146 = vcombine.high %v7124, %v7124
  %v7147 = vcombine.high %v7131, %v7131
  %v7148 = vcombine.high %v7138, %v7138
  %v7149 = vcombine.high %v7145, %v7145
  %v7150 = vcombine.high %v6301, %v6301
  %v7152 = vunpack.c.l.s4 1966171168
  %v7153 = vunpack.c.0.s8 %v7152
  %v7154 = vlaneseq
  %v7155 = vshrl.u32 %v7154, 7
  %v7156 = vsub.s32 %v7153, %v7155
  %v7157 = vrot.slane %v6301, %v7156
  %v7159 = vunpack.c.l.s4 1966171168
  %v7160 = vunpack.c.0.s8 %v7159
  %v7161 = vlaneseq
  %v7162 = vshrl.u32 %v7161, 7
  %v7163 = vsub.s32 %v7160, %v7162
  %v7164 = vrot.slane %v7150, %v7163
  %v7165 = vcombine.high %v7157, %v7157
  %v7166 = vcombine.high %v7164, %v7164
  %v7168 = vunpack.c.l.s4 1966171168
  %v7169 = vunpack.c.0.s8 %v7168
  %v7170 = vlaneseq
  %v7171 = vshrl.u32 %v7170, 7
  %v7172 = vsub.s32 %v7169, %v7171
  %v7173 = vrot.slane %v7157, %v7172
  %v7175 = vunpack.c.l.s4 1966171168
  %v7176 = vunpack.c.0.s8 %v7175
  %v7177 = vlaneseq
  %v7178 = vshrl.u32 %v7177, 7
  %v7179 = vsub.s32 %v7176, %v7178
  %v7180 = vrot.slane %v7164, %v7179
  %v7182 = vunpack.c.l.s4 1966171168
  %v7183 = vunpack.c.0.s8 %v7182
  %v7184 = vlaneseq
  %v7185 = vshrl.u32 %v7184, 7
  %v7186 = vsub.s32 %v7183, %v7185
  %v7187 = vrot.slane %v7165, %v7186
  %v7189 = vunpack.c.l.s4 1966171168
  %v7190 = vunpack.c.0.s8 %v7189
  %v7191 = vlaneseq
  %v7192 = vshrl.u32 %v7191, 7
  %v7193 = vsub.s32 %v7190, %v7192
  %v7194 = vrot.slane %v7166, %v7193
  %v7195 = vcombine.high %v7173, %v7173
  %v7196 = vcombine.high %v7180, %v7180
  %v7197 = vcombine.high %v7187, %v7187
  %v7198 = vcombine.high %v7194, %v7194
  %v7199 = vcombine.high %v6303, %v6303
  %v7201 = vunpack.c.l.s4 1966171168
  %v7202 = vunpack.c.0.s8 %v7201
  %v7203 = vlaneseq
  %v7204 = vshrl.u32 %v7203, 7
  %v7205 = vsub.s32 %v7202, %v7204
  %v7206 = vrot.slane %v6303, %v7205
  %v7208 = vunpack.c.l.s4 1966171168
  %v7209 = vunpack.c.0.s8 %v7208
  %v7210 = vlaneseq
  %v7211 = vshrl.u32 %v7210, 7
  %v7212 = vsub.s32 %v7209, %v7211
  %v7213 = vrot.slane %v7199, %v7212
  %v7214 = vcombine.high %v7206, %v7206
  %v7215 = vcombine.high %v7213, %v7213
  %v7217 = vunpack.c.l.s4 1966171168
  %v7218 = vunpack.c.0.s8 %v7217
  %v7219 = vlaneseq
  %v7220 = vshrl.u32 %v7219, 7
  %v7221 = vsub.s32 %v7218, %v7220
  %v7222 = vrot.slane %v7206, %v7221
  %v7224 = vunpack.c.l.s4 1966171168
  %v7225 = vunpack.c.0.s8 %v7224
  %v7226 = vlaneseq
  %v7227 = vshrl.u32 %v7226, 7
  %v7228 = vsub.s32 %v7225, %v7227
  %v7229 = vrot.slane %v7213, %v7228
  %v7231 = vunpack.c.l.s4 1966171168
  %v7232 = vunpack.c.0.s8 %v7231
  %v7233 = vlaneseq
  %v7234 = vshrl.u32 %v7233, 7
  %v7235 = vsub.s32 %v7232, %v7234
  %v7236 = vrot.slane %v7214, %v7235
  %v7238 = vunpack.c.l.s4 1966171168
  %v7239 = vunpack.c.0.s8 %v7238
  %v7240 = vlaneseq
  %v7241 = vshrl.u32 %v7240, 7
  %v7242 = vsub.s32 %v7239, %v7241
  %v7243 = vrot.slane %v7215, %v7242
  %v7244 = vcombine.high %v7222, %v7222
  %v7245 = vcombine.high %v7229, %v7229
  %v7246 = vcombine.high %v7236, %v7236
  %v7247 = vcombine.high %v7243, %v7243
  %v7248 = vcombine.high %v6305, %v6305
  %v7250 = vunpack.c.l.s4 1966171168
  %v7251 = vunpack.c.0.s8 %v7250
  %v7252 = vlaneseq
  %v7253 = vshrl.u32 %v7252, 7
  %v7254 = vsub.s32 %v7251, %v7253
  %v7255 = vrot.slane %v6305, %v7254
  %v7257 = vunpack.c.l.s4 1966171168
  %v7258 = vunpack.c.0.s8 %v7257
  %v7259 = vlaneseq
  %v7260 = vshrl.u32 %v7259, 7
  %v7261 = vsub.s32 %v7258, %v7260
  %v7262 = vrot.slane %v7248, %v7261
  %v7263 = vcombine.high %v7255, %v7255
  %v7264 = vcombine.high %v7262, %v7262
  %v7266 = vunpack.c.l.s4 1966171168
  %v7267 = vunpack.c.0.s8 %v7266
  %v7268 = vlaneseq
  %v7269 = vshrl.u32 %v7268, 7
  %v7270 = vsub.s32 %v7267, %v7269
  %v7271 = vrot.slane %v7255, %v7270
  %v7273 = vunpack.c.l.s4 1966171168
  %v7274 = vunpack.c.0.s8 %v7273
  %v7275 = vlaneseq
  %v7276 = vshrl.u32 %v7275, 7
  %v7277 = vsub.s32 %v7274, %v7276
  %v7278 = vrot.slane %v7262, %v7277
  %v7280 = vunpack.c.l.s4 1966171168
  %v7281 = vunpack.c.0.s8 %v7280
  %v7282 = vlaneseq
  %v7283 = vshrl.u32 %v7282, 7
  %v7284 = vsub.s32 %v7281, %v7283
  %v7285 = vrot.slane %v7263, %v7284
  %v7287 = vunpack.c.l.s4 1966171168
  %v7288 = vunpack.c.0.s8 %v7287
  %v7289 = vlaneseq
  %v7290 = vshrl.u32 %v7289, 7
  %v7291 = vsub.s32 %v7288, %v7290
  %v7292 = vrot.slane %v7264, %v7291
  %v7293 = vcombine.high %v7271, %v7271
  %v7294 = vcombine.high %v7278, %v7278
  %v7295 = vcombine.high %v7285, %v7285
  %v7296 = vcombine.high %v7292, %v7292
  %v7297 = vcombine.high %v6307, %v6307
  %v7299 = vunpack.c.l.s4 1966171168
  %v7300 = vunpack.c.0.s8 %v7299
  %v7301 = vlaneseq
  %v7302 = vshrl.u32 %v7301, 7
  %v7303 = vsub.s32 %v7300, %v7302
  %v7304 = vrot.slane %v6307, %v7303
  %v7306 = vunpack.c.l.s4 1966171168
  %v7307 = vunpack.c.0.s8 %v7306
  %v7308 = vlaneseq
  %v7309 = vshrl.u32 %v7308, 7
  %v7310 = vsub.s32 %v7307, %v7309
  %v7311 = vrot.slane %v7297, %v7310
  %v7312 = vcombine.high %v7304, %v7304
  %v7313 = vcombine.high %v7311, %v7311
  %v7315 = vunpack.c.l.s4 1966171168
  %v7316 = vunpack.c.0.s8 %v7315
  %v7317 = vlaneseq
  %v7318 = vshrl.u32 %v7317, 7
  %v7319 = vsub.s32 %v7316, %v7318
  %v7320 = vrot.slane %v7304, %v7319
  %v7322 = vunpack.c.l.s4 1966171168
  %v7323 = vunpack.c.0.s8 %v7322
  %v7324 = vlaneseq
  %v7325 = vshrl.u32 %v7324, 7
  %v7326 = vsub.s32 %v7323, %v7325
  %v7327 = vrot.slane %v7311, %v7326
  %v7329 = vunpack.c.l.s4 1966171168
  %v7330 = vunpack.c.0.s8 %v7329
  %v7331 = vlaneseq
  %v7332 = vshrl.u32 %v7331, 7
  %v7333 = vsub.s32 %v7330, %v7332
  %v7334 = vrot.slane %v7312, %v7333
  %v7336 = vunpack.c.l.s4 1966171168
  %v7337 = vunpack.c.0.s8 %v7336
  %v7338 = vlaneseq
  %v7339 = vshrl.u32 %v7338, 7
  %v7340 = vsub.s32 %v7337, %v7339
  %v7341 = vrot.slane %v7313, %v7340
  %v7342 = vcombine.high %v7320, %v7320
  %v7343 = vcombine.high %v7327, %v7327
  %v7344 = vcombine.high %v7334, %v7334
  %v7345 = vcombine.high %v7341, %v7341
  %v7346 = vcombine.high %v6309, %v6309
  %v7348 = vunpack.c.l.s4 1966171168
  %v7349 = vunpack.c.0.s8 %v7348
  %v7350 = vlaneseq
  %v7351 = vshrl.u32 %v7350, 7
  %v7352 = vsub.s32 %v7349, %v7351
  %v7353 = vrot.slane %v6309, %v7352
  %v7355 = vunpack.c.l.s4 1966171168
  %v7356 = vunpack.c.0.s8 %v7355
  %v7357 = vlaneseq
  %v7358 = vshrl.u32 %v7357, 7
  %v7359 = vsub.s32 %v7356, %v7358
  %v7360 = vrot.slane %v7346, %v7359
  %v7361 = vcombine.high %v7353, %v7353
  %v7362 = vcombine.high %v7360, %v7360
  %v7364 = vunpack.c.l.s4 1966171168
  %v7365 = vunpack.c.0.s8 %v7364
  %v7366 = vlaneseq
  %v7367 = vshrl.u32 %v7366, 7
  %v7368 = vsub.s32 %v7365, %v7367
  %v7369 = vrot.slane %v7353, %v7368
  %v7371 = vunpack.c.l.s4 1966171168
  %v7372 = vunpack.c.0.s8 %v7371
  %v7373 = vlaneseq
  %v7374 = vshrl.u32 %v7373, 7
  %v7375 = vsub.s32 %v7372, %v7374
  %v7376 = vrot.slane %v7360, %v7375
  %v7378 = vunpack.c.l.s4 1966171168
  %v7379 = vunpack.c.0.s8 %v7378
  %v7380 = vlaneseq
  %v7381 = vshrl.u32 %v7380, 7
  %v7382 = vsub.s32 %v7379, %v7381
  %v7383 = vrot.slane %v7361, %v7382
  %v7385 = vunpack.c.l.s4 1966171168
  %v7386 = vunpack.c.0.s8 %v7385
  %v7387 = vlaneseq
  %v7388 = vshrl.u32 %v7387, 7
  %v7389 = vsub.s32 %v7386, %v7388
  %v7390 = vrot.slane %v7362, %v7389
  %v7391 = vcombine.high %v7369, %v7369
  %v7392 = vcombine.high %v7376, %v7376
  %v7393 = vcombine.high %v7383, %v7383
  %v7394 = vcombine.high %v7390, %v7390
  %v7395 = vcombine.high %v6311, %v6311
  %v7397 = vunpack.c.l.s4 1966171168
  %v7398 = vunpack.c.0.s8 %v7397
  %v7399 = vlaneseq
  %v7400 = vshrl.u32 %v7399, 7
  %v7401 = vsub.s32 %v7398, %v7400
  %v7402 = vrot.slane %v6311, %v7401
  %v7404 = vunpack.c.l.s4 1966171168
  %v7405 = vunpack.c.0.s8 %v7404
  %v7406 = vlaneseq
  %v7407 = vshrl.u32 %v7406, 7
  %v7408 = vsub.s32 %v7405, %v7407
  %v7409 = vrot.slane %v7395, %v7408
  %v7410 = vcombine.high %v7402, %v7402
  %v7411 = vcombine.high %v7409, %v7409
  %v7413 = vunpack.c.l.s4 1966171168
  %v7414 = vunpack.c.0.s8 %v7413
  %v7415 = vlaneseq
  %v7416 = vshrl.u32 %v7415, 7
  %v7417 = vsub.s32 %v7414, %v7416
  %v7418 = vrot.slane %v7402, %v7417
  %v7420 = vunpack.c.l.s4 1966171168
  %v7421 = vunpack.c.0.s8 %v7420
  %v7422 = vlaneseq
  %v7423 = vshrl.u32 %v7422, 7
  %v7424 = vsub.s32 %v7421, %v7423
  %v7425 = vrot.slane %v7409, %v7424
  %v7427 = vunpack.c.l.s4 1966171168
  %v7428 = vunpack.c.0.s8 %v7427
  %v7429 = vlaneseq
  %v7430 = vshrl.u32 %v7429, 7
  %v7431 = vsub.s32 %v7428, %v7430
  %v7432 = vrot.slane %v7410, %v7431
  %v7434 = vunpack.c.l.s4 1966171168
  %v7435 = vunpack.c.0.s8 %v7434
  %v7436 = vlaneseq
  %v7437 = vshrl.u32 %v7436, 7
  %v7438 = vsub.s32 %v7435, %v7437
  %v7439 = vrot.slane %v7411, %v7438
  %v7440 = vcombine.high %v7418, %v7418
  %v7441 = vcombine.high %v7425, %v7425
  %v7442 = vcombine.high %v7432, %v7432
  %v7443 = vcombine.high %v7439, %v7439
  %v7444 = vcombine.high %v6313, %v6313
  %v7446 = vunpack.c.l.s4 1966171168
  %v7447 = vunpack.c.0.s8 %v7446
  %v7448 = vlaneseq
  %v7449 = vshrl.u32 %v7448, 7
  %v7450 = vsub.s32 %v7447, %v7449
  %v7451 = vrot.slane %v6313, %v7450
  %v7453 = vunpack.c.l.s4 1966171168
  %v7454 = vunpack.c.0.s8 %v7453
  %v7455 = vlaneseq
  %v7456 = vshrl.u32 %v7455, 7
  %v7457 = vsub.s32 %v7454, %v7456
  %v7458 = vrot.slane %v7444, %v7457
  %v7459 = vcombine.high %v7451, %v7451
  %v7460 = vcombine.high %v7458, %v7458
  %v7462 = vunpack.c.l.s4 1966171168
  %v7463 = vunpack.c.0.s8 %v7462
  %v7464 = vlaneseq
  %v7465 = vshrl.u32 %v7464, 7
  %v7466 = vsub.s32 %v7463, %v7465
  %v7467 = vrot.slane %v7451, %v7466
  %v7469 = vunpack.c.l.s4 1966171168
  %v7470 = vunpack.c.0.s8 %v7469
  %v7471 = vlaneseq
  %v7472 = vshrl.u32 %v7471, 7
  %v7473 = vsub.s32 %v7470, %v7472
  %v7474 = vrot.slane %v7458, %v7473
  %v7476 = vunpack.c.l.s4 1966171168
  %v7477 = vunpack.c.0.s8 %v7476
  %v7478 = vlaneseq
  %v7479 = vshrl.u32 %v7478, 7
  %v7480 = vsub.s32 %v7477, %v7479
  %v7481 = vrot.slane %v7459, %v7480
  %v7483 = vunpack.c.l.s4 1966171168
  %v7484 = vunpack.c.0.s8 %v7483
  %v7485 = vlaneseq
  %v7486 = vshrl.u32 %v7485, 7
  %v7487 = vsub.s32 %v7484, %v7486
  %v7488 = vrot.slane %v7460, %v7487
  %v7489 = vcombine.high %v7467, %v7467
  %v7490 = vcombine.high %v7474, %v7474
  %v7491 = vcombine.high %v7481, %v7481
  %v7492 = vcombine.high %v7488, %v7488
  %v7493 = vcombine.high %v6315, %v6315
  %v7495 = vunpack.c.l.s4 1966171168
  %v7496 = vunpack.c.0.s8 %v7495
  %v7497 = vlaneseq
  %v7498 = vshrl.u32 %v7497, 7
  %v7499 = vsub.s32 %v7496, %v7498
  %v7500 = vrot.slane %v6315, %v7499
  %v7502 = vunpack.c.l.s4 1966171168
  %v7503 = vunpack.c.0.s8 %v7502
  %v7504 = vlaneseq
  %v7505 = vshrl.u32 %v7504, 7
  %v7506 = vsub.s32 %v7503, %v7505
  %v7507 = vrot.slane %v7493, %v7506
  %v7508 = vcombine.high %v7500, %v7500
  %v7509 = vcombine.high %v7507, %v7507
  %v7511 = vunpack.c.l.s4 1966171168
  %v7512 = vunpack.c.0.s8 %v7511
  %v7513 = vlaneseq
  %v7514 = vshrl.u32 %v7513, 7
  %v7515 = vsub.s32 %v7512, %v7514
  %v7516 = vrot.slane %v7500, %v7515
  %v7518 = vunpack.c.l.s4 1966171168
  %v7519 = vunpack.c.0.s8 %v7518
  %v7520 = vlaneseq
  %v7521 = vshrl.u32 %v7520, 7
  %v7522 = vsub.s32 %v7519, %v7521
  %v7523 = vrot.slane %v7507, %v7522
  %v7525 = vunpack.c.l.s4 1966171168
  %v7526 = vunpack.c.0.s8 %v7525
  %v7527 = vlaneseq
  %v7528 = vshrl.u32 %v7527, 7
  %v7529 = vsub.s32 %v7526, %v7528
  %v7530 = vrot.slane %v7508, %v7529
  %v7532 = vunpack.c.l.s4 1966171168
  %v7533 = vunpack.c.0.s8 %v7532
  %v7534 = vlaneseq
  %v7535 = vshrl.u32 %v7534, 7
  %v7536 = vsub.s32 %v7533, %v7535
  %v7537 = vrot.slane %v7509, %v7536
  %v7538 = vcombine.high %v7516, %v7516
  %v7539 = vcombine.high %v7523, %v7523
  %v7540 = vcombine.high %v7530, %v7530
  %v7541 = vcombine.high %v7537, %v7537
  %v7542 = vcombine.high %v6317, %v6317
  %v7544 = vunpack.c.l.s4 1966171168
  %v7545 = vunpack.c.0.s8 %v7544
  %v7546 = vlaneseq
  %v7547 = vshrl.u32 %v7546, 7
  %v7548 = vsub.s32 %v7545, %v7547
  %v7549 = vrot.slane %v6317, %v7548
  %v7551 = vunpack.c.l.s4 1966171168
  %v7552 = vunpack.c.0.s8 %v7551
  %v7553 = vlaneseq
  %v7554 = vshrl.u32 %v7553, 7
  %v7555 = vsub.s32 %v7552, %v7554
  %v7556 = vrot.slane %v7542, %v7555
  %v7557 = vcombine.high %v7549, %v7549
  %v7558 = vcombine.high %v7556, %v7556
  %v7560 = vunpack.c.l.s4 1966171168
  %v7561 = vunpack.c.0.s8 %v7560
  %v7562 = vlaneseq
  %v7563 = vshrl.u32 %v7562, 7
  %v7564 = vsub.s32 %v7561, %v7563
  %v7565 = vrot.slane %v7549, %v7564
  %v7567 = vunpack.c.l.s4 1966171168
  %v7568 = vunpack.c.0.s8 %v7567
  %v7569 = vlaneseq
  %v7570 = vshrl.u32 %v7569, 7
  %v7571 = vsub.s32 %v7568, %v7570
  %v7572 = vrot.slane %v7556, %v7571
  %v7574 = vunpack.c.l.s4 1966171168
  %v7575 = vunpack.c.0.s8 %v7574
  %v7576 = vlaneseq
  %v7577 = vshrl.u32 %v7576, 7
  %v7578 = vsub.s32 %v7575, %v7577
  %v7579 = vrot.slane %v7557, %v7578
  %v7581 = vunpack.c.l.s4 1966171168
  %v7582 = vunpack.c.0.s8 %v7581
  %v7583 = vlaneseq
  %v7584 = vshrl.u32 %v7583, 7
  %v7585 = vsub.s32 %v7582, %v7584
  %v7586 = vrot.slane %v7558, %v7585
  %v7587 = vcombine.high %v7565, %v7565
  %v7588 = vcombine.high %v7572, %v7572
  %v7589 = vcombine.high %v7579, %v7579
  %v7590 = vcombine.high %v7586, %v7586
  %v7591 = vcombine.high %v6319, %v6319
  %v7593 = vunpack.c.l.s4 1966171168
  %v7594 = vunpack.c.0.s8 %v7593
  %v7595 = vlaneseq
  %v7596 = vshrl.u32 %v7595, 7
  %v7597 = vsub.s32 %v7594, %v7596
  %v7598 = vrot.slane %v6319, %v7597
  %v7600 = vunpack.c.l.s4 1966171168
  %v7601 = vunpack.c.0.s8 %v7600
  %v7602 = vlaneseq
  %v7603 = vshrl.u32 %v7602, 7
  %v7604 = vsub.s32 %v7601, %v7603
  %v7605 = vrot.slane %v7591, %v7604
  %v7606 = vcombine.high %v7598, %v7598
  %v7607 = vcombine.high %v7605, %v7605
  %v7609 = vunpack.c.l.s4 1966171168
  %v7610 = vunpack.c.0.s8 %v7609
  %v7611 = vlaneseq
  %v7612 = vshrl.u32 %v7611, 7
  %v7613 = vsub.s32 %v7610, %v7612
  %v7614 = vrot.slane %v7598, %v7613
  %v7616 = vunpack.c.l.s4 1966171168
  %v7617 = vunpack.c.0.s8 %v7616
  %v7618 = vlaneseq
  %v7619 = vshrl.u32 %v7618, 7
  %v7620 = vsub.s32 %v7617, %v7619
  %v7621 = vrot.slane %v7605, %v7620
  %v7623 = vunpack.c.l.s4 1966171168
  %v7624 = vunpack.c.0.s8 %v7623
  %v7625 = vlaneseq
  %v7626 = vshrl.u32 %v7625, 7
  %v7627 = vsub.s32 %v7624, %v7626
  %v7628 = vrot.slane %v7606, %v7627
  %v7630 = vunpack.c.l.s4 1966171168
  %v7631 = vunpack.c.0.s8 %v7630
  %v7632 = vlaneseq
  %v7633 = vshrl.u32 %v7632, 7
  %v7634 = vsub.s32 %v7631, %v7633
  %v7635 = vrot.slane %v7607, %v7634
  %v7636 = vcombine.high %v7614, %v7614
  %v7637 = vcombine.high %v7621, %v7621
  %v7638 = vcombine.high %v7628, %v7628
  %v7639 = vcombine.high %v7635, %v7635
  %v7640 = vcombine.high %v6321, %v6321
  %v7642 = vunpack.c.l.s4 1966171168
  %v7643 = vunpack.c.0.s8 %v7642
  %v7644 = vlaneseq
  %v7645 = vshrl.u32 %v7644, 7
  %v7646 = vsub.s32 %v7643, %v7645
  %v7647 = vrot.slane %v6321, %v7646
  %v7649 = vunpack.c.l.s4 1966171168
  %v7650 = vunpack.c.0.s8 %v7649
  %v7651 = vlaneseq
  %v7652 = vshrl.u32 %v7651, 7
  %v7653 = vsub.s32 %v7650, %v7652
  %v7654 = vrot.slane %v7640, %v7653
  %v7655 = vcombine.high %v7647, %v7647
  %v7656 = vcombine.high %v7654, %v7654
  %v7658 = vunpack.c.l.s4 1966171168
  %v7659 = vunpack.c.0.s8 %v7658
  %v7660 = vlaneseq
  %v7661 = vshrl.u32 %v7660, 7
  %v7662 = vsub.s32 %v7659, %v7661
  %v7663 = vrot.slane %v7647, %v7662
  %v7665 = vunpack.c.l.s4 1966171168
  %v7666 = vunpack.c.0.s8 %v7665
  %v7667 = vlaneseq
  %v7668 = vshrl.u32 %v7667, 7
  %v7669 = vsub.s32 %v7666, %v7668
  %v7670 = vrot.slane %v7654, %v7669
  %v7672 = vunpack.c.l.s4 1966171168
  %v7673 = vunpack.c.0.s8 %v7672
  %v7674 = vlaneseq
  %v7675 = vshrl.u32 %v7674, 7
  %v7676 = vsub.s32 %v7673, %v7675
  %v7677 = vrot.slane %v7655, %v7676
  %v7679 = vunpack.c.l.s4 1966171168
  %v7680 = vunpack.c.0.s8 %v7679
  %v7681 = vlaneseq
  %v7682 = vshrl.u32 %v7681, 7
  %v7683 = vsub.s32 %v7680, %v7682
  %v7684 = vrot.slane %v7656, %v7683
  %v7685 = vcombine.high %v7663, %v7663
  %v7686 = vcombine.high %v7670, %v7670
  %v7687 = vcombine.high %v7677, %v7677
  %v7688 = vcombine.high %v7684, %v7684
  %v7689 = vcombine.high %v6323, %v6323
  %v7691 = vunpack.c.l.s4 1966171168
  %v7692 = vunpack.c.0.s8 %v7691
  %v7693 = vlaneseq
  %v7694 = vshrl.u32 %v7693, 7
  %v7695 = vsub.s32 %v7692, %v7694
  %v7696 = vrot.slane %v6323, %v7695
  %v7698 = vunpack.c.l.s4 1966171168
  %v7699 = vunpack.c.0.s8 %v7698
  %v7700 = vlaneseq
  %v7701 = vshrl.u32 %v7700, 7
  %v7702 = vsub.s32 %v7699, %v7701
  %v7703 = vrot.slane %v7689, %v7702
  %v7704 = vcombine.high %v7696, %v7696
  %v7705 = vcombine.high %v7703, %v7703
  %v7707 = vunpack.c.l.s4 1966171168
  %v7708 = vunpack.c.0.s8 %v7707
  %v7709 = vlaneseq
  %v7710 = vshrl.u32 %v7709, 7
  %v7711 = vsub.s32 %v7708, %v7710
  %v7712 = vrot.slane %v7696, %v7711
  %v7714 = vunpack.c.l.s4 1966171168
  %v7715 = vunpack.c.0.s8 %v7714
  %v7716 = vlaneseq
  %v7717 = vshrl.u32 %v7716, 7
  %v7718 = vsub.s32 %v7715, %v7717
  %v7719 = vrot.slane %v7703, %v7718
  %v7721 = vunpack.c.l.s4 1966171168
  %v7722 = vunpack.c.0.s8 %v7721
  %v7723 = vlaneseq
  %v7724 = vshrl.u32 %v7723, 7
  %v7725 = vsub.s32 %v7722, %v7724
  %v7726 = vrot.slane %v7704, %v7725
  %v7728 = vunpack.c.l.s4 1966171168
  %v7729 = vunpack.c.0.s8 %v7728
  %v7730 = vlaneseq
  %v7731 = vshrl.u32 %v7730, 7
  %v7732 = vsub.s32 %v7729, %v7731
  %v7733 = vrot.slane %v7705, %v7732
  %v7734 = vcombine.high %v7712, %v7712
  %v7735 = vcombine.high %v7719, %v7719
  %v7736 = vcombine.high %v7726, %v7726
  %v7737 = vcombine.high %v7733, %v7733
  %v7738 = vcombine.high %v6325, %v6325
  %v7740 = vunpack.c.l.s4 1966171168
  %v7741 = vunpack.c.0.s8 %v7740
  %v7742 = vlaneseq
  %v7743 = vshrl.u32 %v7742, 7
  %v7744 = vsub.s32 %v7741, %v7743
  %v7745 = vrot.slane %v6325, %v7744
  %v7747 = vunpack.c.l.s4 1966171168
  %v7748 = vunpack.c.0.s8 %v7747
  %v7749 = vlaneseq
  %v7750 = vshrl.u32 %v7749, 7
  %v7751 = vsub.s32 %v7748, %v7750
  %v7752 = vrot.slane %v7738, %v7751
  %v7753 = vcombine.high %v7745, %v7745
  %v7754 = vcombine.high %v7752, %v7752
  %v7756 = vunpack.c.l.s4 1966171168
  %v7757 = vunpack.c.0.s8 %v7756
  %v7758 = vlaneseq
  %v7759 = vshrl.u32 %v7758, 7
  %v7760 = vsub.s32 %v7757, %v7759
  %v7761 = vrot.slane %v7745, %v7760
  %v7763 = vunpack.c.l.s4 1966171168
  %v7764 = vunpack.c.0.s8 %v7763
  %v7765 = vlaneseq
  %v7766 = vshrl.u32 %v7765, 7
  %v7767 = vsub.s32 %v7764, %v7766
  %v7768 = vrot.slane %v7752, %v7767
  %v7770 = vunpack.c.l.s4 1966171168
  %v7771 = vunpack.c.0.s8 %v7770
  %v7772 = vlaneseq
  %v7773 = vshrl.u32 %v7772, 7
  %v7774 = vsub.s32 %v7771, %v7773
  %v7775 = vrot.slane %v7753, %v7774
  %v7777 = vunpack.c.l.s4 1966171168
  %v7778 = vunpack.c.0.s8 %v7777
  %v7779 = vlaneseq
  %v7780 = vshrl.u32 %v7779, 7
  %v7781 = vsub.s32 %v7778, %v7780
  %v7782 = vrot.slane %v7754, %v7781
  %v7783 = vcombine.high %v7761, %v7761
  %v7784 = vcombine.high %v7768, %v7768
  %v7785 = vcombine.high %v7775, %v7775
  %v7786 = vcombine.high %v7782, %v7782
  %v7787 = vcombine.high %v6327, %v6327
  %v7789 = vunpack.c.l.s4 1966171168
  %v7790 = vunpack.c.0.s8 %v7789
  %v7791 = vlaneseq
  %v7792 = vshrl.u32 %v7791, 7
  %v7793 = vsub.s32 %v7790, %v7792
  %v7794 = vrot.slane %v6327, %v7793
  %v7796 = vunpack.c.l.s4 1966171168
  %v7797 = vunpack.c.0.s8 %v7796
  %v7798 = vlaneseq
  %v7799 = vshrl.u32 %v7798, 7
  %v7800 = vsub.s32 %v7797, %v7799
  %v7801 = vrot.slane %v7787, %v7800
  %v7802 = vcombine.high %v7794, %v7794
  %v7803 = vcombine.high %v7801, %v7801
  %v7805 = vunpack.c.l.s4 1966171168
  %v7806 = vunpack.c.0.s8 %v7805
  %v7807 = vlaneseq
  %v7808 = vshrl.u32 %v7807, 7
  %v7809 = vsub.s32 %v7806, %v7808
  %v7810 = vrot.slane %v7794, %v7809
  %v7812 = vunpack.c.l.s4 1966171168
  %v7813 = vunpack.c.0.s8 %v7812
  %v7814 = vlaneseq
  %v7815 = vshrl.u32 %v7814, 7
  %v7816 = vsub.s32 %v7813, %v7815
  %v7817 = vrot.slane %v7801, %v7816
  %v7819 = vunpack.c.l.s4 1966171168
  %v7820 = vunpack.c.0.s8 %v7819
  %v7821 = vlaneseq
  %v7822 = vshrl.u32 %v7821, 7
  %v7823 = vsub.s32 %v7820, %v7822
  %v7824 = vrot.slane %v7802, %v7823
  %v7826 = vunpack.c.l.s4 1966171168
  %v7827 = vunpack.c.0.s8 %v7826
  %v7828 = vlaneseq
  %v7829 = vshrl.u32 %v7828, 7
  %v7830 = vsub.s32 %v7827, %v7829
  %v7831 = vrot.slane %v7803, %v7830
  %v7832 = vcombine.high %v7810, %v7810
  %v7833 = vcombine.high %v7817, %v7817
  %v7834 = vcombine.high %v7824, %v7824
  %v7835 = vcombine.high %v7831, %v7831
  %v7836 = vcombine.high %v6329, %v6329
  %v7838 = vunpack.c.l.s4 1966171168
  %v7839 = vunpack.c.0.s8 %v7838
  %v7840 = vlaneseq
  %v7841 = vshrl.u32 %v7840, 7
  %v7842 = vsub.s32 %v7839, %v7841
  %v7843 = vrot.slane %v6329, %v7842
  %v7845 = vunpack.c.l.s4 1966171168
  %v7846 = vunpack.c.0.s8 %v7845
  %v7847 = vlaneseq
  %v7848 = vshrl.u32 %v7847, 7
  %v7849 = vsub.s32 %v7846, %v7848
  %v7850 = vrot.slane %v7836, %v7849
  %v7851 = vcombine.high %v7843, %v7843
  %v7852 = vcombine.high %v7850, %v7850
  %v7854 = vunpack.c.l.s4 1966171168
  %v7855 = vunpack.c.0.s8 %v7854
  %v7856 = vlaneseq
  %v7857 = vshrl.u32 %v7856, 7
  %v7858 = vsub.s32 %v7855, %v7857
  %v7859 = vrot.slane %v7843, %v7858
  %v7861 = vunpack.c.l.s4 1966171168
  %v7862 = vunpack.c.0.s8 %v7861
  %v7863 = vlaneseq
  %v7864 = vshrl.u32 %v7863, 7
  %v7865 = vsub.s32 %v7862, %v7864
  %v7866 = vrot.slane %v7850, %v7865
  %v7868 = vunpack.c.l.s4 1966171168
  %v7869 = vunpack.c.0.s8 %v7868
  %v7870 = vlaneseq
  %v7871 = vshrl.u32 %v7870, 7
  %v7872 = vsub.s32 %v7869, %v7871
  %v7873 = vrot.slane %v7851, %v7872
  %v7875 = vunpack.c.l.s4 1966171168
  %v7876 = vunpack.c.0.s8 %v7875
  %v7877 = vlaneseq
  %v7878 = vshrl.u32 %v7877, 7
  %v7879 = vsub.s32 %v7876, %v7878
  %v7880 = vrot.slane %v7852, %v7879
  %v7881 = vcombine.high %v7859, %v7859
  %v7882 = vcombine.high %v7866, %v7866
  %v7883 = vcombine.high %v7873, %v7873
  %v7884 = vcombine.high %v7880, %v7880
  %v7885 = vcombine.high %v6331, %v6331
  %v7887 = vunpack.c.l.s4 1966171168
  %v7888 = vunpack.c.0.s8 %v7887
  %v7889 = vlaneseq
  %v7890 = vshrl.u32 %v7889, 7
  %v7891 = vsub.s32 %v7888, %v7890
  %v7892 = vrot.slane %v6331, %v7891
  %v7894 = vunpack.c.l.s4 1966171168
  %v7895 = vunpack.c.0.s8 %v7894
  %v7896 = vlaneseq
  %v7897 = vshrl.u32 %v7896, 7
  %v7898 = vsub.s32 %v7895, %v7897
  %v7899 = vrot.slane %v7885, %v7898
  %v7900 = vcombine.high %v7892, %v7892
  %v7901 = vcombine.high %v7899, %v7899
  %v7903 = vunpack.c.l.s4 1966171168
  %v7904 = vunpack.c.0.s8 %v7903
  %v7905 = vlaneseq
  %v7906 = vshrl.u32 %v7905, 7
  %v7907 = vsub.s32 %v7904, %v7906
  %v7908 = vrot.slane %v7892, %v7907
  %v7910 = vunpack.c.l.s4 1966171168
  %v7911 = vunpack.c.0.s8 %v7910
  %v7912 = vlaneseq
  %v7913 = vshrl.u32 %v7912, 7
  %v7914 = vsub.s32 %v7911, %v7913
  %v7915 = vrot.slane %v7899, %v7914
  %v7917 = vunpack.c.l.s4 1966171168
  %v7918 = vunpack.c.0.s8 %v7917
  %v7919 = vlaneseq
  %v7920 = vshrl.u32 %v7919, 7
  %v7921 = vsub.s32 %v7918, %v7920
  %v7922 = vrot.slane %v7900, %v7921
  %v7924 = vunpack.c.l.s4 1966171168
  %v7925 = vunpack.c.0.s8 %v7924
  %v7926 = vlaneseq
  %v7927 = vshrl.u32 %v7926, 7
  %v7928 = vsub.s32 %v7925, %v7927
  %v7929 = vrot.slane %v7901, %v7928
  %v7930 = vcombine.high %v7908, %v7908
  %v7931 = vcombine.high %v7915, %v7915
  %v7932 = vcombine.high %v7922, %v7922
  %v7933 = vcombine.high %v7929, %v7929
  %v7934 = vcombine.high %v6333, %v6333
  %v7936 = vunpack.c.l.s4 1966171168
  %v7937 = vunpack.c.0.s8 %v7936
  %v7938 = vlaneseq
  %v7939 = vshrl.u32 %v7938, 7
  %v7940 = vsub.s32 %v7937, %v7939
  %v7941 = vrot.slane %v6333, %v7940
  %v7943 = vunpack.c.l.s4 1966171168
  %v7944 = vunpack.c.0.s8 %v7943
  %v7945 = vlaneseq
  %v7946 = vshrl.u32 %v7945, 7
  %v7947 = vsub.s32 %v7944, %v7946
  %v7948 = vrot.slane %v7934, %v7947
  %v7949 = vcombine.high %v7941, %v7941
  %v7950 = vcombine.high %v7948, %v7948
  %v7952 = vunpack.c.l.s4 1966171168
  %v7953 = vunpack.c.0.s8 %v7952
  %v7954 = vlaneseq
  %v7955 = vshrl.u32 %v7954, 7
  %v7956 = vsub.s32 %v7953, %v7955
  %v7957 = vrot.slane %v7941, %v7956
  %v7959 = vunpack.c.l.s4 1966171168
  %v7960 = vunpack.c.0.s8 %v7959
  %v7961 = vlaneseq
  %v7962 = vshrl.u32 %v7961, 7
  %v7963 = vsub.s32 %v7960, %v7962
  %v7964 = vrot.slane %v7948, %v7963
  %v7966 = vunpack.c.l.s4 1966171168
  %v7967 = vunpack.c.0.s8 %v7966
  %v7968 = vlaneseq
  %v7969 = vshrl.u32 %v7968, 7
  %v7970 = vsub.s32 %v7967, %v7969
  %v7971 = vrot.slane %v7949, %v7970
  %v7973 = vunpack.c.l.s4 1966171168
  %v7974 = vunpack.c.0.s8 %v7973
  %v7975 = vlaneseq
  %v7976 = vshrl.u32 %v7975, 7
  %v7977 = vsub.s32 %v7974, %v7976
  %v7978 = vrot.slane %v7950, %v7977
  %v7979 = vcombine.high %v7957, %v7957
  %v7980 = vcombine.high %v7964, %v7964
  %v7981 = vcombine.high %v7971, %v7971
  %v7982 = vcombine.high %v7978, %v7978
  %v7983 = vcombine.high %v6335, %v6335
  %v7985 = vunpack.c.l.s4 1966171168
  %v7986 = vunpack.c.0.s8 %v7985
  %v7987 = vlaneseq
  %v7988 = vshrl.u32 %v7987, 7
  %v7989 = vsub.s32 %v7986, %v7988
  %v7990 = vrot.slane %v6335, %v7989
  %v7992 = vunpack.c.l.s4 1966171168
  %v7993 = vunpack.c.0.s8 %v7992
  %v7994 = vlaneseq
  %v7995 = vshrl.u32 %v7994, 7
  %v7996 = vsub.s32 %v7993, %v7995
  %v7997 = vrot.slane %v7983, %v7996
  %v7998 = vcombine.high %v7990, %v7990
  %v7999 = vcombine.high %v7997, %v7997
  %v8001 = vunpack.c.l.s4 1966171168
  %v8002 = vunpack.c.0.s8 %v8001
  %v8003 = vlaneseq
  %v8004 = vshrl.u32 %v8003, 7
  %v8005 = vsub.s32 %v8002, %v8004
  %v8006 = vrot.slane %v7990, %v8005
  %v8008 = vunpack.c.l.s4 1966171168
  %v8009 = vunpack.c.0.s8 %v8008
  %v8010 = vlaneseq
  %v8011 = vshrl.u32 %v8010, 7
  %v8012 = vsub.s32 %v8009, %v8011
  %v8013 = vrot.slane %v7997, %v8012
  %v8015 = vunpack.c.l.s4 1966171168
  %v8016 = vunpack.c.0.s8 %v8015
  %v8017 = vlaneseq
  %v8018 = vshrl.u32 %v8017, 7
  %v8019 = vsub.s32 %v8016, %v8018
  %v8020 = vrot.slane %v7998, %v8019
  %v8022 = vunpack.c.l.s4 1966171168
  %v8023 = vunpack.c.0.s8 %v8022
  %v8024 = vlaneseq
  %v8025 = vshrl.u32 %v8024, 7
  %v8026 = vsub.s32 %v8023, %v8025
  %v8027 = vrot.slane %v7999, %v8026
  %v8028 = vcombine.high %v8006, %v8006
  %v8029 = vcombine.high %v8013, %v8013
  %v8030 = vcombine.high %v8020, %v8020
  %v8031 = vcombine.high %v8027, %v8027
  %v8032 = vcombine.high %v6337, %v6337
  %v8034 = vunpack.c.l.s4 1966171168
  %v8035 = vunpack.c.0.s8 %v8034
  %v8036 = vlaneseq
  %v8037 = vshrl.u32 %v8036, 7
  %v8038 = vsub.s32 %v8035, %v8037
  %v8039 = vrot.slane %v6337, %v8038
  %v8041 = vunpack.c.l.s4 1966171168
  %v8042 = vunpack.c.0.s8 %v8041
  %v8043 = vlaneseq
  %v8044 = vshrl.u32 %v8043, 7
  %v8045 = vsub.s32 %v8042, %v8044
  %v8046 = vrot.slane %v8032, %v8045
  %v8047 = vcombine.high %v8039, %v8039
  %v8048 = vcombine.high %v8046, %v8046
  %v8050 = vunpack.c.l.s4 1966171168
  %v8051 = vunpack.c.0.s8 %v8050
  %v8052 = vlaneseq
  %v8053 = vshrl.u32 %v8052, 7
  %v8054 = vsub.s32 %v8051, %v8053
  %v8055 = vrot.slane %v8039, %v8054
  %v8057 = vunpack.c.l.s4 1966171168
  %v8058 = vunpack.c.0.s8 %v8057
  %v8059 = vlaneseq
  %v8060 = vshrl.u32 %v8059, 7
  %v8061 = vsub.s32 %v8058, %v8060
  %v8062 = vrot.slane %v8046, %v8061
  %v8064 = vunpack.c.l.s4 1966171168
  %v8065 = vunpack.c.0.s8 %v8064
  %v8066 = vlaneseq
  %v8067 = vshrl.u32 %v8066, 7
  %v8068 = vsub.s32 %v8065, %v8067
  %v8069 = vrot.slane %v8047, %v8068
  %v8071 = vunpack.c.l.s4 1966171168
  %v8072 = vunpack.c.0.s8 %v8071
  %v8073 = vlaneseq
  %v8074 = vshrl.u32 %v8073, 7
  %v8075 = vsub.s32 %v8072, %v8074
  %v8076 = vrot.slane %v8048, %v8075
  %v8077 = vcombine.high %v8055, %v8055
  %v8078 = vcombine.high %v8062, %v8062
  %v8079 = vcombine.high %v8069, %v8069
  %v8080 = vcombine.high %v8076, %v8076
  %v8081 = vcombine.high %v6339, %v6339
  %v8083 = vunpack.c.l.s4 1966171168
  %v8084 = vunpack.c.0.s8 %v8083
  %v8085 = vlaneseq
  %v8086 = vshrl.u32 %v8085, 7
  %v8087 = vsub.s32 %v8084, %v8086
  %v8088 = vrot.slane %v6339, %v8087
  %v8090 = vunpack.c.l.s4 1966171168
  %v8091 = vunpack.c.0.s8 %v8090
  %v8092 = vlaneseq
  %v8093 = vshrl.u32 %v8092, 7
  %v8094 = vsub.s32 %v8091, %v8093
  %v8095 = vrot.slane %v8081, %v8094
  %v8096 = vcombine.high %v8088, %v8088
  %v8097 = vcombine.high %v8095, %v8095
  %v8099 = vunpack.c.l.s4 1966171168
  %v8100 = vunpack.c.0.s8 %v8099
  %v8101 = vlaneseq
  %v8102 = vshrl.u32 %v8101, 7
  %v8103 = vsub.s32 %v8100, %v8102
  %v8104 = vrot.slane %v8088, %v8103
  %v8106 = vunpack.c.l.s4 1966171168
  %v8107 = vunpack.c.0.s8 %v8106
  %v8108 = vlaneseq
  %v8109 = vshrl.u32 %v8108, 7
  %v8110 = vsub.s32 %v8107, %v8109
  %v8111 = vrot.slane %v8095, %v8110
  %v8113 = vunpack.c.l.s4 1966171168
  %v8114 = vunpack.c.0.s8 %v8113
  %v8115 = vlaneseq
  %v8116 = vshrl.u32 %v8115, 7
  %v8117 = vsub.s32 %v8114, %v8116
  %v8118 = vrot.slane %v8096, %v8117
  %v8120 = vunpack.c.l.s4 1966171168
  %v8121 = vunpack.c.0.s8 %v8120
  %v8122 = vlaneseq
  %v8123 = vshrl.u32 %v8122, 7
  %v8124 = vsub.s32 %v8121, %v8123
  %v8125 = vrot.slane %v8097, %v8124
  %v8126 = vcombine.high %v8104, %v8104
  %v8127 = vcombine.high %v8111, %v8111
  %v8128 = vcombine.high %v8118, %v8118
  %v8129 = vcombine.high %v8125, %v8125
  %v8130 = vcombine.high %v6341, %v6341
  %v8132 = vunpack.c.l.s4 1966171168
  %v8133 = vunpack.c.0.s8 %v8132
  %v8134 = vlaneseq
  %v8135 = vshrl.u32 %v8134, 7
  %v8136 = vsub.s32 %v8133, %v8135
  %v8137 = vrot.slane %v6341, %v8136
  %v8139 = vunpack.c.l.s4 1966171168
  %v8140 = vunpack.c.0.s8 %v8139
  %v8141 = vlaneseq
  %v8142 = vshrl.u32 %v8141, 7
  %v8143 = vsub.s32 %v8140, %v8142
  %v8144 = vrot.slane %v8130, %v8143
  %v8145 = vcombine.high %v8137, %v8137
  %v8146 = vcombine.high %v8144, %v8144
  %v8148 = vunpack.c.l.s4 1966171168
  %v8149 = vunpack.c.0.s8 %v8148
  %v8150 = vlaneseq
  %v8151 = vshrl.u32 %v8150, 7
  %v8152 = vsub.s32 %v8149, %v8151
  %v8153 = vrot.slane %v8137, %v8152
  %v8155 = vunpack.c.l.s4 1966171168
  %v8156 = vunpack.c.0.s8 %v8155
  %v8157 = vlaneseq
  %v8158 = vshrl.u32 %v8157, 7
  %v8159 = vsub.s32 %v8156, %v8158
  %v8160 = vrot.slane %v8144, %v8159
  %v8162 = vunpack.c.l.s4 1966171168
  %v8163 = vunpack.c.0.s8 %v8162
  %v8164 = vlaneseq
  %v8165 = vshrl.u32 %v8164, 7
  %v8166 = vsub.s32 %v8163, %v8165
  %v8167 = vrot.slane %v8145, %v8166
  %v8169 = vunpack.c.l.s4 1966171168
  %v8170 = vunpack.c.0.s8 %v8169
  %v8171 = vlaneseq
  %v8172 = vshrl.u32 %v8171, 7
  %v8173 = vsub.s32 %v8170, %v8172
  %v8174 = vrot.slane %v8146, %v8173
  %v8175 = vcombine.high %v8153, %v8153
  %v8176 = vcombine.high %v8160, %v8160
  %v8177 = vcombine.high %v8167, %v8167
  %v8178 = vcombine.high %v8174, %v8174
  %v8179 = vcombine.high %v6343, %v6343
  %v8181 = vunpack.c.l.s4 1966171168
  %v8182 = vunpack.c.0.s8 %v8181
  %v8183 = vlaneseq
  %v8184 = vshrl.u32 %v8183, 7
  %v8185 = vsub.s32 %v8182, %v8184
  %v8186 = vrot.slane %v6343, %v8185
  %v8188 = vunpack.c.l.s4 1966171168
  %v8189 = vunpack.c.0.s8 %v8188
  %v8190 = vlaneseq
  %v8191 = vshrl.u32 %v8190, 7
  %v8192 = vsub.s32 %v8189, %v8191
  %v8193 = vrot.slane %v8179, %v8192
  %v8194 = vcombine.high %v8186, %v8186
  %v8195 = vcombine.high %v8193, %v8193
  %v8197 = vunpack.c.l.s4 1966171168
  %v8198 = vunpack.c.0.s8 %v8197
  %v8199 = vlaneseq
  %v8200 = vshrl.u32 %v8199, 7
  %v8201 = vsub.s32 %v8198, %v8200
  %v8202 = vrot.slane %v8186, %v8201
  %v8204 = vunpack.c.l.s4 1966171168
  %v8205 = vunpack.c.0.s8 %v8204
  %v8206 = vlaneseq
  %v8207 = vshrl.u32 %v8206, 7
  %v8208 = vsub.s32 %v8205, %v8207
  %v8209 = vrot.slane %v8193, %v8208
  %v8211 = vunpack.c.l.s4 1966171168
  %v8212 = vunpack.c.0.s8 %v8211
  %v8213 = vlaneseq
  %v8214 = vshrl.u32 %v8213, 7
  %v8215 = vsub.s32 %v8212, %v8214
  %v8216 = vrot.slane %v8194, %v8215
  %v8218 = vunpack.c.l.s4 1966171168
  %v8219 = vunpack.c.0.s8 %v8218
  %v8220 = vlaneseq
  %v8221 = vshrl.u32 %v8220, 7
  %v8222 = vsub.s32 %v8219, %v8221
  %v8223 = vrot.slane %v8195, %v8222
  %v8224 = vcombine.high %v8202, %v8202
  %v8225 = vcombine.high %v8209, %v8209
  %v8226 = vcombine.high %v8216, %v8216
  %v8227 = vcombine.high %v8223, %v8223
  %v8228 = vcombine.high %v6345, %v6345
  %v8230 = vunpack.c.l.s4 1966171168
  %v8231 = vunpack.c.0.s8 %v8230
  %v8232 = vlaneseq
  %v8233 = vshrl.u32 %v8232, 7
  %v8234 = vsub.s32 %v8231, %v8233
  %v8235 = vrot.slane %v6345, %v8234
  %v8237 = vunpack.c.l.s4 1966171168
  %v8238 = vunpack.c.0.s8 %v8237
  %v8239 = vlaneseq
  %v8240 = vshrl.u32 %v8239, 7
  %v8241 = vsub.s32 %v8238, %v8240
  %v8242 = vrot.slane %v8228, %v8241
  %v8243 = vcombine.high %v8235, %v8235
  %v8244 = vcombine.high %v8242, %v8242
  %v8246 = vunpack.c.l.s4 1966171168
  %v8247 = vunpack.c.0.s8 %v8246
  %v8248 = vlaneseq
  %v8249 = vshrl.u32 %v8248, 7
  %v8250 = vsub.s32 %v8247, %v8249
  %v8251 = vrot.slane %v8235, %v8250
  %v8253 = vunpack.c.l.s4 1966171168
  %v8254 = vunpack.c.0.s8 %v8253
  %v8255 = vlaneseq
  %v8256 = vshrl.u32 %v8255, 7
  %v8257 = vsub.s32 %v8254, %v8256
  %v8258 = vrot.slane %v8242, %v8257
  %v8260 = vunpack.c.l.s4 1966171168
  %v8261 = vunpack.c.0.s8 %v8260
  %v8262 = vlaneseq
  %v8263 = vshrl.u32 %v8262, 7
  %v8264 = vsub.s32 %v8261, %v8263
  %v8265 = vrot.slane %v8243, %v8264
  %v8267 = vunpack.c.l.s4 1966171168
  %v8268 = vunpack.c.0.s8 %v8267
  %v8269 = vlaneseq
  %v8270 = vshrl.u32 %v8269, 7
  %v8271 = vsub.s32 %v8268, %v8270
  %v8272 = vrot.slane %v8244, %v8271
  %v8273 = vcombine.high %v8251, %v8251
  %v8274 = vcombine.high %v8258, %v8258
  %v8275 = vcombine.high %v8265, %v8265
  %v8276 = vcombine.high %v8272, %v8272
  %v8277 = vcombine.high %v6347, %v6347
  %v8279 = vunpack.c.l.s4 1966171168
  %v8280 = vunpack.c.0.s8 %v8279
  %v8281 = vlaneseq
  %v8282 = vshrl.u32 %v8281, 7
  %v8283 = vsub.s32 %v8280, %v8282
  %v8284 = vrot.slane %v6347, %v8283
  %v8286 = vunpack.c.l.s4 1966171168
  %v8287 = vunpack.c.0.s8 %v8286
  %v8288 = vlaneseq
  %v8289 = vshrl.u32 %v8288, 7
  %v8290 = vsub.s32 %v8287, %v8289
  %v8291 = vrot.slane %v8277, %v8290
  %v8292 = vcombine.high %v8284, %v8284
  %v8293 = vcombine.high %v8291, %v8291
  %v8295 = vunpack.c.l.s4 1966171168
  %v8296 = vunpack.c.0.s8 %v8295
  %v8297 = vlaneseq
  %v8298 = vshrl.u32 %v8297, 7
  %v8299 = vsub.s32 %v8296, %v8298
  %v8300 = vrot.slane %v8284, %v8299
  %v8302 = vunpack.c.l.s4 1966171168
  %v8303 = vunpack.c.0.s8 %v8302
  %v8304 = vlaneseq
  %v8305 = vshrl.u32 %v8304, 7
  %v8306 = vsub.s32 %v8303, %v8305
  %v8307 = vrot.slane %v8291, %v8306
  %v8309 = vunpack.c.l.s4 1966171168
  %v8310 = vunpack.c.0.s8 %v8309
  %v8311 = vlaneseq
  %v8312 = vshrl.u32 %v8311, 7
  %v8313 = vsub.s32 %v8310, %v8312
  %v8314 = vrot.slane %v8292, %v8313
  %v8316 = vunpack.c.l.s4 1966171168
  %v8317 = vunpack.c.0.s8 %v8316
  %v8318 = vlaneseq
  %v8319 = vshrl.u32 %v8318, 7
  %v8320 = vsub.s32 %v8317, %v8319
  %v8321 = vrot.slane %v8293, %v8320
  %v8322 = vcombine.high %v8300, %v8300
  %v8323 = vcombine.high %v8307, %v8307
  %v8324 = vcombine.high %v8314, %v8314
  %v8325 = vcombine.high %v8321, %v8321
  %v8326 = vcombine.high %v6349, %v6349
  %v8328 = vunpack.c.l.s4 1966171168
  %v8329 = vunpack.c.0.s8 %v8328
  %v8330 = vlaneseq
  %v8331 = vshrl.u32 %v8330, 7
  %v8332 = vsub.s32 %v8329, %v8331
  %v8333 = vrot.slane %v6349, %v8332
  %v8335 = vunpack.c.l.s4 1966171168
  %v8336 = vunpack.c.0.s8 %v8335
  %v8337 = vlaneseq
  %v8338 = vshrl.u32 %v8337, 7
  %v8339 = vsub.s32 %v8336, %v8338
  %v8340 = vrot.slane %v8326, %v8339
  %v8341 = vcombine.high %v8333, %v8333
  %v8342 = vcombine.high %v8340, %v8340
  %v8344 = vunpack.c.l.s4 1966171168
  %v8345 = vunpack.c.0.s8 %v8344
  %v8346 = vlaneseq
  %v8347 = vshrl.u32 %v8346, 7
  %v8348 = vsub.s32 %v8345, %v8347
  %v8349 = vrot.slane %v8333, %v8348
  %v8351 = vunpack.c.l.s4 1966171168
  %v8352 = vunpack.c.0.s8 %v8351
  %v8353 = vlaneseq
  %v8354 = vshrl.u32 %v8353, 7
  %v8355 = vsub.s32 %v8352, %v8354
  %v8356 = vrot.slane %v8340, %v8355
  %v8358 = vunpack.c.l.s4 1966171168
  %v8359 = vunpack.c.0.s8 %v8358
  %v8360 = vlaneseq
  %v8361 = vshrl.u32 %v8360, 7
  %v8362 = vsub.s32 %v8359, %v8361
  %v8363 = vrot.slane %v8341, %v8362
  %v8365 = vunpack.c.l.s4 1966171168
  %v8366 = vunpack.c.0.s8 %v8365
  %v8367 = vlaneseq
  %v8368 = vshrl.u32 %v8367, 7
  %v8369 = vsub.s32 %v8366, %v8368
  %v8370 = vrot.slane %v8342, %v8369
  %v8371 = vcombine.high %v8349, %v8349
  %v8372 = vcombine.high %v8356, %v8356
  %v8373 = vcombine.high %v8363, %v8363
  %v8374 = vcombine.high %v8370, %v8370
  %v8375 = vcombine.high %v6351, %v6351
  %v8377 = vunpack.c.l.s4 1966171168
  %v8378 = vunpack.c.0.s8 %v8377
  %v8379 = vlaneseq
  %v8380 = vshrl.u32 %v8379, 7
  %v8381 = vsub.s32 %v8378, %v8380
  %v8382 = vrot.slane %v6351, %v8381
  %v8384 = vunpack.c.l.s4 1966171168
  %v8385 = vunpack.c.0.s8 %v8384
  %v8386 = vlaneseq
  %v8387 = vshrl.u32 %v8386, 7
  %v8388 = vsub.s32 %v8385, %v8387
  %v8389 = vrot.slane %v8375, %v8388
  %v8390 = vcombine.high %v8382, %v8382
  %v8391 = vcombine.high %v8389, %v8389
  %v8393 = vunpack.c.l.s4 1966171168
  %v8394 = vunpack.c.0.s8 %v8393
  %v8395 = vlaneseq
  %v8396 = vshrl.u32 %v8395, 7
  %v8397 = vsub.s32 %v8394, %v8396
  %v8398 = vrot.slane %v8382, %v8397
  %v8400 = vunpack.c.l.s4 1966171168
  %v8401 = vunpack.c.0.s8 %v8400
  %v8402 = vlaneseq
  %v8403 = vshrl.u32 %v8402, 7
  %v8404 = vsub.s32 %v8401, %v8403
  %v8405 = vrot.slane %v8389, %v8404
  %v8407 = vunpack.c.l.s4 1966171168
  %v8408 = vunpack.c.0.s8 %v8407
  %v8409 = vlaneseq
  %v8410 = vshrl.u32 %v8409, 7
  %v8411 = vsub.s32 %v8408, %v8410
  %v8412 = vrot.slane %v8390, %v8411
  %v8414 = vunpack.c.l.s4 1966171168
  %v8415 = vunpack.c.0.s8 %v8414
  %v8416 = vlaneseq
  %v8417 = vshrl.u32 %v8416, 7
  %v8418 = vsub.s32 %v8415, %v8417
  %v8419 = vrot.slane %v8391, %v8418
  %v8420 = vcombine.high %v8398, %v8398
  %v8421 = vcombine.high %v8405, %v8405
  %v8422 = vcombine.high %v8412, %v8412
  %v8423 = vcombine.high %v8419, %v8419
  %v8424 = vcombine.high %v6353, %v6353
  %v8426 = vunpack.c.l.s4 1966171168
  %v8427 = vunpack.c.0.s8 %v8426
  %v8428 = vlaneseq
  %v8429 = vshrl.u32 %v8428, 7
  %v8430 = vsub.s32 %v8427, %v8429
  %v8431 = vrot.slane %v6353, %v8430
  %v8433 = vunpack.c.l.s4 1966171168
  %v8434 = vunpack.c.0.s8 %v8433
  %v8435 = vlaneseq
  %v8436 = vshrl.u32 %v8435, 7
  %v8437 = vsub.s32 %v8434, %v8436
  %v8438 = vrot.slane %v8424, %v8437
  %v8439 = vcombine.high %v8431, %v8431
  %v8440 = vcombine.high %v8438, %v8438
  %v8442 = vunpack.c.l.s4 1966171168
  %v8443 = vunpack.c.0.s8 %v8442
  %v8444 = vlaneseq
  %v8445 = vshrl.u32 %v8444, 7
  %v8446 = vsub.s32 %v8443, %v8445
  %v8447 = vrot.slane %v8431, %v8446
  %v8449 = vunpack.c.l.s4 1966171168
  %v8450 = vunpack.c.0.s8 %v8449
  %v8451 = vlaneseq
  %v8452 = vshrl.u32 %v8451, 7
  %v8453 = vsub.s32 %v8450, %v8452
  %v8454 = vrot.slane %v8438, %v8453
  %v8456 = vunpack.c.l.s4 1966171168
  %v8457 = vunpack.c.0.s8 %v8456
  %v8458 = vlaneseq
  %v8459 = vshrl.u32 %v8458, 7
  %v8460 = vsub.s32 %v8457, %v8459
  %v8461 = vrot.slane %v8439, %v8460
  %v8463 = vunpack.c.l.s4 1966171168
  %v8464 = vunpack.c.0.s8 %v8463
  %v8465 = vlaneseq
  %v8466 = vshrl.u32 %v8465, 7
  %v8467 = vsub.s32 %v8464, %v8466
  %v8468 = vrot.slane %v8440, %v8467
  %v8469 = vcombine.high %v8447, %v8447
  %v8470 = vcombine.high %v8454, %v8454
  %v8471 = vcombine.high %v8461, %v8461
  %v8472 = vcombine.high %v8468, %v8468
  %v8473 = vcombine.high %v6355, %v6355
  %v8475 = vunpack.c.l.s4 1966171168
  %v8476 = vunpack.c.0.s8 %v8475
  %v8477 = vlaneseq
  %v8478 = vshrl.u32 %v8477, 7
  %v8479 = vsub.s32 %v8476, %v8478
  %v8480 = vrot.slane %v6355, %v8479
  %v8482 = vunpack.c.l.s4 1966171168
  %v8483 = vunpack.c.0.s8 %v8482
  %v8484 = vlaneseq
  %v8485 = vshrl.u32 %v8484, 7
  %v8486 = vsub.s32 %v8483, %v8485
  %v8487 = vrot.slane %v8473, %v8486
  %v8488 = vcombine.high %v8480, %v8480
  %v8489 = vcombine.high %v8487, %v8487
  %v8491 = vunpack.c.l.s4 1966171168
  %v8492 = vunpack.c.0.s8 %v8491
  %v8493 = vlaneseq
  %v8494 = vshrl.u32 %v8493, 7
  %v8495 = vsub.s32 %v8492, %v8494
  %v8496 = vrot.slane %v8480, %v8495
  %v8498 = vunpack.c.l.s4 1966171168
  %v8499 = vunpack.c.0.s8 %v8498
  %v8500 = vlaneseq
  %v8501 = vshrl.u32 %v8500, 7
  %v8502 = vsub.s32 %v8499, %v8501
  %v8503 = vrot.slane %v8487, %v8502
  %v8505 = vunpack.c.l.s4 1966171168
  %v8506 = vunpack.c.0.s8 %v8505
  %v8507 = vlaneseq
  %v8508 = vshrl.u32 %v8507, 7
  %v8509 = vsub.s32 %v8506, %v8508
  %v8510 = vrot.slane %v8488, %v8509
  %v8512 = vunpack.c.l.s4 1966171168
  %v8513 = vunpack.c.0.s8 %v8512
  %v8514 = vlaneseq
  %v8515 = vshrl.u32 %v8514, 7
  %v8516 = vsub.s32 %v8513, %v8515
  %v8517 = vrot.slane %v8489, %v8516
  %v8518 = vcombine.high %v8496, %v8496
  %v8519 = vcombine.high %v8503, %v8503
  %v8520 = vcombine.high %v8510, %v8510
  %v8521 = vcombine.high %v8517, %v8517
  %v8522 = vcombine.high %v6357, %v6357
  %v8524 = vunpack.c.l.s4 1966171168
  %v8525 = vunpack.c.0.s8 %v8524
  %v8526 = vlaneseq
  %v8527 = vshrl.u32 %v8526, 7
  %v8528 = vsub.s32 %v8525, %v8527
  %v8529 = vrot.slane %v6357, %v8528
  %v8531 = vunpack.c.l.s4 1966171168
  %v8532 = vunpack.c.0.s8 %v8531
  %v8533 = vlaneseq
  %v8534 = vshrl.u32 %v8533, 7
  %v8535 = vsub.s32 %v8532, %v8534
  %v8536 = vrot.slane %v8522, %v8535
  %v8537 = vcombine.high %v8529, %v8529
  %v8538 = vcombine.high %v8536, %v8536
  %v8540 = vunpack.c.l.s4 1966171168
  %v8541 = vunpack.c.0.s8 %v8540
  %v8542 = vlaneseq
  %v8543 = vshrl.u32 %v8542, 7
  %v8544 = vsub.s32 %v8541, %v8543
  %v8545 = vrot.slane %v8529, %v8544
  %v8547 = vunpack.c.l.s4 1966171168
  %v8548 = vunpack.c.0.s8 %v8547
  %v8549 = vlaneseq
  %v8550 = vshrl.u32 %v8549, 7
  %v8551 = vsub.s32 %v8548, %v8550
  %v8552 = vrot.slane %v8536, %v8551
  %v8554 = vunpack.c.l.s4 1966171168
  %v8555 = vunpack.c.0.s8 %v8554
  %v8556 = vlaneseq
  %v8557 = vshrl.u32 %v8556, 7
  %v8558 = vsub.s32 %v8555, %v8557
  %v8559 = vrot.slane %v8537, %v8558
  %v8561 = vunpack.c.l.s4 1966171168
  %v8562 = vunpack.c.0.s8 %v8561
  %v8563 = vlaneseq
  %v8564 = vshrl.u32 %v8563, 7
  %v8565 = vsub.s32 %v8562, %v8564
  %v8566 = vrot.slane %v8538, %v8565
  %v8567 = vcombine.high %v8545, %v8545
  %v8568 = vcombine.high %v8552, %v8552
  %v8569 = vcombine.high %v8559, %v8559
  %v8570 = vcombine.high %v8566, %v8566
  %v8571 = vcombine.high %v6359, %v6359
  %v8573 = vunpack.c.l.s4 1966171168
  %v8574 = vunpack.c.0.s8 %v8573
  %v8575 = vlaneseq
  %v8576 = vshrl.u32 %v8575, 7
  %v8577 = vsub.s32 %v8574, %v8576
  %v8578 = vrot.slane %v6359, %v8577
  %v8580 = vunpack.c.l.s4 1966171168
  %v8581 = vunpack.c.0.s8 %v8580
  %v8582 = vlaneseq
  %v8583 = vshrl.u32 %v8582, 7
  %v8584 = vsub.s32 %v8581, %v8583
  %v8585 = vrot.slane %v8571, %v8584
  %v8586 = vcombine.high %v8578, %v8578
  %v8587 = vcombine.high %v8585, %v8585
  %v8589 = vunpack.c.l.s4 1966171168
  %v8590 = vunpack.c.0.s8 %v8589
  %v8591 = vlaneseq
  %v8592 = vshrl.u32 %v8591, 7
  %v8593 = vsub.s32 %v8590, %v8592
  %v8594 = vrot.slane %v8578, %v8593
  %v8596 = vunpack.c.l.s4 1966171168
  %v8597 = vunpack.c.0.s8 %v8596
  %v8598 = vlaneseq
  %v8599 = vshrl.u32 %v8598, 7
  %v8600 = vsub.s32 %v8597, %v8599
  %v8601 = vrot.slane %v8585, %v8600
  %v8603 = vunpack.c.l.s4 1966171168
  %v8604 = vunpack.c.0.s8 %v8603
  %v8605 = vlaneseq
  %v8606 = vshrl.u32 %v8605, 7
  %v8607 = vsub.s32 %v8604, %v8606
  %v8608 = vrot.slane %v8586, %v8607
  %v8610 = vunpack.c.l.s4 1966171168
  %v8611 = vunpack.c.0.s8 %v8610
  %v8612 = vlaneseq
  %v8613 = vshrl.u32 %v8612, 7
  %v8614 = vsub.s32 %v8611, %v8613
  %v8615 = vrot.slane %v8587, %v8614
  %v8616 = vcombine.high %v8594, %v8594
  %v8617 = vcombine.high %v8601, %v8601
  %v8618 = vcombine.high %v8608, %v8608
  %v8619 = vcombine.high %v8615, %v8615
  %v8620 = vcombine.high %v6361, %v6361
  %v8622 = vunpack.c.l.s4 1966171168
  %v8623 = vunpack.c.0.s8 %v8622
  %v8624 = vlaneseq
  %v8625 = vshrl.u32 %v8624, 7
  %v8626 = vsub.s32 %v8623, %v8625
  %v8627 = vrot.slane %v6361, %v8626
  %v8629 = vunpack.c.l.s4 1966171168
  %v8630 = vunpack.c.0.s8 %v8629
  %v8631 = vlaneseq
  %v8632 = vshrl.u32 %v8631, 7
  %v8633 = vsub.s32 %v8630, %v8632
  %v8634 = vrot.slane %v8620, %v8633
  %v8635 = vcombine.high %v8627, %v8627
  %v8636 = vcombine.high %v8634, %v8634
  %v8638 = vunpack.c.l.s4 1966171168
  %v8639 = vunpack.c.0.s8 %v8638
  %v8640 = vlaneseq
  %v8641 = vshrl.u32 %v8640, 7
  %v8642 = vsub.s32 %v8639, %v8641
  %v8643 = vrot.slane %v8627, %v8642
  %v8645 = vunpack.c.l.s4 1966171168
  %v8646 = vunpack.c.0.s8 %v8645
  %v8647 = vlaneseq
  %v8648 = vshrl.u32 %v8647, 7
  %v8649 = vsub.s32 %v8646, %v8648
  %v8650 = vrot.slane %v8634, %v8649
  %v8652 = vunpack.c.l.s4 1966171168
  %v8653 = vunpack.c.0.s8 %v8652
  %v8654 = vlaneseq
  %v8655 = vshrl.u32 %v8654, 7
  %v8656 = vsub.s32 %v8653, %v8655
  %v8657 = vrot.slane %v8635, %v8656
  %v8659 = vunpack.c.l.s4 1966171168
  %v8660 = vunpack.c.0.s8 %v8659
  %v8661 = vlaneseq
  %v8662 = vshrl.u32 %v8661, 7
  %v8663 = vsub.s32 %v8660, %v8662
  %v8664 = vrot.slane %v8636, %v8663
  %v8665 = vcombine.high %v8643, %v8643
  %v8666 = vcombine.high %v8650, %v8650
  %v8667 = vcombine.high %v8657, %v8657
  %v8668 = vcombine.high %v8664, %v8664
  %v8669 = vcombine.high %v6363, %v6363
  %v8671 = vunpack.c.l.s4 1966171168
  %v8672 = vunpack.c.0.s8 %v8671
  %v8673 = vlaneseq
  %v8674 = vshrl.u32 %v8673, 7
  %v8675 = vsub.s32 %v8672, %v8674
  %v8676 = vrot.slane %v6363, %v8675
  %v8678 = vunpack.c.l.s4 1966171168
  %v8679 = vunpack.c.0.s8 %v8678
  %v8680 = vlaneseq
  %v8681 = vshrl.u32 %v8680, 7
  %v8682 = vsub.s32 %v8679, %v8681
  %v8683 = vrot.slane %v8669, %v8682
  %v8684 = vcombine.high %v8676, %v8676
  %v8685 = vcombine.high %v8683, %v8683
  %v8687 = vunpack.c.l.s4 1966171168
  %v8688 = vunpack.c.0.s8 %v8687
  %v8689 = vlaneseq
  %v8690 = vshrl.u32 %v8689, 7
  %v8691 = vsub.s32 %v8688, %v8690
  %v8692 = vrot.slane %v8676, %v8691
  %v8694 = vunpack.c.l.s4 1966171168
  %v8695 = vunpack.c.0.s8 %v8694
  %v8696 = vlaneseq
  %v8697 = vshrl.u32 %v8696, 7
  %v8698 = vsub.s32 %v8695, %v8697
  %v8699 = vrot.slane %v8683, %v8698
  %v8701 = vunpack.c.l.s4 1966171168
  %v8702 = vunpack.c.0.s8 %v8701
  %v8703 = vlaneseq
  %v8704 = vshrl.u32 %v8703, 7
  %v8705 = vsub.s32 %v8702, %v8704
  %v8706 = vrot.slane %v8684, %v8705
  %v8708 = vunpack.c.l.s4 1966171168
  %v8709 = vunpack.c.0.s8 %v8708
  %v8710 = vlaneseq
  %v8711 = vshrl.u32 %v8710, 7
  %v8712 = vsub.s32 %v8709, %v8711
  %v8713 = vrot.slane %v8685, %v8712
  %v8714 = vcombine.high %v8692, %v8692
  %v8715 = vcombine.high %v8699, %v8699
  %v8716 = vcombine.high %v8706, %v8706
  %v8717 = vcombine.high %v8713, %v8713
  %v8718 = vcombine.high %v6365, %v6365
  %v8720 = vunpack.c.l.s4 1966171168
  %v8721 = vunpack.c.0.s8 %v8720
  %v8722 = vlaneseq
  %v8723 = vshrl.u32 %v8722, 7
  %v8724 = vsub.s32 %v8721, %v8723
  %v8725 = vrot.slane %v6365, %v8724
  %v8727 = vunpack.c.l.s4 1966171168
  %v8728 = vunpack.c.0.s8 %v8727
  %v8729 = vlaneseq
  %v8730 = vshrl.u32 %v8729, 7
  %v8731 = vsub.s32 %v8728, %v8730
  %v8732 = vrot.slane %v8718, %v8731
  %v8733 = vcombine.high %v8725, %v8725
  %v8734 = vcombine.high %v8732, %v8732
  %v8736 = vunpack.c.l.s4 1966171168
  %v8737 = vunpack.c.0.s8 %v8736
  %v8738 = vlaneseq
  %v8739 = vshrl.u32 %v8738, 7
  %v8740 = vsub.s32 %v8737, %v8739
  %v8741 = vrot.slane %v8725, %v8740
  %v8743 = vunpack.c.l.s4 1966171168
  %v8744 = vunpack.c.0.s8 %v8743
  %v8745 = vlaneseq
  %v8746 = vshrl.u32 %v8745, 7
  %v8747 = vsub.s32 %v8744, %v8746
  %v8748 = vrot.slane %v8732, %v8747
  %v8750 = vunpack.c.l.s4 1966171168
  %v8751 = vunpack.c.0.s8 %v8750
  %v8752 = vlaneseq
  %v8753 = vshrl.u32 %v8752, 7
  %v8754 = vsub.s32 %v8751, %v8753
  %v8755 = vrot.slane %v8733, %v8754
  %v8757 = vunpack.c.l.s4 1966171168
  %v8758 = vunpack.c.0.s8 %v8757
  %v8759 = vlaneseq
  %v8760 = vshrl.u32 %v8759, 7
  %v8761 = vsub.s32 %v8758, %v8760
  %v8762 = vrot.slane %v8734, %v8761
  %v8763 = vcombine.high %v8741, %v8741
  %v8764 = vcombine.high %v8748, %v8748
  %v8765 = vcombine.high %v8755, %v8755
  %v8766 = vcombine.high %v8762, %v8762
  %v8767 = vcombine.high %v6367, %v6367
  %v8769 = vunpack.c.l.s4 1966171168
  %v8770 = vunpack.c.0.s8 %v8769
  %v8771 = vlaneseq
  %v8772 = vshrl.u32 %v8771, 7
  %v8773 = vsub.s32 %v8770, %v8772
  %v8774 = vrot.slane %v6367, %v8773
  %v8776 = vunpack.c.l.s4 1966171168
  %v8777 = vunpack.c.0.s8 %v8776
  %v8778 = vlaneseq
  %v8779 = vshrl.u32 %v8778, 7
  %v8780 = vsub.s32 %v8777, %v8779
  %v8781 = vrot.slane %v8767, %v8780
  %v8782 = vcombine.high %v8774, %v8774
  %v8783 = vcombine.high %v8781, %v8781
  %v8785 = vunpack.c.l.s4 1966171168
  %v8786 = vunpack.c.0.s8 %v8785
  %v8787 = vlaneseq
  %v8788 = vshrl.u32 %v8787, 7
  %v8789 = vsub.s32 %v8786, %v8788
  %v8790 = vrot.slane %v8774, %v8789
  %v8792 = vunpack.c.l.s4 1966171168
  %v8793 = vunpack.c.0.s8 %v8792
  %v8794 = vlaneseq
  %v8795 = vshrl.u32 %v8794, 7
  %v8796 = vsub.s32 %v8793, %v8795
  %v8797 = vrot.slane %v8781, %v8796
  %v8799 = vunpack.c.l.s4 1966171168
  %v8800 = vunpack.c.0.s8 %v8799
  %v8801 = vlaneseq
  %v8802 = vshrl.u32 %v8801, 7
  %v8803 = vsub.s32 %v8800, %v8802
  %v8804 = vrot.slane %v8782, %v8803
  %v8806 = vunpack.c.l.s4 1966171168
  %v8807 = vunpack.c.0.s8 %v8806
  %v8808 = vlaneseq
  %v8809 = vshrl.u32 %v8808, 7
  %v8810 = vsub.s32 %v8807, %v8809
  %v8811 = vrot.slane %v8783, %v8810
  %v8812 = vcombine.high %v8790, %v8790
  %v8813 = vcombine.high %v8797, %v8797
  %v8814 = vcombine.high %v8804, %v8804
  %v8815 = vcombine.high %v8811, %v8811
  %v8816 = vcombine.high %v6369, %v6369
  %v8818 = vunpack.c.l.s4 1966171168
  %v8819 = vunpack.c.0.s8 %v8818
  %v8820 = vlaneseq
  %v8821 = vshrl.u32 %v8820, 7
  %v8822 = vsub.s32 %v8819, %v8821
  %v8823 = vrot.slane %v6369, %v8822
  %v8825 = vunpack.c.l.s4 1966171168
  %v8826 = vunpack.c.0.s8 %v8825
  %v8827 = vlaneseq
  %v8828 = vshrl.u32 %v8827, 7
  %v8829 = vsub.s32 %v8826, %v8828
  %v8830 = vrot.slane %v8816, %v8829
  %v8831 = vcombine.high %v8823, %v8823
  %v8832 = vcombine.high %v8830, %v8830
  %v8834 = vunpack.c.l.s4 1966171168
  %v8835 = vunpack.c.0.s8 %v8834
  %v8836 = vlaneseq
  %v8837 = vshrl.u32 %v8836, 7
  %v8838 = vsub.s32 %v8835, %v8837
  %v8839 = vrot.slane %v8823, %v8838
  %v8841 = vunpack.c.l.s4 1966171168
  %v8842 = vunpack.c.0.s8 %v8841
  %v8843 = vlaneseq
  %v8844 = vshrl.u32 %v8843, 7
  %v8845 = vsub.s32 %v8842, %v8844
  %v8846 = vrot.slane %v8830, %v8845
  %v8848 = vunpack.c.l.s4 1966171168
  %v8849 = vunpack.c.0.s8 %v8848
  %v8850 = vlaneseq
  %v8851 = vshrl.u32 %v8850, 7
  %v8852 = vsub.s32 %v8849, %v8851
  %v8853 = vrot.slane %v8831, %v8852
  %v8855 = vunpack.c.l.s4 1966171168
  %v8856 = vunpack.c.0.s8 %v8855
  %v8857 = vlaneseq
  %v8858 = vshrl.u32 %v8857, 7
  %v8859 = vsub.s32 %v8856, %v8858
  %v8860 = vrot.slane %v8832, %v8859
  %v8861 = vcombine.high %v8839, %v8839
  %v8862 = vcombine.high %v8846, %v8846
  %v8863 = vcombine.high %v8853, %v8853
  %v8864 = vcombine.high %v8860, %v8860
  %v8865 = vcombine.high %v6371, %v6371
  %v8867 = vunpack.c.l.s4 1966171168
  %v8868 = vunpack.c.0.s8 %v8867
  %v8869 = vlaneseq
  %v8870 = vshrl.u32 %v8869, 7
  %v8871 = vsub.s32 %v8868, %v8870
  %v8872 = vrot.slane %v6371, %v8871
  %v8874 = vunpack.c.l.s4 1966171168
  %v8875 = vunpack.c.0.s8 %v8874
  %v8876 = vlaneseq
  %v8877 = vshrl.u32 %v8876, 7
  %v8878 = vsub.s32 %v8875, %v8877
  %v8879 = vrot.slane %v8865, %v8878
  %v8880 = vcombine.high %v8872, %v8872
  %v8881 = vcombine.high %v8879, %v8879
  %v8883 = vunpack.c.l.s4 1966171168
  %v8884 = vunpack.c.0.s8 %v8883
  %v8885 = vlaneseq
  %v8886 = vshrl.u32 %v8885, 7
  %v8887 = vsub.s32 %v8884, %v8886
  %v8888 = vrot.slane %v8872, %v8887
  %v8890 = vunpack.c.l.s4 1966171168
  %v8891 = vunpack.c.0.s8 %v8890
  %v8892 = vlaneseq
  %v8893 = vshrl.u32 %v8892, 7
  %v8894 = vsub.s32 %v8891, %v8893
  %v8895 = vrot.slane %v8879, %v8894
  %v8897 = vunpack.c.l.s4 1966171168
  %v8898 = vunpack.c.0.s8 %v8897
  %v8899 = vlaneseq
  %v8900 = vshrl.u32 %v8899, 7
  %v8901 = vsub.s32 %v8898, %v8900
  %v8902 = vrot.slane %v8880, %v8901
  %v8904 = vunpack.c.l.s4 1966171168
  %v8905 = vunpack.c.0.s8 %v8904
  %v8906 = vlaneseq
  %v8907 = vshrl.u32 %v8906, 7
  %v8908 = vsub.s32 %v8905, %v8907
  %v8909 = vrot.slane %v8881, %v8908
  %v8910 = vcombine.high %v8888, %v8888
  %v8911 = vcombine.high %v8895, %v8895
  %v8912 = vcombine.high %v8902, %v8902
  %v8913 = vcombine.high %v8909, %v8909
  %v8914 = vcombine.high %v6373, %v6373
  %v8916 = vunpack.c.l.s4 1966171168
  %v8917 = vunpack.c.0.s8 %v8916
  %v8918 = vlaneseq
  %v8919 = vshrl.u32 %v8918, 7
  %v8920 = vsub.s32 %v8917, %v8919
  %v8921 = vrot.slane %v6373, %v8920
  %v8923 = vunpack.c.l.s4 1966171168
  %v8924 = vunpack.c.0.s8 %v8923
  %v8925 = vlaneseq
  %v8926 = vshrl.u32 %v8925, 7
  %v8927 = vsub.s32 %v8924, %v8926
  %v8928 = vrot.slane %v8914, %v8927
  %v8929 = vcombine.high %v8921, %v8921
  %v8930 = vcombine.high %v8928, %v8928
  %v8932 = vunpack.c.l.s4 1966171168
  %v8933 = vunpack.c.0.s8 %v8932
  %v8934 = vlaneseq
  %v8935 = vshrl.u32 %v8934, 7
  %v8936 = vsub.s32 %v8933, %v8935
  %v8937 = vrot.slane %v8921, %v8936
  %v8939 = vunpack.c.l.s4 1966171168
  %v8940 = vunpack.c.0.s8 %v8939
  %v8941 = vlaneseq
  %v8942 = vshrl.u32 %v8941, 7
  %v8943 = vsub.s32 %v8940, %v8942
  %v8944 = vrot.slane %v8928, %v8943
  %v8946 = vunpack.c.l.s4 1966171168
  %v8947 = vunpack.c.0.s8 %v8946
  %v8948 = vlaneseq
  %v8949 = vshrl.u32 %v8948, 7
  %v8950 = vsub.s32 %v8947, %v8949
  %v8951 = vrot.slane %v8929, %v8950
  %v8953 = vunpack.c.l.s4 1966171168
  %v8954 = vunpack.c.0.s8 %v8953
  %v8955 = vlaneseq
  %v8956 = vshrl.u32 %v8955, 7
  %v8957 = vsub.s32 %v8954, %v8956
  %v8958 = vrot.slane %v8930, %v8957
  %v8959 = vcombine.high %v8937, %v8937
  %v8960 = vcombine.high %v8944, %v8944
  %v8961 = vcombine.high %v8951, %v8951
  %v8962 = vcombine.high %v8958, %v8958
  %v8963 = vcombine.high %v6375, %v6375
  %v8965 = vunpack.c.l.s4 1966171168
  %v8966 = vunpack.c.0.s8 %v8965
  %v8967 = vlaneseq
  %v8968 = vshrl.u32 %v8967, 7
  %v8969 = vsub.s32 %v8966, %v8968
  %v8970 = vrot.slane %v6375, %v8969
  %v8972 = vunpack.c.l.s4 1966171168
  %v8973 = vunpack.c.0.s8 %v8972
  %v8974 = vlaneseq
  %v8975 = vshrl.u32 %v8974, 7
  %v8976 = vsub.s32 %v8973, %v8975
  %v8977 = vrot.slane %v8963, %v8976
  %v8978 = vcombine.high %v8970, %v8970
  %v8979 = vcombine.high %v8977, %v8977
  %v8981 = vunpack.c.l.s4 1966171168
  %v8982 = vunpack.c.0.s8 %v8981
  %v8983 = vlaneseq
  %v8984 = vshrl.u32 %v8983, 7
  %v8985 = vsub.s32 %v8982, %v8984
  %v8986 = vrot.slane %v8970, %v8985
  %v8988 = vunpack.c.l.s4 1966171168
  %v8989 = vunpack.c.0.s8 %v8988
  %v8990 = vlaneseq
  %v8991 = vshrl.u32 %v8990, 7
  %v8992 = vsub.s32 %v8989, %v8991
  %v8993 = vrot.slane %v8977, %v8992
  %v8995 = vunpack.c.l.s4 1966171168
  %v8996 = vunpack.c.0.s8 %v8995
  %v8997 = vlaneseq
  %v8998 = vshrl.u32 %v8997, 7
  %v8999 = vsub.s32 %v8996, %v8998
  %v9000 = vrot.slane %v8978, %v8999
  %v9002 = vunpack.c.l.s4 1966171168
  %v9003 = vunpack.c.0.s8 %v9002
  %v9004 = vlaneseq
  %v9005 = vshrl.u32 %v9004, 7
  %v9006 = vsub.s32 %v9003, %v9005
  %v9007 = vrot.slane %v8979, %v9006
  %v9008 = vcombine.high %v8986, %v8986
  %v9009 = vcombine.high %v8993, %v8993
  %v9010 = vcombine.high %v9000, %v9000
  %v9011 = vcombine.high %v9007, %v9007
  %v9012 = vcombine.high %v6377, %v6377
  %v9014 = vunpack.c.l.s4 1966171168
  %v9015 = vunpack.c.0.s8 %v9014
  %v9016 = vlaneseq
  %v9017 = vshrl.u32 %v9016, 7
  %v9018 = vsub.s32 %v9015, %v9017
  %v9019 = vrot.slane %v6377, %v9018
  %v9021 = vunpack.c.l.s4 1966171168
  %v9022 = vunpack.c.0.s8 %v9021
  %v9023 = vlaneseq
  %v9024 = vshrl.u32 %v9023, 7
  %v9025 = vsub.s32 %v9022, %v9024
  %v9026 = vrot.slane %v9012, %v9025
  %v9027 = vcombine.high %v9019, %v9019
  %v9028 = vcombine.high %v9026, %v9026
  %v9030 = vunpack.c.l.s4 1966171168
  %v9031 = vunpack.c.0.s8 %v9030
  %v9032 = vlaneseq
  %v9033 = vshrl.u32 %v9032, 7
  %v9034 = vsub.s32 %v9031, %v9033
  %v9035 = vrot.slane %v9019, %v9034
  %v9037 = vunpack.c.l.s4 1966171168
  %v9038 = vunpack.c.0.s8 %v9037
  %v9039 = vlaneseq
  %v9040 = vshrl.u32 %v9039, 7
  %v9041 = vsub.s32 %v9038, %v9040
  %v9042 = vrot.slane %v9026, %v9041
  %v9044 = vunpack.c.l.s4 1966171168
  %v9045 = vunpack.c.0.s8 %v9044
  %v9046 = vlaneseq
  %v9047 = vshrl.u32 %v9046, 7
  %v9048 = vsub.s32 %v9045, %v9047
  %v9049 = vrot.slane %v9027, %v9048
  %v9051 = vunpack.c.l.s4 1966171168
  %v9052 = vunpack.c.0.s8 %v9051
  %v9053 = vlaneseq
  %v9054 = vshrl.u32 %v9053, 7
  %v9055 = vsub.s32 %v9052, %v9054
  %v9056 = vrot.slane %v9028, %v9055
  %v9057 = vcombine.high %v9035, %v9035
  %v9058 = vcombine.high %v9042, %v9042
  %v9059 = vcombine.high %v9049, %v9049
  %v9060 = vcombine.high %v9056, %v9056
  %v9061 = vcombine.high %v6379, %v6379
  %v9063 = vunpack.c.l.s4 1966171168
  %v9064 = vunpack.c.0.s8 %v9063
  %v9065 = vlaneseq
  %v9066 = vshrl.u32 %v9065, 7
  %v9067 = vsub.s32 %v9064, %v9066
  %v9068 = vrot.slane %v6379, %v9067
  %v9070 = vunpack.c.l.s4 1966171168
  %v9071 = vunpack.c.0.s8 %v9070
  %v9072 = vlaneseq
  %v9073 = vshrl.u32 %v9072, 7
  %v9074 = vsub.s32 %v9071, %v9073
  %v9075 = vrot.slane %v9061, %v9074
  %v9076 = vcombine.high %v9068, %v9068
  %v9077 = vcombine.high %v9075, %v9075
  %v9079 = vunpack.c.l.s4 1966171168
  %v9080 = vunpack.c.0.s8 %v9079
  %v9081 = vlaneseq
  %v9082 = vshrl.u32 %v9081, 7
  %v9083 = vsub.s32 %v9080, %v9082
  %v9084 = vrot.slane %v9068, %v9083
  %v9086 = vunpack.c.l.s4 1966171168
  %v9087 = vunpack.c.0.s8 %v9086
  %v9088 = vlaneseq
  %v9089 = vshrl.u32 %v9088, 7
  %v9090 = vsub.s32 %v9087, %v9089
  %v9091 = vrot.slane %v9075, %v9090
  %v9093 = vunpack.c.l.s4 1966171168
  %v9094 = vunpack.c.0.s8 %v9093
  %v9095 = vlaneseq
  %v9096 = vshrl.u32 %v9095, 7
  %v9097 = vsub.s32 %v9094, %v9096
  %v9098 = vrot.slane %v9076, %v9097
  %v9100 = vunpack.c.l.s4 1966171168
  %v9101 = vunpack.c.0.s8 %v9100
  %v9102 = vlaneseq
  %v9103 = vshrl.u32 %v9102, 7
  %v9104 = vsub.s32 %v9101, %v9103
  %v9105 = vrot.slane %v9077, %v9104
  %v9106 = vcombine.high %v9084, %v9084
  %v9107 = vcombine.high %v9091, %v9091
  %v9108 = vcombine.high %v9098, %v9098
  %v9109 = vcombine.high %v9105, %v9105
  %v9110 = vcombine.high %v6381, %v6381
  %v9112 = vunpack.c.l.s4 1966171168
  %v9113 = vunpack.c.0.s8 %v9112
  %v9114 = vlaneseq
  %v9115 = vshrl.u32 %v9114, 7
  %v9116 = vsub.s32 %v9113, %v9115
  %v9117 = vrot.slane %v6381, %v9116
  %v9119 = vunpack.c.l.s4 1966171168
  %v9120 = vunpack.c.0.s8 %v9119
  %v9121 = vlaneseq
  %v9122 = vshrl.u32 %v9121, 7
  %v9123 = vsub.s32 %v9120, %v9122
  %v9124 = vrot.slane %v9110, %v9123
  %v9125 = vcombine.high %v9117, %v9117
  %v9126 = vcombine.high %v9124, %v9124
  %v9128 = vunpack.c.l.s4 1966171168
  %v9129 = vunpack.c.0.s8 %v9128
  %v9130 = vlaneseq
  %v9131 = vshrl.u32 %v9130, 7
  %v9132 = vsub.s32 %v9129, %v9131
  %v9133 = vrot.slane %v9117, %v9132
  %v9135 = vunpack.c.l.s4 1966171168
  %v9136 = vunpack.c.0.s8 %v9135
  %v9137 = vlaneseq
  %v9138 = vshrl.u32 %v9137, 7
  %v9139 = vsub.s32 %v9136, %v9138
  %v9140 = vrot.slane %v9124, %v9139
  %v9142 = vunpack.c.l.s4 1966171168
  %v9143 = vunpack.c.0.s8 %v9142
  %v9144 = vlaneseq
  %v9145 = vshrl.u32 %v9144, 7
  %v9146 = vsub.s32 %v9143, %v9145
  %v9147 = vrot.slane %v9125, %v9146
  %v9149 = vunpack.c.l.s4 1966171168
  %v9150 = vunpack.c.0.s8 %v9149
  %v9151 = vlaneseq
  %v9152 = vshrl.u32 %v9151, 7
  %v9153 = vsub.s32 %v9150, %v9152
  %v9154 = vrot.slane %v9126, %v9153
  %v9155 = vcombine.high %v9133, %v9133
  %v9156 = vcombine.high %v9140, %v9140
  %v9157 = vcombine.high %v9147, %v9147
  %v9158 = vcombine.high %v9154, %v9154
  %v9159 = vcombine.high %v6383, %v6383
  %v9161 = vunpack.c.l.s4 1966171168
  %v9162 = vunpack.c.0.s8 %v9161
  %v9163 = vlaneseq
  %v9164 = vshrl.u32 %v9163, 7
  %v9165 = vsub.s32 %v9162, %v9164
  %v9166 = vrot.slane %v6383, %v9165
  %v9168 = vunpack.c.l.s4 1966171168
  %v9169 = vunpack.c.0.s8 %v9168
  %v9170 = vlaneseq
  %v9171 = vshrl.u32 %v9170, 7
  %v9172 = vsub.s32 %v9169, %v9171
  %v9173 = vrot.slane %v9159, %v9172
  %v9174 = vcombine.high %v9166, %v9166
  %v9175 = vcombine.high %v9173, %v9173
  %v9177 = vunpack.c.l.s4 1966171168
  %v9178 = vunpack.c.0.s8 %v9177
  %v9179 = vlaneseq
  %v9180 = vshrl.u32 %v9179, 7
  %v9181 = vsub.s32 %v9178, %v9180
  %v9182 = vrot.slane %v9166, %v9181
  %v9184 = vunpack.c.l.s4 1966171168
  %v9185 = vunpack.c.0.s8 %v9184
  %v9186 = vlaneseq
  %v9187 = vshrl.u32 %v9186, 7
  %v9188 = vsub.s32 %v9185, %v9187
  %v9189 = vrot.slane %v9173, %v9188
  %v9191 = vunpack.c.l.s4 1966171168
  %v9192 = vunpack.c.0.s8 %v9191
  %v9193 = vlaneseq
  %v9194 = vshrl.u32 %v9193, 7
  %v9195 = vsub.s32 %v9192, %v9194
  %v9196 = vrot.slane %v9174, %v9195
  %v9198 = vunpack.c.l.s4 1966171168
  %v9199 = vunpack.c.0.s8 %v9198
  %v9200 = vlaneseq
  %v9201 = vshrl.u32 %v9200, 7
  %v9202 = vsub.s32 %v9199, %v9201
  %v9203 = vrot.slane %v9175, %v9202
  %v9204 = vcombine.high %v9182, %v9182
  %v9205 = vcombine.high %v9189, %v9189
  %v9206 = vcombine.high %v9196, %v9196
  %v9207 = vcombine.high %v9203, %v9203
  %v9208 = vcombine.high %v6385, %v6385
  %v9210 = vunpack.c.l.s4 1966171168
  %v9211 = vunpack.c.0.s8 %v9210
  %v9212 = vlaneseq
  %v9213 = vshrl.u32 %v9212, 7
  %v9214 = vsub.s32 %v9211, %v9213
  %v9215 = vrot.slane %v6385, %v9214
  %v9217 = vunpack.c.l.s4 1966171168
  %v9218 = vunpack.c.0.s8 %v9217
  %v9219 = vlaneseq
  %v9220 = vshrl.u32 %v9219, 7
  %v9221 = vsub.s32 %v9218, %v9220
  %v9222 = vrot.slane %v9208, %v9221
  %v9223 = vcombine.high %v9215, %v9215
  %v9224 = vcombine.high %v9222, %v9222
  %v9226 = vunpack.c.l.s4 1966171168
  %v9227 = vunpack.c.0.s8 %v9226
  %v9228 = vlaneseq
  %v9229 = vshrl.u32 %v9228, 7
  %v9230 = vsub.s32 %v9227, %v9229
  %v9231 = vrot.slane %v9215, %v9230
  %v9233 = vunpack.c.l.s4 1966171168
  %v9234 = vunpack.c.0.s8 %v9233
  %v9235 = vlaneseq
  %v9236 = vshrl.u32 %v9235, 7
  %v9237 = vsub.s32 %v9234, %v9236
  %v9238 = vrot.slane %v9222, %v9237
  %v9240 = vunpack.c.l.s4 1966171168
  %v9241 = vunpack.c.0.s8 %v9240
  %v9242 = vlaneseq
  %v9243 = vshrl.u32 %v9242, 7
  %v9244 = vsub.s32 %v9241, %v9243
  %v9245 = vrot.slane %v9223, %v9244
  %v9247 = vunpack.c.l.s4 1966171168
  %v9248 = vunpack.c.0.s8 %v9247
  %v9249 = vlaneseq
  %v9250 = vshrl.u32 %v9249, 7
  %v9251 = vsub.s32 %v9248, %v9250
  %v9252 = vrot.slane %v9224, %v9251
  %v9253 = vcombine.high %v9231, %v9231
  %v9254 = vcombine.high %v9238, %v9238
  %v9255 = vcombine.high %v9245, %v9245
  %v9256 = vcombine.high %v9252, %v9252
  %v9257 = vcombine.high %v6387, %v6387
  %v9259 = vunpack.c.l.s4 1966171168
  %v9260 = vunpack.c.0.s8 %v9259
  %v9261 = vlaneseq
  %v9262 = vshrl.u32 %v9261, 7
  %v9263 = vsub.s32 %v9260, %v9262
  %v9264 = vrot.slane %v6387, %v9263
  %v9266 = vunpack.c.l.s4 1966171168
  %v9267 = vunpack.c.0.s8 %v9266
  %v9268 = vlaneseq
  %v9269 = vshrl.u32 %v9268, 7
  %v9270 = vsub.s32 %v9267, %v9269
  %v9271 = vrot.slane %v9257, %v9270
  %v9272 = vcombine.high %v9264, %v9264
  %v9273 = vcombine.high %v9271, %v9271
  %v9275 = vunpack.c.l.s4 1966171168
  %v9276 = vunpack.c.0.s8 %v9275
  %v9277 = vlaneseq
  %v9278 = vshrl.u32 %v9277, 7
  %v9279 = vsub.s32 %v9276, %v9278
  %v9280 = vrot.slane %v9264, %v9279
  %v9282 = vunpack.c.l.s4 1966171168
  %v9283 = vunpack.c.0.s8 %v9282
  %v9284 = vlaneseq
  %v9285 = vshrl.u32 %v9284, 7
  %v9286 = vsub.s32 %v9283, %v9285
  %v9287 = vrot.slane %v9271, %v9286
  %v9289 = vunpack.c.l.s4 1966171168
  %v9290 = vunpack.c.0.s8 %v9289
  %v9291 = vlaneseq
  %v9292 = vshrl.u32 %v9291, 7
  %v9293 = vsub.s32 %v9290, %v9292
  %v9294 = vrot.slane %v9272, %v9293
  %v9296 = vunpack.c.l.s4 1966171168
  %v9297 = vunpack.c.0.s8 %v9296
  %v9298 = vlaneseq
  %v9299 = vshrl.u32 %v9298, 7
  %v9300 = vsub.s32 %v9297, %v9299
  %v9301 = vrot.slane %v9273, %v9300
  %v9302 = vcombine.high %v9280, %v9280
  %v9303 = vcombine.high %v9287, %v9287
  %v9304 = vcombine.high %v9294, %v9294
  %v9305 = vcombine.high %v9301, %v9301
  %v9306 = vcombine.high %v6389, %v6389
  %v9308 = vunpack.c.l.s4 1966171168
  %v9309 = vunpack.c.0.s8 %v9308
  %v9310 = vlaneseq
  %v9311 = vshrl.u32 %v9310, 7
  %v9312 = vsub.s32 %v9309, %v9311
  %v9313 = vrot.slane %v6389, %v9312
  %v9315 = vunpack.c.l.s4 1966171168
  %v9316 = vunpack.c.0.s8 %v9315
  %v9317 = vlaneseq
  %v9318 = vshrl.u32 %v9317, 7
  %v9319 = vsub.s32 %v9316, %v9318
  %v9320 = vrot.slane %v9306, %v9319
  %v9321 = vcombine.high %v9313, %v9313
  %v9322 = vcombine.high %v9320, %v9320
  %v9324 = vunpack.c.l.s4 1966171168
  %v9325 = vunpack.c.0.s8 %v9324
  %v9326 = vlaneseq
  %v9327 = vshrl.u32 %v9326, 7
  %v9328 = vsub.s32 %v9325, %v9327
  %v9329 = vrot.slane %v9313, %v9328
  %v9331 = vunpack.c.l.s4 1966171168
  %v9332 = vunpack.c.0.s8 %v9331
  %v9333 = vlaneseq
  %v9334 = vshrl.u32 %v9333, 7
  %v9335 = vsub.s32 %v9332, %v9334
  %v9336 = vrot.slane %v9320, %v9335
  %v9338 = vunpack.c.l.s4 1966171168
  %v9339 = vunpack.c.0.s8 %v9338
  %v9340 = vlaneseq
  %v9341 = vshrl.u32 %v9340, 7
  %v9342 = vsub.s32 %v9339, %v9341
  %v9343 = vrot.slane %v9321, %v9342
  %v9345 = vunpack.c.l.s4 1966171168
  %v9346 = vunpack.c.0.s8 %v9345
  %v9347 = vlaneseq
  %v9348 = vshrl.u32 %v9347, 7
  %v9349 = vsub.s32 %v9346, %v9348
  %v9350 = vrot.slane %v9322, %v9349
  %v9351 = vcombine.high %v9329, %v9329
  %v9352 = vcombine.high %v9336, %v9336
  %v9353 = vcombine.high %v9343, %v9343
  %v9354 = vcombine.high %v9350, %v9350
  %v9355 = vcombine.high %v6391, %v6391
  %v9357 = vunpack.c.l.s4 1966171168
  %v9358 = vunpack.c.0.s8 %v9357
  %v9359 = vlaneseq
  %v9360 = vshrl.u32 %v9359, 7
  %v9361 = vsub.s32 %v9358, %v9360
  %v9362 = vrot.slane %v6391, %v9361
  %v9364 = vunpack.c.l.s4 1966171168
  %v9365 = vunpack.c.0.s8 %v9364
  %v9366 = vlaneseq
  %v9367 = vshrl.u32 %v9366, 7
  %v9368 = vsub.s32 %v9365, %v9367
  %v9369 = vrot.slane %v9355, %v9368
  %v9370 = vcombine.high %v9362, %v9362
  %v9371 = vcombine.high %v9369, %v9369
  %v9373 = vunpack.c.l.s4 1966171168
  %v9374 = vunpack.c.0.s8 %v9373
  %v9375 = vlaneseq
  %v9376 = vshrl.u32 %v9375, 7
  %v9377 = vsub.s32 %v9374, %v9376
  %v9378 = vrot.slane %v9362, %v9377
  %v9380 = vunpack.c.l.s4 1966171168
  %v9381 = vunpack.c.0.s8 %v9380
  %v9382 = vlaneseq
  %v9383 = vshrl.u32 %v9382, 7
  %v9384 = vsub.s32 %v9381, %v9383
  %v9385 = vrot.slane %v9369, %v9384
  %v9387 = vunpack.c.l.s4 1966171168
  %v9388 = vunpack.c.0.s8 %v9387
  %v9389 = vlaneseq
  %v9390 = vshrl.u32 %v9389, 7
  %v9391 = vsub.s32 %v9388, %v9390
  %v9392 = vrot.slane %v9370, %v9391
  %v9394 = vunpack.c.l.s4 1966171168
  %v9395 = vunpack.c.0.s8 %v9394
  %v9396 = vlaneseq
  %v9397 = vshrl.u32 %v9396, 7
  %v9398 = vsub.s32 %v9395, %v9397
  %v9399 = vrot.slane %v9371, %v9398
  %v9400 = vcombine.high %v9378, %v9378
  %v9401 = vcombine.high %v9385, %v9385
  %v9402 = vcombine.high %v9392, %v9392
  %v9403 = vcombine.high %v9399, %v9399
  %v9404 = vcombine.high %v6393, %v6393
  %v9406 = vunpack.c.l.s4 1966171168
  %v9407 = vunpack.c.0.s8 %v9406
  %v9408 = vlaneseq
  %v9409 = vshrl.u32 %v9408, 7
  %v9410 = vsub.s32 %v9407, %v9409
  %v9411 = vrot.slane %v6393, %v9410
  %v9413 = vunpack.c.l.s4 1966171168
  %v9414 = vunpack.c.0.s8 %v9413
  %v9415 = vlaneseq
  %v9416 = vshrl.u32 %v9415, 7
  %v9417 = vsub.s32 %v9414, %v9416
  %v9418 = vrot.slane %v9404, %v9417
  %v9419 = vcombine.high %v9411, %v9411
  %v9420 = vcombine.high %v9418, %v9418
  %v9422 = vunpack.c.l.s4 1966171168
  %v9423 = vunpack.c.0.s8 %v9422
  %v9424 = vlaneseq
  %v9425 = vshrl.u32 %v9424, 7
  %v9426 = vsub.s32 %v9423, %v9425
  %v9427 = vrot.slane %v9411, %v9426
  %v9429 = vunpack.c.l.s4 1966171168
  %v9430 = vunpack.c.0.s8 %v9429
  %v9431 = vlaneseq
  %v9432 = vshrl.u32 %v9431, 7
  %v9433 = vsub.s32 %v9430, %v9432
  %v9434 = vrot.slane %v9418, %v9433
  %v9436 = vunpack.c.l.s4 1966171168
  %v9437 = vunpack.c.0.s8 %v9436
  %v9438 = vlaneseq
  %v9439 = vshrl.u32 %v9438, 7
  %v9440 = vsub.s32 %v9437, %v9439
  %v9441 = vrot.slane %v9419, %v9440
  %v9443 = vunpack.c.l.s4 1966171168
  %v9444 = vunpack.c.0.s8 %v9443
  %v9445 = vlaneseq
  %v9446 = vshrl.u32 %v9445, 7
  %v9447 = vsub.s32 %v9444, %v9446
  %v9448 = vrot.slane %v9420, %v9447
  %v9449 = vcombine.high %v9427, %v9427
  %v9450 = vcombine.high %v9434, %v9434
  %v9451 = vcombine.high %v9441, %v9441
  %v9452 = vcombine.high %v9448, %v9448
  %v9453 = vcombine.high %v6395, %v6395
  %v9455 = vunpack.c.l.s4 1966171168
  %v9456 = vunpack.c.0.s8 %v9455
  %v9457 = vlaneseq
  %v9458 = vshrl.u32 %v9457, 7
  %v9459 = vsub.s32 %v9456, %v9458
  %v9460 = vrot.slane %v6395, %v9459
  %v9462 = vunpack.c.l.s4 1966171168
  %v9463 = vunpack.c.0.s8 %v9462
  %v9464 = vlaneseq
  %v9465 = vshrl.u32 %v9464, 7
  %v9466 = vsub.s32 %v9463, %v9465
  %v9467 = vrot.slane %v9453, %v9466
  %v9468 = vcombine.high %v9460, %v9460
  %v9469 = vcombine.high %v9467, %v9467
  %v9471 = vunpack.c.l.s4 1966171168
  %v9472 = vunpack.c.0.s8 %v9471
  %v9473 = vlaneseq
  %v9474 = vshrl.u32 %v9473, 7
  %v9475 = vsub.s32 %v9472, %v9474
  %v9476 = vrot.slane %v9460, %v9475
  %v9478 = vunpack.c.l.s4 1966171168
  %v9479 = vunpack.c.0.s8 %v9478
  %v9480 = vlaneseq
  %v9481 = vshrl.u32 %v9480, 7
  %v9482 = vsub.s32 %v9479, %v9481
  %v9483 = vrot.slane %v9467, %v9482
  %v9485 = vunpack.c.l.s4 1966171168
  %v9486 = vunpack.c.0.s8 %v9485
  %v9487 = vlaneseq
  %v9488 = vshrl.u32 %v9487, 7
  %v9489 = vsub.s32 %v9486, %v9488
  %v9490 = vrot.slane %v9468, %v9489
  %v9492 = vunpack.c.l.s4 1966171168
  %v9493 = vunpack.c.0.s8 %v9492
  %v9494 = vlaneseq
  %v9495 = vshrl.u32 %v9494, 7
  %v9496 = vsub.s32 %v9493, %v9495
  %v9497 = vrot.slane %v9469, %v9496
  %v9498 = vcombine.high %v9476, %v9476
  %v9499 = vcombine.high %v9483, %v9483
  %v9500 = vcombine.high %v9490, %v9490
  %v9501 = vcombine.high %v9497, %v9497
  %v9502 = vcombine.high %v6397, %v6397
  %v9504 = vunpack.c.l.s4 1966171168
  %v9505 = vunpack.c.0.s8 %v9504
  %v9506 = vlaneseq
  %v9507 = vshrl.u32 %v9506, 7
  %v9508 = vsub.s32 %v9505, %v9507
  %v9509 = vrot.slane %v6397, %v9508
  %v9511 = vunpack.c.l.s4 1966171168
  %v9512 = vunpack.c.0.s8 %v9511
  %v9513 = vlaneseq
  %v9514 = vshrl.u32 %v9513, 7
  %v9515 = vsub.s32 %v9512, %v9514
  %v9516 = vrot.slane %v9502, %v9515
  %v9517 = vcombine.high %v9509, %v9509
  %v9518 = vcombine.high %v9516, %v9516
  %v9520 = vunpack.c.l.s4 1966171168
  %v9521 = vunpack.c.0.s8 %v9520
  %v9522 = vlaneseq
  %v9523 = vshrl.u32 %v9522, 7
  %v9524 = vsub.s32 %v9521, %v9523
  %v9525 = vrot.slane %v9509, %v9524
  %v9527 = vunpack.c.l.s4 1966171168
  %v9528 = vunpack.c.0.s8 %v9527
  %v9529 = vlaneseq
  %v9530 = vshrl.u32 %v9529, 7
  %v9531 = vsub.s32 %v9528, %v9530
  %v9532 = vrot.slane %v9516, %v9531
  %v9534 = vunpack.c.l.s4 1966171168
  %v9535 = vunpack.c.0.s8 %v9534
  %v9536 = vlaneseq
  %v9537 = vshrl.u32 %v9536, 7
  %v9538 = vsub.s32 %v9535, %v9537
  %v9539 = vrot.slane %v9517, %v9538
  %v9541 = vunpack.c.l.s4 1966171168
  %v9542 = vunpack.c.0.s8 %v9541
  %v9543 = vlaneseq
  %v9544 = vshrl.u32 %v9543, 7
  %v9545 = vsub.s32 %v9542, %v9544
  %v9546 = vrot.slane %v9518, %v9545
  %v9547 = vcombine.high %v9525, %v9525
  %v9548 = vcombine.high %v9532, %v9532
  %v9549 = vcombine.high %v9539, %v9539
  %v9550 = vcombine.high %v9546, %v9546
  %v9551 = vcombine.high %v6399, %v6399
  %v9553 = vunpack.c.l.s4 1966171168
  %v9554 = vunpack.c.0.s8 %v9553
  %v9555 = vlaneseq
  %v9556 = vshrl.u32 %v9555, 7
  %v9557 = vsub.s32 %v9554, %v9556
  %v9558 = vrot.slane %v6399, %v9557
  %v9560 = vunpack.c.l.s4 1966171168
  %v9561 = vunpack.c.0.s8 %v9560
  %v9562 = vlaneseq
  %v9563 = vshrl.u32 %v9562, 7
  %v9564 = vsub.s32 %v9561, %v9563
  %v9565 = vrot.slane %v9551, %v9564
  %v9566 = vcombine.high %v9558, %v9558
  %v9567 = vcombine.high %v9565, %v9565
  %v9569 = vunpack.c.l.s4 1966171168
  %v9570 = vunpack.c.0.s8 %v9569
  %v9571 = vlaneseq
  %v9572 = vshrl.u32 %v9571, 7
  %v9573 = vsub.s32 %v9570, %v9572
  %v9574 = vrot.slane %v9558, %v9573
  %v9576 = vunpack.c.l.s4 1966171168
  %v9577 = vunpack.c.0.s8 %v9576
  %v9578 = vlaneseq
  %v9579 = vshrl.u32 %v9578, 7
  %v9580 = vsub.s32 %v9577, %v9579
  %v9581 = vrot.slane %v9565, %v9580
  %v9583 = vunpack.c.l.s4 1966171168
  %v9584 = vunpack.c.0.s8 %v9583
  %v9585 = vlaneseq
  %v9586 = vshrl.u32 %v9585, 7
  %v9587 = vsub.s32 %v9584, %v9586
  %v9588 = vrot.slane %v9566, %v9587
  %v9590 = vunpack.c.l.s4 1966171168
  %v9591 = vunpack.c.0.s8 %v9590
  %v9592 = vlaneseq
  %v9593 = vshrl.u32 %v9592, 7
  %v9594 = vsub.s32 %v9591, %v9593
  %v9595 = vrot.slane %v9567, %v9594
  %v9596 = vcombine.high %v9574, %v9574
  %v9597 = vcombine.high %v9581, %v9581
  %v9598 = vcombine.high %v9588, %v9588
  %v9599 = vcombine.high %v9595, %v9595
  %v9600 = vcombine.low %v6487, %v6501
  %v9601 = vcombine.low %v6509, %v6511
  %v9602 = vcombine.low %v6494, %v6508
  %v9603 = vcombine.low %v6510, %v6512
  %v9605 = vunpack.c.l.s4 1966171168
  %v9606 = vunpack.c.0.s8 %v9605
  %v9607 = vlaneseq
  %v9608 = vshrl.u32 %v9607, 7
  %v9609 = vsub.s32 %v9606, %v9608
  %v9610 = vrot.slane %v9600, %v9609
  %v9612 = vunpack.c.l.s4 1966171168
  %v9613 = vunpack.c.0.s8 %v9612
  %v9614 = vlaneseq
  %v9615 = vshrl.u32 %v9614, 7
  %v9616 = vsub.s32 %v9613, %v9615
  %v9617 = vrot.slane %v9601, %v9616
  %v9619 = vunpack.c.l.s4 1966171168
  %v9620 = vunpack.c.0.s8 %v9619
  %v9621 = vlaneseq
  %v9622 = vshrl.u32 %v9621, 7
  %v9623 = vsub.s32 %v9620, %v9622
  %v9624 = vrot.slane %v9602, %v9623
  %v9626 = vunpack.c.l.s4 1966171168
  %v9627 = vunpack.c.0.s8 %v9626
  %v9628 = vlaneseq
  %v9629 = vshrl.u32 %v9628, 7
  %v9630 = vsub.s32 %v9627, %v9629
  %v9631 = vrot.slane %v9603, %v9630
  %v9632 = vcombine.low %v9610, %v9617
  %v9633 = vcombine.low %v9624, %v9631
  %v9635 = vunpack.c.l.s4 1966171168
  %v9636 = vunpack.c.0.s8 %v9635
  %v9637 = vlaneseq
  %v9638 = vshrl.u32 %v9637, 7
  %v9639 = vsub.s32 %v9636, %v9638
  %v9640 = vrot.slane %v9632, %v9639
  %v9642 = vunpack.c.l.s4 1966171168
  %v9643 = vunpack.c.0.s8 %v9642
  %v9644 = vlaneseq
  %v9645 = vshrl.u32 %v9644, 7
  %v9646 = vsub.s32 %v9643, %v9645
  %v9647 = vrot.slane %v9633, %v9646
  %v9648 = vcombine.low %v9640, %v9647
  %v9649 = vcombine.low %v6536, %v6550
  %v9650 = vcombine.low %v6558, %v6560
  %v9651 = vcombine.low %v6543, %v6557
  %v9652 = vcombine.low %v6559, %v6561
  %v9654 = vunpack.c.l.s4 1966171168
  %v9655 = vunpack.c.0.s8 %v9654
  %v9656 = vlaneseq
  %v9657 = vshrl.u32 %v9656, 7
  %v9658 = vsub.s32 %v9655, %v9657
  %v9659 = vrot.slane %v9649, %v9658
  %v9661 = vunpack.c.l.s4 1966171168
  %v9662 = vunpack.c.0.s8 %v9661
  %v9663 = vlaneseq
  %v9664 = vshrl.u32 %v9663, 7
  %v9665 = vsub.s32 %v9662, %v9664
  %v9666 = vrot.slane %v9650, %v9665
  %v9668 = vunpack.c.l.s4 1966171168
  %v9669 = vunpack.c.0.s8 %v9668
  %v9670 = vlaneseq
  %v9671 = vshrl.u32 %v9670, 7
  %v9672 = vsub.s32 %v9669, %v9671
  %v9673 = vrot.slane %v9651, %v9672
  %v9675 = vunpack.c.l.s4 1966171168
  %v9676 = vunpack.c.0.s8 %v9675
  %v9677 = vlaneseq
  %v9678 = vshrl.u32 %v9677, 7
  %v9679 = vsub.s32 %v9676, %v9678
  %v9680 = vrot.slane %v9652, %v9679
  %v9681 = vcombine.low %v9659, %v9666
  %v9682 = vcombine.low %v9673, %v9680
  %v9684 = vunpack.c.l.s4 1966171168
  %v9685 = vunpack.c.0.s8 %v9684
  %v9686 = vlaneseq
  %v9687 = vshrl.u32 %v9686, 7
  %v9688 = vsub.s32 %v9685, %v9687
  %v9689 = vrot.slane %v9681, %v9688
  %v9691 = vunpack.c.l.s4 1966171168
  %v9692 = vunpack.c.0.s8 %v9691
  %v9693 = vlaneseq
  %v9694 = vshrl.u32 %v9693, 7
  %v9695 = vsub.s32 %v9692, %v9694
  %v9696 = vrot.slane %v9682, %v9695
  %v9697 = vcombine.low %v9689, %v9696
  %v9698 = vcombine.low %v6585, %v6599
  %v9699 = vcombine.low %v6607, %v6609
  %v9700 = vcombine.low %v6592, %v6606
  %v9701 = vcombine.low %v6608, %v6610
  %v9703 = vunpack.c.l.s4 1966171168
  %v9704 = vunpack.c.0.s8 %v9703
  %v9705 = vlaneseq
  %v9706 = vshrl.u32 %v9705, 7
  %v9707 = vsub.s32 %v9704, %v9706
  %v9708 = vrot.slane %v9698, %v9707
  %v9710 = vunpack.c.l.s4 1966171168
  %v9711 = vunpack.c.0.s8 %v9710
  %v9712 = vlaneseq
  %v9713 = vshrl.u32 %v9712, 7
  %v9714 = vsub.s32 %v9711, %v9713
  %v9715 = vrot.slane %v9699, %v9714
  %v9717 = vunpack.c.l.s4 1966171168
  %v9718 = vunpack.c.0.s8 %v9717
  %v9719 = vlaneseq
  %v9720 = vshrl.u32 %v9719, 7
  %v9721 = vsub.s32 %v9718, %v9720
  %v9722 = vrot.slane %v9700, %v9721
  %v9724 = vunpack.c.l.s4 1966171168
  %v9725 = vunpack.c.0.s8 %v9724
  %v9726 = vlaneseq
  %v9727 = vshrl.u32 %v9726, 7
  %v9728 = vsub.s32 %v9725, %v9727
  %v9729 = vrot.slane %v9701, %v9728
  %v9730 = vcombine.low %v9708, %v9715
  %v9731 = vcombine.low %v9722, %v9729
  %v9733 = vunpack.c.l.s4 1966171168
  %v9734 = vunpack.c.0.s8 %v9733
  %v9735 = vlaneseq
  %v9736 = vshrl.u32 %v9735, 7
  %v9737 = vsub.s32 %v9734, %v9736
  %v9738 = vrot.slane %v9730, %v9737
  %v9740 = vunpack.c.l.s4 1966171168
  %v9741 = vunpack.c.0.s8 %v9740
  %v9742 = vlaneseq
  %v9743 = vshrl.u32 %v9742, 7
  %v9744 = vsub.s32 %v9741, %v9743
  %v9745 = vrot.slane %v9731, %v9744
  %v9746 = vcombine.low %v9738, %v9745
  %v9747 = vcombine.low %v6634, %v6648
  %v9748 = vcombine.low %v6656, %v6658
  %v9749 = vcombine.low %v6641, %v6655
  %v9750 = vcombine.low %v6657, %v6659
  %v9752 = vunpack.c.l.s4 1966171168
  %v9753 = vunpack.c.0.s8 %v9752
  %v9754 = vlaneseq
  %v9755 = vshrl.u32 %v9754, 7
  %v9756 = vsub.s32 %v9753, %v9755
  %v9757 = vrot.slane %v9747, %v9756
  %v9759 = vunpack.c.l.s4 1966171168
  %v9760 = vunpack.c.0.s8 %v9759
  %v9761 = vlaneseq
  %v9762 = vshrl.u32 %v9761, 7
  %v9763 = vsub.s32 %v9760, %v9762
  %v9764 = vrot.slane %v9748, %v9763
  %v9766 = vunpack.c.l.s4 1966171168
  %v9767 = vunpack.c.0.s8 %v9766
  %v9768 = vlaneseq
  %v9769 = vshrl.u32 %v9768, 7
  %v9770 = vsub.s32 %v9767, %v9769
  %v9771 = vrot.slane %v9749, %v9770
  %v9773 = vunpack.c.l.s4 1966171168
  %v9774 = vunpack.c.0.s8 %v9773
  %v9775 = vlaneseq
  %v9776 = vshrl.u32 %v9775, 7
  %v9777 = vsub.s32 %v9774, %v9776
  %v9778 = vrot.slane %v9750, %v9777
  %v9779 = vcombine.low %v9757, %v9764
  %v9780 = vcombine.low %v9771, %v9778
  %v9782 = vunpack.c.l.s4 1966171168
  %v9783 = vunpack.c.0.s8 %v9782
  %v9784 = vlaneseq
  %v9785 = vshrl.u32 %v9784, 7
  %v9786 = vsub.s32 %v9783, %v9785
  %v9787 = vrot.slane %v9779, %v9786
  %v9789 = vunpack.c.l.s4 1966171168
  %v9790 = vunpack.c.0.s8 %v9789
  %v9791 = vlaneseq
  %v9792 = vshrl.u32 %v9791, 7
  %v9793 = vsub.s32 %v9790, %v9792
  %v9794 = vrot.slane %v9780, %v9793
  %v9795 = vcombine.low %v9787, %v9794
  %v9796 = vcombine.low %v6683, %v6697
  %v9797 = vcombine.low %v6705, %v6707
  %v9798 = vcombine.low %v6690, %v6704
  %v9799 = vcombine.low %v6706, %v6708
  %v9801 = vunpack.c.l.s4 1966171168
  %v9802 = vunpack.c.0.s8 %v9801
  %v9803 = vlaneseq
  %v9804 = vshrl.u32 %v9803, 7
  %v9805 = vsub.s32 %v9802, %v9804
  %v9806 = vrot.slane %v9796, %v9805
  %v9808 = vunpack.c.l.s4 1966171168
  %v9809 = vunpack.c.0.s8 %v9808
  %v9810 = vlaneseq
  %v9811 = vshrl.u32 %v9810, 7
  %v9812 = vsub.s32 %v9809, %v9811
  %v9813 = vrot.slane %v9797, %v9812
  %v9815 = vunpack.c.l.s4 1966171168
  %v9816 = vunpack.c.0.s8 %v9815
  %v9817 = vlaneseq
  %v9818 = vshrl.u32 %v9817, 7
  %v9819 = vsub.s32 %v9816, %v9818
  %v9820 = vrot.slane %v9798, %v9819
  %v9822 = vunpack.c.l.s4 1966171168
  %v9823 = vunpack.c.0.s8 %v9822
  %v9824 = vlaneseq
  %v9825 = vshrl.u32 %v9824, 7
  %v9826 = vsub.s32 %v9823, %v9825
  %v9827 = vrot.slane %v9799, %v9826
  %v9828 = vcombine.low %v9806, %v9813
  %v9829 = vcombine.low %v9820, %v9827
  %v9831 = vunpack.c.l.s4 1966171168
  %v9832 = vunpack.c.0.s8 %v9831
  %v9833 = vlaneseq
  %v9834 = vshrl.u32 %v9833, 7
  %v9835 = vsub.s32 %v9832, %v9834
  %v9836 = vrot.slane %v9828, %v9835
  %v9838 = vunpack.c.l.s4 1966171168
  %v9839 = vunpack.c.0.s8 %v9838
  %v9840 = vlaneseq
  %v9841 = vshrl.u32 %v9840, 7
  %v9842 = vsub.s32 %v9839, %v9841
  %v9843 = vrot.slane %v9829, %v9842
  %v9844 = vcombine.low %v9836, %v9843
  %v9845 = vcombine.low %v6732, %v6746
  %v9846 = vcombine.low %v6754, %v6756
  %v9847 = vcombine.low %v6739, %v6753
  %v9848 = vcombine.low %v6755, %v6757
  %v9850 = vunpack.c.l.s4 1966171168
  %v9851 = vunpack.c.0.s8 %v9850
  %v9852 = vlaneseq
  %v9853 = vshrl.u32 %v9852, 7
  %v9854 = vsub.s32 %v9851, %v9853
  %v9855 = vrot.slane %v9845, %v9854
  %v9857 = vunpack.c.l.s4 1966171168
  %v9858 = vunpack.c.0.s8 %v9857
  %v9859 = vlaneseq
  %v9860 = vshrl.u32 %v9859, 7
  %v9861 = vsub.s32 %v9858, %v9860
  %v9862 = vrot.slane %v9846, %v9861
  %v9864 = vunpack.c.l.s4 1966171168
  %v9865 = vunpack.c.0.s8 %v9864
  %v9866 = vlaneseq
  %v9867 = vshrl.u32 %v9866, 7
  %v9868 = vsub.s32 %v9865, %v9867
  %v9869 = vrot.slane %v9847, %v9868
  %v9871 = vunpack.c.l.s4 1966171168
  %v9872 = vunpack.c.0.s8 %v9871
  %v9873 = vlaneseq
  %v9874 = vshrl.u32 %v9873, 7
  %v9875 = vsub.s32 %v9872, %v9874
  %v9876 = vrot.slane %v9848, %v9875
  %v9877 = vcombine.low %v9855, %v9862
  %v9878 = vcombine.low %v9869, %v9876
  %v9880 = vunpack.c.l.s4 1966171168
  %v9881 = vunpack.c.0.s8 %v9880
  %v9882 = vlaneseq
  %v9883 = vshrl.u32 %v9882, 7
  %v9884 = vsub.s32 %v9881, %v9883
  %v9885 = vrot.slane %v9877, %v9884
  %v9887 = vunpack.c.l.s4 1966171168
  %v9888 = vunpack.c.0.s8 %v9887
  %v9889 = vlaneseq
  %v9890 = vshrl.u32 %v9889, 7
  %v9891 = vsub.s32 %v9888, %v9890
  %v9892 = vrot.slane %v9878, %v9891
  %v9893 = vcombine.low %v9885, %v9892
  %v9894 = vcombine.low %v6781, %v6795
  %v9895 = vcombine.low %v6803, %v6805
  %v9896 = vcombine.low %v6788, %v6802
  %v9897 = vcombine.low %v6804, %v6806
  %v9899 = vunpack.c.l.s4 1966171168
  %v9900 = vunpack.c.0.s8 %v9899
  %v9901 = vlaneseq
  %v9902 = vshrl.u32 %v9901, 7
  %v9903 = vsub.s32 %v9900, %v9902
  %v9904 = vrot.slane %v9894, %v9903
  %v9906 = vunpack.c.l.s4 1966171168
  %v9907 = vunpack.c.0.s8 %v9906
  %v9908 = vlaneseq
  %v9909 = vshrl.u32 %v9908, 7
  %v9910 = vsub.s32 %v9907, %v9909
  %v9911 = vrot.slane %v9895, %v9910
  %v9913 = vunpack.c.l.s4 1966171168
  %v9914 = vunpack.c.0.s8 %v9913
  %v9915 = vlaneseq
  %v9916 = vshrl.u32 %v9915, 7
  %v9917 = vsub.s32 %v9914, %v9916
  %v9918 = vrot.slane %v9896, %v9917
  %v9920 = vunpack.c.l.s4 1966171168
  %v9921 = vunpack.c.0.s8 %v9920
  %v9922 = vlaneseq
  %v9923 = vshrl.u32 %v9922, 7
  %v9924 = vsub.s32 %v9921, %v9923
  %v9925 = vrot.slane %v9897, %v9924
  %v9926 = vcombine.low %v9904, %v9911
  %v9927 = vcombine.low %v9918, %v9925
  %v9929 = vunpack.c.l.s4 1966171168
  %v9930 = vunpack.c.0.s8 %v9929
  %v9931 = vlaneseq
  %v9932 = vshrl.u32 %v9931, 7
  %v9933 = vsub.s32 %v9930, %v9932
  %v9934 = vrot.slane %v9926, %v9933
  %v9936 = vunpack.c.l.s4 1966171168
  %v9937 = vunpack.c.0.s8 %v9936
  %v9938 = vlaneseq
  %v9939 = vshrl.u32 %v9938, 7
  %v9940 = vsub.s32 %v9937, %v9939
  %v9941 = vrot.slane %v9927, %v9940
  %v9942 = vcombine.low %v9934, %v9941
  %v9943 = vcombine.low %v6830, %v6844
  %v9944 = vcombine.low %v6852, %v6854
  %v9945 = vcombine.low %v6837, %v6851
  %v9946 = vcombine.low %v6853, %v6855
  %v9948 = vunpack.c.l.s4 1966171168
  %v9949 = vunpack.c.0.s8 %v9948
  %v9950 = vlaneseq
  %v9951 = vshrl.u32 %v9950, 7
  %v9952 = vsub.s32 %v9949, %v9951
  %v9953 = vrot.slane %v9943, %v9952
  %v9955 = vunpack.c.l.s4 1966171168
  %v9956 = vunpack.c.0.s8 %v9955
  %v9957 = vlaneseq
  %v9958 = vshrl.u32 %v9957, 7
  %v9959 = vsub.s32 %v9956, %v9958
  %v9960 = vrot.slane %v9944, %v9959
  %v9962 = vunpack.c.l.s4 1966171168
  %v9963 = vunpack.c.0.s8 %v9962
  %v9964 = vlaneseq
  %v9965 = vshrl.u32 %v9964, 7
  %v9966 = vsub.s32 %v9963, %v9965
  %v9967 = vrot.slane %v9945, %v9966
  %v9969 = vunpack.c.l.s4 1966171168
  %v9970 = vunpack.c.0.s8 %v9969
  %v9971 = vlaneseq
  %v9972 = vshrl.u32 %v9971, 7
  %v9973 = vsub.s32 %v9970, %v9972
  %v9974 = vrot.slane %v9946, %v9973
  %v9975 = vcombine.low %v9953, %v9960
  %v9976 = vcombine.low %v9967, %v9974
  %v9978 = vunpack.c.l.s4 1966171168
  %v9979 = vunpack.c.0.s8 %v9978
  %v9980 = vlaneseq
  %v9981 = vshrl.u32 %v9980, 7
  %v9982 = vsub.s32 %v9979, %v9981
  %v9983 = vrot.slane %v9975, %v9982
  %v9985 = vunpack.c.l.s4 1966171168
  %v9986 = vunpack.c.0.s8 %v9985
  %v9987 = vlaneseq
  %v9988 = vshrl.u32 %v9987, 7
  %v9989 = vsub.s32 %v9986, %v9988
  %v9990 = vrot.slane %v9976, %v9989
  %v9991 = vcombine.low %v9983, %v9990
  %v9992 = vcombine.low %v6879, %v6893
  %v9993 = vcombine.low %v6901, %v6903
  %v9994 = vcombine.low %v6886, %v6900
  %v9995 = vcombine.low %v6902, %v6904
  %v9997 = vunpack.c.l.s4 1966171168
  %v9998 = vunpack.c.0.s8 %v9997
  %v9999 = vlaneseq
  %v10000 = vshrl.u32 %v9999, 7
  %v10001 = vsub.s32 %v9998, %v10000
  %v10002 = vrot.slane %v9992, %v10001
  %v10004 = vunpack.c.l.s4 1966171168
  %v10005 = vunpack.c.0.s8 %v10004
  %v10006 = vlaneseq
  %v10007 = vshrl.u32 %v10006, 7
  %v10008 = vsub.s32 %v10005, %v10007
  %v10009 = vrot.slane %v9993, %v10008
  %v10011 = vunpack.c.l.s4 1966171168
  %v10012 = vunpack.c.0.s8 %v10011
  %v10013 = vlaneseq
  %v10014 = vshrl.u32 %v10013, 7
  %v10015 = vsub.s32 %v10012, %v10014
  %v10016 = vrot.slane %v9994, %v10015
  %v10018 = vunpack.c.l.s4 1966171168
  %v10019 = vunpack.c.0.s8 %v10018
  %v10020 = vlaneseq
  %v10021 = vshrl.u32 %v10020, 7
  %v10022 = vsub.s32 %v10019, %v10021
  %v10023 = vrot.slane %v9995, %v10022
  %v10024 = vcombine.low %v10002, %v10009
  %v10025 = vcombine.low %v10016, %v10023
  %v10027 = vunpack.c.l.s4 1966171168
  %v10028 = vunpack.c.0.s8 %v10027
  %v10029 = vlaneseq
  %v10030 = vshrl.u32 %v10029, 7
  %v10031 = vsub.s32 %v10028, %v10030
  %v10032 = vrot.slane %v10024, %v10031
  %v10034 = vunpack.c.l.s4 1966171168
  %v10035 = vunpack.c.0.s8 %v10034
  %v10036 = vlaneseq
  %v10037 = vshrl.u32 %v10036, 7
  %v10038 = vsub.s32 %v10035, %v10037
  %v10039 = vrot.slane %v10025, %v10038
  %v10040 = vcombine.low %v10032, %v10039
  %v10041 = vcombine.low %v6928, %v6942
  %v10042 = vcombine.low %v6950, %v6952
  %v10043 = vcombine.low %v6935, %v6949
  %v10044 = vcombine.low %v6951, %v6953
  %v10046 = vunpack.c.l.s4 1966171168
  %v10047 = vunpack.c.0.s8 %v10046
  %v10048 = vlaneseq
  %v10049 = vshrl.u32 %v10048, 7
  %v10050 = vsub.s32 %v10047, %v10049
  %v10051 = vrot.slane %v10041, %v10050
  %v10053 = vunpack.c.l.s4 1966171168
  %v10054 = vunpack.c.0.s8 %v10053
  %v10055 = vlaneseq
  %v10056 = vshrl.u32 %v10055, 7
  %v10057 = vsub.s32 %v10054, %v10056
  %v10058 = vrot.slane %v10042, %v10057
  %v10060 = vunpack.c.l.s4 1966171168
  %v10061 = vunpack.c.0.s8 %v10060
  %v10062 = vlaneseq
  %v10063 = vshrl.u32 %v10062, 7
  %v10064 = vsub.s32 %v10061, %v10063
  %v10065 = vrot.slane %v10043, %v10064
  %v10067 = vunpack.c.l.s4 1966171168
  %v10068 = vunpack.c.0.s8 %v10067
  %v10069 = vlaneseq
  %v10070 = vshrl.u32 %v10069, 7
  %v10071 = vsub.s32 %v10068, %v10070
  %v10072 = vrot.slane %v10044, %v10071
  %v10073 = vcombine.low %v10051, %v10058
  %v10074 = vcombine.low %v10065, %v10072
  %v10076 = vunpack.c.l.s4 1966171168
  %v10077 = vunpack.c.0.s8 %v10076
  %v10078 = vlaneseq
  %v10079 = vshrl.u32 %v10078, 7
  %v10080 = vsub.s32 %v10077, %v10079
  %v10081 = vrot.slane %v10073, %v10080
  %v10083 = vunpack.c.l.s4 1966171168
  %v10084 = vunpack.c.0.s8 %v10083
  %v10085 = vlaneseq
  %v10086 = vshrl.u32 %v10085, 7
  %v10087 = vsub.s32 %v10084, %v10086
  %v10088 = vrot.slane %v10074, %v10087
  %v10089 = vcombine.low %v10081, %v10088
  %v10090 = vcombine.low %v6977, %v6991
  %v10091 = vcombine.low %v6999, %v7001
  %v10092 = vcombine.low %v6984, %v6998
  %v10093 = vcombine.low %v7000, %v7002
  %v10095 = vunpack.c.l.s4 1966171168
  %v10096 = vunpack.c.0.s8 %v10095
  %v10097 = vlaneseq
  %v10098 = vshrl.u32 %v10097, 7
  %v10099 = vsub.s32 %v10096, %v10098
  %v10100 = vrot.slane %v10090, %v10099
  %v10102 = vunpack.c.l.s4 1966171168
  %v10103 = vunpack.c.0.s8 %v10102
  %v10104 = vlaneseq
  %v10105 = vshrl.u32 %v10104, 7
  %v10106 = vsub.s32 %v10103, %v10105
  %v10107 = vrot.slane %v10091, %v10106
  %v10109 = vunpack.c.l.s4 1966171168
  %v10110 = vunpack.c.0.s8 %v10109
  %v10111 = vlaneseq
  %v10112 = vshrl.u32 %v10111, 7
  %v10113 = vsub.s32 %v10110, %v10112
  %v10114 = vrot.slane %v10092, %v10113
  %v10116 = vunpack.c.l.s4 1966171168
  %v10117 = vunpack.c.0.s8 %v10116
  %v10118 = vlaneseq
  %v10119 = vshrl.u32 %v10118, 7
  %v10120 = vsub.s32 %v10117, %v10119
  %v10121 = vrot.slane %v10093, %v10120
  %v10122 = vcombine.low %v10100, %v10107
  %v10123 = vcombine.low %v10114, %v10121
  %v10125 = vunpack.c.l.s4 1966171168
  %v10126 = vunpack.c.0.s8 %v10125
  %v10127 = vlaneseq
  %v10128 = vshrl.u32 %v10127, 7
  %v10129 = vsub.s32 %v10126, %v10128
  %v10130 = vrot.slane %v10122, %v10129
  %v10132 = vunpack.c.l.s4 1966171168
  %v10133 = vunpack.c.0.s8 %v10132
  %v10134 = vlaneseq
  %v10135 = vshrl.u32 %v10134, 7
  %v10136 = vsub.s32 %v10133, %v10135
  %v10137 = vrot.slane %v10123, %v10136
  %v10138 = vcombine.low %v10130, %v10137
  %v10139 = vcombine.low %v7026, %v7040
  %v10140 = vcombine.low %v7048, %v7050
  %v10141 = vcombine.low %v7033, %v7047
  %v10142 = vcombine.low %v7049, %v7051
  %v10144 = vunpack.c.l.s4 1966171168
  %v10145 = vunpack.c.0.s8 %v10144
  %v10146 = vlaneseq
  %v10147 = vshrl.u32 %v10146, 7
  %v10148 = vsub.s32 %v10145, %v10147
  %v10149 = vrot.slane %v10139, %v10148
  %v10151 = vunpack.c.l.s4 1966171168
  %v10152 = vunpack.c.0.s8 %v10151
  %v10153 = vlaneseq
  %v10154 = vshrl.u32 %v10153, 7
  %v10155 = vsub.s32 %v10152, %v10154
  %v10156 = vrot.slane %v10140, %v10155
  %v10158 = vunpack.c.l.s4 1966171168
  %v10159 = vunpack.c.0.s8 %v10158
  %v10160 = vlaneseq
  %v10161 = vshrl.u32 %v10160, 7
  %v10162 = vsub.s32 %v10159, %v10161
  %v10163 = vrot.slane %v10141, %v10162
  %v10165 = vunpack.c.l.s4 1966171168
  %v10166 = vunpack.c.0.s8 %v10165
  %v10167 = vlaneseq
  %v10168 = vshrl.u32 %v10167, 7
  %v10169 = vsub.s32 %v10166, %v10168
  %v10170 = vrot.slane %v10142, %v10169
  %v10171 = vcombine.low %v10149, %v10156
  %v10172 = vcombine.low %v10163, %v10170
  %v10174 = vunpack.c.l.s4 1966171168
  %v10175 = vunpack.c.0.s8 %v10174
  %v10176 = vlaneseq
  %v10177 = vshrl.u32 %v10176, 7
  %v10178 = vsub.s32 %v10175, %v10177
  %v10179 = vrot.slane %v10171, %v10178
  %v10181 = vunpack.c.l.s4 1966171168
  %v10182 = vunpack.c.0.s8 %v10181
  %v10183 = vlaneseq
  %v10184 = vshrl.u32 %v10183, 7
  %v10185 = vsub.s32 %v10182, %v10184
  %v10186 = vrot.slane %v10172, %v10185
  %v10187 = vcombine.low %v10179, %v10186
  %v10188 = vcombine.low %v7075, %v7089
  %v10189 = vcombine.low %v7097, %v7099
  %v10190 = vcombine.low %v7082, %v7096
  %v10191 = vcombine.low %v7098, %v7100
  %v10193 = vunpack.c.l.s4 1966171168
  %v10194 = vunpack.c.0.s8 %v10193
  %v10195 = vlaneseq
  %v10196 = vshrl.u32 %v10195, 7
  %v10197 = vsub.s32 %v10194, %v10196
  %v10198 = vrot.slane %v10188, %v10197
  %v10200 = vunpack.c.l.s4 1966171168
  %v10201 = vunpack.c.0.s8 %v10200
  %v10202 = vlaneseq
  %v10203 = vshrl.u32 %v10202, 7
  %v10204 = vsub.s32 %v10201, %v10203
  %v10205 = vrot.slane %v10189, %v10204
  %v10207 = vunpack.c.l.s4 1966171168
  %v10208 = vunpack.c.0.s8 %v10207
  %v10209 = vlaneseq
  %v10210 = vshrl.u32 %v10209, 7
  %v10211 = vsub.s32 %v10208, %v10210
  %v10212 = vrot.slane %v10190, %v10211
  %v10214 = vunpack.c.l.s4 1966171168
  %v10215 = vunpack.c.0.s8 %v10214
  %v10216 = vlaneseq
  %v10217 = vshrl.u32 %v10216, 7
  %v10218 = vsub.s32 %v10215, %v10217
  %v10219 = vrot.slane %v10191, %v10218
  %v10220 = vcombine.low %v10198, %v10205
  %v10221 = vcombine.low %v10212, %v10219
  %v10223 = vunpack.c.l.s4 1966171168
  %v10224 = vunpack.c.0.s8 %v10223
  %v10225 = vlaneseq
  %v10226 = vshrl.u32 %v10225, 7
  %v10227 = vsub.s32 %v10224, %v10226
  %v10228 = vrot.slane %v10220, %v10227
  %v10230 = vunpack.c.l.s4 1966171168
  %v10231 = vunpack.c.0.s8 %v10230
  %v10232 = vlaneseq
  %v10233 = vshrl.u32 %v10232, 7
  %v10234 = vsub.s32 %v10231, %v10233
  %v10235 = vrot.slane %v10221, %v10234
  %v10236 = vcombine.low %v10228, %v10235
  %v10237 = vcombine.low %v7124, %v7138
  %v10238 = vcombine.low %v7146, %v7148
  %v10239 = vcombine.low %v7131, %v7145
  %v10240 = vcombine.low %v7147, %v7149
  %v10242 = vunpack.c.l.s4 1966171168
  %v10243 = vunpack.c.0.s8 %v10242
  %v10244 = vlaneseq
  %v10245 = vshrl.u32 %v10244, 7
  %v10246 = vsub.s32 %v10243, %v10245
  %v10247 = vrot.slane %v10237, %v10246
  %v10249 = vunpack.c.l.s4 1966171168
  %v10250 = vunpack.c.0.s8 %v10249
  %v10251 = vlaneseq
  %v10252 = vshrl.u32 %v10251, 7
  %v10253 = vsub.s32 %v10250, %v10252
  %v10254 = vrot.slane %v10238, %v10253
  %v10256 = vunpack.c.l.s4 1966171168
  %v10257 = vunpack.c.0.s8 %v10256
  %v10258 = vlaneseq
  %v10259 = vshrl.u32 %v10258, 7
  %v10260 = vsub.s32 %v10257, %v10259
  %v10261 = vrot.slane %v10239, %v10260
  %v10263 = vunpack.c.l.s4 1966171168
  %v10264 = vunpack.c.0.s8 %v10263
  %v10265 = vlaneseq
  %v10266 = vshrl.u32 %v10265, 7
  %v10267 = vsub.s32 %v10264, %v10266
  %v10268 = vrot.slane %v10240, %v10267
  %v10269 = vcombine.low %v10247, %v10254
  %v10270 = vcombine.low %v10261, %v10268
  %v10272 = vunpack.c.l.s4 1966171168
  %v10273 = vunpack.c.0.s8 %v10272
  %v10274 = vlaneseq
  %v10275 = vshrl.u32 %v10274, 7
  %v10276 = vsub.s32 %v10273, %v10275
  %v10277 = vrot.slane %v10269, %v10276
  %v10279 = vunpack.c.l.s4 1966171168
  %v10280 = vunpack.c.0.s8 %v10279
  %v10281 = vlaneseq
  %v10282 = vshrl.u32 %v10281, 7
  %v10283 = vsub.s32 %v10280, %v10282
  %v10284 = vrot.slane %v10270, %v10283
  %v10285 = vcombine.low %v10277, %v10284
  %v10286 = vcombine.low %v7173, %v7187
  %v10287 = vcombine.low %v7195, %v7197
  %v10288 = vcombine.low %v7180, %v7194
  %v10289 = vcombine.low %v7196, %v7198
  %v10291 = vunpack.c.l.s4 1966171168
  %v10292 = vunpack.c.0.s8 %v10291
  %v10293 = vlaneseq
  %v10294 = vshrl.u32 %v10293, 7
  %v10295 = vsub.s32 %v10292, %v10294
  %v10296 = vrot.slane %v10286, %v10295
  %v10298 = vunpack.c.l.s4 1966171168
  %v10299 = vunpack.c.0.s8 %v10298
  %v10300 = vlaneseq
  %v10301 = vshrl.u32 %v10300, 7
  %v10302 = vsub.s32 %v10299, %v10301
  %v10303 = vrot.slane %v10287, %v10302
  %v10305 = vunpack.c.l.s4 1966171168
  %v10306 = vunpack.c.0.s8 %v10305
  %v10307 = vlaneseq
  %v10308 = vshrl.u32 %v10307, 7
  %v10309 = vsub.s32 %v10306, %v10308
  %v10310 = vrot.slane %v10288, %v10309
  %v10312 = vunpack.c.l.s4 1966171168
  %v10313 = vunpack.c.0.s8 %v10312
  %v10314 = vlaneseq
  %v10315 = vshrl.u32 %v10314, 7
  %v10316 = vsub.s32 %v10313, %v10315
  %v10317 = vrot.slane %v10289, %v10316
  %v10318 = vcombine.low %v10296, %v10303
  %v10319 = vcombine.low %v10310, %v10317
  %v10321 = vunpack.c.l.s4 1966171168
  %v10322 = vunpack.c.0.s8 %v10321
  %v10323 = vlaneseq
  %v10324 = vshrl.u32 %v10323, 7
  %v10325 = vsub.s32 %v10322, %v10324
  %v10326 = vrot.slane %v10318, %v10325
  %v10328 = vunpack.c.l.s4 1966171168
  %v10329 = vunpack.c.0.s8 %v10328
  %v10330 = vlaneseq
  %v10331 = vshrl.u32 %v10330, 7
  %v10332 = vsub.s32 %v10329, %v10331
  %v10333 = vrot.slane %v10319, %v10332
  %v10334 = vcombine.low %v10326, %v10333
  %v10335 = vcombine.low %v7222, %v7236
  %v10336 = vcombine.low %v7244, %v7246
  %v10337 = vcombine.low %v7229, %v7243
  %v10338 = vcombine.low %v7245, %v7247
  %v10340 = vunpack.c.l.s4 1966171168
  %v10341 = vunpack.c.0.s8 %v10340
  %v10342 = vlaneseq
  %v10343 = vshrl.u32 %v10342, 7
  %v10344 = vsub.s32 %v10341, %v10343
  %v10345 = vrot.slane %v10335, %v10344
  %v10347 = vunpack.c.l.s4 1966171168
  %v10348 = vunpack.c.0.s8 %v10347
  %v10349 = vlaneseq
  %v10350 = vshrl.u32 %v10349, 7
  %v10351 = vsub.s32 %v10348, %v10350
  %v10352 = vrot.slane %v10336, %v10351
  %v10354 = vunpack.c.l.s4 1966171168
  %v10355 = vunpack.c.0.s8 %v10354
  %v10356 = vlaneseq
  %v10357 = vshrl.u32 %v10356, 7
  %v10358 = vsub.s32 %v10355, %v10357
  %v10359 = vrot.slane %v10337, %v10358
  %v10361 = vunpack.c.l.s4 1966171168
  %v10362 = vunpack.c.0.s8 %v10361
  %v10363 = vlaneseq
  %v10364 = vshrl.u32 %v10363, 7
  %v10365 = vsub.s32 %v10362, %v10364
  %v10366 = vrot.slane %v10338, %v10365
  %v10367 = vcombine.low %v10345, %v10352
  %v10368 = vcombine.low %v10359, %v10366
  %v10370 = vunpack.c.l.s4 1966171168
  %v10371 = vunpack.c.0.s8 %v10370
  %v10372 = vlaneseq
  %v10373 = vshrl.u32 %v10372, 7
  %v10374 = vsub.s32 %v10371, %v10373
  %v10375 = vrot.slane %v10367, %v10374
  %v10377 = vunpack.c.l.s4 1966171168
  %v10378 = vunpack.c.0.s8 %v10377
  %v10379 = vlaneseq
  %v10380 = vshrl.u32 %v10379, 7
  %v10381 = vsub.s32 %v10378, %v10380
  %v10382 = vrot.slane %v10368, %v10381
  %v10383 = vcombine.low %v10375, %v10382
  %v10384 = vcombine.low %v7271, %v7285
  %v10385 = vcombine.low %v7293, %v7295
  %v10386 = vcombine.low %v7278, %v7292
  %v10387 = vcombine.low %v7294, %v7296
  %v10389 = vunpack.c.l.s4 1966171168
  %v10390 = vunpack.c.0.s8 %v10389
  %v10391 = vlaneseq
  %v10392 = vshrl.u32 %v10391, 7
  %v10393 = vsub.s32 %v10390, %v10392
  %v10394 = vrot.slane %v10384, %v10393
  %v10396 = vunpack.c.l.s4 1966171168
  %v10397 = vunpack.c.0.s8 %v10396
  %v10398 = vlaneseq
  %v10399 = vshrl.u32 %v10398, 7
  %v10400 = vsub.s32 %v10397, %v10399
  %v10401 = vrot.slane %v10385, %v10400
  %v10403 = vunpack.c.l.s4 1966171168
  %v10404 = vunpack.c.0.s8 %v10403
  %v10405 = vlaneseq
  %v10406 = vshrl.u32 %v10405, 7
  %v10407 = vsub.s32 %v10404, %v10406
  %v10408 = vrot.slane %v10386, %v10407
  %v10410 = vunpack.c.l.s4 1966171168
  %v10411 = vunpack.c.0.s8 %v10410
  %v10412 = vlaneseq
  %v10413 = vshrl.u32 %v10412, 7
  %v10414 = vsub.s32 %v10411, %v10413
  %v10415 = vrot.slane %v10387, %v10414
  %v10416 = vcombine.low %v10394, %v10401
  %v10417 = vcombine.low %v10408, %v10415
  %v10419 = vunpack.c.l.s4 1966171168
  %v10420 = vunpack.c.0.s8 %v10419
  %v10421 = vlaneseq
  %v10422 = vshrl.u32 %v10421, 7
  %v10423 = vsub.s32 %v10420, %v10422
  %v10424 = vrot.slane %v10416, %v10423
  %v10426 = vunpack.c.l.s4 1966171168
  %v10427 = vunpack.c.0.s8 %v10426
  %v10428 = vlaneseq
  %v10429 = vshrl.u32 %v10428, 7
  %v10430 = vsub.s32 %v10427, %v10429
  %v10431 = vrot.slane %v10417, %v10430
  %v10432 = vcombine.low %v10424, %v10431
  %v10433 = vcombine.low %v7320, %v7334
  %v10434 = vcombine.low %v7342, %v7344
  %v10435 = vcombine.low %v7327, %v7341
  %v10436 = vcombine.low %v7343, %v7345
  %v10438 = vunpack.c.l.s4 1966171168
  %v10439 = vunpack.c.0.s8 %v10438
  %v10440 = vlaneseq
  %v10441 = vshrl.u32 %v10440, 7
  %v10442 = vsub.s32 %v10439, %v10441
  %v10443 = vrot.slane %v10433, %v10442
  %v10445 = vunpack.c.l.s4 1966171168
  %v10446 = vunpack.c.0.s8 %v10445
  %v10447 = vlaneseq
  %v10448 = vshrl.u32 %v10447, 7
  %v10449 = vsub.s32 %v10446, %v10448
  %v10450 = vrot.slane %v10434, %v10449
  %v10452 = vunpack.c.l.s4 1966171168
  %v10453 = vunpack.c.0.s8 %v10452
  %v10454 = vlaneseq
  %v10455 = vshrl.u32 %v10454, 7
  %v10456 = vsub.s32 %v10453, %v10455
  %v10457 = vrot.slane %v10435, %v10456
  %v10459 = vunpack.c.l.s4 1966171168
  %v10460 = vunpack.c.0.s8 %v10459
  %v10461 = vlaneseq
  %v10462 = vshrl.u32 %v10461, 7
  %v10463 = vsub.s32 %v10460, %v10462
  %v10464 = vrot.slane %v10436, %v10463
  %v10465 = vcombine.low %v10443, %v10450
  %v10466 = vcombine.low %v10457, %v10464
  %v10468 = vunpack.c.l.s4 1966171168
  %v10469 = vunpack.c.0.s8 %v10468
  %v10470 = vlaneseq
  %v10471 = vshrl.u32 %v10470, 7
  %v10472 = vsub.s32 %v10469, %v10471
  %v10473 = vrot.slane %v10465, %v10472
  %v10475 = vunpack.c.l.s4 1966171168
  %v10476 = vunpack.c.0.s8 %v10475
  %v10477 = vlaneseq
  %v10478 = vshrl.u32 %v10477, 7
  %v10479 = vsub.s32 %v10476, %v10478
  %v10480 = vrot.slane %v10466, %v10479
  %v10481 = vcombine.low %v10473, %v10480
  %v10482 = vcombine.low %v7369, %v7383
  %v10483 = vcombine.low %v7391, %v7393
  %v10484 = vcombine.low %v7376, %v7390
  %v10485 = vcombine.low %v7392, %v7394
  %v10487 = vunpack.c.l.s4 1966171168
  %v10488 = vunpack.c.0.s8 %v10487
  %v10489 = vlaneseq
  %v10490 = vshrl.u32 %v10489, 7
  %v10491 = vsub.s32 %v10488, %v10490
  %v10492 = vrot.slane %v10482, %v10491
  %v10494 = vunpack.c.l.s4 1966171168
  %v10495 = vunpack.c.0.s8 %v10494
  %v10496 = vlaneseq
  %v10497 = vshrl.u32 %v10496, 7
  %v10498 = vsub.s32 %v10495, %v10497
  %v10499 = vrot.slane %v10483, %v10498
  %v10501 = vunpack.c.l.s4 1966171168
  %v10502 = vunpack.c.0.s8 %v10501
  %v10503 = vlaneseq
  %v10504 = vshrl.u32 %v10503, 7
  %v10505 = vsub.s32 %v10502, %v10504
  %v10506 = vrot.slane %v10484, %v10505
  %v10508 = vunpack.c.l.s4 1966171168
  %v10509 = vunpack.c.0.s8 %v10508
  %v10510 = vlaneseq
  %v10511 = vshrl.u32 %v10510, 7
  %v10512 = vsub.s32 %v10509, %v10511
  %v10513 = vrot.slane %v10485, %v10512
  %v10514 = vcombine.low %v10492, %v10499
  %v10515 = vcombine.low %v10506, %v10513
  %v10517 = vunpack.c.l.s4 1966171168
  %v10518 = vunpack.c.0.s8 %v10517
  %v10519 = vlaneseq
  %v10520 = vshrl.u32 %v10519, 7
  %v10521 = vsub.s32 %v10518, %v10520
  %v10522 = vrot.slane %v10514, %v10521
  %v10524 = vunpack.c.l.s4 1966171168
  %v10525 = vunpack.c.0.s8 %v10524
  %v10526 = vlaneseq
  %v10527 = vshrl.u32 %v10526, 7
  %v10528 = vsub.s32 %v10525, %v10527
  %v10529 = vrot.slane %v10515, %v10528
  %v10530 = vcombine.low %v10522, %v10529
  %v10531 = vcombine.low %v7418, %v7432
  %v10532 = vcombine.low %v7440, %v7442
  %v10533 = vcombine.low %v7425, %v7439
  %v10534 = vcombine.low %v7441, %v7443
  %v10536 = vunpack.c.l.s4 1966171168
  %v10537 = vunpack.c.0.s8 %v10536
  %v10538 = vlaneseq
  %v10539 = vshrl.u32 %v10538, 7
  %v10540 = vsub.s32 %v10537, %v10539
  %v10541 = vrot.slane %v10531, %v10540
  %v10543 = vunpack.c.l.s4 1966171168
  %v10544 = vunpack.c.0.s8 %v10543
  %v10545 = vlaneseq
  %v10546 = vshrl.u32 %v10545, 7
  %v10547 = vsub.s32 %v10544, %v10546
  %v10548 = vrot.slane %v10532, %v10547
  %v10550 = vunpack.c.l.s4 1966171168
  %v10551 = vunpack.c.0.s8 %v10550
  %v10552 = vlaneseq
  %v10553 = vshrl.u32 %v10552, 7
  %v10554 = vsub.s32 %v10551, %v10553
  %v10555 = vrot.slane %v10533, %v10554
  %v10557 = vunpack.c.l.s4 1966171168
  %v10558 = vunpack.c.0.s8 %v10557
  %v10559 = vlaneseq
  %v10560 = vshrl.u32 %v10559, 7
  %v10561 = vsub.s32 %v10558, %v10560
  %v10562 = vrot.slane %v10534, %v10561
  %v10563 = vcombine.low %v10541, %v10548
  %v10564 = vcombine.low %v10555, %v10562
  %v10566 = vunpack.c.l.s4 1966171168
  %v10567 = vunpack.c.0.s8 %v10566
  %v10568 = vlaneseq
  %v10569 = vshrl.u32 %v10568, 7
  %v10570 = vsub.s32 %v10567, %v10569
  %v10571 = vrot.slane %v10563, %v10570
  %v10573 = vunpack.c.l.s4 1966171168
  %v10574 = vunpack.c.0.s8 %v10573
  %v10575 = vlaneseq
  %v10576 = vshrl.u32 %v10575, 7
  %v10577 = vsub.s32 %v10574, %v10576
  %v10578 = vrot.slane %v10564, %v10577
  %v10579 = vcombine.low %v10571, %v10578
  %v10580 = vcombine.low %v7467, %v7481
  %v10581 = vcombine.low %v7489, %v7491
  %v10582 = vcombine.low %v7474, %v7488
  %v10583 = vcombine.low %v7490, %v7492
  %v10585 = vunpack.c.l.s4 1966171168
  %v10586 = vunpack.c.0.s8 %v10585
  %v10587 = vlaneseq
  %v10588 = vshrl.u32 %v10587, 7
  %v10589 = vsub.s32 %v10586, %v10588
  %v10590 = vrot.slane %v10580, %v10589
  %v10592 = vunpack.c.l.s4 1966171168
  %v10593 = vunpack.c.0.s8 %v10592
  %v10594 = vlaneseq
  %v10595 = vshrl.u32 %v10594, 7
  %v10596 = vsub.s32 %v10593, %v10595
  %v10597 = vrot.slane %v10581, %v10596
  %v10599 = vunpack.c.l.s4 1966171168
  %v10600 = vunpack.c.0.s8 %v10599
  %v10601 = vlaneseq
  %v10602 = vshrl.u32 %v10601, 7
  %v10603 = vsub.s32 %v10600, %v10602
  %v10604 = vrot.slane %v10582, %v10603
  %v10606 = vunpack.c.l.s4 1966171168
  %v10607 = vunpack.c.0.s8 %v10606
  %v10608 = vlaneseq
  %v10609 = vshrl.u32 %v10608, 7
  %v10610 = vsub.s32 %v10607, %v10609
  %v10611 = vrot.slane %v10583, %v10610
  %v10612 = vcombine.low %v10590, %v10597
  %v10613 = vcombine.low %v10604, %v10611
  %v10615 = vunpack.c.l.s4 1966171168
  %v10616 = vunpack.c.0.s8 %v10615
  %v10617 = vlaneseq
  %v10618 = vshrl.u32 %v10617, 7
  %v10619 = vsub.s32 %v10616, %v10618
  %v10620 = vrot.slane %v10612, %v10619
  %v10622 = vunpack.c.l.s4 1966171168
  %v10623 = vunpack.c.0.s8 %v10622
  %v10624 = vlaneseq
  %v10625 = vshrl.u32 %v10624, 7
  %v10626 = vsub.s32 %v10623, %v10625
  %v10627 = vrot.slane %v10613, %v10626
  %v10628 = vcombine.low %v10620, %v10627
  %v10629 = vcombine.low %v7516, %v7530
  %v10630 = vcombine.low %v7538, %v7540
  %v10631 = vcombine.low %v7523, %v7537
  %v10632 = vcombine.low %v7539, %v7541
  %v10634 = vunpack.c.l.s4 1966171168
  %v10635 = vunpack.c.0.s8 %v10634
  %v10636 = vlaneseq
  %v10637 = vshrl.u32 %v10636, 7
  %v10638 = vsub.s32 %v10635, %v10637
  %v10639 = vrot.slane %v10629, %v10638
  %v10641 = vunpack.c.l.s4 1966171168
  %v10642 = vunpack.c.0.s8 %v10641
  %v10643 = vlaneseq
  %v10644 = vshrl.u32 %v10643, 7
  %v10645 = vsub.s32 %v10642, %v10644
  %v10646 = vrot.slane %v10630, %v10645
  %v10648 = vunpack.c.l.s4 1966171168
  %v10649 = vunpack.c.0.s8 %v10648
  %v10650 = vlaneseq
  %v10651 = vshrl.u32 %v10650, 7
  %v10652 = vsub.s32 %v10649, %v10651
  %v10653 = vrot.slane %v10631, %v10652
  %v10655 = vunpack.c.l.s4 1966171168
  %v10656 = vunpack.c.0.s8 %v10655
  %v10657 = vlaneseq
  %v10658 = vshrl.u32 %v10657, 7
  %v10659 = vsub.s32 %v10656, %v10658
  %v10660 = vrot.slane %v10632, %v10659
  %v10661 = vcombine.low %v10639, %v10646
  %v10662 = vcombine.low %v10653, %v10660
  %v10664 = vunpack.c.l.s4 1966171168
  %v10665 = vunpack.c.0.s8 %v10664
  %v10666 = vlaneseq
  %v10667 = vshrl.u32 %v10666, 7
  %v10668 = vsub.s32 %v10665, %v10667
  %v10669 = vrot.slane %v10661, %v10668
  %v10671 = vunpack.c.l.s4 1966171168
  %v10672 = vunpack.c.0.s8 %v10671
  %v10673 = vlaneseq
  %v10674 = vshrl.u32 %v10673, 7
  %v10675 = vsub.s32 %v10672, %v10674
  %v10676 = vrot.slane %v10662, %v10675
  %v10677 = vcombine.low %v10669, %v10676
  %v10678 = vcombine.low %v7565, %v7579
  %v10679 = vcombine.low %v7587, %v7589
  %v10680 = vcombine.low %v7572, %v7586
  %v10681 = vcombine.low %v7588, %v7590
  %v10683 = vunpack.c.l.s4 1966171168
  %v10684 = vunpack.c.0.s8 %v10683
  %v10685 = vlaneseq
  %v10686 = vshrl.u32 %v10685, 7
  %v10687 = vsub.s32 %v10684, %v10686
  %v10688 = vrot.slane %v10678, %v10687
  %v10690 = vunpack.c.l.s4 1966171168
  %v10691 = vunpack.c.0.s8 %v10690
  %v10692 = vlaneseq
  %v10693 = vshrl.u32 %v10692, 7
  %v10694 = vsub.s32 %v10691, %v10693
  %v10695 = vrot.slane %v10679, %v10694
  %v10697 = vunpack.c.l.s4 1966171168
  %v10698 = vunpack.c.0.s8 %v10697
  %v10699 = vlaneseq
  %v10700 = vshrl.u32 %v10699, 7
  %v10701 = vsub.s32 %v10698, %v10700
  %v10702 = vrot.slane %v10680, %v10701
  %v10704 = vunpack.c.l.s4 1966171168
  %v10705 = vunpack.c.0.s8 %v10704
  %v10706 = vlaneseq
  %v10707 = vshrl.u32 %v10706, 7
  %v10708 = vsub.s32 %v10705, %v10707
  %v10709 = vrot.slane %v10681, %v10708
  %v10710 = vcombine.low %v10688, %v10695
  %v10711 = vcombine.low %v10702, %v10709
  %v10713 = vunpack.c.l.s4 1966171168
  %v10714 = vunpack.c.0.s8 %v10713
  %v10715 = vlaneseq
  %v10716 = vshrl.u32 %v10715, 7
  %v10717 = vsub.s32 %v10714, %v10716
  %v10718 = vrot.slane %v10710, %v10717
  %v10720 = vunpack.c.l.s4 1966171168
  %v10721 = vunpack.c.0.s8 %v10720
  %v10722 = vlaneseq
  %v10723 = vshrl.u32 %v10722, 7
  %v10724 = vsub.s32 %v10721, %v10723
  %v10725 = vrot.slane %v10711, %v10724
  %v10726 = vcombine.low %v10718, %v10725
  %v10727 = vcombine.low %v7614, %v7628
  %v10728 = vcombine.low %v7636, %v7638
  %v10729 = vcombine.low %v7621, %v7635
  %v10730 = vcombine.low %v7637, %v7639
  %v10732 = vunpack.c.l.s4 1966171168
  %v10733 = vunpack.c.0.s8 %v10732
  %v10734 = vlaneseq
  %v10735 = vshrl.u32 %v10734, 7
  %v10736 = vsub.s32 %v10733, %v10735
  %v10737 = vrot.slane %v10727, %v10736
  %v10739 = vunpack.c.l.s4 1966171168
  %v10740 = vunpack.c.0.s8 %v10739
  %v10741 = vlaneseq
  %v10742 = vshrl.u32 %v10741, 7
  %v10743 = vsub.s32 %v10740, %v10742
  %v10744 = vrot.slane %v10728, %v10743
  %v10746 = vunpack.c.l.s4 1966171168
  %v10747 = vunpack.c.0.s8 %v10746
  %v10748 = vlaneseq
  %v10749 = vshrl.u32 %v10748, 7
  %v10750 = vsub.s32 %v10747, %v10749
  %v10751 = vrot.slane %v10729, %v10750
  %v10753 = vunpack.c.l.s4 1966171168
  %v10754 = vunpack.c.0.s8 %v10753
  %v10755 = vlaneseq
  %v10756 = vshrl.u32 %v10755, 7
  %v10757 = vsub.s32 %v10754, %v10756
  %v10758 = vrot.slane %v10730, %v10757
  %v10759 = vcombine.low %v10737, %v10744
  %v10760 = vcombine.low %v10751, %v10758
  %v10762 = vunpack.c.l.s4 1966171168
  %v10763 = vunpack.c.0.s8 %v10762
  %v10764 = vlaneseq
  %v10765 = vshrl.u32 %v10764, 7
  %v10766 = vsub.s32 %v10763, %v10765
  %v10767 = vrot.slane %v10759, %v10766
  %v10769 = vunpack.c.l.s4 1966171168
  %v10770 = vunpack.c.0.s8 %v10769
  %v10771 = vlaneseq
  %v10772 = vshrl.u32 %v10771, 7
  %v10773 = vsub.s32 %v10770, %v10772
  %v10774 = vrot.slane %v10760, %v10773
  %v10775 = vcombine.low %v10767, %v10774
  %v10776 = vcombine.low %v7663, %v7677
  %v10777 = vcombine.low %v7685, %v7687
  %v10778 = vcombine.low %v7670, %v7684
  %v10779 = vcombine.low %v7686, %v7688
  %v10781 = vunpack.c.l.s4 1966171168
  %v10782 = vunpack.c.0.s8 %v10781
  %v10783 = vlaneseq
  %v10784 = vshrl.u32 %v10783, 7
  %v10785 = vsub.s32 %v10782, %v10784
  %v10786 = vrot.slane %v10776, %v10785
  %v10788 = vunpack.c.l.s4 1966171168
  %v10789 = vunpack.c.0.s8 %v10788
  %v10790 = vlaneseq
  %v10791 = vshrl.u32 %v10790, 7
  %v10792 = vsub.s32 %v10789, %v10791
  %v10793 = vrot.slane %v10777, %v10792
  %v10795 = vunpack.c.l.s4 1966171168
  %v10796 = vunpack.c.0.s8 %v10795
  %v10797 = vlaneseq
  %v10798 = vshrl.u32 %v10797, 7
  %v10799 = vsub.s32 %v10796, %v10798
  %v10800 = vrot.slane %v10778, %v10799
  %v10802 = vunpack.c.l.s4 1966171168
  %v10803 = vunpack.c.0.s8 %v10802
  %v10804 = vlaneseq
  %v10805 = vshrl.u32 %v10804, 7
  %v10806 = vsub.s32 %v10803, %v10805
  %v10807 = vrot.slane %v10779, %v10806
  %v10808 = vcombine.low %v10786, %v10793
  %v10809 = vcombine.low %v10800, %v10807
  %v10811 = vunpack.c.l.s4 1966171168
  %v10812 = vunpack.c.0.s8 %v10811
  %v10813 = vlaneseq
  %v10814 = vshrl.u32 %v10813, 7
  %v10815 = vsub.s32 %v10812, %v10814
  %v10816 = vrot.slane %v10808, %v10815
  %v10818 = vunpack.c.l.s4 1966171168
  %v10819 = vunpack.c.0.s8 %v10818
  %v10820 = vlaneseq
  %v10821 = vshrl.u32 %v10820, 7
  %v10822 = vsub.s32 %v10819, %v10821
  %v10823 = vrot.slane %v10809, %v10822
  %v10824 = vcombine.low %v10816, %v10823
  %v10825 = vcombine.low %v7712, %v7726
  %v10826 = vcombine.low %v7734, %v7736
  %v10827 = vcombine.low %v7719, %v7733
  %v10828 = vcombine.low %v7735, %v7737
  %v10830 = vunpack.c.l.s4 1966171168
  %v10831 = vunpack.c.0.s8 %v10830
  %v10832 = vlaneseq
  %v10833 = vshrl.u32 %v10832, 7
  %v10834 = vsub.s32 %v10831, %v10833
  %v10835 = vrot.slane %v10825, %v10834
  %v10837 = vunpack.c.l.s4 1966171168
  %v10838 = vunpack.c.0.s8 %v10837
  %v10839 = vlaneseq
  %v10840 = vshrl.u32 %v10839, 7
  %v10841 = vsub.s32 %v10838, %v10840
  %v10842 = vrot.slane %v10826, %v10841
  %v10844 = vunpack.c.l.s4 1966171168
  %v10845 = vunpack.c.0.s8 %v10844
  %v10846 = vlaneseq
  %v10847 = vshrl.u32 %v10846, 7
  %v10848 = vsub.s32 %v10845, %v10847
  %v10849 = vrot.slane %v10827, %v10848
  %v10851 = vunpack.c.l.s4 1966171168
  %v10852 = vunpack.c.0.s8 %v10851
  %v10853 = vlaneseq
  %v10854 = vshrl.u32 %v10853, 7
  %v10855 = vsub.s32 %v10852, %v10854
  %v10856 = vrot.slane %v10828, %v10855
  %v10857 = vcombine.low %v10835, %v10842
  %v10858 = vcombine.low %v10849, %v10856
  %v10860 = vunpack.c.l.s4 1966171168
  %v10861 = vunpack.c.0.s8 %v10860
  %v10862 = vlaneseq
  %v10863 = vshrl.u32 %v10862, 7
  %v10864 = vsub.s32 %v10861, %v10863
  %v10865 = vrot.slane %v10857, %v10864
  %v10867 = vunpack.c.l.s4 1966171168
  %v10868 = vunpack.c.0.s8 %v10867
  %v10869 = vlaneseq
  %v10870 = vshrl.u32 %v10869, 7
  %v10871 = vsub.s32 %v10868, %v10870
  %v10872 = vrot.slane %v10858, %v10871
  %v10873 = vcombine.low %v10865, %v10872
  %v10874 = vcombine.low %v7761, %v7775
  %v10875 = vcombine.low %v7783, %v7785
  %v10876 = vcombine.low %v7768, %v7782
  %v10877 = vcombine.low %v7784, %v7786
  %v10879 = vunpack.c.l.s4 1966171168
  %v10880 = vunpack.c.0.s8 %v10879
  %v10881 = vlaneseq
  %v10882 = vshrl.u32 %v10881, 7
  %v10883 = vsub.s32 %v10880, %v10882
  %v10884 = vrot.slane %v10874, %v10883
  %v10886 = vunpack.c.l.s4 1966171168
  %v10887 = vunpack.c.0.s8 %v10886
  %v10888 = vlaneseq
  %v10889 = vshrl.u32 %v10888, 7
  %v10890 = vsub.s32 %v10887, %v10889
  %v10891 = vrot.slane %v10875, %v10890
  %v10893 = vunpack.c.l.s4 1966171168
  %v10894 = vunpack.c.0.s8 %v10893
  %v10895 = vlaneseq
  %v10896 = vshrl.u32 %v10895, 7
  %v10897 = vsub.s32 %v10894, %v10896
  %v10898 = vrot.slane %v10876, %v10897
  %v10900 = vunpack.c.l.s4 1966171168
  %v10901 = vunpack.c.0.s8 %v10900
  %v10902 = vlaneseq
  %v10903 = vshrl.u32 %v10902, 7
  %v10904 = vsub.s32 %v10901, %v10903
  %v10905 = vrot.slane %v10877, %v10904
  %v10906 = vcombine.low %v10884, %v10891
  %v10907 = vcombine.low %v10898, %v10905
  %v10909 = vunpack.c.l.s4 1966171168
  %v10910 = vunpack.c.0.s8 %v10909
  %v10911 = vlaneseq
  %v10912 = vshrl.u32 %v10911, 7
  %v10913 = vsub.s32 %v10910, %v10912
  %v10914 = vrot.slane %v10906, %v10913
  %v10916 = vunpack.c.l.s4 1966171168
  %v10917 = vunpack.c.0.s8 %v10916
  %v10918 = vlaneseq
  %v10919 = vshrl.u32 %v10918, 7
  %v10920 = vsub.s32 %v10917, %v10919
  %v10921 = vrot.slane %v10907, %v10920
  %v10922 = vcombine.low %v10914, %v10921
  %v10923 = vcombine.low %v7810, %v7824
  %v10924 = vcombine.low %v7832, %v7834
  %v10925 = vcombine.low %v7817, %v7831
  %v10926 = vcombine.low %v7833, %v7835
  %v10928 = vunpack.c.l.s4 1966171168
  %v10929 = vunpack.c.0.s8 %v10928
  %v10930 = vlaneseq
  %v10931 = vshrl.u32 %v10930, 7
  %v10932 = vsub.s32 %v10929, %v10931
  %v10933 = vrot.slane %v10923, %v10932
  %v10935 = vunpack.c.l.s4 1966171168
  %v10936 = vunpack.c.0.s8 %v10935
  %v10937 = vlaneseq
  %v10938 = vshrl.u32 %v10937, 7
  %v10939 = vsub.s32 %v10936, %v10938
  %v10940 = vrot.slane %v10924, %v10939
  %v10942 = vunpack.c.l.s4 1966171168
  %v10943 = vunpack.c.0.s8 %v10942
  %v10944 = vlaneseq
  %v10945 = vshrl.u32 %v10944, 7
  %v10946 = vsub.s32 %v10943, %v10945
  %v10947 = vrot.slane %v10925, %v10946
  %v10949 = vunpack.c.l.s4 1966171168
  %v10950 = vunpack.c.0.s8 %v10949
  %v10951 = vlaneseq
  %v10952 = vshrl.u32 %v10951, 7
  %v10953 = vsub.s32 %v10950, %v10952
  %v10954 = vrot.slane %v10926, %v10953
  %v10955 = vcombine.low %v10933, %v10940
  %v10956 = vcombine.low %v10947, %v10954
  %v10958 = vunpack.c.l.s4 1966171168
  %v10959 = vunpack.c.0.s8 %v10958
  %v10960 = vlaneseq
  %v10961 = vshrl.u32 %v10960, 7
  %v10962 = vsub.s32 %v10959, %v10961
  %v10963 = vrot.slane %v10955, %v10962
  %v10965 = vunpack.c.l.s4 1966171168
  %v10966 = vunpack.c.0.s8 %v10965
  %v10967 = vlaneseq
  %v10968 = vshrl.u32 %v10967, 7
  %v10969 = vsub.s32 %v10966, %v10968
  %v10970 = vrot.slane %v10956, %v10969
  %v10971 = vcombine.low %v10963, %v10970
  %v10972 = vcombine.low %v7859, %v7873
  %v10973 = vcombine.low %v7881, %v7883
  %v10974 = vcombine.low %v7866, %v7880
  %v10975 = vcombine.low %v7882, %v7884
  %v10977 = vunpack.c.l.s4 1966171168
  %v10978 = vunpack.c.0.s8 %v10977
  %v10979 = vlaneseq
  %v10980 = vshrl.u32 %v10979, 7
  %v10981 = vsub.s32 %v10978, %v10980
  %v10982 = vrot.slane %v10972, %v10981
  %v10984 = vunpack.c.l.s4 1966171168
  %v10985 = vunpack.c.0.s8 %v10984
  %v10986 = vlaneseq
  %v10987 = vshrl.u32 %v10986, 7
  %v10988 = vsub.s32 %v10985, %v10987
  %v10989 = vrot.slane %v10973, %v10988
  %v10991 = vunpack.c.l.s4 1966171168
  %v10992 = vunpack.c.0.s8 %v10991
  %v10993 = vlaneseq
  %v10994 = vshrl.u32 %v10993, 7
  %v10995 = vsub.s32 %v10992, %v10994
  %v10996 = vrot.slane %v10974, %v10995
  %v10998 = vunpack.c.l.s4 1966171168
  %v10999 = vunpack.c.0.s8 %v10998
  %v11000 = vlaneseq
  %v11001 = vshrl.u32 %v11000, 7
  %v11002 = vsub.s32 %v10999, %v11001
  %v11003 = vrot.slane %v10975, %v11002
  %v11004 = vcombine.low %v10982, %v10989
  %v11005 = vcombine.low %v10996, %v11003
  %v11007 = vunpack.c.l.s4 1966171168
  %v11008 = vunpack.c.0.s8 %v11007
  %v11009 = vlaneseq
  %v11010 = vshrl.u32 %v11009, 7
  %v11011 = vsub.s32 %v11008, %v11010
  %v11012 = vrot.slane %v11004, %v11011
  %v11014 = vunpack.c.l.s4 1966171168
  %v11015 = vunpack.c.0.s8 %v11014
  %v11016 = vlaneseq
  %v11017 = vshrl.u32 %v11016, 7
  %v11018 = vsub.s32 %v11015, %v11017
  %v11019 = vrot.slane %v11005, %v11018
  %v11020 = vcombine.low %v11012, %v11019
  %v11021 = vcombine.low %v7908, %v7922
  %v11022 = vcombine.low %v7930, %v7932
  %v11023 = vcombine.low %v7915, %v7929
  %v11024 = vcombine.low %v7931, %v7933
  %v11026 = vunpack.c.l.s4 1966171168
  %v11027 = vunpack.c.0.s8 %v11026
  %v11028 = vlaneseq
  %v11029 = vshrl.u32 %v11028, 7
  %v11030 = vsub.s32 %v11027, %v11029
  %v11031 = vrot.slane %v11021, %v11030
  %v11033 = vunpack.c.l.s4 1966171168
  %v11034 = vunpack.c.0.s8 %v11033
  %v11035 = vlaneseq
  %v11036 = vshrl.u32 %v11035, 7
  %v11037 = vsub.s32 %v11034, %v11036
  %v11038 = vrot.slane %v11022, %v11037
  %v11040 = vunpack.c.l.s4 1966171168
  %v11041 = vunpack.c.0.s8 %v11040
  %v11042 = vlaneseq
  %v11043 = vshrl.u32 %v11042, 7
  %v11044 = vsub.s32 %v11041, %v11043
  %v11045 = vrot.slane %v11023, %v11044
  %v11047 = vunpack.c.l.s4 1966171168
  %v11048 = vunpack.c.0.s8 %v11047
  %v11049 = vlaneseq
  %v11050 = vshrl.u32 %v11049, 7
  %v11051 = vsub.s32 %v11048, %v11050
  %v11052 = vrot.slane %v11024, %v11051
  %v11053 = vcombine.low %v11031, %v11038
  %v11054 = vcombine.low %v11045, %v11052
  %v11056 = vunpack.c.l.s4 1966171168
  %v11057 = vunpack.c.0.s8 %v11056
  %v11058 = vlaneseq
  %v11059 = vshrl.u32 %v11058, 7
  %v11060 = vsub.s32 %v11057, %v11059
  %v11061 = vrot.slane %v11053, %v11060
  %v11063 = vunpack.c.l.s4 1966171168
  %v11064 = vunpack.c.0.s8 %v11063
  %v11065 = vlaneseq
  %v11066 = vshrl.u32 %v11065, 7
  %v11067 = vsub.s32 %v11064, %v11066
  %v11068 = vrot.slane %v11054, %v11067
  %v11069 = vcombine.low %v11061, %v11068
  %v11070 = vcombine.low %v7957, %v7971
  %v11071 = vcombine.low %v7979, %v7981
  %v11072 = vcombine.low %v7964, %v7978
  %v11073 = vcombine.low %v7980, %v7982
  %v11075 = vunpack.c.l.s4 1966171168
  %v11076 = vunpack.c.0.s8 %v11075
  %v11077 = vlaneseq
  %v11078 = vshrl.u32 %v11077, 7
  %v11079 = vsub.s32 %v11076, %v11078
  %v11080 = vrot.slane %v11070, %v11079
  %v11082 = vunpack.c.l.s4 1966171168
  %v11083 = vunpack.c.0.s8 %v11082
  %v11084 = vlaneseq
  %v11085 = vshrl.u32 %v11084, 7
  %v11086 = vsub.s32 %v11083, %v11085
  %v11087 = vrot.slane %v11071, %v11086
  %v11089 = vunpack.c.l.s4 1966171168
  %v11090 = vunpack.c.0.s8 %v11089
  %v11091 = vlaneseq
  %v11092 = vshrl.u32 %v11091, 7
  %v11093 = vsub.s32 %v11090, %v11092
  %v11094 = vrot.slane %v11072, %v11093
  %v11096 = vunpack.c.l.s4 1966171168
  %v11097 = vunpack.c.0.s8 %v11096
  %v11098 = vlaneseq
  %v11099 = vshrl.u32 %v11098, 7
  %v11100 = vsub.s32 %v11097, %v11099
  %v11101 = vrot.slane %v11073, %v11100
  %v11102 = vcombine.low %v11080, %v11087
  %v11103 = vcombine.low %v11094, %v11101
  %v11105 = vunpack.c.l.s4 1966171168
  %v11106 = vunpack.c.0.s8 %v11105
  %v11107 = vlaneseq
  %v11108 = vshrl.u32 %v11107, 7
  %v11109 = vsub.s32 %v11106, %v11108
  %v11110 = vrot.slane %v11102, %v11109
  %v11112 = vunpack.c.l.s4 1966171168
  %v11113 = vunpack.c.0.s8 %v11112
  %v11114 = vlaneseq
  %v11115 = vshrl.u32 %v11114, 7
  %v11116 = vsub.s32 %v11113, %v11115
  %v11117 = vrot.slane %v11103, %v11116
  %v11118 = vcombine.low %v11110, %v11117
  %v11119 = vcombine.low %v8006, %v8020
  %v11120 = vcombine.low %v8028, %v8030
  %v11121 = vcombine.low %v8013, %v8027
  %v11122 = vcombine.low %v8029, %v8031
  %v11124 = vunpack.c.l.s4 1966171168
  %v11125 = vunpack.c.0.s8 %v11124
  %v11126 = vlaneseq
  %v11127 = vshrl.u32 %v11126, 7
  %v11128 = vsub.s32 %v11125, %v11127
  %v11129 = vrot.slane %v11119, %v11128
  %v11131 = vunpack.c.l.s4 1966171168
  %v11132 = vunpack.c.0.s8 %v11131
  %v11133 = vlaneseq
  %v11134 = vshrl.u32 %v11133, 7
  %v11135 = vsub.s32 %v11132, %v11134
  %v11136 = vrot.slane %v11120, %v11135
  %v11138 = vunpack.c.l.s4 1966171168
  %v11139 = vunpack.c.0.s8 %v11138
  %v11140 = vlaneseq
  %v11141 = vshrl.u32 %v11140, 7
  %v11142 = vsub.s32 %v11139, %v11141
  %v11143 = vrot.slane %v11121, %v11142
  %v11145 = vunpack.c.l.s4 1966171168
  %v11146 = vunpack.c.0.s8 %v11145
  %v11147 = vlaneseq
  %v11148 = vshrl.u32 %v11147, 7
  %v11149 = vsub.s32 %v11146, %v11148
  %v11150 = vrot.slane %v11122, %v11149
  %v11151 = vcombine.low %v11129, %v11136
  %v11152 = vcombine.low %v11143, %v11150
  %v11154 = vunpack.c.l.s4 1966171168
  %v11155 = vunpack.c.0.s8 %v11154
  %v11156 = vlaneseq
  %v11157 = vshrl.u32 %v11156, 7
  %v11158 = vsub.s32 %v11155, %v11157
  %v11159 = vrot.slane %v11151, %v11158
  %v11161 = vunpack.c.l.s4 1966171168
  %v11162 = vunpack.c.0.s8 %v11161
  %v11163 = vlaneseq
  %v11164 = vshrl.u32 %v11163, 7
  %v11165 = vsub.s32 %v11162, %v11164
  %v11166 = vrot.slane %v11152, %v11165
  %v11167 = vcombine.low %v11159, %v11166
  %v11168 = vcombine.low %v8055, %v8069
  %v11169 = vcombine.low %v8077, %v8079
  %v11170 = vcombine.low %v8062, %v8076
  %v11171 = vcombine.low %v8078, %v8080
  %v11173 = vunpack.c.l.s4 1966171168
  %v11174 = vunpack.c.0.s8 %v11173
  %v11175 = vlaneseq
  %v11176 = vshrl.u32 %v11175, 7
  %v11177 = vsub.s32 %v11174, %v11176
  %v11178 = vrot.slane %v11168, %v11177
  %v11180 = vunpack.c.l.s4 1966171168
  %v11181 = vunpack.c.0.s8 %v11180
  %v11182 = vlaneseq
  %v11183 = vshrl.u32 %v11182, 7
  %v11184 = vsub.s32 %v11181, %v11183
  %v11185 = vrot.slane %v11169, %v11184
  %v11187 = vunpack.c.l.s4 1966171168
  %v11188 = vunpack.c.0.s8 %v11187
  %v11189 = vlaneseq
  %v11190 = vshrl.u32 %v11189, 7
  %v11191 = vsub.s32 %v11188, %v11190
  %v11192 = vrot.slane %v11170, %v11191
  %v11194 = vunpack.c.l.s4 1966171168
  %v11195 = vunpack.c.0.s8 %v11194
  %v11196 = vlaneseq
  %v11197 = vshrl.u32 %v11196, 7
  %v11198 = vsub.s32 %v11195, %v11197
  %v11199 = vrot.slane %v11171, %v11198
  %v11200 = vcombine.low %v11178, %v11185
  %v11201 = vcombine.low %v11192, %v11199
  %v11203 = vunpack.c.l.s4 1966171168
  %v11204 = vunpack.c.0.s8 %v11203
  %v11205 = vlaneseq
  %v11206 = vshrl.u32 %v11205, 7
  %v11207 = vsub.s32 %v11204, %v11206
  %v11208 = vrot.slane %v11200, %v11207
  %v11210 = vunpack.c.l.s4 1966171168
  %v11211 = vunpack.c.0.s8 %v11210
  %v11212 = vlaneseq
  %v11213 = vshrl.u32 %v11212, 7
  %v11214 = vsub.s32 %v11211, %v11213
  %v11215 = vrot.slane %v11201, %v11214
  %v11216 = vcombine.low %v11208, %v11215
  %v11217 = vcombine.low %v8104, %v8118
  %v11218 = vcombine.low %v8126, %v8128
  %v11219 = vcombine.low %v8111, %v8125
  %v11220 = vcombine.low %v8127, %v8129
  %v11222 = vunpack.c.l.s4 1966171168
  %v11223 = vunpack.c.0.s8 %v11222
  %v11224 = vlaneseq
  %v11225 = vshrl.u32 %v11224, 7
  %v11226 = vsub.s32 %v11223, %v11225
  %v11227 = vrot.slane %v11217, %v11226
  %v11229 = vunpack.c.l.s4 1966171168
  %v11230 = vunpack.c.0.s8 %v11229
  %v11231 = vlaneseq
  %v11232 = vshrl.u32 %v11231, 7
  %v11233 = vsub.s32 %v11230, %v11232
  %v11234 = vrot.slane %v11218, %v11233
  %v11236 = vunpack.c.l.s4 1966171168
  %v11237 = vunpack.c.0.s8 %v11236
  %v11238 = vlaneseq
  %v11239 = vshrl.u32 %v11238, 7
  %v11240 = vsub.s32 %v11237, %v11239
  %v11241 = vrot.slane %v11219, %v11240
  %v11243 = vunpack.c.l.s4 1966171168
  %v11244 = vunpack.c.0.s8 %v11243
  %v11245 = vlaneseq
  %v11246 = vshrl.u32 %v11245, 7
  %v11247 = vsub.s32 %v11244, %v11246
  %v11248 = vrot.slane %v11220, %v11247
  %v11249 = vcombine.low %v11227, %v11234
  %v11250 = vcombine.low %v11241, %v11248
  %v11252 = vunpack.c.l.s4 1966171168
  %v11253 = vunpack.c.0.s8 %v11252
  %v11254 = vlaneseq
  %v11255 = vshrl.u32 %v11254, 7
  %v11256 = vsub.s32 %v11253, %v11255
  %v11257 = vrot.slane %v11249, %v11256
  %v11259 = vunpack.c.l.s4 1966171168
  %v11260 = vunpack.c.0.s8 %v11259
  %v11261 = vlaneseq
  %v11262 = vshrl.u32 %v11261, 7
  %v11263 = vsub.s32 %v11260, %v11262
  %v11264 = vrot.slane %v11250, %v11263
  %v11265 = vcombine.low %v11257, %v11264
  %v11266 = vcombine.low %v8153, %v8167
  %v11267 = vcombine.low %v8175, %v8177
  %v11268 = vcombine.low %v8160, %v8174
  %v11269 = vcombine.low %v8176, %v8178
  %v11271 = vunpack.c.l.s4 1966171168
  %v11272 = vunpack.c.0.s8 %v11271
  %v11273 = vlaneseq
  %v11274 = vshrl.u32 %v11273, 7
  %v11275 = vsub.s32 %v11272, %v11274
  %v11276 = vrot.slane %v11266, %v11275
  %v11278 = vunpack.c.l.s4 1966171168
  %v11279 = vunpack.c.0.s8 %v11278
  %v11280 = vlaneseq
  %v11281 = vshrl.u32 %v11280, 7
  %v11282 = vsub.s32 %v11279, %v11281
  %v11283 = vrot.slane %v11267, %v11282
  %v11285 = vunpack.c.l.s4 1966171168
  %v11286 = vunpack.c.0.s8 %v11285
  %v11287 = vlaneseq
  %v11288 = vshrl.u32 %v11287, 7
  %v11289 = vsub.s32 %v11286, %v11288
  %v11290 = vrot.slane %v11268, %v11289
  %v11292 = vunpack.c.l.s4 1966171168
  %v11293 = vunpack.c.0.s8 %v11292
  %v11294 = vlaneseq
  %v11295 = vshrl.u32 %v11294, 7
  %v11296 = vsub.s32 %v11293, %v11295
  %v11297 = vrot.slane %v11269, %v11296
  %v11298 = vcombine.low %v11276, %v11283
  %v11299 = vcombine.low %v11290, %v11297
  %v11301 = vunpack.c.l.s4 1966171168
  %v11302 = vunpack.c.0.s8 %v11301
  %v11303 = vlaneseq
  %v11304 = vshrl.u32 %v11303, 7
  %v11305 = vsub.s32 %v11302, %v11304
  %v11306 = vrot.slane %v11298, %v11305
  %v11308 = vunpack.c.l.s4 1966171168
  %v11309 = vunpack.c.0.s8 %v11308
  %v11310 = vlaneseq
  %v11311 = vshrl.u32 %v11310, 7
  %v11312 = vsub.s32 %v11309, %v11311
  %v11313 = vrot.slane %v11299, %v11312
  %v11314 = vcombine.low %v11306, %v11313
  %v11315 = vcombine.low %v8202, %v8216
  %v11316 = vcombine.low %v8224, %v8226
  %v11317 = vcombine.low %v8209, %v8223
  %v11318 = vcombine.low %v8225, %v8227
  %v11320 = vunpack.c.l.s4 1966171168
  %v11321 = vunpack.c.0.s8 %v11320
  %v11322 = vlaneseq
  %v11323 = vshrl.u32 %v11322, 7
  %v11324 = vsub.s32 %v11321, %v11323
  %v11325 = vrot.slane %v11315, %v11324
  %v11327 = vunpack.c.l.s4 1966171168
  %v11328 = vunpack.c.0.s8 %v11327
  %v11329 = vlaneseq
  %v11330 = vshrl.u32 %v11329, 7
  %v11331 = vsub.s32 %v11328, %v11330
  %v11332 = vrot.slane %v11316, %v11331
  %v11334 = vunpack.c.l.s4 1966171168
  %v11335 = vunpack.c.0.s8 %v11334
  %v11336 = vlaneseq
  %v11337 = vshrl.u32 %v11336, 7
  %v11338 = vsub.s32 %v11335, %v11337
  %v11339 = vrot.slane %v11317, %v11338
  %v11341 = vunpack.c.l.s4 1966171168
  %v11342 = vunpack.c.0.s8 %v11341
  %v11343 = vlaneseq
  %v11344 = vshrl.u32 %v11343, 7
  %v11345 = vsub.s32 %v11342, %v11344
  %v11346 = vrot.slane %v11318, %v11345
  %v11347 = vcombine.low %v11325, %v11332
  %v11348 = vcombine.low %v11339, %v11346
  %v11350 = vunpack.c.l.s4 1966171168
  %v11351 = vunpack.c.0.s8 %v11350
  %v11352 = vlaneseq
  %v11353 = vshrl.u32 %v11352, 7
  %v11354 = vsub.s32 %v11351, %v11353
  %v11355 = vrot.slane %v11347, %v11354
  %v11357 = vunpack.c.l.s4 1966171168
  %v11358 = vunpack.c.0.s8 %v11357
  %v11359 = vlaneseq
  %v11360 = vshrl.u32 %v11359, 7
  %v11361 = vsub.s32 %v11358, %v11360
  %v11362 = vrot.slane %v11348, %v11361
  %v11363 = vcombine.low %v11355, %v11362
  %v11364 = vcombine.low %v8251, %v8265
  %v11365 = vcombine.low %v8273, %v8275
  %v11366 = vcombine.low %v8258, %v8272
  %v11367 = vcombine.low %v8274, %v8276
  %v11369 = vunpack.c.l.s4 1966171168
  %v11370 = vunpack.c.0.s8 %v11369
  %v11371 = vlaneseq
  %v11372 = vshrl.u32 %v11371, 7
  %v11373 = vsub.s32 %v11370, %v11372
  %v11374 = vrot.slane %v11364, %v11373
  %v11376 = vunpack.c.l.s4 1966171168
  %v11377 = vunpack.c.0.s8 %v11376
  %v11378 = vlaneseq
  %v11379 = vshrl.u32 %v11378, 7
  %v11380 = vsub.s32 %v11377, %v11379
  %v11381 = vrot.slane %v11365, %v11380
  %v11383 = vunpack.c.l.s4 1966171168
  %v11384 = vunpack.c.0.s8 %v11383
  %v11385 = vlaneseq
  %v11386 = vshrl.u32 %v11385, 7
  %v11387 = vsub.s32 %v11384, %v11386
  %v11388 = vrot.slane %v11366, %v11387
  %v11390 = vunpack.c.l.s4 1966171168
  %v11391 = vunpack.c.0.s8 %v11390
  %v11392 = vlaneseq
  %v11393 = vshrl.u32 %v11392, 7
  %v11394 = vsub.s32 %v11391, %v11393
  %v11395 = vrot.slane %v11367, %v11394
  %v11396 = vcombine.low %v11374, %v11381
  %v11397 = vcombine.low %v11388, %v11395
  %v11399 = vunpack.c.l.s4 1966171168
  %v11400 = vunpack.c.0.s8 %v11399
  %v11401 = vlaneseq
  %v11402 = vshrl.u32 %v11401, 7
  %v11403 = vsub.s32 %v11400, %v11402
  %v11404 = vrot.slane %v11396, %v11403
  %v11406 = vunpack.c.l.s4 1966171168
  %v11407 = vunpack.c.0.s8 %v11406
  %v11408 = vlaneseq
  %v11409 = vshrl.u32 %v11408, 7
  %v11410 = vsub.s32 %v11407, %v11409
  %v11411 = vrot.slane %v11397, %v11410
  %v11412 = vcombine.low %v11404, %v11411
  %v11413 = vcombine.low %v8300, %v8314
  %v11414 = vcombine.low %v8322, %v8324
  %v11415 = vcombine.low %v8307, %v8321
  %v11416 = vcombine.low %v8323, %v8325
  %v11418 = vunpack.c.l.s4 1966171168
  %v11419 = vunpack.c.0.s8 %v11418
  %v11420 = vlaneseq
  %v11421 = vshrl.u32 %v11420, 7
  %v11422 = vsub.s32 %v11419, %v11421
  %v11423 = vrot.slane %v11413, %v11422
  %v11425 = vunpack.c.l.s4 1966171168
  %v11426 = vunpack.c.0.s8 %v11425
  %v11427 = vlaneseq
  %v11428 = vshrl.u32 %v11427, 7
  %v11429 = vsub.s32 %v11426, %v11428
  %v11430 = vrot.slane %v11414, %v11429
  %v11432 = vunpack.c.l.s4 1966171168
  %v11433 = vunpack.c.0.s8 %v11432
  %v11434 = vlaneseq
  %v11435 = vshrl.u32 %v11434, 7
  %v11436 = vsub.s32 %v11433, %v11435
  %v11437 = vrot.slane %v11415, %v11436
  %v11439 = vunpack.c.l.s4 1966171168
  %v11440 = vunpack.c.0.s8 %v11439
  %v11441 = vlaneseq
  %v11442 = vshrl.u32 %v11441, 7
  %v11443 = vsub.s32 %v11440, %v11442
  %v11444 = vrot.slane %v11416, %v11443
  %v11445 = vcombine.low %v11423, %v11430
  %v11446 = vcombine.low %v11437, %v11444
  %v11448 = vunpack.c.l.s4 1966171168
  %v11449 = vunpack.c.0.s8 %v11448
  %v11450 = vlaneseq
  %v11451 = vshrl.u32 %v11450, 7
  %v11452 = vsub.s32 %v11449, %v11451
  %v11453 = vrot.slane %v11445, %v11452
  %v11455 = vunpack.c.l.s4 1966171168
  %v11456 = vunpack.c.0.s8 %v11455
  %v11457 = vlaneseq
  %v11458 = vshrl.u32 %v11457, 7
  %v11459 = vsub.s32 %v11456, %v11458
  %v11460 = vrot.slane %v11446, %v11459
  %v11461 = vcombine.low %v11453, %v11460
  %v11462 = vcombine.low %v8349, %v8363
  %v11463 = vcombine.low %v8371, %v8373
  %v11464 = vcombine.low %v8356, %v8370
  %v11465 = vcombine.low %v8372, %v8374
  %v11467 = vunpack.c.l.s4 1966171168
  %v11468 = vunpack.c.0.s8 %v11467
  %v11469 = vlaneseq
  %v11470 = vshrl.u32 %v11469, 7
  %v11471 = vsub.s32 %v11468, %v11470
  %v11472 = vrot.slane %v11462, %v11471
  %v11474 = vunpack.c.l.s4 1966171168
  %v11475 = vunpack.c.0.s8 %v11474
  %v11476 = vlaneseq
  %v11477 = vshrl.u32 %v11476, 7
  %v11478 = vsub.s32 %v11475, %v11477
  %v11479 = vrot.slane %v11463, %v11478
  %v11481 = vunpack.c.l.s4 1966171168
  %v11482 = vunpack.c.0.s8 %v11481
  %v11483 = vlaneseq
  %v11484 = vshrl.u32 %v11483, 7
  %v11485 = vsub.s32 %v11482, %v11484
  %v11486 = vrot.slane %v11464, %v11485
  %v11488 = vunpack.c.l.s4 1966171168
  %v11489 = vunpack.c.0.s8 %v11488
  %v11490 = vlaneseq
  %v11491 = vshrl.u32 %v11490, 7
  %v11492 = vsub.s32 %v11489, %v11491
  %v11493 = vrot.slane %v11465, %v11492
  %v11494 = vcombine.low %v11472, %v11479
  %v11495 = vcombine.low %v11486, %v11493
  %v11497 = vunpack.c.l.s4 1966171168
  %v11498 = vunpack.c.0.s8 %v11497
  %v11499 = vlaneseq
  %v11500 = vshrl.u32 %v11499, 7
  %v11501 = vsub.s32 %v11498, %v11500
  %v11502 = vrot.slane %v11494, %v11501
  %v11504 = vunpack.c.l.s4 1966171168
  %v11505 = vunpack.c.0.s8 %v11504
  %v11506 = vlaneseq
  %v11507 = vshrl.u32 %v11506, 7
  %v11508 = vsub.s32 %v11505, %v11507
  %v11509 = vrot.slane %v11495, %v11508
  %v11510 = vcombine.low %v11502, %v11509
  %v11511 = vcombine.low %v8398, %v8412
  %v11512 = vcombine.low %v8420, %v8422
  %v11513 = vcombine.low %v8405, %v8419
  %v11514 = vcombine.low %v8421, %v8423
  %v11516 = vunpack.c.l.s4 1966171168
  %v11517 = vunpack.c.0.s8 %v11516
  %v11518 = vlaneseq
  %v11519 = vshrl.u32 %v11518, 7
  %v11520 = vsub.s32 %v11517, %v11519
  %v11521 = vrot.slane %v11511, %v11520
  %v11523 = vunpack.c.l.s4 1966171168
  %v11524 = vunpack.c.0.s8 %v11523
  %v11525 = vlaneseq
  %v11526 = vshrl.u32 %v11525, 7
  %v11527 = vsub.s32 %v11524, %v11526
  %v11528 = vrot.slane %v11512, %v11527
  %v11530 = vunpack.c.l.s4 1966171168
  %v11531 = vunpack.c.0.s8 %v11530
  %v11532 = vlaneseq
  %v11533 = vshrl.u32 %v11532, 7
  %v11534 = vsub.s32 %v11531, %v11533
  %v11535 = vrot.slane %v11513, %v11534
  %v11537 = vunpack.c.l.s4 1966171168
  %v11538 = vunpack.c.0.s8 %v11537
  %v11539 = vlaneseq
  %v11540 = vshrl.u32 %v11539, 7
  %v11541 = vsub.s32 %v11538, %v11540
  %v11542 = vrot.slane %v11514, %v11541
  %v11543 = vcombine.low %v11521, %v11528
  %v11544 = vcombine.low %v11535, %v11542
  %v11546 = vunpack.c.l.s4 1966171168
  %v11547 = vunpack.c.0.s8 %v11546
  %v11548 = vlaneseq
  %v11549 = vshrl.u32 %v11548, 7
  %v11550 = vsub.s32 %v11547, %v11549
  %v11551 = vrot.slane %v11543, %v11550
  %v11553 = vunpack.c.l.s4 1966171168
  %v11554 = vunpack.c.0.s8 %v11553
  %v11555 = vlaneseq
  %v11556 = vshrl.u32 %v11555, 7
  %v11557 = vsub.s32 %v11554, %v11556
  %v11558 = vrot.slane %v11544, %v11557
  %v11559 = vcombine.low %v11551, %v11558
  %v11560 = vcombine.low %v8447, %v8461
  %v11561 = vcombine.low %v8469, %v8471
  %v11562 = vcombine.low %v8454, %v8468
  %v11563 = vcombine.low %v8470, %v8472
  %v11565 = vunpack.c.l.s4 1966171168
  %v11566 = vunpack.c.0.s8 %v11565
  %v11567 = vlaneseq
  %v11568 = vshrl.u32 %v11567, 7
  %v11569 = vsub.s32 %v11566, %v11568
  %v11570 = vrot.slane %v11560, %v11569
  %v11572 = vunpack.c.l.s4 1966171168
  %v11573 = vunpack.c.0.s8 %v11572
  %v11574 = vlaneseq
  %v11575 = vshrl.u32 %v11574, 7
  %v11576 = vsub.s32 %v11573, %v11575
  %v11577 = vrot.slane %v11561, %v11576
  %v11579 = vunpack.c.l.s4 1966171168
  %v11580 = vunpack.c.0.s8 %v11579
  %v11581 = vlaneseq
  %v11582 = vshrl.u32 %v11581, 7
  %v11583 = vsub.s32 %v11580, %v11582
  %v11584 = vrot.slane %v11562, %v11583
  %v11586 = vunpack.c.l.s4 1966171168
  %v11587 = vunpack.c.0.s8 %v11586
  %v11588 = vlaneseq
  %v11589 = vshrl.u32 %v11588, 7
  %v11590 = vsub.s32 %v11587, %v11589
  %v11591 = vrot.slane %v11563, %v11590
  %v11592 = vcombine.low %v11570, %v11577
  %v11593 = vcombine.low %v11584, %v11591
  %v11595 = vunpack.c.l.s4 1966171168
  %v11596 = vunpack.c.0.s8 %v11595
  %v11597 = vlaneseq
  %v11598 = vshrl.u32 %v11597, 7
  %v11599 = vsub.s32 %v11596, %v11598
  %v11600 = vrot.slane %v11592, %v11599
  %v11602 = vunpack.c.l.s4 1966171168
  %v11603 = vunpack.c.0.s8 %v11602
  %v11604 = vlaneseq
  %v11605 = vshrl.u32 %v11604, 7
  %v11606 = vsub.s32 %v11603, %v11605
  %v11607 = vrot.slane %v11593, %v11606
  %v11608 = vcombine.low %v11600, %v11607
  %v11609 = vcombine.low %v8496, %v8510
  %v11610 = vcombine.low %v8518, %v8520
  %v11611 = vcombine.low %v8503, %v8517
  %v11612 = vcombine.low %v8519, %v8521
  %v11614 = vunpack.c.l.s4 1966171168
  %v11615 = vunpack.c.0.s8 %v11614
  %v11616 = vlaneseq
  %v11617 = vshrl.u32 %v11616, 7
  %v11618 = vsub.s32 %v11615, %v11617
  %v11619 = vrot.slane %v11609, %v11618
  %v11621 = vunpack.c.l.s4 1966171168
  %v11622 = vunpack.c.0.s8 %v11621
  %v11623 = vlaneseq
  %v11624 = vshrl.u32 %v11623, 7
  %v11625 = vsub.s32 %v11622, %v11624
  %v11626 = vrot.slane %v11610, %v11625
  %v11628 = vunpack.c.l.s4 1966171168
  %v11629 = vunpack.c.0.s8 %v11628
  %v11630 = vlaneseq
  %v11631 = vshrl.u32 %v11630, 7
  %v11632 = vsub.s32 %v11629, %v11631
  %v11633 = vrot.slane %v11611, %v11632
  %v11635 = vunpack.c.l.s4 1966171168
  %v11636 = vunpack.c.0.s8 %v11635
  %v11637 = vlaneseq
  %v11638 = vshrl.u32 %v11637, 7
  %v11639 = vsub.s32 %v11636, %v11638
  %v11640 = vrot.slane %v11612, %v11639
  %v11641 = vcombine.low %v11619, %v11626
  %v11642 = vcombine.low %v11633, %v11640
  %v11644 = vunpack.c.l.s4 1966171168
  %v11645 = vunpack.c.0.s8 %v11644
  %v11646 = vlaneseq
  %v11647 = vshrl.u32 %v11646, 7
  %v11648 = vsub.s32 %v11645, %v11647
  %v11649 = vrot.slane %v11641, %v11648
  %v11651 = vunpack.c.l.s4 1966171168
  %v11652 = vunpack.c.0.s8 %v11651
  %v11653 = vlaneseq
  %v11654 = vshrl.u32 %v11653, 7
  %v11655 = vsub.s32 %v11652, %v11654
  %v11656 = vrot.slane %v11642, %v11655
  %v11657 = vcombine.low %v11649, %v11656
  %v11658 = vcombine.low %v8545, %v8559
  %v11659 = vcombine.low %v8567, %v8569
  %v11660 = vcombine.low %v8552, %v8566
  %v11661 = vcombine.low %v8568, %v8570
  %v11663 = vunpack.c.l.s4 1966171168
  %v11664 = vunpack.c.0.s8 %v11663
  %v11665 = vlaneseq
  %v11666 = vshrl.u32 %v11665, 7
  %v11667 = vsub.s32 %v11664, %v11666
  %v11668 = vrot.slane %v11658, %v11667
  %v11670 = vunpack.c.l.s4 1966171168
  %v11671 = vunpack.c.0.s8 %v11670
  %v11672 = vlaneseq
  %v11673 = vshrl.u32 %v11672, 7
  %v11674 = vsub.s32 %v11671, %v11673
  %v11675 = vrot.slane %v11659, %v11674
  %v11677 = vunpack.c.l.s4 1966171168
  %v11678 = vunpack.c.0.s8 %v11677
  %v11679 = vlaneseq
  %v11680 = vshrl.u32 %v11679, 7
  %v11681 = vsub.s32 %v11678, %v11680
  %v11682 = vrot.slane %v11660, %v11681
  %v11684 = vunpack.c.l.s4 1966171168
  %v11685 = vunpack.c.0.s8 %v11684
  %v11686 = vlaneseq
  %v11687 = vshrl.u32 %v11686, 7
  %v11688 = vsub.s32 %v11685, %v11687
  %v11689 = vrot.slane %v11661, %v11688
  %v11690 = vcombine.low %v11668, %v11675
  %v11691 = vcombine.low %v11682, %v11689
  %v11693 = vunpack.c.l.s4 1966171168
  %v11694 = vunpack.c.0.s8 %v11693
  %v11695 = vlaneseq
  %v11696 = vshrl.u32 %v11695, 7
  %v11697 = vsub.s32 %v11694, %v11696
  %v11698 = vrot.slane %v11690, %v11697
  %v11700 = vunpack.c.l.s4 1966171168
  %v11701 = vunpack.c.0.s8 %v11700
  %v11702 = vlaneseq
  %v11703 = vshrl.u32 %v11702, 7
  %v11704 = vsub.s32 %v11701, %v11703
  %v11705 = vrot.slane %v11691, %v11704
  %v11706 = vcombine.low %v11698, %v11705
  %v11707 = vcombine.low %v8594, %v8608
  %v11708 = vcombine.low %v8616, %v8618
  %v11709 = vcombine.low %v8601, %v8615
  %v11710 = vcombine.low %v8617, %v8619
  %v11712 = vunpack.c.l.s4 1966171168
  %v11713 = vunpack.c.0.s8 %v11712
  %v11714 = vlaneseq
  %v11715 = vshrl.u32 %v11714, 7
  %v11716 = vsub.s32 %v11713, %v11715
  %v11717 = vrot.slane %v11707, %v11716
  %v11719 = vunpack.c.l.s4 1966171168
  %v11720 = vunpack.c.0.s8 %v11719
  %v11721 = vlaneseq
  %v11722 = vshrl.u32 %v11721, 7
  %v11723 = vsub.s32 %v11720, %v11722
  %v11724 = vrot.slane %v11708, %v11723
  %v11726 = vunpack.c.l.s4 1966171168
  %v11727 = vunpack.c.0.s8 %v11726
  %v11728 = vlaneseq
  %v11729 = vshrl.u32 %v11728, 7
  %v11730 = vsub.s32 %v11727, %v11729
  %v11731 = vrot.slane %v11709, %v11730
  %v11733 = vunpack.c.l.s4 1966171168
  %v11734 = vunpack.c.0.s8 %v11733
  %v11735 = vlaneseq
  %v11736 = vshrl.u32 %v11735, 7
  %v11737 = vsub.s32 %v11734, %v11736
  %v11738 = vrot.slane %v11710, %v11737
  %v11739 = vcombine.low %v11717, %v11724
  %v11740 = vcombine.low %v11731, %v11738
  %v11742 = vunpack.c.l.s4 1966171168
  %v11743 = vunpack.c.0.s8 %v11742
  %v11744 = vlaneseq
  %v11745 = vshrl.u32 %v11744, 7
  %v11746 = vsub.s32 %v11743, %v11745
  %v11747 = vrot.slane %v11739, %v11746
  %v11749 = vunpack.c.l.s4 1966171168
  %v11750 = vunpack.c.0.s8 %v11749
  %v11751 = vlaneseq
  %v11752 = vshrl.u32 %v11751, 7
  %v11753 = vsub.s32 %v11750, %v11752
  %v11754 = vrot.slane %v11740, %v11753
  %v11755 = vcombine.low %v11747, %v11754
  %v11756 = vcombine.low %v8643, %v8657
  %v11757 = vcombine.low %v8665, %v8667
  %v11758 = vcombine.low %v8650, %v8664
  %v11759 = vcombine.low %v8666, %v8668
  %v11761 = vunpack.c.l.s4 1966171168
  %v11762 = vunpack.c.0.s8 %v11761
  %v11763 = vlaneseq
  %v11764 = vshrl.u32 %v11763, 7
  %v11765 = vsub.s32 %v11762, %v11764
  %v11766 = vrot.slane %v11756, %v11765
  %v11768 = vunpack.c.l.s4 1966171168
  %v11769 = vunpack.c.0.s8 %v11768
  %v11770 = vlaneseq
  %v11771 = vshrl.u32 %v11770, 7
  %v11772 = vsub.s32 %v11769, %v11771
  %v11773 = vrot.slane %v11757, %v11772
  %v11775 = vunpack.c.l.s4 1966171168
  %v11776 = vunpack.c.0.s8 %v11775
  %v11777 = vlaneseq
  %v11778 = vshrl.u32 %v11777, 7
  %v11779 = vsub.s32 %v11776, %v11778
  %v11780 = vrot.slane %v11758, %v11779
  %v11782 = vunpack.c.l.s4 1966171168
  %v11783 = vunpack.c.0.s8 %v11782
  %v11784 = vlaneseq
  %v11785 = vshrl.u32 %v11784, 7
  %v11786 = vsub.s32 %v11783, %v11785
  %v11787 = vrot.slane %v11759, %v11786
  %v11788 = vcombine.low %v11766, %v11773
  %v11789 = vcombine.low %v11780, %v11787
  %v11791 = vunpack.c.l.s4 1966171168
  %v11792 = vunpack.c.0.s8 %v11791
  %v11793 = vlaneseq
  %v11794 = vshrl.u32 %v11793, 7
  %v11795 = vsub.s32 %v11792, %v11794
  %v11796 = vrot.slane %v11788, %v11795
  %v11798 = vunpack.c.l.s4 1966171168
  %v11799 = vunpack.c.0.s8 %v11798
  %v11800 = vlaneseq
  %v11801 = vshrl.u32 %v11800, 7
  %v11802 = vsub.s32 %v11799, %v11801
  %v11803 = vrot.slane %v11789, %v11802
  %v11804 = vcombine.low %v11796, %v11803
  %v11805 = vcombine.low %v8692, %v8706
  %v11806 = vcombine.low %v8714, %v8716
  %v11807 = vcombine.low %v8699, %v8713
  %v11808 = vcombine.low %v8715, %v8717
  %v11810 = vunpack.c.l.s4 1966171168
  %v11811 = vunpack.c.0.s8 %v11810
  %v11812 = vlaneseq
  %v11813 = vshrl.u32 %v11812, 7
  %v11814 = vsub.s32 %v11811, %v11813
  %v11815 = vrot.slane %v11805, %v11814
  %v11817 = vunpack.c.l.s4 1966171168
  %v11818 = vunpack.c.0.s8 %v11817
  %v11819 = vlaneseq
  %v11820 = vshrl.u32 %v11819, 7
  %v11821 = vsub.s32 %v11818, %v11820
  %v11822 = vrot.slane %v11806, %v11821
  %v11824 = vunpack.c.l.s4 1966171168
  %v11825 = vunpack.c.0.s8 %v11824
  %v11826 = vlaneseq
  %v11827 = vshrl.u32 %v11826, 7
  %v11828 = vsub.s32 %v11825, %v11827
  %v11829 = vrot.slane %v11807, %v11828
  %v11831 = vunpack.c.l.s4 1966171168
  %v11832 = vunpack.c.0.s8 %v11831
  %v11833 = vlaneseq
  %v11834 = vshrl.u32 %v11833, 7
  %v11835 = vsub.s32 %v11832, %v11834
  %v11836 = vrot.slane %v11808, %v11835
  %v11837 = vcombine.low %v11815, %v11822
  %v11838 = vcombine.low %v11829, %v11836
  %v11840 = vunpack.c.l.s4 1966171168
  %v11841 = vunpack.c.0.s8 %v11840
  %v11842 = vlaneseq
  %v11843 = vshrl.u32 %v11842, 7
  %v11844 = vsub.s32 %v11841, %v11843
  %v11845 = vrot.slane %v11837, %v11844
  %v11847 = vunpack.c.l.s4 1966171168
  %v11848 = vunpack.c.0.s8 %v11847
  %v11849 = vlaneseq
  %v11850 = vshrl.u32 %v11849, 7
  %v11851 = vsub.s32 %v11848, %v11850
  %v11852 = vrot.slane %v11838, %v11851
  %v11853 = vcombine.low %v11845, %v11852
  %v11854 = vcombine.low %v8741, %v8755
  %v11855 = vcombine.low %v8763, %v8765
  %v11856 = vcombine.low %v8748, %v8762
  %v11857 = vcombine.low %v8764, %v8766
  %v11859 = vunpack.c.l.s4 1966171168
  %v11860 = vunpack.c.0.s8 %v11859
  %v11861 = vlaneseq
  %v11862 = vshrl.u32 %v11861, 7
  %v11863 = vsub.s32 %v11860, %v11862
  %v11864 = vrot.slane %v11854, %v11863
  %v11866 = vunpack.c.l.s4 1966171168
  %v11867 = vunpack.c.0.s8 %v11866
  %v11868 = vlaneseq
  %v11869 = vshrl.u32 %v11868, 7
  %v11870 = vsub.s32 %v11867, %v11869
  %v11871 = vrot.slane %v11855, %v11870
  %v11873 = vunpack.c.l.s4 1966171168
  %v11874 = vunpack.c.0.s8 %v11873
  %v11875 = vlaneseq
  %v11876 = vshrl.u32 %v11875, 7
  %v11877 = vsub.s32 %v11874, %v11876
  %v11878 = vrot.slane %v11856, %v11877
  %v11880 = vunpack.c.l.s4 1966171168
  %v11881 = vunpack.c.0.s8 %v11880
  %v11882 = vlaneseq
  %v11883 = vshrl.u32 %v11882, 7
  %v11884 = vsub.s32 %v11881, %v11883
  %v11885 = vrot.slane %v11857, %v11884
  %v11886 = vcombine.low %v11864, %v11871
  %v11887 = vcombine.low %v11878, %v11885
  %v11889 = vunpack.c.l.s4 1966171168
  %v11890 = vunpack.c.0.s8 %v11889
  %v11891 = vlaneseq
  %v11892 = vshrl.u32 %v11891, 7
  %v11893 = vsub.s32 %v11890, %v11892
  %v11894 = vrot.slane %v11886, %v11893
  %v11896 = vunpack.c.l.s4 1966171168
  %v11897 = vunpack.c.0.s8 %v11896
  %v11898 = vlaneseq
  %v11899 = vshrl.u32 %v11898, 7
  %v11900 = vsub.s32 %v11897, %v11899
  %v11901 = vrot.slane %v11887, %v11900
  %v11902 = vcombine.low %v11894, %v11901
  %v11903 = vcombine.low %v8790, %v8804
  %v11904 = vcombine.low %v8812, %v8814
  %v11905 = vcombine.low %v8797, %v8811
  %v11906 = vcombine.low %v8813, %v8815
  %v11908 = vunpack.c.l.s4 1966171168
  %v11909 = vunpack.c.0.s8 %v11908
  %v11910 = vlaneseq
  %v11911 = vshrl.u32 %v11910, 7
  %v11912 = vsub.s32 %v11909, %v11911
  %v11913 = vrot.slane %v11903, %v11912
  %v11915 = vunpack.c.l.s4 1966171168
  %v11916 = vunpack.c.0.s8 %v11915
  %v11917 = vlaneseq
  %v11918 = vshrl.u32 %v11917, 7
  %v11919 = vsub.s32 %v11916, %v11918
  %v11920 = vrot.slane %v11904, %v11919
  %v11922 = vunpack.c.l.s4 1966171168
  %v11923 = vunpack.c.0.s8 %v11922
  %v11924 = vlaneseq
  %v11925 = vshrl.u32 %v11924, 7
  %v11926 = vsub.s32 %v11923, %v11925
  %v11927 = vrot.slane %v11905, %v11926
  %v11929 = vunpack.c.l.s4 1966171168
  %v11930 = vunpack.c.0.s8 %v11929
  %v11931 = vlaneseq
  %v11932 = vshrl.u32 %v11931, 7
  %v11933 = vsub.s32 %v11930, %v11932
  %v11934 = vrot.slane %v11906, %v11933
  %v11935 = vcombine.low %v11913, %v11920
  %v11936 = vcombine.low %v11927, %v11934
  %v11938 = vunpack.c.l.s4 1966171168
  %v11939 = vunpack.c.0.s8 %v11938
  %v11940 = vlaneseq
  %v11941 = vshrl.u32 %v11940, 7
  %v11942 = vsub.s32 %v11939, %v11941
  %v11943 = vrot.slane %v11935, %v11942
  %v11945 = vunpack.c.l.s4 1966171168
  %v11946 = vunpack.c.0.s8 %v11945
  %v11947 = vlaneseq
  %v11948 = vshrl.u32 %v11947, 7
  %v11949 = vsub.s32 %v11946, %v11948
  %v11950 = vrot.slane %v11936, %v11949
  %v11951 = vcombine.low %v11943, %v11950
  %v11952 = vcombine.low %v8839, %v8853
  %v11953 = vcombine.low %v8861, %v8863
  %v11954 = vcombine.low %v8846, %v8860
  %v11955 = vcombine.low %v8862, %v8864
  %v11957 = vunpack.c.l.s4 1966171168
  %v11958 = vunpack.c.0.s8 %v11957
  %v11959 = vlaneseq
  %v11960 = vshrl.u32 %v11959, 7
  %v11961 = vsub.s32 %v11958, %v11960
  %v11962 = vrot.slane %v11952, %v11961
  %v11964 = vunpack.c.l.s4 1966171168
  %v11965 = vunpack.c.0.s8 %v11964
  %v11966 = vlaneseq
  %v11967 = vshrl.u32 %v11966, 7
  %v11968 = vsub.s32 %v11965, %v11967
  %v11969 = vrot.slane %v11953, %v11968
  %v11971 = vunpack.c.l.s4 1966171168
  %v11972 = vunpack.c.0.s8 %v11971
  %v11973 = vlaneseq
  %v11974 = vshrl.u32 %v11973, 7
  %v11975 = vsub.s32 %v11972, %v11974
  %v11976 = vrot.slane %v11954, %v11975
  %v11978 = vunpack.c.l.s4 1966171168
  %v11979 = vunpack.c.0.s8 %v11978
  %v11980 = vlaneseq
  %v11981 = vshrl.u32 %v11980, 7
  %v11982 = vsub.s32 %v11979, %v11981
  %v11983 = vrot.slane %v11955, %v11982
  %v11984 = vcombine.low %v11962, %v11969
  %v11985 = vcombine.low %v11976, %v11983
  %v11987 = vunpack.c.l.s4 1966171168
  %v11988 = vunpack.c.0.s8 %v11987
  %v11989 = vlaneseq
  %v11990 = vshrl.u32 %v11989, 7
  %v11991 = vsub.s32 %v11988, %v11990
  %v11992 = vrot.slane %v11984, %v11991
  %v11994 = vunpack.c.l.s4 1966171168
  %v11995 = vunpack.c.0.s8 %v11994
  %v11996 = vlaneseq
  %v11997 = vshrl.u32 %v11996, 7
  %v11998 = vsub.s32 %v11995, %v11997
  %v11999 = vrot.slane %v11985, %v11998
  %v12000 = vcombine.low %v11992, %v11999
  %v12001 = vcombine.low %v8888, %v8902
  %v12002 = vcombine.low %v8910, %v8912
  %v12003 = vcombine.low %v8895, %v8909
  %v12004 = vcombine.low %v8911, %v8913
  %v12006 = vunpack.c.l.s4 1966171168
  %v12007 = vunpack.c.0.s8 %v12006
  %v12008 = vlaneseq
  %v12009 = vshrl.u32 %v12008, 7
  %v12010 = vsub.s32 %v12007, %v12009
  %v12011 = vrot.slane %v12001, %v12010
  %v12013 = vunpack.c.l.s4 1966171168
  %v12014 = vunpack.c.0.s8 %v12013
  %v12015 = vlaneseq
  %v12016 = vshrl.u32 %v12015, 7
  %v12017 = vsub.s32 %v12014, %v12016
  %v12018 = vrot.slane %v12002, %v12017
  %v12020 = vunpack.c.l.s4 1966171168
  %v12021 = vunpack.c.0.s8 %v12020
  %v12022 = vlaneseq
  %v12023 = vshrl.u32 %v12022, 7
  %v12024 = vsub.s32 %v12021, %v12023
  %v12025 = vrot.slane %v12003, %v12024
  %v12027 = vunpack.c.l.s4 1966171168
  %v12028 = vunpack.c.0.s8 %v12027
  %v12029 = vlaneseq
  %v12030 = vshrl.u32 %v12029, 7
  %v12031 = vsub.s32 %v12028, %v12030
  %v12032 = vrot.slane %v12004, %v12031
  %v12033 = vcombine.low %v12011, %v12018
  %v12034 = vcombine.low %v12025, %v12032
  %v12036 = vunpack.c.l.s4 1966171168
  %v12037 = vunpack.c.0.s8 %v12036
  %v12038 = vlaneseq
  %v12039 = vshrl.u32 %v12038, 7
  %v12040 = vsub.s32 %v12037, %v12039
  %v12041 = vrot.slane %v12033, %v12040
  %v12043 = vunpack.c.l.s4 1966171168
  %v12044 = vunpack.c.0.s8 %v12043
  %v12045 = vlaneseq
  %v12046 = vshrl.u32 %v12045, 7
  %v12047 = vsub.s32 %v12044, %v12046
  %v12048 = vrot.slane %v12034, %v12047
  %v12049 = vcombine.low %v12041, %v12048
  %v12050 = vcombine.low %v8937, %v8951
  %v12051 = vcombine.low %v8959, %v8961
  %v12052 = vcombine.low %v8944, %v8958
  %v12053 = vcombine.low %v8960, %v8962
  %v12055 = vunpack.c.l.s4 1966171168
  %v12056 = vunpack.c.0.s8 %v12055
  %v12057 = vlaneseq
  %v12058 = vshrl.u32 %v12057, 7
  %v12059 = vsub.s32 %v12056, %v12058
  %v12060 = vrot.slane %v12050, %v12059
  %v12062 = vunpack.c.l.s4 1966171168
  %v12063 = vunpack.c.0.s8 %v12062
  %v12064 = vlaneseq
  %v12065 = vshrl.u32 %v12064, 7
  %v12066 = vsub.s32 %v12063, %v12065
  %v12067 = vrot.slane %v12051, %v12066
  %v12069 = vunpack.c.l.s4 1966171168
  %v12070 = vunpack.c.0.s8 %v12069
  %v12071 = vlaneseq
  %v12072 = vshrl.u32 %v12071, 7
  %v12073 = vsub.s32 %v12070, %v12072
  %v12074 = vrot.slane %v12052, %v12073
  %v12076 = vunpack.c.l.s4 1966171168
  %v12077 = vunpack.c.0.s8 %v12076
  %v12078 = vlaneseq
  %v12079 = vshrl.u32 %v12078, 7
  %v12080 = vsub.s32 %v12077, %v12079
  %v12081 = vrot.slane %v12053, %v12080
  %v12082 = vcombine.low %v12060, %v12067
  %v12083 = vcombine.low %v12074, %v12081
  %v12085 = vunpack.c.l.s4 1966171168
  %v12086 = vunpack.c.0.s8 %v12085
  %v12087 = vlaneseq
  %v12088 = vshrl.u32 %v12087, 7
  %v12089 = vsub.s32 %v12086, %v12088
  %v12090 = vrot.slane %v12082, %v12089
  %v12092 = vunpack.c.l.s4 1966171168
  %v12093 = vunpack.c.0.s8 %v12092
  %v12094 = vlaneseq
  %v12095 = vshrl.u32 %v12094, 7
  %v12096 = vsub.s32 %v12093, %v12095
  %v12097 = vrot.slane %v12083, %v12096
  %v12098 = vcombine.low %v12090, %v12097
  %v12099 = vcombine.low %v8986, %v9000
  %v12100 = vcombine.low %v9008, %v9010
  %v12101 = vcombine.low %v8993, %v9007
  %v12102 = vcombine.low %v9009, %v9011
  %v12104 = vunpack.c.l.s4 1966171168
  %v12105 = vunpack.c.0.s8 %v12104
  %v12106 = vlaneseq
  %v12107 = vshrl.u32 %v12106, 7
  %v12108 = vsub.s32 %v12105, %v12107
  %v12109 = vrot.slane %v12099, %v12108
  %v12111 = vunpack.c.l.s4 1966171168
  %v12112 = vunpack.c.0.s8 %v12111
  %v12113 = vlaneseq
  %v12114 = vshrl.u32 %v12113, 7
  %v12115 = vsub.s32 %v12112, %v12114
  %v12116 = vrot.slane %v12100, %v12115
  %v12118 = vunpack.c.l.s4 1966171168
  %v12119 = vunpack.c.0.s8 %v12118
  %v12120 = vlaneseq
  %v12121 = vshrl.u32 %v12120, 7
  %v12122 = vsub.s32 %v12119, %v12121
  %v12123 = vrot.slane %v12101, %v12122
  %v12125 = vunpack.c.l.s4 1966171168
  %v12126 = vunpack.c.0.s8 %v12125
  %v12127 = vlaneseq
  %v12128 = vshrl.u32 %v12127, 7
  %v12129 = vsub.s32 %v12126, %v12128
  %v12130 = vrot.slane %v12102, %v12129
  %v12131 = vcombine.low %v12109, %v12116
  %v12132 = vcombine.low %v12123, %v12130
  %v12134 = vunpack.c.l.s4 1966171168
  %v12135 = vunpack.c.0.s8 %v12134
  %v12136 = vlaneseq
  %v12137 = vshrl.u32 %v12136, 7
  %v12138 = vsub.s32 %v12135, %v12137
  %v12139 = vrot.slane %v12131, %v12138
  %v12141 = vunpack.c.l.s4 1966171168
  %v12142 = vunpack.c.0.s8 %v12141
  %v12143 = vlaneseq
  %v12144 = vshrl.u32 %v12143, 7
  %v12145 = vsub.s32 %v12142, %v12144
  %v12146 = vrot.slane %v12132, %v12145
  %v12147 = vcombine.low %v12139, %v12146
  %v12148 = vcombine.low %v9035, %v9049
  %v12149 = vcombine.low %v9057, %v9059
  %v12150 = vcombine.low %v9042, %v9056
  %v12151 = vcombine.low %v9058, %v9060
  %v12153 = vunpack.c.l.s4 1966171168
  %v12154 = vunpack.c.0.s8 %v12153
  %v12155 = vlaneseq
  %v12156 = vshrl.u32 %v12155, 7
  %v12157 = vsub.s32 %v12154, %v12156
  %v12158 = vrot.slane %v12148, %v12157
  %v12160 = vunpack.c.l.s4 1966171168
  %v12161 = vunpack.c.0.s8 %v12160
  %v12162 = vlaneseq
  %v12163 = vshrl.u32 %v12162, 7
  %v12164 = vsub.s32 %v12161, %v12163
  %v12165 = vrot.slane %v12149, %v12164
  %v12167 = vunpack.c.l.s4 1966171168
  %v12168 = vunpack.c.0.s8 %v12167
  %v12169 = vlaneseq
  %v12170 = vshrl.u32 %v12169, 7
  %v12171 = vsub.s32 %v12168, %v12170
  %v12172 = vrot.slane %v12150, %v12171
  %v12174 = vunpack.c.l.s4 1966171168
  %v12175 = vunpack.c.0.s8 %v12174
  %v12176 = vlaneseq
  %v12177 = vshrl.u32 %v12176, 7
  %v12178 = vsub.s32 %v12175, %v12177
  %v12179 = vrot.slane %v12151, %v12178
  %v12180 = vcombine.low %v12158, %v12165
  %v12181 = vcombine.low %v12172, %v12179
  %v12183 = vunpack.c.l.s4 1966171168
  %v12184 = vunpack.c.0.s8 %v12183
  %v12185 = vlaneseq
  %v12186 = vshrl.u32 %v12185, 7
  %v12187 = vsub.s32 %v12184, %v12186
  %v12188 = vrot.slane %v12180, %v12187
  %v12190 = vunpack.c.l.s4 1966171168
  %v12191 = vunpack.c.0.s8 %v12190
  %v12192 = vlaneseq
  %v12193 = vshrl.u32 %v12192, 7
  %v12194 = vsub.s32 %v12191, %v12193
  %v12195 = vrot.slane %v12181, %v12194
  %v12196 = vcombine.low %v12188, %v12195
  %v12197 = vcombine.low %v9084, %v9098
  %v12198 = vcombine.low %v9106, %v9108
  %v12199 = vcombine.low %v9091, %v9105
  %v12200 = vcombine.low %v9107, %v9109
  %v12202 = vunpack.c.l.s4 1966171168
  %v12203 = vunpack.c.0.s8 %v12202
  %v12204 = vlaneseq
  %v12205 = vshrl.u32 %v12204, 7
  %v12206 = vsub.s32 %v12203, %v12205
  %v12207 = vrot.slane %v12197, %v12206
  %v12209 = vunpack.c.l.s4 1966171168
  %v12210 = vunpack.c.0.s8 %v12209
  %v12211 = vlaneseq
  %v12212 = vshrl.u32 %v12211, 7
  %v12213 = vsub.s32 %v12210, %v12212
  %v12214 = vrot.slane %v12198, %v12213
  %v12216 = vunpack.c.l.s4 1966171168
  %v12217 = vunpack.c.0.s8 %v12216
  %v12218 = vlaneseq
  %v12219 = vshrl.u32 %v12218, 7
  %v12220 = vsub.s32 %v12217, %v12219
  %v12221 = vrot.slane %v12199, %v12220
  %v12223 = vunpack.c.l.s4 1966171168
  %v12224 = vunpack.c.0.s8 %v12223
  %v12225 = vlaneseq
  %v12226 = vshrl.u32 %v12225, 7
  %v12227 = vsub.s32 %v12224, %v12226
  %v12228 = vrot.slane %v12200, %v12227
  %v12229 = vcombine.low %v12207, %v12214
  %v12230 = vcombine.low %v12221, %v12228
  %v12232 = vunpack.c.l.s4 1966171168
  %v12233 = vunpack.c.0.s8 %v12232
  %v12234 = vlaneseq
  %v12235 = vshrl.u32 %v12234, 7
  %v12236 = vsub.s32 %v12233, %v12235
  %v12237 = vrot.slane %v12229, %v12236
  %v12239 = vunpack.c.l.s4 1966171168
  %v12240 = vunpack.c.0.s8 %v12239
  %v12241 = vlaneseq
  %v12242 = vshrl.u32 %v12241, 7
  %v12243 = vsub.s32 %v12240, %v12242
  %v12244 = vrot.slane %v12230, %v12243
  %v12245 = vcombine.low %v12237, %v12244
  %v12246 = vcombine.low %v9133, %v9147
  %v12247 = vcombine.low %v9155, %v9157
  %v12248 = vcombine.low %v9140, %v9154
  %v12249 = vcombine.low %v9156, %v9158
  %v12251 = vunpack.c.l.s4 1966171168
  %v12252 = vunpack.c.0.s8 %v12251
  %v12253 = vlaneseq
  %v12254 = vshrl.u32 %v12253, 7
  %v12255 = vsub.s32 %v12252, %v12254
  %v12256 = vrot.slane %v12246, %v12255
  %v12258 = vunpack.c.l.s4 1966171168
  %v12259 = vunpack.c.0.s8 %v12258
  %v12260 = vlaneseq
  %v12261 = vshrl.u32 %v12260, 7
  %v12262 = vsub.s32 %v12259, %v12261
  %v12263 = vrot.slane %v12247, %v12262
  %v12265 = vunpack.c.l.s4 1966171168
  %v12266 = vunpack.c.0.s8 %v12265
  %v12267 = vlaneseq
  %v12268 = vshrl.u32 %v12267, 7
  %v12269 = vsub.s32 %v12266, %v12268
  %v12270 = vrot.slane %v12248, %v12269
  %v12272 = vunpack.c.l.s4 1966171168
  %v12273 = vunpack.c.0.s8 %v12272
  %v12274 = vlaneseq
  %v12275 = vshrl.u32 %v12274, 7
  %v12276 = vsub.s32 %v12273, %v12275
  %v12277 = vrot.slane %v12249, %v12276
  %v12278 = vcombine.low %v12256, %v12263
  %v12279 = vcombine.low %v12270, %v12277
  %v12281 = vunpack.c.l.s4 1966171168
  %v12282 = vunpack.c.0.s8 %v12281
  %v12283 = vlaneseq
  %v12284 = vshrl.u32 %v12283, 7
  %v12285 = vsub.s32 %v12282, %v12284
  %v12286 = vrot.slane %v12278, %v12285
  %v12288 = vunpack.c.l.s4 1966171168
  %v12289 = vunpack.c.0.s8 %v12288
  %v12290 = vlaneseq
  %v12291 = vshrl.u32 %v12290, 7
  %v12292 = vsub.s32 %v12289, %v12291
  %v12293 = vrot.slane %v12279, %v12292
  %v12294 = vcombine.low %v12286, %v12293
  %v12295 = vcombine.low %v9182, %v9196
  %v12296 = vcombine.low %v9204, %v9206
  %v12297 = vcombine.low %v9189, %v9203
  %v12298 = vcombine.low %v9205, %v9207
  %v12300 = vunpack.c.l.s4 1966171168
  %v12301 = vunpack.c.0.s8 %v12300
  %v12302 = vlaneseq
  %v12303 = vshrl.u32 %v12302, 7
  %v12304 = vsub.s32 %v12301, %v12303
  %v12305 = vrot.slane %v12295, %v12304
  %v12307 = vunpack.c.l.s4 1966171168
  %v12308 = vunpack.c.0.s8 %v12307
  %v12309 = vlaneseq
  %v12310 = vshrl.u32 %v12309, 7
  %v12311 = vsub.s32 %v12308, %v12310
  %v12312 = vrot.slane %v12296, %v12311
  %v12314 = vunpack.c.l.s4 1966171168
  %v12315 = vunpack.c.0.s8 %v12314
  %v12316 = vlaneseq
  %v12317 = vshrl.u32 %v12316, 7
  %v12318 = vsub.s32 %v12315, %v12317
  %v12319 = vrot.slane %v12297, %v12318
  %v12321 = vunpack.c.l.s4 1966171168
  %v12322 = vunpack.c.0.s8 %v12321
  %v12323 = vlaneseq
  %v12324 = vshrl.u32 %v12323, 7
  %v12325 = vsub.s32 %v12322, %v12324
  %v12326 = vrot.slane %v12298, %v12325
  %v12327 = vcombine.low %v12305, %v12312
  %v12328 = vcombine.low %v12319, %v12326
  %v12330 = vunpack.c.l.s4 1966171168
  %v12331 = vunpack.c.0.s8 %v12330
  %v12332 = vlaneseq
  %v12333 = vshrl.u32 %v12332, 7
  %v12334 = vsub.s32 %v12331, %v12333
  %v12335 = vrot.slane %v12327, %v12334
  %v12337 = vunpack.c.l.s4 1966171168
  %v12338 = vunpack.c.0.s8 %v12337
  %v12339 = vlaneseq
  %v12340 = vshrl.u32 %v12339, 7
  %v12341 = vsub.s32 %v12338, %v12340
  %v12342 = vrot.slane %v12328, %v12341
  %v12343 = vcombine.low %v12335, %v12342
  %v12344 = vcombine.low %v9231, %v9245
  %v12345 = vcombine.low %v9253, %v9255
  %v12346 = vcombine.low %v9238, %v9252
  %v12347 = vcombine.low %v9254, %v9256
  %v12349 = vunpack.c.l.s4 1966171168
  %v12350 = vunpack.c.0.s8 %v12349
  %v12351 = vlaneseq
  %v12352 = vshrl.u32 %v12351, 7
  %v12353 = vsub.s32 %v12350, %v12352
  %v12354 = vrot.slane %v12344, %v12353
  %v12356 = vunpack.c.l.s4 1966171168
  %v12357 = vunpack.c.0.s8 %v12356
  %v12358 = vlaneseq
  %v12359 = vshrl.u32 %v12358, 7
  %v12360 = vsub.s32 %v12357, %v12359
  %v12361 = vrot.slane %v12345, %v12360
  %v12363 = vunpack.c.l.s4 1966171168
  %v12364 = vunpack.c.0.s8 %v12363
  %v12365 = vlaneseq
  %v12366 = vshrl.u32 %v12365, 7
  %v12367 = vsub.s32 %v12364, %v12366
  %v12368 = vrot.slane %v12346, %v12367
  %v12370 = vunpack.c.l.s4 1966171168
  %v12371 = vunpack.c.0.s8 %v12370
  %v12372 = vlaneseq
  %v12373 = vshrl.u32 %v12372, 7
  %v12374 = vsub.s32 %v12371, %v12373
  %v12375 = vrot.slane %v12347, %v12374
  %v12376 = vcombine.low %v12354, %v12361
  %v12377 = vcombine.low %v12368, %v12375
  %v12379 = vunpack.c.l.s4 1966171168
  %v12380 = vunpack.c.0.s8 %v12379
  %v12381 = vlaneseq
  %v12382 = vshrl.u32 %v12381, 7
  %v12383 = vsub.s32 %v12380, %v12382
  %v12384 = vrot.slane %v12376, %v12383
  %v12386 = vunpack.c.l.s4 1966171168
  %v12387 = vunpack.c.0.s8 %v12386
  %v12388 = vlaneseq
  %v12389 = vshrl.u32 %v12388, 7
  %v12390 = vsub.s32 %v12387, %v12389
  %v12391 = vrot.slane %v12377, %v12390
  %v12392 = vcombine.low %v12384, %v12391
  %v12393 = vcombine.low %v9280, %v9294
  %v12394 = vcombine.low %v9302, %v9304
  %v12395 = vcombine.low %v9287, %v9301
  %v12396 = vcombine.low %v9303, %v9305
  %v12398 = vunpack.c.l.s4 1966171168
  %v12399 = vunpack.c.0.s8 %v12398
  %v12400 = vlaneseq
  %v12401 = vshrl.u32 %v12400, 7
  %v12402 = vsub.s32 %v12399, %v12401
  %v12403 = vrot.slane %v12393, %v12402
  %v12405 = vunpack.c.l.s4 1966171168
  %v12406 = vunpack.c.0.s8 %v12405
  %v12407 = vlaneseq
  %v12408 = vshrl.u32 %v12407, 7
  %v12409 = vsub.s32 %v12406, %v12408
  %v12410 = vrot.slane %v12394, %v12409
  %v12412 = vunpack.c.l.s4 1966171168
  %v12413 = vunpack.c.0.s8 %v12412
  %v12414 = vlaneseq
  %v12415 = vshrl.u32 %v12414, 7
  %v12416 = vsub.s32 %v12413, %v12415
  %v12417 = vrot.slane %v12395, %v12416
  %v12419 = vunpack.c.l.s4 1966171168
  %v12420 = vunpack.c.0.s8 %v12419
  %v12421 = vlaneseq
  %v12422 = vshrl.u32 %v12421, 7
  %v12423 = vsub.s32 %v12420, %v12422
  %v12424 = vrot.slane %v12396, %v12423
  %v12425 = vcombine.low %v12403, %v12410
  %v12426 = vcombine.low %v12417, %v12424
  %v12428 = vunpack.c.l.s4 1966171168
  %v12429 = vunpack.c.0.s8 %v12428
  %v12430 = vlaneseq
  %v12431 = vshrl.u32 %v12430, 7
  %v12432 = vsub.s32 %v12429, %v12431
  %v12433 = vrot.slane %v12425, %v12432
  %v12435 = vunpack.c.l.s4 1966171168
  %v12436 = vunpack.c.0.s8 %v12435
  %v12437 = vlaneseq
  %v12438 = vshrl.u32 %v12437, 7
  %v12439 = vsub.s32 %v12436, %v12438
  %v12440 = vrot.slane %v12426, %v12439
  %v12441 = vcombine.low %v12433, %v12440
  %v12442 = vcombine.low %v9329, %v9343
  %v12443 = vcombine.low %v9351, %v9353
  %v12444 = vcombine.low %v9336, %v9350
  %v12445 = vcombine.low %v9352, %v9354
  %v12447 = vunpack.c.l.s4 1966171168
  %v12448 = vunpack.c.0.s8 %v12447
  %v12449 = vlaneseq
  %v12450 = vshrl.u32 %v12449, 7
  %v12451 = vsub.s32 %v12448, %v12450
  %v12452 = vrot.slane %v12442, %v12451
  %v12454 = vunpack.c.l.s4 1966171168
  %v12455 = vunpack.c.0.s8 %v12454
  %v12456 = vlaneseq
  %v12457 = vshrl.u32 %v12456, 7
  %v12458 = vsub.s32 %v12455, %v12457
  %v12459 = vrot.slane %v12443, %v12458
  %v12461 = vunpack.c.l.s4 1966171168
  %v12462 = vunpack.c.0.s8 %v12461
  %v12463 = vlaneseq
  %v12464 = vshrl.u32 %v12463, 7
  %v12465 = vsub.s32 %v12462, %v12464
  %v12466 = vrot.slane %v12444, %v12465
  %v12468 = vunpack.c.l.s4 1966171168
  %v12469 = vunpack.c.0.s8 %v12468
  %v12470 = vlaneseq
  %v12471 = vshrl.u32 %v12470, 7
  %v12472 = vsub.s32 %v12469, %v12471
  %v12473 = vrot.slane %v12445, %v12472
  %v12474 = vcombine.low %v12452, %v12459
  %v12475 = vcombine.low %v12466, %v12473
  %v12477 = vunpack.c.l.s4 1966171168
  %v12478 = vunpack.c.0.s8 %v12477
  %v12479 = vlaneseq
  %v12480 = vshrl.u32 %v12479, 7
  %v12481 = vsub.s32 %v12478, %v12480
  %v12482 = vrot.slane %v12474, %v12481
  %v12484 = vunpack.c.l.s4 1966171168
  %v12485 = vunpack.c.0.s8 %v12484
  %v12486 = vlaneseq
  %v12487 = vshrl.u32 %v12486, 7
  %v12488 = vsub.s32 %v12485, %v12487
  %v12489 = vrot.slane %v12475, %v12488
  %v12490 = vcombine.low %v12482, %v12489
  %v12491 = vcombine.low %v9378, %v9392
  %v12492 = vcombine.low %v9400, %v9402
  %v12493 = vcombine.low %v9385, %v9399
  %v12494 = vcombine.low %v9401, %v9403
  %v12496 = vunpack.c.l.s4 1966171168
  %v12497 = vunpack.c.0.s8 %v12496
  %v12498 = vlaneseq
  %v12499 = vshrl.u32 %v12498, 7
  %v12500 = vsub.s32 %v12497, %v12499
  %v12501 = vrot.slane %v12491, %v12500
  %v12503 = vunpack.c.l.s4 1966171168
  %v12504 = vunpack.c.0.s8 %v12503
  %v12505 = vlaneseq
  %v12506 = vshrl.u32 %v12505, 7
  %v12507 = vsub.s32 %v12504, %v12506
  %v12508 = vrot.slane %v12492, %v12507
  %v12510 = vunpack.c.l.s4 1966171168
  %v12511 = vunpack.c.0.s8 %v12510
  %v12512 = vlaneseq
  %v12513 = vshrl.u32 %v12512, 7
  %v12514 = vsub.s32 %v12511, %v12513
  %v12515 = vrot.slane %v12493, %v12514
  %v12517 = vunpack.c.l.s4 1966171168
  %v12518 = vunpack.c.0.s8 %v12517
  %v12519 = vlaneseq
  %v12520 = vshrl.u32 %v12519, 7
  %v12521 = vsub.s32 %v12518, %v12520
  %v12522 = vrot.slane %v12494, %v12521
  %v12523 = vcombine.low %v12501, %v12508
  %v12524 = vcombine.low %v12515, %v12522
  %v12526 = vunpack.c.l.s4 1966171168
  %v12527 = vunpack.c.0.s8 %v12526
  %v12528 = vlaneseq
  %v12529 = vshrl.u32 %v12528, 7
  %v12530 = vsub.s32 %v12527, %v12529
  %v12531 = vrot.slane %v12523, %v12530
  %v12533 = vunpack.c.l.s4 1966171168
  %v12534 = vunpack.c.0.s8 %v12533
  %v12535 = vlaneseq
  %v12536 = vshrl.u32 %v12535, 7
  %v12537 = vsub.s32 %v12534, %v12536
  %v12538 = vrot.slane %v12524, %v12537
  %v12539 = vcombine.low %v12531, %v12538
  %v12540 = vcombine.low %v9427, %v9441
  %v12541 = vcombine.low %v9449, %v9451
  %v12542 = vcombine.low %v9434, %v9448
  %v12543 = vcombine.low %v9450, %v9452
  %v12545 = vunpack.c.l.s4 1966171168
  %v12546 = vunpack.c.0.s8 %v12545
  %v12547 = vlaneseq
  %v12548 = vshrl.u32 %v12547, 7
  %v12549 = vsub.s32 %v12546, %v12548
  %v12550 = vrot.slane %v12540, %v12549
  %v12552 = vunpack.c.l.s4 1966171168
  %v12553 = vunpack.c.0.s8 %v12552
  %v12554 = vlaneseq
  %v12555 = vshrl.u32 %v12554, 7
  %v12556 = vsub.s32 %v12553, %v12555
  %v12557 = vrot.slane %v12541, %v12556
  %v12559 = vunpack.c.l.s4 1966171168
  %v12560 = vunpack.c.0.s8 %v12559
  %v12561 = vlaneseq
  %v12562 = vshrl.u32 %v12561, 7
  %v12563 = vsub.s32 %v12560, %v12562
  %v12564 = vrot.slane %v12542, %v12563
  %v12566 = vunpack.c.l.s4 1966171168
  %v12567 = vunpack.c.0.s8 %v12566
  %v12568 = vlaneseq
  %v12569 = vshrl.u32 %v12568, 7
  %v12570 = vsub.s32 %v12567, %v12569
  %v12571 = vrot.slane %v12543, %v12570
  %v12572 = vcombine.low %v12550, %v12557
  %v12573 = vcombine.low %v12564, %v12571
  %v12575 = vunpack.c.l.s4 1966171168
  %v12576 = vunpack.c.0.s8 %v12575
  %v12577 = vlaneseq
  %v12578 = vshrl.u32 %v12577, 7
  %v12579 = vsub.s32 %v12576, %v12578
  %v12580 = vrot.slane %v12572, %v12579
  %v12582 = vunpack.c.l.s4 1966171168
  %v12583 = vunpack.c.0.s8 %v12582
  %v12584 = vlaneseq
  %v12585 = vshrl.u32 %v12584, 7
  %v12586 = vsub.s32 %v12583, %v12585
  %v12587 = vrot.slane %v12573, %v12586
  %v12588 = vcombine.low %v12580, %v12587
  %v12589 = vcombine.low %v9476, %v9490
  %v12590 = vcombine.low %v9498, %v9500
  %v12591 = vcombine.low %v9483, %v9497
  %v12592 = vcombine.low %v9499, %v9501
  %v12594 = vunpack.c.l.s4 1966171168
  %v12595 = vunpack.c.0.s8 %v12594
  %v12596 = vlaneseq
  %v12597 = vshrl.u32 %v12596, 7
  %v12598 = vsub.s32 %v12595, %v12597
  %v12599 = vrot.slane %v12589, %v12598
  %v12601 = vunpack.c.l.s4 1966171168
  %v12602 = vunpack.c.0.s8 %v12601
  %v12603 = vlaneseq
  %v12604 = vshrl.u32 %v12603, 7
  %v12605 = vsub.s32 %v12602, %v12604
  %v12606 = vrot.slane %v12590, %v12605
  %v12608 = vunpack.c.l.s4 1966171168
  %v12609 = vunpack.c.0.s8 %v12608
  %v12610 = vlaneseq
  %v12611 = vshrl.u32 %v12610, 7
  %v12612 = vsub.s32 %v12609, %v12611
  %v12613 = vrot.slane %v12591, %v12612
  %v12615 = vunpack.c.l.s4 1966171168
  %v12616 = vunpack.c.0.s8 %v12615
  %v12617 = vlaneseq
  %v12618 = vshrl.u32 %v12617, 7
  %v12619 = vsub.s32 %v12616, %v12618
  %v12620 = vrot.slane %v12592, %v12619
  %v12621 = vcombine.low %v12599, %v12606
  %v12622 = vcombine.low %v12613, %v12620
  %v12624 = vunpack.c.l.s4 1966171168
  %v12625 = vunpack.c.0.s8 %v12624
  %v12626 = vlaneseq
  %v12627 = vshrl.u32 %v12626, 7
  %v12628 = vsub.s32 %v12625, %v12627
  %v12629 = vrot.slane %v12621, %v12628
  %v12631 = vunpack.c.l.s4 1966171168
  %v12632 = vunpack.c.0.s8 %v12631
  %v12633 = vlaneseq
  %v12634 = vshrl.u32 %v12633, 7
  %v12635 = vsub.s32 %v12632, %v12634
  %v12636 = vrot.slane %v12622, %v12635
  %v12637 = vcombine.low %v12629, %v12636
  %v12638 = vcombine.low %v9525, %v9539
  %v12639 = vcombine.low %v9547, %v9549
  %v12640 = vcombine.low %v9532, %v9546
  %v12641 = vcombine.low %v9548, %v9550
  %v12643 = vunpack.c.l.s4 1966171168
  %v12644 = vunpack.c.0.s8 %v12643
  %v12645 = vlaneseq
  %v12646 = vshrl.u32 %v12645, 7
  %v12647 = vsub.s32 %v12644, %v12646
  %v12648 = vrot.slane %v12638, %v12647
  %v12650 = vunpack.c.l.s4 1966171168
  %v12651 = vunpack.c.0.s8 %v12650
  %v12652 = vlaneseq
  %v12653 = vshrl.u32 %v12652, 7
  %v12654 = vsub.s32 %v12651, %v12653
  %v12655 = vrot.slane %v12639, %v12654
  %v12657 = vunpack.c.l.s4 1966171168
  %v12658 = vunpack.c.0.s8 %v12657
  %v12659 = vlaneseq
  %v12660 = vshrl.u32 %v12659, 7
  %v12661 = vsub.s32 %v12658, %v12660
  %v12662 = vrot.slane %v12640, %v12661
  %v12664 = vunpack.c.l.s4 1966171168
  %v12665 = vunpack.c.0.s8 %v12664
  %v12666 = vlaneseq
  %v12667 = vshrl.u32 %v12666, 7
  %v12668 = vsub.s32 %v12665, %v12667
  %v12669 = vrot.slane %v12641, %v12668
  %v12670 = vcombine.low %v12648, %v12655
  %v12671 = vcombine.low %v12662, %v12669
  %v12673 = vunpack.c.l.s4 1966171168
  %v12674 = vunpack.c.0.s8 %v12673
  %v12675 = vlaneseq
  %v12676 = vshrl.u32 %v12675, 7
  %v12677 = vsub.s32 %v12674, %v12676
  %v12678 = vrot.slane %v12670, %v12677
  %v12680 = vunpack.c.l.s4 1966171168
  %v12681 = vunpack.c.0.s8 %v12680
  %v12682 = vlaneseq
  %v12683 = vshrl.u32 %v12682, 7
  %v12684 = vsub.s32 %v12681, %v12683
  %v12685 = vrot.slane %v12671, %v12684
  %v12686 = vcombine.low %v12678, %v12685
  %v12687 = vcombine.low %v9574, %v9588
  %v12688 = vcombine.low %v9596, %v9598
  %v12689 = vcombine.low %v9581, %v9595
  %v12690 = vcombine.low %v9597, %v9599
  %v12692 = vunpack.c.l.s4 1966171168
  %v12693 = vunpack.c.0.s8 %v12692
  %v12694 = vlaneseq
  %v12695 = vshrl.u32 %v12694, 7
  %v12696 = vsub.s32 %v12693, %v12695
  %v12697 = vrot.slane %v12687, %v12696
  %v12699 = vunpack.c.l.s4 1966171168
  %v12700 = vunpack.c.0.s8 %v12699
  %v12701 = vlaneseq
  %v12702 = vshrl.u32 %v12701, 7
  %v12703 = vsub.s32 %v12700, %v12702
  %v12704 = vrot.slane %v12688, %v12703
  %v12706 = vunpack.c.l.s4 1966171168
  %v12707 = vunpack.c.0.s8 %v12706
  %v12708 = vlaneseq
  %v12709 = vshrl.u32 %v12708, 7
  %v12710 = vsub.s32 %v12707, %v12709
  %v12711 = vrot.slane %v12689, %v12710
  %v12713 = vunpack.c.l.s4 1966171168
  %v12714 = vunpack.c.0.s8 %v12713
  %v12715 = vlaneseq
  %v12716 = vshrl.u32 %v12715, 7
  %v12717 = vsub.s32 %v12714, %v12716
  %v12718 = vrot.slane %v12690, %v12717
  %v12719 = vcombine.low %v12697, %v12704
  %v12720 = vcombine.low %v12711, %v12718
  %v12722 = vunpack.c.l.s4 1966171168
  %v12723 = vunpack.c.0.s8 %v12722
  %v12724 = vlaneseq
  %v12725 = vshrl.u32 %v12724, 7
  %v12726 = vsub.s32 %v12723, %v12725
  %v12727 = vrot.slane %v12719, %v12726
  %v12729 = vunpack.c.l.s4 1966171168
  %v12730 = vunpack.c.0.s8 %v12729
  %v12731 = vlaneseq
  %v12732 = vshrl.u32 %v12731, 7
  %v12733 = vsub.s32 %v12730, %v12732
  %v12734 = vrot.slane %v12720, %v12733
  %v12735 = vcombine.low %v12727, %v12734
  %12736 = vset.pattern.permute.xlu0 0
  %12737 = vperm.xlu0 %12736, %v9648
  %v12738 = vpop.permute.xlu0 %12737
  %12739 = vset.pattern.permute.xlu0 0
  %12740 = vperm.xlu0 %12739, %v9697
  %v12741 = vpop.permute.xlu0 %12740
  %12742 = vset.pattern.permute.xlu0 0
  %12743 = vperm.xlu0 %12742, %v9746
  %v12744 = vpop.permute.xlu0 %12743
  %12745 = vset.pattern.permute.xlu0 0
  %12746 = vperm.xlu0 %12745, %v9795
  %v12747 = vpop.permute.xlu0 %12746
  %12748 = vset.pattern.permute.xlu0 0
  %12749 = vperm.xlu0 %12748, %v9844
  %v12750 = vpop.permute.xlu0 %12749
  %12751 = vset.pattern.permute.xlu0 0
  %12752 = vperm.xlu0 %12751, %v9893
  %v12753 = vpop.permute.xlu0 %12752
  %12754 = vset.pattern.permute.xlu0 0
  %12755 = vperm.xlu0 %12754, %v9942
  %v12756 = vpop.permute.xlu0 %12755
  %12757 = vset.pattern.permute.xlu0 0
  %12758 = vperm.xlu0 %12757, %v9991
  %v12759 = vpop.permute.xlu0 %12758
  %12760 = vset.pattern.permute.xlu0 0
  %12761 = vperm.xlu0 %12760, %v10040
  %v12762 = vpop.permute.xlu0 %12761
  %12763 = vset.pattern.permute.xlu0 0
  %12764 = vperm.xlu0 %12763, %v10089
  %v12765 = vpop.permute.xlu0 %12764
  %12766 = vset.pattern.permute.xlu0 0
  %12767 = vperm.xlu0 %12766, %v10138
  %v12768 = vpop.permute.xlu0 %12767
  %12769 = vset.pattern.permute.xlu0 0
  %12770 = vperm.xlu0 %12769, %v10187
  %v12771 = vpop.permute.xlu0 %12770
  %12772 = vset.pattern.permute.xlu0 0
  %12773 = vperm.xlu0 %12772, %v10236
  %v12774 = vpop.permute.xlu0 %12773
  %12775 = vset.pattern.permute.xlu0 0
  %12776 = vperm.xlu0 %12775, %v10285
  %v12777 = vpop.permute.xlu0 %12776
  %12778 = vset.pattern.permute.xlu0 0
  %12779 = vperm.xlu0 %12778, %v10334
  %v12780 = vpop.permute.xlu0 %12779
  %12781 = vset.pattern.permute.xlu0 0
  %12782 = vperm.xlu0 %12781, %v10383
  %v12783 = vpop.permute.xlu0 %12782
  %12784 = vset.pattern.permute.xlu0 0
  %12785 = vperm.xlu0 %12784, %v10432
  %v12786 = vpop.permute.xlu0 %12785
  %12787 = vset.pattern.permute.xlu0 0
  %12788 = vperm.xlu0 %12787, %v10481
  %v12789 = vpop.permute.xlu0 %12788
  %12790 = vset.pattern.permute.xlu0 0
  %12791 = vperm.xlu0 %12790, %v10530
  %v12792 = vpop.permute.xlu0 %12791
  %12793 = vset.pattern.permute.xlu0 0
  %12794 = vperm.xlu0 %12793, %v10579
  %v12795 = vpop.permute.xlu0 %12794
  %12796 = vset.pattern.permute.xlu0 0
  %12797 = vperm.xlu0 %12796, %v10628
  %v12798 = vpop.permute.xlu0 %12797
  %12799 = vset.pattern.permute.xlu0 0
  %12800 = vperm.xlu0 %12799, %v10677
  %v12801 = vpop.permute.xlu0 %12800
  %12802 = vset.pattern.permute.xlu0 0
  %12803 = vperm.xlu0 %12802, %v10726
  %v12804 = vpop.permute.xlu0 %12803
  %12805 = vset.pattern.permute.xlu0 0
  %12806 = vperm.xlu0 %12805, %v10775
  %v12807 = vpop.permute.xlu0 %12806
  %12808 = vset.pattern.permute.xlu0 0
  %12809 = vperm.xlu0 %12808, %v10824
  %v12810 = vpop.permute.xlu0 %12809
  %12811 = vset.pattern.permute.xlu0 0
  %12812 = vperm.xlu0 %12811, %v10873
  %v12813 = vpop.permute.xlu0 %12812
  %12814 = vset.pattern.permute.xlu0 0
  %12815 = vperm.xlu0 %12814, %v10922
  %v12816 = vpop.permute.xlu0 %12815
  %12817 = vset.pattern.permute.xlu0 0
  %12818 = vperm.xlu0 %12817, %v10971
  %v12819 = vpop.permute.xlu0 %12818
  %12820 = vset.pattern.permute.xlu0 0
  %12821 = vperm.xlu0 %12820, %v11020
  %v12822 = vpop.permute.xlu0 %12821
  %12823 = vset.pattern.permute.xlu0 0
  %12824 = vperm.xlu0 %12823, %v11069
  %v12825 = vpop.permute.xlu0 %12824
  %12826 = vset.pattern.permute.xlu0 0
  %12827 = vperm.xlu0 %12826, %v11118
  %v12828 = vpop.permute.xlu0 %12827
  %12829 = vset.pattern.permute.xlu0 0
  %12830 = vperm.xlu0 %12829, %v11167
  %v12831 = vpop.permute.xlu0 %12830
  %12832 = vset.pattern.permute.xlu0 0
  %12833 = vperm.xlu0 %12832, %v11216
  %v12834 = vpop.permute.xlu0 %12833
  %12835 = vset.pattern.permute.xlu0 0
  %12836 = vperm.xlu0 %12835, %v11265
  %v12837 = vpop.permute.xlu0 %12836
  %12838 = vset.pattern.permute.xlu0 0
  %12839 = vperm.xlu0 %12838, %v11314
  %v12840 = vpop.permute.xlu0 %12839
  %12841 = vset.pattern.permute.xlu0 0
  %12842 = vperm.xlu0 %12841, %v11363
  %v12843 = vpop.permute.xlu0 %12842
  %12844 = vset.pattern.permute.xlu0 0
  %12845 = vperm.xlu0 %12844, %v11412
  %v12846 = vpop.permute.xlu0 %12845
  %12847 = vset.pattern.permute.xlu0 0
  %12848 = vperm.xlu0 %12847, %v11461
  %v12849 = vpop.permute.xlu0 %12848
  %12850 = vset.pattern.permute.xlu0 0
  %12851 = vperm.xlu0 %12850, %v11510
  %v12852 = vpop.permute.xlu0 %12851
  %12853 = vset.pattern.permute.xlu0 0
  %12854 = vperm.xlu0 %12853, %v11559
  %v12855 = vpop.permute.xlu0 %12854
  %12856 = vset.pattern.permute.xlu0 0
  %12857 = vperm.xlu0 %12856, %v11608
  %v12858 = vpop.permute.xlu0 %12857
  %12859 = vset.pattern.permute.xlu0 0
  %12860 = vperm.xlu0 %12859, %v11657
  %v12861 = vpop.permute.xlu0 %12860
  %12862 = vset.pattern.permute.xlu0 0
  %12863 = vperm.xlu0 %12862, %v11706
  %v12864 = vpop.permute.xlu0 %12863
  %12865 = vset.pattern.permute.xlu0 0
  %12866 = vperm.xlu0 %12865, %v11755
  %v12867 = vpop.permute.xlu0 %12866
  %12868 = vset.pattern.permute.xlu0 0
  %12869 = vperm.xlu0 %12868, %v11804
  %v12870 = vpop.permute.xlu0 %12869
  %12871 = vset.pattern.permute.xlu0 0
  %12872 = vperm.xlu0 %12871, %v11853
  %v12873 = vpop.permute.xlu0 %12872
  %12874 = vset.pattern.permute.xlu0 0
  %12875 = vperm.xlu0 %12874, %v11902
  %v12876 = vpop.permute.xlu0 %12875
  %12877 = vset.pattern.permute.xlu0 0
  %12878 = vperm.xlu0 %12877, %v11951
  %v12879 = vpop.permute.xlu0 %12878
  %12880 = vset.pattern.permute.xlu0 0
  %12881 = vperm.xlu0 %12880, %v12000
  %v12882 = vpop.permute.xlu0 %12881
  %12883 = vset.pattern.permute.xlu0 0
  %12884 = vperm.xlu0 %12883, %v12049
  %v12885 = vpop.permute.xlu0 %12884
  %12886 = vset.pattern.permute.xlu0 0
  %12887 = vperm.xlu0 %12886, %v12098
  %v12888 = vpop.permute.xlu0 %12887
  %12889 = vset.pattern.permute.xlu0 0
  %12890 = vperm.xlu0 %12889, %v12147
  %v12891 = vpop.permute.xlu0 %12890
  %12892 = vset.pattern.permute.xlu0 0
  %12893 = vperm.xlu0 %12892, %v12196
  %v12894 = vpop.permute.xlu0 %12893
  %12895 = vset.pattern.permute.xlu0 0
  %12896 = vperm.xlu0 %12895, %v12245
  %v12897 = vpop.permute.xlu0 %12896
  %12898 = vset.pattern.permute.xlu0 0
  %12899 = vperm.xlu0 %12898, %v12294
  %v12900 = vpop.permute.xlu0 %12899
  %12901 = vset.pattern.permute.xlu0 0
  %12902 = vperm.xlu0 %12901, %v12343
  %v12903 = vpop.permute.xlu0 %12902
  %12904 = vset.pattern.permute.xlu0 0
  %12905 = vperm.xlu0 %12904, %v12392
  %v12906 = vpop.permute.xlu0 %12905
  %12907 = vset.pattern.permute.xlu0 0
  %12908 = vperm.xlu0 %12907, %v12441
  %v12909 = vpop.permute.xlu0 %12908
  %12910 = vset.pattern.permute.xlu0 0
  %12911 = vperm.xlu0 %12910, %v12490
  %v12912 = vpop.permute.xlu0 %12911
  %12913 = vset.pattern.permute.xlu0 0
  %12914 = vperm.xlu0 %12913, %v12539
  %v12915 = vpop.permute.xlu0 %12914
  %12916 = vset.pattern.permute.xlu0 0
  %12917 = vperm.xlu0 %12916, %v12588
  %v12918 = vpop.permute.xlu0 %12917
  %12919 = vset.pattern.permute.xlu0 0
  %12920 = vperm.xlu0 %12919, %v12637
  %v12921 = vpop.permute.xlu0 %12920
  %12922 = vset.pattern.permute.xlu0 0
  %12923 = vperm.xlu0 %12922, %v12686
  %v12924 = vpop.permute.xlu0 %12923
  %12925 = vset.pattern.permute.xlu0 0
  %12926 = vperm.xlu0 %12925, %v12735
  %v12927 = vpop.permute.xlu0 %12926
  %v12928 = vlaneseq
  %v12929 = vshrl.u32 %v12928, 7
  %v12930 = vsub.s32 %v144, %v12929
  %v12931 = vrot.slane %v12738, %v12930
  %v12932 = vadd.s32 %v144, 4294967288
  %v12933 = vlaneseq
  %v12934 = vshrl.u32 %v12933, 7
  %v12935 = vsub.s32 %v12932, %v12934
  %v12936 = vrot.slane %v12741, %v12935
  %vm12937 = vcmask 130112
  %v12938 = vsel %vm12937, %v12936, %v12931
  %v12939 = vadd.s32 %v144, 4294967280
  %v12940 = vlaneseq
  %v12941 = vshrl.u32 %v12940, 7
  %v12942 = vsub.s32 %v12939, %v12941
  %v12943 = vrot.slane %v12744, %v12942
  %vm12944 = vcmask 195712
  %v12945 = vsel %vm12944, %v12943, %v12938
  %v12946 = vadd.s32 %v144, 4294967272
  %v12947 = vlaneseq
  %v12948 = vshrl.u32 %v12947, 7
  %v12949 = vsub.s32 %v12946, %v12948
  %v12950 = vrot.slane %v12747, %v12949
  %vm12951 = vcmask 261312
  %v12952 = vsel %vm12951, %v12950, %v12945
  %v12953 = vadd.s32 %v144, 4294967264
  %v12954 = vlaneseq
  %v12955 = vshrl.u32 %v12954, 7
  %v12956 = vsub.s32 %v12953, %v12955
  %v12957 = vrot.slane %v12750, %v12956
  %vm12958 = vcmask 326912
  %v12959 = vsel %vm12958, %v12957, %v12952
  %v12960 = vadd.s32 %v144, 4294967256
  %v12961 = vlaneseq
  %v12962 = vshrl.u32 %v12961, 7
  %v12963 = vsub.s32 %v12960, %v12962
  %v12964 = vrot.slane %v12753, %v12963
  %vm12965 = vcmask 392512
  %v12966 = vsel %vm12965, %v12964, %v12959
  %v12967 = vadd.s32 %v144, 4294967248
  %v12968 = vlaneseq
  %v12969 = vshrl.u32 %v12968, 7
  %v12970 = vsub.s32 %v12967, %v12969
  %v12971 = vrot.slane %v12756, %v12970
  %vm12972 = vcmask 458112
  %v12973 = vsel %vm12972, %v12971, %v12966
  %v12974 = vadd.s32 %v144, 4294967240
  %v12975 = vlaneseq
  %v12976 = vshrl.u32 %v12975, 7
  %v12977 = vsub.s32 %v12974, %v12976
  %v12978 = vrot.slane %v12759, %v12977
  %vm12979 = vcmask 523712
  %v12980 = vsel %vm12979, %v12978, %v12973
  %v12981 = vadd.s32 %v144, 4294967232
  %v12982 = vlaneseq
  %v12983 = vshrl.u32 %v12982, 7
  %v12984 = vsub.s32 %v12981, %v12983
  %v12985 = vrot.slane %v12762, %v12984
  %vm12986 = vcmask 589312
  %v12987 = vsel %vm12986, %v12985, %v12980
  %v12988 = vadd.s32 %v144, 4294967224
  %v12989 = vlaneseq
  %v12990 = vshrl.u32 %v12989, 7
  %v12991 = vsub.s32 %v12988, %v12990
  %v12992 = vrot.slane %v12765, %v12991
  %vm12993 = vcmask 654912
  %v12994 = vsel %vm12993, %v12992, %v12987
  %v12995 = vadd.s32 %v144, 4294967216
  %v12996 = vlaneseq
  %v12997 = vshrl.u32 %v12996, 7
  %v12998 = vsub.s32 %v12995, %v12997
  %v12999 = vrot.slane %v12768, %v12998
  %vm13000 = vcmask 720512
  %v13001 = vsel %vm13000, %v12999, %v12994
  %v13002 = vadd.s32 %v144, 4294967208
  %v13003 = vlaneseq
  %v13004 = vshrl.u32 %v13003, 7
  %v13005 = vsub.s32 %v13002, %v13004
  %v13006 = vrot.slane %v12771, %v13005
  %vm13007 = vcmask 786112
  %v13008 = vsel %vm13007, %v13006, %v13001
  %v13009 = vadd.s32 %v144, 4294967200
  %v13010 = vlaneseq
  %v13011 = vshrl.u32 %v13010, 7
  %v13012 = vsub.s32 %v13009, %v13011
  %v13013 = vrot.slane %v12774, %v13012
  %vm13014 = vcmask 851712
  %v13015 = vsel %vm13014, %v13013, %v13008
  %v13016 = vadd.s32 %v144, 4294967192
  %v13017 = vlaneseq
  %v13018 = vshrl.u32 %v13017, 7
  %v13019 = vsub.s32 %v13016, %v13018
  %v13020 = vrot.slane %v12777, %v13019
  %vm13021 = vcmask 917312
  %v13022 = vsel %vm13021, %v13020, %v13015
  %v13023 = vadd.s32 %v144, 4294967184
  %v13024 = vlaneseq
  %v13025 = vshrl.u32 %v13024, 7
  %v13026 = vsub.s32 %v13023, %v13025
  %v13027 = vrot.slane %v12780, %v13026
  %vm13028 = vcmask 982912
  %v13029 = vsel %vm13028, %v13027, %v13022
  %v13030 = vadd.s32 %v144, 4294967176
  %v13031 = vlaneseq
  %v13032 = vshrl.u32 %v13031, 7
  %v13033 = vsub.s32 %v13030, %v13032
  %v13034 = vrot.slane %v12783, %v13033
  %vm13035 = vcmask 1048512
  %v13036 = vsel %vm13035, %v13034, %v13029
  %v13037 = vlaneseq
  %v13038 = vshrl.u32 %v13037, 7
  %v13039 = vsub.s32 %v144, %v13038
  %v13040 = vrot.slane %v12786, %v13039
  %v13041 = vlaneseq
  %v13042 = vshrl.u32 %v13041, 7
  %v13043 = vsub.s32 %v12932, %v13042
  %v13044 = vrot.slane %v12789, %v13043
  %v13045 = vsel %vm12937, %v13044, %v13040
  %v13046 = vlaneseq
  %v13047 = vshrl.u32 %v13046, 7
  %v13048 = vsub.s32 %v12939, %v13047
  %v13049 = vrot.slane %v12792, %v13048
  %v13050 = vsel %vm12944, %v13049, %v13045
  %v13051 = vlaneseq
  %v13052 = vshrl.u32 %v13051, 7
  %v13053 = vsub.s32 %v12946, %v13052
  %v13054 = vrot.slane %v12795, %v13053
  %v13055 = vsel %vm12951, %v13054, %v13050
  %v13056 = vlaneseq
  %v13057 = vshrl.u32 %v13056, 7
  %v13058 = vsub.s32 %v12953, %v13057
  %v13059 = vrot.slane %v12798, %v13058
  %v13060 = vsel %vm12958, %v13059, %v13055
  %v13061 = vlaneseq
  %v13062 = vshrl.u32 %v13061, 7
  %v13063 = vsub.s32 %v12960, %v13062
  %v13064 = vrot.slane %v12801, %v13063
  %v13065 = vsel %vm12965, %v13064, %v13060
  %v13066 = vlaneseq
  %v13067 = vshrl.u32 %v13066, 7
  %v13068 = vsub.s32 %v12967, %v13067
  %v13069 = vrot.slane %v12804, %v13068
  %v13070 = vsel %vm12972, %v13069, %v13065
  %v13071 = vlaneseq
  %v13072 = vshrl.u32 %v13071, 7
  %v13073 = vsub.s32 %v12974, %v13072
  %v13074 = vrot.slane %v12807, %v13073
  %v13075 = vsel %vm12979, %v13074, %v13070
  %v13076 = vlaneseq
  %v13077 = vshrl.u32 %v13076, 7
  %v13078 = vsub.s32 %v12981, %v13077
  %v13079 = vrot.slane %v12810, %v13078
  %v13080 = vsel %vm12986, %v13079, %v13075
  %v13081 = vlaneseq
  %v13082 = vshrl.u32 %v13081, 7
  %v13083 = vsub.s32 %v12988, %v13082
  %v13084 = vrot.slane %v12813, %v13083
  %v13085 = vsel %vm12993, %v13084, %v13080
  %v13086 = vlaneseq
  %v13087 = vshrl.u32 %v13086, 7
  %v13088 = vsub.s32 %v12995, %v13087
  %v13089 = vrot.slane %v12816, %v13088
  %v13090 = vsel %vm13000, %v13089, %v13085
  %v13091 = vlaneseq
  %v13092 = vshrl.u32 %v13091, 7
  %v13093 = vsub.s32 %v13002, %v13092
  %v13094 = vrot.slane %v12819, %v13093
  %v13095 = vsel %vm13007, %v13094, %v13090
  %v13096 = vlaneseq
  %v13097 = vshrl.u32 %v13096, 7
  %v13098 = vsub.s32 %v13009, %v13097
  %v13099 = vrot.slane %v12822, %v13098
  %v13100 = vsel %vm13014, %v13099, %v13095
  %v13101 = vlaneseq
  %v13102 = vshrl.u32 %v13101, 7
  %v13103 = vsub.s32 %v13016, %v13102
  %v13104 = vrot.slane %v12825, %v13103
  %v13105 = vsel %vm13021, %v13104, %v13100
  %v13106 = vlaneseq
  %v13107 = vshrl.u32 %v13106, 7
  %v13108 = vsub.s32 %v13023, %v13107
  %v13109 = vrot.slane %v12828, %v13108
  %v13110 = vsel %vm13028, %v13109, %v13105
  %v13111 = vlaneseq
  %v13112 = vshrl.u32 %v13111, 7
  %v13113 = vsub.s32 %v13030, %v13112
  %v13114 = vrot.slane %v12831, %v13113
  %v13115 = vsel %vm13035, %v13114, %v13110
  %v13116 = vlaneseq
  %v13117 = vshrl.u32 %v13116, 7
  %v13118 = vsub.s32 %v144, %v13117
  %v13119 = vrot.slane %v12834, %v13118
  %v13120 = vlaneseq
  %v13121 = vshrl.u32 %v13120, 7
  %v13122 = vsub.s32 %v12932, %v13121
  %v13123 = vrot.slane %v12837, %v13122
  %v13124 = vsel %vm12937, %v13123, %v13119
  %v13125 = vlaneseq
  %v13126 = vshrl.u32 %v13125, 7
  %v13127 = vsub.s32 %v12939, %v13126
  %v13128 = vrot.slane %v12840, %v13127
  %v13129 = vsel %vm12944, %v13128, %v13124
  %v13130 = vlaneseq
  %v13131 = vshrl.u32 %v13130, 7
  %v13132 = vsub.s32 %v12946, %v13131
  %v13133 = vrot.slane %v12843, %v13132
  %v13134 = vsel %vm12951, %v13133, %v13129
  %v13135 = vlaneseq
  %v13136 = vshrl.u32 %v13135, 7
  %v13137 = vsub.s32 %v12953, %v13136
  %v13138 = vrot.slane %v12846, %v13137
  %v13139 = vsel %vm12958, %v13138, %v13134
  %v13140 = vlaneseq
  %v13141 = vshrl.u32 %v13140, 7
  %v13142 = vsub.s32 %v12960, %v13141
  %v13143 = vrot.slane %v12849, %v13142
  %v13144 = vsel %vm12965, %v13143, %v13139
  %v13145 = vlaneseq
  %v13146 = vshrl.u32 %v13145, 7
  %v13147 = vsub.s32 %v12967, %v13146
  %v13148 = vrot.slane %v12852, %v13147
  %v13149 = vsel %vm12972, %v13148, %v13144
  %v13150 = vlaneseq
  %v13151 = vshrl.u32 %v13150, 7
  %v13152 = vsub.s32 %v12974, %v13151
  %v13153 = vrot.slane %v12855, %v13152
  %v13154 = vsel %vm12979, %v13153, %v13149
  %v13155 = vlaneseq
  %v13156 = vshrl.u32 %v13155, 7
  %v13157 = vsub.s32 %v12981, %v13156
  %v13158 = vrot.slane %v12858, %v13157
  %v13159 = vsel %vm12986, %v13158, %v13154
  %v13160 = vlaneseq
  %v13161 = vshrl.u32 %v13160, 7
  %v13162 = vsub.s32 %v12988, %v13161
  %v13163 = vrot.slane %v12861, %v13162
  %v13164 = vsel %vm12993, %v13163, %v13159
  %v13165 = vlaneseq
  %v13166 = vshrl.u32 %v13165, 7
  %v13167 = vsub.s32 %v12995, %v13166
  %v13168 = vrot.slane %v12864, %v13167
  %v13169 = vsel %vm13000, %v13168, %v13164
  %v13170 = vlaneseq
  %v13171 = vshrl.u32 %v13170, 7
  %v13172 = vsub.s32 %v13002, %v13171
  %v13173 = vrot.slane %v12867, %v13172
  %v13174 = vsel %vm13007, %v13173, %v13169
  %v13175 = vlaneseq
  %v13176 = vshrl.u32 %v13175, 7
  %v13177 = vsub.s32 %v13009, %v13176
  %v13178 = vrot.slane %v12870, %v13177
  %v13179 = vsel %vm13014, %v13178, %v13174
  %v13180 = vlaneseq
  %v13181 = vshrl.u32 %v13180, 7
  %v13182 = vsub.s32 %v13016, %v13181
  %v13183 = vrot.slane %v12873, %v13182
  %v13184 = vsel %vm13021, %v13183, %v13179
  %v13185 = vlaneseq
  %v13186 = vshrl.u32 %v13185, 7
  %v13187 = vsub.s32 %v13023, %v13186
  %v13188 = vrot.slane %v12876, %v13187
  %v13189 = vsel %vm13028, %v13188, %v13184
  %v13190 = vlaneseq
  %v13191 = vshrl.u32 %v13190, 7
  %v13192 = vsub.s32 %v13030, %v13191
  %v13193 = vrot.slane %v12879, %v13192
  %v13194 = vsel %vm13035, %v13193, %v13189
  %v13195 = vlaneseq
  %v13196 = vshrl.u32 %v13195, 7
  %v13197 = vsub.s32 %v144, %v13196
  %v13198 = vrot.slane %v12882, %v13197
  %v13199 = vlaneseq
  %v13200 = vshrl.u32 %v13199, 7
  %v13201 = vsub.s32 %v12932, %v13200
  %v13202 = vrot.slane %v12885, %v13201
  %v13203 = vsel %vm12937, %v13202, %v13198
  %v13204 = vlaneseq
  %v13205 = vshrl.u32 %v13204, 7
  %v13206 = vsub.s32 %v12939, %v13205
  %v13207 = vrot.slane %v12888, %v13206
  %v13208 = vsel %vm12944, %v13207, %v13203
  %v13209 = vlaneseq
  %v13210 = vshrl.u32 %v13209, 7
  %v13211 = vsub.s32 %v12946, %v13210
  %v13212 = vrot.slane %v12891, %v13211
  %v13213 = vsel %vm12951, %v13212, %v13208
  %v13214 = vlaneseq
  %v13215 = vshrl.u32 %v13214, 7
  %v13216 = vsub.s32 %v12953, %v13215
  %v13217 = vrot.slane %v12894, %v13216
  %v13218 = vsel %vm12958, %v13217, %v13213
  %v13219 = vlaneseq
  %v13220 = vshrl.u32 %v13219, 7
  %v13221 = vsub.s32 %v12960, %v13220
  %v13222 = vrot.slane %v12897, %v13221
  %v13223 = vsel %vm12965, %v13222, %v13218
  %v13224 = vlaneseq
  %v13225 = vshrl.u32 %v13224, 7
  %v13226 = vsub.s32 %v12967, %v13225
  %v13227 = vrot.slane %v12900, %v13226
  %v13228 = vsel %vm12972, %v13227, %v13223
  %v13229 = vlaneseq
  %v13230 = vshrl.u32 %v13229, 7
  %v13231 = vsub.s32 %v12974, %v13230
  %v13232 = vrot.slane %v12903, %v13231
  %v13233 = vsel %vm12979, %v13232, %v13228
  %v13234 = vlaneseq
  %v13235 = vshrl.u32 %v13234, 7
  %v13236 = vsub.s32 %v12981, %v13235
  %v13237 = vrot.slane %v12906, %v13236
  %v13238 = vsel %vm12986, %v13237, %v13233
  %v13239 = vlaneseq
  %v13240 = vshrl.u32 %v13239, 7
  %v13241 = vsub.s32 %v12988, %v13240
  %v13242 = vrot.slane %v12909, %v13241
  %v13243 = vsel %vm12993, %v13242, %v13238
  %v13244 = vlaneseq
  %v13245 = vshrl.u32 %v13244, 7
  %v13246 = vsub.s32 %v12995, %v13245
  %v13247 = vrot.slane %v12912, %v13246
  %v13248 = vsel %vm13000, %v13247, %v13243
  %v13249 = vlaneseq
  %v13250 = vshrl.u32 %v13249, 7
  %v13251 = vsub.s32 %v13002, %v13250
  %v13252 = vrot.slane %v12915, %v13251
  %v13253 = vsel %vm13007, %v13252, %v13248
  %v13254 = vlaneseq
  %v13255 = vshrl.u32 %v13254, 7
  %v13256 = vsub.s32 %v13009, %v13255
  %v13257 = vrot.slane %v12918, %v13256
  %v13258 = vsel %vm13014, %v13257, %v13253
  %v13259 = vlaneseq
  %v13260 = vshrl.u32 %v13259, 7
  %v13261 = vsub.s32 %v13016, %v13260
  %v13262 = vrot.slane %v12921, %v13261
  %v13263 = vsel %vm13021, %v13262, %v13258
  %v13264 = vlaneseq
  %v13265 = vshrl.u32 %v13264, 7
  %v13266 = vsub.s32 %v13023, %v13265
  %v13267 = vrot.slane %v12924, %v13266
  %v13268 = vsel %vm13028, %v13267, %v13263
  %v13269 = vlaneseq
  %v13270 = vshrl.u32 %v13269, 7
  %v13271 = vsub.s32 %v13030, %v13270
  %v13272 = vrot.slane %v12927, %v13271
  %v13273 = vsel %vm13035, %v13272, %v13268
  %v13274 = vcombine.low %v13036, %v13115
  %v13275 = vcombine.low %v13194, %v13273
  %v13277 = vunpack.c.l.s4 1966171168
  %v13278 = vunpack.c.0.s8 %v13277
  %v13279 = vlaneseq
  %v13280 = vshrl.u32 %v13279, 7
  %v13281 = vsub.s32 %v13278, %v13280
  %v13282 = vrot.slane %v13274, %v13281
  %v13284 = vunpack.c.l.s4 1966171168
  %v13285 = vunpack.c.0.s8 %v13284
  %v13286 = vlaneseq
  %v13287 = vshrl.u32 %v13286, 7
  %v13288 = vsub.s32 %v13285, %v13287
  %v13289 = vrot.slane %v13275, %v13288
  %v13290 = vcombine.low %v13282, %v13289
  %v13292 = vunpack.c.l.s4 1966171168
  %v13293 = vunpack.c.0.s8 %v13292
  %v13294 = vlaneseq
  %v13295 = vshrl.u32 %v13294, 7
  %v13296 = vsub.s32 %v13293, %v13295
  %v13297 = vrot.slane %v13290, %v13296
  %v13299 = vlaneseq
  %vm13300 = vcmp.ge.s32.totalorder %v13299, 0
  %vm13301 = vcmp.lt.s32.totalorder %v13299, 512
  %vm13302 = vmand %vm13300, %vm13301
  %13303 = vst.msk [vmem:[%s3] sm:$0xf] %vm13302, %v13297
  // Predicated region
  $region14: #{pnn_forward.1} parent=0 // pred_check
    _
  $region15: #{pnn_forward.1} parent=0 // pred_check_branch
    %13305 = sbr.rel (0) target = $region17
  $region16: #{pnn_forward.1} parent=0 // pred_region
    _
  $region17: #{pnn_forward.1} parent=0 // pred_fallthru
    _
  // Predicated region
  $region18: #{pnn_forward.1} parent=0 // pred_check
    _
  $region19: #{pnn_forward.1} parent=0 // pred_check_branch
    %13307 = sbr.rel (0) target = $region21
  $region20: #{pnn_forward.1} parent=0 // pred_region
    _
  $region21: #{pnn_forward.1} parent=0 // pred_fallthru
    _

</llo_original>
